<compile_context>
chip_gen: v6e
topology: v6e:2x2x1
jax: 0.10.0
libtpu: 0.0.40
codegen_flags: <defaults>
</compile_context>

<pallas_src>
import functools

import jax
import jax.numpy as jnp
from jax.experimental import pallas as pl
from jax.experimental.pallas import tpu as pltpu

EXPANSION = 4
LANES = 128


def _round_up(n, m=LANES):
    return ((n + m - 1) // m) * m


# ----------------------------------------------------------------------------
# Kernel: one batch element per grid step.
# ----------------------------------------------------------------------------
def _bottleneck_kernel(*refs, H, W, P, Cout, stride, identity):
    if identity:
        (x_ref, w1_ref, s1_ref, b1_ref, w2_ref, s2_ref, b2_ref,
         w3_ref, s3_ref, b3_ref, out_ref, *scratch) = refs
        ssc_ref = bsc_ref = None
    else:
        (x_ref, w1_ref, s1_ref, b1_ref, w2_ref, s2_ref, b2_ref,
         w3_ref, s3_ref, b3_ref, ssc_ref, bsc_ref, out_ref, *scratch) = refs

    Ho = (H - 1) // stride + 1
    Wo = (W - 1) // stride + 1
    f32, bf16 = jnp.float32, jnp.bfloat16

    x = x_ref[0]                                   # (H, W, Cin_p) bf16
    Cin = x.shape[-1]
    xm = x.reshape(H * W, Cin)

    # --- conv1 (1x1) + bn1 + relu.  For projection blocks the 1x1 shortcut
    # conv is fused into the same matmul (weights concatenated along N).
    h = jnp.dot(xm, w1_ref[...], preferred_element_type=f32)   # (H*W, P[+Cout])
    h1 = jnp.maximum(h[:, :P] * s1_ref[...] + b1_ref[...], 0.0)  # (H*W, P) f32

    # --- conv2 (3x3, pad=1): the three column (kw) taps are folded into the
    # contraction dim, so the 3x3 conv is 3 dots with K = 3*P (one per kh).
    # Column shifts use XLU rolls of the row-padded flattened activation with
    # the wrapped image column masked to zero; masks are hoisted and applied
    # after the bf16 cast.
    n_rows = (H + 2) * W
    zrow = jnp.zeros((W, P), f32)
    pf = jnp.concatenate([zrow, h1, zrow], axis=0)              # ((H+2)*W, P)
    col = jax.lax.broadcasted_iota(jnp.int32, (n_rows, 1), 0) % W
    left_edge = col == 0
    right_edge = col == (W - 1)
    zero = jnp.zeros((), bf16)
    left = jnp.where(left_edge, zero,
                     pltpu.roll(pf, shift=1, axis=0).astype(bf16))
    right = jnp.where(right_edge, zero,
                      pltpu.roll(pf, shift=n_rows - 1, axis=0).astype(bf16))
    cat = jnp.concatenate([left, pf.astype(bf16), right], axis=-1)  # (.., 3P)

    acc = jnp.zeros((H * W, P), f32)
    for kh in range(3):
        acc = acc + jnp.dot(cat[kh * W:(kh + H) * W, :], w2_ref[kh],
                            preferred_element_type=f32)
    h2 = jnp.maximum(acc * s2_ref[...] + b2_ref[...], 0.0)      # (H*W, P) f32

    # --- spatial subsampling / shortcut --------------------------------------
    if stride == 1:
        h2s = h2.astype(bf16)                                   # (Ho*Wo, P)
        if identity:
            sc = xm.astype(f32)              # Cin == Cout, padded lanes are 0
        else:
            sc = h[:, P:] * ssc_ref[...] + bsc_ref[...]
    else:
        # stride > 1: full-resolution conv2 / projection results are written
        # to an f32 VMEM scratch and subsampled with strided pl.ds reads.
        ds_ref = scratch[0]
        ds_ref[...] = jnp.concatenate([h2, h[:, P:]], axis=-1)  # (H*W, P+Cout)
        sub = jnp.concatenate(
            [ds_ref[pl.ds(i * stride * W, Wo, stride), :] for i in range(Ho)],
            axis=0)                                             # (Ho*Wo, P+Cout)
        h2s = sub[:, :P].astype(bf16)
        sc = sub[:, P:] * ssc_ref[...] + bsc_ref[...]

    # --- conv3 (1x1) + bn3, residual add, relu --------------------------------
    h3 = jnp.dot(h2s, w3_ref[...], preferred_element_type=f32)
    h3 = h3 * s3_ref[...] + b3_ref[...]                         # (Ho*Wo, Cout)
    out = jnp.maximum(h3 + sc, 0.0)
    out_ref[0] = out.reshape(Ho, Wo, Cout).astype(out_ref.dtype)


# ----------------------------------------------------------------------------
# Parameter preparation: pad channels to 128, cast to bf16, fuse the shortcut
# projection into conv1, fold the 3x3 kw taps into the contraction dim.
# ----------------------------------------------------------------------------
def _prepare(params, stride):
    w1, w2, w3 = params["w1"], params["w2"], params["w3"]
    Cin, P = w1.shape
    Cout = w3.shape[1]
    Cin_p, P_p, Cout_p = _round_up(Cin), _round_up(P), _round_up(Cout)

    identity = bool(params["identity_shortcut"])
    if identity:
        assert stride == 1 and Cin == Cout, (
            "identity shortcut requires stride == 1 and "
            "in_planes == expansion * planes")

    bf16, f32 = jnp.bfloat16, jnp.float32

    def padw(a, shape):
        return jnp.pad(a, [(0, t - s) for s, t in zip(a.shape, shape)])

    def padv(v, c):
        return padw(v.astype(f32), (1, c))

    w1p = padw(w1, (Cin_p, P_p)).astype(bf16)
    if not identity:
        wscp = padw(params["wsc"], (Cin_p, Cout_p)).astype(bf16)
        w1p = jnp.concatenate([w1p, wscp], axis=1)      # (Cin_p, P_p + Cout_p)

    # (3, 3, P, P) -> (3, 3*P_p, P_p): K packs the three kw taps per kh.
    w2p = padw(w2, (3, 3, P_p, P_p)).reshape(3, 3 * P_p, P_p).astype(bf16)

    weights = [
        w1p,
        padv(params["s1"], P_p), padv(params["b1"], P_p),
        w2p,
        padv(params["s2"], P_p), padv(params["b2"], P_p),
        padw(w3, (P_p, Cout_p)).astype(bf16),
        padv(params["s3"], Cout_p), padv(params["b3"], Cout_p),
    ]
    if not identity:
        weights += [padv(params["ssc"], Cout_p), padv(params["bsc"], Cout_p)]

    dims = dict(Cin=Cin, P=P, Cout=Cout, Cin_p=Cin_p, P_p=P_p, Cout_p=Cout_p,
                identity=identity)
    return weights, dims


prepare_bottleneck_params = _prepare


# ----------------------------------------------------------------------------
# Padded-channel bf16 NHWC fast path (for chaining blocks without extra HBM
# pad/cast/slice/transpose passes).  Padded input channels must be zero; the
# padded output channels are zero too, so the result feeds the next block.
# ----------------------------------------------------------------------------
def bottleneck_pallas_padded(x_padded, prepared, *, stride=1,
                             out_dtype=jnp.bfloat16):
    weights, d = prepared
    N, H, W, Cin_p = x_padded.shape
    assert Cin_p == d["Cin_p"], (Cin_p, d["Cin_p"])
    P_p, Cout_p = d["P_p"], d["Cout_p"]
    identity = d["identity"]
    Ho = (H - 1) // stride + 1
    Wo = (W - 1) // stride + 1

    x = x_padded.astype(jnp.bfloat16)

    kernel = functools.partial(
        _bottleneck_kernel, H=H, W=W, P=P_p, Cout=Cout_p,
        stride=stride, identity=identity)

    scratch_shapes = []
    if stride > 1:
        scratch_shapes.append(pltpu.VMEM((H * W, P_p + Cout_p), jnp.float32))

    # VMEM limit derived from the device (v7x: 64 MiB, v5e/v6e: 128 MiB).
    try:
        vmem_cap = int(pltpu.get_tpu_info().vmem_capacity_bytes)
    except Exception:
        vmem_cap = 64 * 2**20
    out_isz = jnp.dtype(out_dtype).itemsize
    blk_in = H * W * Cin_p * 2
    blk_out = Ho * Wo * Cout_p * out_isz
    w_bytes = sum(int(w.size) * w.dtype.itemsize for w in weights)
    rows_p = (H + 2) * W
    n1 = P_p + (0 if identity else Cout_p)
    interm = (H * W * n1 * 4                    # conv1 accumulator (f32)
              + rows_p * P_p * (4 + 2 + 2)      # pf (f32) + left/right (bf16)
              + rows_p * 3 * P_p * 2            # cat (bf16)
              + H * W * P_p * 8                 # acc + h2 (f32)
              + Ho * Wo * Cout_p * 8)           # h3 + sc (f32)
    scratch_b = (H * W * (P_p + Cout_p) * 4) if stride > 1 else 0
    need = 2 * (blk_in + blk_out) + 2 * w_bytes + interm + scratch_b + (4 << 20)
    vmem_limit = int(min(max(need, 32 * 2**20), int(0.85 * vmem_cap)))

    # Advisory cost estimate so XLA schedules neighbouring ops around the call.
    flops = 2 * N * (H * W * Cin_p * n1
                     + (H * W if stride > 1 else Ho * Wo) * 9 * P_p * P_p
                     + Ho * Wo * P_p * Cout_p)
    cost = pl.CostEstimate(flops=int(flops), transcendentals=0,
                           bytes_accessed=int(N * (blk_in + blk_out) + w_bytes))

    def _run(single_buffer_weights):
        def _const_spec(a):
            zeros = (0,) * a.ndim
            if single_buffer_weights:
                # Block index never changes -> keep a single VMEM copy.
                return pl.BlockSpec(a.shape, lambda n, _z=zeros: _z,
                                    pipeline_mode=pl.Buffered(1))
            return pl.BlockSpec(a.shape, lambda n, _z=zeros: _z)

        return pl.pallas_call(
            kernel,
            out_shape=jax.ShapeDtypeStruct((N, Ho, Wo, Cout_p), out_dtype),
            grid_spec=pltpu.PrefetchScalarGridSpec(
                num_scalar_prefetch=0,
                grid=(N,),
                in_specs=[pl.BlockSpec((1, H, W, Cin_p),
                                       lambda n: (n, 0, 0, 0))]
                         + [_const_spec(w) for w in weights],
                out_specs=pl.BlockSpec((1, Ho, Wo, Cout_p),
                                       lambda n: (n, 0, 0, 0)),
                scratch_shapes=tuple(scratch_shapes)),
            compiler_params=pltpu.CompilerParams(
                dimension_semantics=("parallel",),
                vmem_limit_bytes=vmem_limit),
            cost_estimate=cost,
        )(x, *weights)

    try:
        return _run(True)
    except Exception:
        # pl.Buffered(1) (single-buffered constant weights) unsupported on
        # this jax/backend: fall back to default double buffering.
        return _run(False)


# ----------------------------------------------------------------------------
# Convenience wrappers (PyTorch parity path).
# ----------------------------------------------------------------------------
def bottleneck_pallas_nhwc(x_nhwc, params, *, stride=1, out_dtype=jnp.float32):
    N, H, W, Cin = x_nhwc.shape
    prepared = _prepare(params, stride)
    d = prepared[1]
    assert Cin == d["Cin"]
    x = jnp.pad(x_nhwc, ((0, 0), (0, 0), (0, 0), (0, d["Cin_p"] - Cin)))
    x = x.astype(jnp.bfloat16)
    out = bottleneck_pallas_padded(x, prepared, stride=stride,
                                   out_dtype=out_dtype)
    return out[..., :d["Cout"]]


def bottleneck_pallas(x_nchw, params, *, stride=1):
    """NCHW float32 in / NCHW float32 out (PyTorch convention)."""
    x = jnp.transpose(x_nchw, (0, 2, 3, 1))
    out = bottleneck_pallas_nhwc(x, params, stride=stride,
                                 out_dtype=jnp.float32)
    return jnp.transpose(out, (0, 3, 1, 2))


# ----------------------------------------------------------------------------
# Deterministic synthetic parameters (mirrors the PyTorch __init__ shapes).
# ----------------------------------------------------------------------------
def _fold_bn(gamma, beta, mean, var, eps=1e-5):
    scale = gamma / jnp.sqrt(var + eps)
    bias = beta - mean * scale
    return scale[None, :], bias[None, :]            # (1, C) each


def init_bottleneck_params(key, in_planes, planes, stride):
    Cout = EXPANSION * planes
    ks = jax.random.split(key, 8)

    def conv_w(k, cin, cout, kh, kw):
        # PyTorch weight layout (cout, cin, kh, kw) -> (kh, kw, cin, cout)
        w = 0.1 * jax.random.normal(k, (cout, cin, kh, kw), jnp.float32)
        return jnp.transpose(w, (2, 3, 1, 0))

    def bn(k, c):
        k1, k2, k3, k4 = jax.random.split(k, 4)
        gamma = 1.0 + 0.1 * jax.random.normal(k1, (c,), jnp.float32)
        beta = 0.1 * jax.random.normal(k2, (c,), jnp.float32)
        mean = 0.1 * jax.random.normal(k3, (c,), jnp.float32)
        var = jnp.abs(1.0 + 0.1 * jax.random.normal(k4, (c,), jnp.float32))
        return _fold_bn(gamma, beta, mean, var)

    p = {}
    p["w1"] = conv_w(ks[0], in_planes, planes, 1, 1)[0, 0]       # (Cin, P)
    p["s1"], p["b1"] = bn(ks[1], planes)
    p["w2"] = conv_w(ks[2], planes, planes, 3, 3)                # (3,3,P,P)
    p["s2"], p["b2"] = bn(ks[3], planes)
    p["w3"] = conv_w(ks[4], planes, Cout, 1, 1)[0, 0]            # (P, Cout)
    p["s3"], p["b3"] = bn(ks[5], Cout)

    identity = (stride == 1 and in_planes == Cout)
    p["identity_shortcut"] = identity
    if not identity:
        p["wsc"] = conv_w(ks[6], in_planes, Cout, 1, 1)[0, 0]    # (Cin, Cout)
        p["ssc"], p["bsc"] = bn(ks[7], Cout)
    return p


# ----------------------------------------------------------------------------
# Pure-JAX reference (same math, XLA convs).
# ----------------------------------------------------------------------------
def bottleneck_ref(x_nchw, p, stride):
    dn = ("NHWC", "HWIO", "NHWC")
    x = jnp.transpose(x_nchw, (0, 2, 3, 1))

    def conv(y, w, s, pad):
        return jax.lax.conv_general_dilated(y, w, (s, s), pad,
                                            dimension_numbers=dn)

    h = conv(x, p["w1"][None, None], 1, "VALID") * p["s1"][0] + p["b1"][0]
    h = jnp.maximum(h, 0.0)
    h = conv(h, p["w2"], stride, ((1, 1), (1, 1))) * p["s2"][0] + p["b2"][0]
    h = jnp.maximum(h, 0.0)
    h = conv(h, p["w3"][None, None], 1, "VALID") * p["s3"][0] + p["b3"][0]
    if p["identity_shortcut"]:
        sc = x
    else:
        sc = conv(x, p["wsc"][None, None], stride, "VALID")
        sc = sc * p["ssc"][0] + p["bsc"][0]
    out = jnp.maximum(h + sc, 0.0)
    return jnp.transpose(out, (0, 3, 1, 2))


if __name__ == "__main__":
    key = jax.random.PRNGKey(0)
    k1, k2, k3, k4, k5, k6 = jax.random.split(key, 6)

    N, in_planes, planes, H, W = 2, 4, 4, 16, 16

    # Case 1: projection shortcut (in_planes != expansion*planes), stride=1.
    x = jax.random.normal(k1, (N, in_planes, H, W), jnp.float32)
    params = init_bottleneck_params(k2, in_planes, planes, stride=1)
    out = jax.block_until_ready(bottleneck_pallas(x, params, stride=1))
    ref = bottleneck_ref(x, params, 1)
    assert out.shape == ref.shape == (N, EXPANSION * planes, H, W)
    err = float(jnp.max(jnp.abs(out - ref)))
    assert jnp.allclose(out, ref, atol=5e-2, rtol=5e-2), (
        f"projection-shortcut mismatch: max err {err}")

    # Case 2: identity shortcut (in_planes == expansion*planes), stride=1.
    in_planes2 = EXPANSION * planes
    x2 = jax.random.normal(k3, (N, in_planes2, H, W), jnp.float32)
    params2 = init_bottleneck_params(k4, in_planes2, planes, stride=1)
    out2 = jax.block_until_ready(bottleneck_pallas(x2, params2, stride=1))
    ref2 = bottleneck_ref(x2, params2, 1)
    err2 = float(jnp.max(jnp.abs(out2 - ref2)))
    assert jnp.allclose(out2, ref2, atol=5e-2, rtol=5e-2), (
        f"identity-shortcut mismatch: max err {err2}")

    # Case 3: projection shortcut with stride=2 (downsampling block).
    x3 = jax.random.normal(k5, (N, in_planes, H, W), jnp.float32)
    params3 = init_bottleneck_params(k6, in_planes, planes, stride=2)
    out3 = jax.block_until_ready(bottleneck_pallas(x3, params3, stride=2))
    ref3 = bottleneck_ref(x3, params3, 2)
    assert out3.shape == ref3.shape == (N, EXPANSION * planes, H // 2, W // 2)
    err3 = float(jnp.max(jnp.abs(out3 - ref3)))
    assert jnp.allclose(out3, ref3, atol=5e-2, rtol=5e-2), (
        f"stride-2 projection mismatch: max err {err3}")

    # Case 4: chained padded bf16 NHWC path (no pad/slice/cast between blocks).
    prep1 = prepare_bottleneck_params(params, 1)
    prep2 = prepare_bottleneck_params(params2, 1)
    d1 = prep1[1]
    xpad = jnp.transpose(x, (0, 2, 3, 1))
    xpad = jnp.pad(xpad, ((0, 0), (0, 0), (0, 0),
                          (0, d1["Cin_p"] - in_planes))).astype(jnp.bfloat16)
    y1 = bottleneck_pallas_padded(xpad, prep1, stride=1)
    assert y1.shape == (N, H, W, d1["Cout_p"])
    y2 = jax.block_until_ready(bottleneck_pallas_padded(y1, prep2, stride=1))
    assert y2.shape == (N, H, W, prep2[1]["Cout_p"])
    assert bool(jnp.all(jnp.isfinite(y2.astype(jnp.float32))))

    print("KERNEL_OK")
</pallas_src>

<mosaic_0001>
module attributes {stable_mosaic.version = 11 : i64} {
  func.func @_bottleneck_kernel(%arg0: i32, %arg1: memref<1x16x16x128xbf16, #tpu.memory_space<vmem>>, %arg2: memref<128x256xbf16, #tpu.memory_space<vmem>>, %arg3: memref<1x128xf32, #tpu.memory_space<vmem>>, %arg4: memref<1x128xf32, #tpu.memory_space<vmem>>, %arg5: memref<3x384x128xbf16, #tpu.memory_space<vmem>>, %arg6: memref<1x128xf32, #tpu.memory_space<vmem>>, %arg7: memref<1x128xf32, #tpu.memory_space<vmem>>, %arg8: memref<128x128xbf16, #tpu.memory_space<vmem>>, %arg9: memref<1x128xf32, #tpu.memory_space<vmem>>, %arg10: memref<1x128xf32, #tpu.memory_space<vmem>>, %arg11: memref<1x128xf32, #tpu.memory_space<vmem>>, %arg12: memref<1x128xf32, #tpu.memory_space<vmem>>, %arg13: memref<1x16x16x128xf32, #tpu.memory_space<vmem>>) attributes {dimension_semantics = [#tpu.dimension_semantics<parallel>], iteration_bounds = array<i64: 2>, scalar_prefetch = 0 : i64, scratch_operands = 0 : i64, tpu.core_type = #tpu.core_type<tc>, window_params = [{transform_indices = @transform_0, window_bounds = array<i64: 1, 16, 16, 128>}, {pipeline_mode = #tpu.pipeline_mode<synchronous>, transform_indices = @transform_1, window_bounds = array<i64: 128, 256>}, {pipeline_mode = #tpu.pipeline_mode<synchronous>, transform_indices = @transform_2, window_bounds = array<i64: 1, 128>}, {pipeline_mode = #tpu.pipeline_mode<synchronous>, transform_indices = @transform_3, window_bounds = array<i64: 1, 128>}, {pipeline_mode = #tpu.pipeline_mode<synchronous>, transform_indices = @transform_4, window_bounds = array<i64: 3, 384, 128>}, {pipeline_mode = #tpu.pipeline_mode<synchronous>, transform_indices = @transform_5, window_bounds = array<i64: 1, 128>}, {pipeline_mode = #tpu.pipeline_mode<synchronous>, transform_indices = @transform_6, window_bounds = array<i64: 1, 128>}, {pipeline_mode = #tpu.pipeline_mode<synchronous>, transform_indices = @transform_7, window_bounds = array<i64: 128, 128>}, {pipeline_mode = #tpu.pipeline_mode<synchronous>, transform_indices = @transform_8, window_bounds = array<i64: 1, 128>}, {pipeline_mode = #tpu.pipeline_mode<synchronous>, transform_indices = @transform_9, window_bounds = array<i64: 1, 128>}, {pipeline_mode = #tpu.pipeline_mode<synchronous>, transform_indices = @transform_10, window_bounds = array<i64: 1, 128>}, {pipeline_mode = #tpu.pipeline_mode<synchronous>, transform_indices = @transform_11, window_bounds = array<i64: 1, 128>}, {transform_indices = @transform_12, window_bounds = array<i64: 1, 16, 16, 128>}]} {
    %c0 = arith.constant 0 : index
    %c0_0 = arith.constant 0 : index
    %c0_1 = arith.constant 0 : index
    %c0_2 = arith.constant 0 : index
    %0 = vector.load %arg1[%c0, %c0_0, %c0_1, %c0_2] : memref<1x16x16x128xbf16, #tpu.memory_space<vmem>>, vector<1x16x16x128xbf16>
    %1 = vector.shape_cast %0 : vector<1x16x16x128xbf16> to vector<16x16x128xbf16>
    %2 = vector.shape_cast %1 : vector<16x16x128xbf16> to vector<256x128xbf16>
    %c0_3 = arith.constant 0 : index
    %c0_4 = arith.constant 0 : index
    %3 = vector.load %arg2[%c0_3, %c0_4] : memref<128x256xbf16, #tpu.memory_space<vmem>>, vector<128x256xbf16>
    %cst = arith.constant dense<0.000000e+00> : vector<256x256xf32>
    %4 = tpu.matmul %2, %3, %cst {dimension_numbers = #tpu.dot_dimension_numbers<[1], [0], [0], [1], [0, 0, 1, 1], [], []>} : vector<256x128xbf16>, vector<128x256xbf16>, vector<256x256xf32> -> vector<256x256xf32>
    %5 = vector.extract_strided_slice %4 {offsets = [0, 0], sizes = [256, 128], strides = [1, 1]} : vector<256x256xf32> to vector<256x128xf32>
    %c0_5 = arith.constant 0 : index
    %c0_6 = arith.constant 0 : index
    %6 = vector.load %arg3[%c0_5, %c0_6] : memref<1x128xf32, #tpu.memory_space<vmem>>, vector<1x128xf32>
    %7 = vector.broadcast %6 : vector<1x128xf32> to vector<256x128xf32>
    %8 = arith.mulf %5, %7 : vector<256x128xf32>
    %c0_7 = arith.constant 0 : index
    %c0_8 = arith.constant 0 : index
    %9 = vector.load %arg4[%c0_7, %c0_8] : memref<1x128xf32, #tpu.memory_space<vmem>>, vector<1x128xf32>
    %10 = vector.broadcast %9 : vector<1x128xf32> to vector<256x128xf32>
    %11 = arith.addf %8, %10 : vector<256x128xf32>
    %cst_9 = arith.constant 0.000000e+00 : f32
    %12 = vector.broadcast %cst_9 : f32 to vector<256x128xf32>
    %13 = arith.maximumf %11, %12 : vector<256x128xf32>
    %cst_10 = arith.constant 0.000000e+00 : f32
    %14 = vector.broadcast %cst_10 : f32 to vector<16x128xf32>
    %15 = tpu.concatenate %14, %13, %14 in 0 : vector<16x128xf32>, vector<256x128xf32>, vector<16x128xf32> -> vector<288x128xf32>
    %16 = tpu.iota {dimensions = array<i32: 0>} : vector<288x1xi32>
    %c16_i32 = arith.constant 16 : i32
    %c0_i32 = arith.constant 0 : i32
    %17 = arith.cmpi eq, %c16_i32, %c0_i32 : i32
    %c1_i32 = arith.constant 1 : i32
    %18 = arith.select %17, %c1_i32, %c16_i32 : i32
    %19 = vector.broadcast %18 : i32 to vector<288x1xi32>
    %20 = arith.remsi %16, %19 : vector<288x1xi32>
    %c0_i32_11 = arith.constant 0 : i32
    %21 = vector.broadcast %c0_i32_11 : i32 to vector<288x1xi32>
    %22 = arith.cmpi ne, %20, %21 : vector<288x1xi32>
    %c0_i32_12 = arith.constant 0 : i32
    %23 = vector.broadcast %c0_i32_12 : i32 to vector<288x1xi32>
    %24 = arith.cmpi slt, %20, %23 : vector<288x1xi32>
    %c0_i32_13 = arith.constant 0 : i32
    %25 = arith.cmpi slt, %18, %c0_i32_13 : i32
    %26 = vector.broadcast %25 : i1 to vector<288x1xi1>
    %27 = vector.broadcast %26 : vector<288x1xi1> to vector<288x1xi1>
    %28 = arith.xori %24, %27 : vector<288x1xi1>
    %29 = arith.andi %28, %22 : vector<288x1xi1>
    %30 = vector.broadcast %18 : i32 to vector<288x1xi32>
    %31 = arith.addi %20, %30 : vector<288x1xi32>
    %32 = arith.select %29, %31, %20 : vector<288x1xi1>, vector<288x1xi32>
    %c0_i32_14 = arith.constant 0 : i32
    %33 = vector.broadcast %c0_i32_14 : i32 to vector<288x1xi32>
    %34 = arith.cmpi eq, %32, %33 : vector<288x1xi32>
    %c15_i32 = arith.constant 15 : i32
    %35 = vector.broadcast %c15_i32 : i32 to vector<288x1xi32>
    %36 = arith.cmpi eq, %32, %35 : vector<288x1xi32>
    %c1_i32_15 = arith.constant 1 : i32
    %37 = tpu.dynamic_rotate %15 by %c1_i32_15 dim 0 : vector<288x128xf32>, i32 -> vector<288x128xf32>
    %38 = arith.truncf %37 : vector<288x128xf32> to vector<288x128xbf16>
    %cst_16 = arith.constant 0.000000e+00 : bf16
    %39 = vector.shape_cast %34 : vector<288x1xi1> to vector<288x1xi1>
    %40 = vector.broadcast %39 : vector<288x1xi1> to vector<288x128xi1>
    %41 = vector.broadcast %cst_16 : bf16 to vector<288x128xbf16>
    %42 = arith.select %40, %41, %38 : vector<288x128xi1>, vector<288x128xbf16>
    %c287_i32 = arith.constant 287 : i32
    %43 = tpu.dynamic_rotate %15 by %c287_i32 dim 0 : vector<288x128xf32>, i32 -> vector<288x128xf32>
    %44 = arith.truncf %43 : vector<288x128xf32> to vector<288x128xbf16>
    %cst_17 = arith.constant 0.000000e+00 : bf16
    %45 = vector.shape_cast %36 : vector<288x1xi1> to vector<288x1xi1>
    %46 = vector.broadcast %45 : vector<288x1xi1> to vector<288x128xi1>
    %47 = vector.broadcast %cst_17 : bf16 to vector<288x128xbf16>
    %48 = arith.select %46, %47, %44 : vector<288x128xi1>, vector<288x128xbf16>
    %49 = arith.truncf %15 : vector<288x128xf32> to vector<288x128xbf16>
    %50 = tpu.concatenate %42, %49, %48 in 1 : vector<288x128xbf16>, vector<288x128xbf16>, vector<288x128xbf16> -> vector<288x384xbf16>
    %cst_18 = arith.constant 0.000000e+00 : f32
    %51 = vector.broadcast %cst_18 : f32 to vector<256x128xf32>
    %52 = vector.extract_strided_slice %50 {offsets = [0, 0], sizes = [256, 384], strides = [1, 1]} : vector<288x384xbf16> to vector<256x384xbf16>
    %c0_19 = arith.constant 0 : index
    %c0_20 = arith.constant 0 : index
    %c0_21 = arith.constant 0 : index
    %53 = vector.load %arg5[%c0_19, %c0_20, %c0_21] : memref<3x384x128xbf16, #tpu.memory_space<vmem>>, vector<1x384x128xbf16>
    %54 = vector.shape_cast %53 : vector<1x384x128xbf16> to vector<384x128xbf16>
    %cst_22 = arith.constant dense<0.000000e+00> : vector<256x128xf32>
    %55 = tpu.matmul %52, %54, %cst_22 {dimension_numbers = #tpu.dot_dimension_numbers<[1], [0], [0], [1], [0, 0, 1, 1], [], []>} : vector<256x384xbf16>, vector<384x128xbf16>, vector<256x128xf32> -> vector<256x128xf32>
    %56 = arith.addf %51, %55 : vector<256x128xf32>
    %57 = vector.extract_strided_slice %50 {offsets = [16, 0], sizes = [256, 384], strides = [1, 1]} : vector<288x384xbf16> to vector<256x384xbf16>
    %c1 = arith.constant 1 : index
    %c0_23 = arith.constant 0 : index
    %c0_24 = arith.constant 0 : index
    %58 = vector.load %arg5[%c1, %c0_23, %c0_24] : memref<3x384x128xbf16, #tpu.memory_space<vmem>>, vector<1x384x128xbf16>
    %59 = vector.shape_cast %58 : vector<1x384x128xbf16> to vector<384x128xbf16>
    %cst_25 = arith.constant dense<0.000000e+00> : vector<256x128xf32>
    %60 = tpu.matmul %57, %59, %cst_25 {dimension_numbers = #tpu.dot_dimension_numbers<[1], [0], [0], [1], [0, 0, 1, 1], [], []>} : vector<256x384xbf16>, vector<384x128xbf16>, vector<256x128xf32> -> vector<256x128xf32>
    %61 = arith.addf %56, %60 : vector<256x128xf32>
    %62 = vector.extract_strided_slice %50 {offsets = [32, 0], sizes = [256, 384], strides = [1, 1]} : vector<288x384xbf16> to vector<256x384xbf16>
    %c2 = arith.constant 2 : index
    %c0_26 = arith.constant 0 : index
    %c0_27 = arith.constant 0 : index
    %63 = vector.load %arg5[%c2, %c0_26, %c0_27] : memref<3x384x128xbf16, #tpu.memory_space<vmem>>, vector<1x384x128xbf16>
    %64 = vector.shape_cast %63 : vector<1x384x128xbf16> to vector<384x128xbf16>
    %cst_28 = arith.constant dense<0.000000e+00> : vector<256x128xf32>
    %65 = tpu.matmul %62, %64, %cst_28 {dimension_numbers = #tpu.dot_dimension_numbers<[1], [0], [0], [1], [0, 0, 1, 1], [], []>} : vector<256x384xbf16>, vector<384x128xbf16>, vector<256x128xf32> -> vector<256x128xf32>
    %66 = arith.addf %61, %65 : vector<256x128xf32>
    %c0_29 = arith.constant 0 : index
    %c0_30 = arith.constant 0 : index
    %67 = vector.load %arg6[%c0_29, %c0_30] : memref<1x128xf32, #tpu.memory_space<vmem>>, vector<1x128xf32>
    %68 = vector.broadcast %67 : vector<1x128xf32> to vector<256x128xf32>
    %69 = arith.mulf %66, %68 : vector<256x128xf32>
    %c0_31 = arith.constant 0 : index
    %c0_32 = arith.constant 0 : index
    %70 = vector.load %arg7[%c0_31, %c0_32] : memref<1x128xf32, #tpu.memory_space<vmem>>, vector<1x128xf32>
    %71 = vector.broadcast %70 : vector<1x128xf32> to vector<256x128xf32>
    %72 = arith.addf %69, %71 : vector<256x128xf32>
    %cst_33 = arith.constant 0.000000e+00 : f32
    %73 = vector.broadcast %cst_33 : f32 to vector<256x128xf32>
    %74 = arith.maximumf %72, %73 : vector<256x128xf32>
    %75 = arith.truncf %74 : vector<256x128xf32> to vector<256x128xbf16>
    %76 = vector.extract_strided_slice %4 {offsets = [0, 128], sizes = [256, 128], strides = [1, 1]} : vector<256x256xf32> to vector<256x128xf32>
    %c0_34 = arith.constant 0 : index
    %c0_35 = arith.constant 0 : index
    %77 = vector.load %arg11[%c0_34, %c0_35] : memref<1x128xf32, #tpu.memory_space<vmem>>, vector<1x128xf32>
    %78 = vector.broadcast %77 : vector<1x128xf32> to vector<256x128xf32>
    %79 = arith.mulf %76, %78 : vector<256x128xf32>
    %c0_36 = arith.constant 0 : index
    %c0_37 = arith.constant 0 : index
    %80 = vector.load %arg12[%c0_36, %c0_37] : memref<1x128xf32, #tpu.memory_space<vmem>>, vector<1x128xf32>
    %81 = vector.broadcast %80 : vector<1x128xf32> to vector<256x128xf32>
    %82 = arith.addf %79, %81 : vector<256x128xf32>
    %c0_38 = arith.constant 0 : index
    %c0_39 = arith.constant 0 : index
    %83 = vector.load %arg8[%c0_38, %c0_39] : memref<128x128xbf16, #tpu.memory_space<vmem>>, vector<128x128xbf16>
    %cst_40 = arith.constant dense<0.000000e+00> : vector<256x128xf32>
    %84 = tpu.matmul %75, %83, %cst_40 {dimension_numbers = #tpu.dot_dimension_numbers<[1], [0], [0], [1], [0, 0, 1, 1], [], []>} : vector<256x128xbf16>, vector<128x128xbf16>, vector<256x128xf32> -> vector<256x128xf32>
    %c0_41 = arith.constant 0 : index
    %c0_42 = arith.constant 0 : index
    %85 = vector.load %arg9[%c0_41, %c0_42] : memref<1x128xf32, #tpu.memory_space<vmem>>, vector<1x128xf32>
    %86 = vector.broadcast %85 : vector<1x128xf32> to vector<256x128xf32>
    %87 = arith.mulf %84, %86 : vector<256x128xf32>
    %c0_43 = arith.constant 0 : index
    %c0_44 = arith.constant 0 : index
    %88 = vector.load %arg10[%c0_43, %c0_44] : memref<1x128xf32, #tpu.memory_space<vmem>>, vector<1x128xf32>
    %89 = vector.broadcast %88 : vector<1x128xf32> to vector<256x128xf32>
    %90 = arith.addf %87, %89 : vector<256x128xf32>
    %91 = arith.addf %90, %82 : vector<256x128xf32>
    %cst_45 = arith.constant 0.000000e+00 : f32
    %92 = vector.broadcast %cst_45 : f32 to vector<256x128xf32>
    %93 = arith.maximumf %91, %92 : vector<256x128xf32>
    %94 = vector.shape_cast %93 : vector<256x128xf32> to vector<16x16x128xf32>
    %c0_46 = arith.constant 0 : index
    %c0_47 = arith.constant 0 : index
    %c0_48 = arith.constant 0 : index
    %c0_49 = arith.constant 0 : index
    %95 = vector.load %arg13[%c0_46, %c0_47, %c0_48, %c0_49] : memref<1x16x16x128xf32, #tpu.memory_space<vmem>>, vector<1x16x16x128xf32>
    %96 = vector.shape_cast %95 : vector<1x16x16x128xf32> to vector<16x16x128xf32>
    %97 = vector.shape_cast %94 : vector<16x16x128xf32> to vector<1x16x16x128xf32>
    tpu.vector_store %arg13[%c0_46, %c0_47, %c0_48, %c0_49], %97 {strides = array<i32>} : memref<1x16x16x128xf32, #tpu.memory_space<vmem>>, vector<1x16x16x128xf32>,
    return
  }
  func.func @transform_0(%arg0: i32) -> (i32, i32, i32, i32) {
    %c0_i32 = arith.constant 0 : i32
    %c0_i32_0 = arith.constant 0 : i32
    %c0_i32_1 = arith.constant 0 : i32
    %c0_i32_2 = arith.constant 0 : i32
    return %arg0, %c0_i32, %c0_i32_0, %c0_i32_1 : i32, i32, i32, i32
  }
  func.func @transform_1(%arg0: i32) -> (i32, i32) {
    %c0_i32 = arith.constant 0 : i32
    %c0_i32_0 = arith.constant 0 : i32
    %c0_i32_1 = arith.constant 0 : i32
    return %c0_i32, %c0_i32_0 : i32, i32
  }
  func.func @transform_2(%arg0: i32) -> (i32, i32) {
    %c0_i32 = arith.constant 0 : i32
    %c0_i32_0 = arith.constant 0 : i32
    %c0_i32_1 = arith.constant 0 : i32
    return %c0_i32, %c0_i32_0 : i32, i32
  }
  func.func @transform_3(%arg0: i32) -> (i32, i32) {
    %c0_i32 = arith.constant 0 : i32
    %c0_i32_0 = arith.constant 0 : i32
    %c0_i32_1 = arith.constant 0 : i32
    return %c0_i32, %c0_i32_0 : i32, i32
  }
  func.func @transform_4(%arg0: i32) -> (i32, i32, i32) {
    %c0_i32 = arith.constant 0 : i32
    %c0_i32_0 = arith.constant 0 : i32
    %c0_i32_1 = arith.constant 0 : i32
    %c0_i32_2 = arith.constant 0 : i32
    return %c0_i32, %c0_i32_0, %c0_i32_1 : i32, i32, i32
  }
  func.func @transform_5(%arg0: i32) -> (i32, i32) {
    %c0_i32 = arith.constant 0 : i32
    %c0_i32_0 = arith.constant 0 : i32
    %c0_i32_1 = arith.constant 0 : i32
    return %c0_i32, %c0_i32_0 : i32, i32
  }
  func.func @transform_6(%arg0: i32) -> (i32, i32) {
    %c0_i32 = arith.constant 0 : i32
    %c0_i32_0 = arith.constant 0 : i32
    %c0_i32_1 = arith.constant 0 : i32
    return %c0_i32, %c0_i32_0 : i32, i32
  }
  func.func @transform_7(%arg0: i32) -> (i32, i32) {
    %c0_i32 = arith.constant 0 : i32
    %c0_i32_0 = arith.constant 0 : i32
    %c0_i32_1 = arith.constant 0 : i32
    return %c0_i32, %c0_i32_0 : i32, i32
  }
  func.func @transform_8(%arg0: i32) -> (i32, i32) {
    %c0_i32 = arith.constant 0 : i32
    %c0_i32_0 = arith.constant 0 : i32
    %c0_i32_1 = arith.constant 0 : i32
    return %c0_i32, %c0_i32_0 : i32, i32
  }
  func.func @transform_9(%arg0: i32) -> (i32, i32) {
    %c0_i32 = arith.constant 0 : i32
    %c0_i32_0 = arith.constant 0 : i32
    %c0_i32_1 = arith.constant 0 : i32
    return %c0_i32, %c0_i32_0 : i32, i32
  }
  func.func @transform_10(%arg0: i32) -> (i32, i32) {
    %c0_i32 = arith.constant 0 : i32
    %c0_i32_0 = arith.constant 0 : i32
    %c0_i32_1 = arith.constant 0 : i32
    return %c0_i32, %c0_i32_0 : i32, i32
  }
  func.func @transform_11(%arg0: i32) -> (i32, i32) {
    %c0_i32 = arith.constant 0 : i32
    %c0_i32_0 = arith.constant 0 : i32
    %c0_i32_1 = arith.constant 0 : i32
    return %c0_i32, %c0_i32_0 : i32, i32
  }
  func.func @transform_12(%arg0: i32) -> (i32, i32, i32, i32) {
    %c0_i32 = arith.constant 0 : i32
    %c0_i32_0 = arith.constant 0 : i32
    %c0_i32_1 = arith.constant 0 : i32
    %c0_i32_2 = arith.constant 0 : i32
    return %arg0, %c0_i32, %c0_i32_0, %c0_i32_1 : i32, i32, i32, i32
  }
}

module attributes {stable_mosaic.version = 11 : i64} {
  func.func @_bottleneck_kernel(%arg0: i32, %arg1: memref<1x16x16x128xbf16, #tpu.memory_space<vmem>>, %arg2: memref<128x256xbf16, #tpu.memory_space<vmem>>, %arg3: memref<1x128xf32, #tpu.memory_space<vmem>>, %arg4: memref<1x128xf32, #tpu.memory_space<vmem>>, %arg5: memref<3x384x128xbf16, #tpu.memory_space<vmem>>, %arg6: memref<1x128xf32, #tpu.memory_space<vmem>>, %arg7: memref<1x128xf32, #tpu.memory_space<vmem>>, %arg8: memref<128x128xbf16, #tpu.memory_space<vmem>>, %arg9: memref<1x128xf32, #tpu.memory_space<vmem>>, %arg10: memref<1x128xf32, #tpu.memory_space<vmem>>, %arg11: memref<1x128xf32, #tpu.memory_space<vmem>>, %arg12: memref<1x128xf32, #tpu.memory_space<vmem>>, %arg13: memref<1x16x16x128xf32, #tpu.memory_space<vmem>>) attributes {dimension_semantics = [#tpu.dimension_semantics<parallel>], iteration_bounds = array<i64: 2>, scalar_prefetch = 0 : i64, scratch_operands = 0 : i64, tpu.core_type = #tpu.core_type<tc>, window_params = [{transform_indices = @transform_0, window_bounds = array<i64: 1, 16, 16, 128>}, {pipeline_mode = #tpu.pipeline_mode<synchronous>, transform_indices = @transform_1, window_bounds = array<i64: 128, 256>}, {pipeline_mode = #tpu.pipeline_mode<synchronous>, transform_indices = @transform_2, window_bounds = array<i64: 1, 128>}, {pipeline_mode = #tpu.pipeline_mode<synchronous>, transform_indices = @transform_3, window_bounds = array<i64: 1, 128>}, {pipeline_mode = #tpu.pipeline_mode<synchronous>, transform_indices = @transform_4, window_bounds = array<i64: 3, 384, 128>}, {pipeline_mode = #tpu.pipeline_mode<synchronous>, transform_indices = @transform_5, window_bounds = array<i64: 1, 128>}, {pipeline_mode = #tpu.pipeline_mode<synchronous>, transform_indices = @transform_6, window_bounds = array<i64: 1, 128>}, {pipeline_mode = #tpu.pipeline_mode<synchronous>, transform_indices = @transform_7, window_bounds = array<i64: 128, 128>}, {pipeline_mode = #tpu.pipeline_mode<synchronous>, transform_indices = @transform_8, window_bounds = array<i64: 1, 128>}, {pipeline_mode = #tpu.pipeline_mode<synchronous>, transform_indices = @transform_9, window_bounds = array<i64: 1, 128>}, {pipeline_mode = #tpu.pipeline_mode<synchronous>, transform_indices = @transform_10, window_bounds = array<i64: 1, 128>}, {pipeline_mode = #tpu.pipeline_mode<synchronous>, transform_indices = @transform_11, window_bounds = array<i64: 1, 128>}, {transform_indices = @transform_12, window_bounds = array<i64: 1, 16, 16, 128>}]} {
    %c0 = arith.constant 0 : index
    %c0_0 = arith.constant 0 : index
    %c0_1 = arith.constant 0 : index
    %c0_2 = arith.constant 0 : index
    %0 = vector.load %arg1[%c0, %c0_0, %c0_1, %c0_2] : memref<1x16x16x128xbf16, #tpu.memory_space<vmem>>, vector<1x16x16x128xbf16>
    %1 = vector.shape_cast %0 : vector<1x16x16x128xbf16> to vector<16x16x128xbf16>
    %2 = vector.shape_cast %1 : vector<16x16x128xbf16> to vector<256x128xbf16>
    %c0_3 = arith.constant 0 : index
    %c0_4 = arith.constant 0 : index
    %3 = vector.load %arg2[%c0_3, %c0_4] : memref<128x256xbf16, #tpu.memory_space<vmem>>, vector<128x256xbf16>
    %cst = arith.constant dense<0.000000e+00> : vector<256x256xf32>
    %4 = tpu.matmul %2, %3, %cst {dimension_numbers = #tpu.dot_dimension_numbers<[1], [0], [0], [1], [0, 0, 1, 1], [], []>} : vector<256x128xbf16>, vector<128x256xbf16>, vector<256x256xf32> -> vector<256x256xf32>
    %5 = vector.extract_strided_slice %4 {offsets = [0, 0], sizes = [256, 128], strides = [1, 1]} : vector<256x256xf32> to vector<256x128xf32>
    %c0_5 = arith.constant 0 : index
    %c0_6 = arith.constant 0 : index
    %6 = vector.load %arg3[%c0_5, %c0_6] : memref<1x128xf32, #tpu.memory_space<vmem>>, vector<1x128xf32>
    %7 = vector.broadcast %6 : vector<1x128xf32> to vector<256x128xf32>
    %8 = arith.mulf %5, %7 : vector<256x128xf32>
    %c0_7 = arith.constant 0 : index
    %c0_8 = arith.constant 0 : index
    %9 = vector.load %arg4[%c0_7, %c0_8] : memref<1x128xf32, #tpu.memory_space<vmem>>, vector<1x128xf32>
    %10 = vector.broadcast %9 : vector<1x128xf32> to vector<256x128xf32>
    %11 = arith.addf %8, %10 : vector<256x128xf32>
    %cst_9 = arith.constant 0.000000e+00 : f32
    %12 = vector.broadcast %cst_9 : f32 to vector<256x128xf32>
    %13 = arith.maximumf %11, %12 : vector<256x128xf32>
    %cst_10 = arith.constant 0.000000e+00 : f32
    %14 = vector.broadcast %cst_10 : f32 to vector<16x128xf32>
    %15 = tpu.concatenate %14, %13, %14 in 0 : vector<16x128xf32>, vector<256x128xf32>, vector<16x128xf32> -> vector<288x128xf32>
    %16 = tpu.iota {dimensions = array<i32: 0>} : vector<288x1xi32>
    %c16_i32 = arith.constant 16 : i32
    %c0_i32 = arith.constant 0 : i32
    %17 = arith.cmpi eq, %c16_i32, %c0_i32 : i32
    %c1_i32 = arith.constant 1 : i32
    %18 = arith.select %17, %c1_i32, %c16_i32 : i32
    %19 = vector.broadcast %18 : i32 to vector<288x1xi32>
    %20 = arith.remsi %16, %19 : vector<288x1xi32>
    %c0_i32_11 = arith.constant 0 : i32
    %21 = vector.broadcast %c0_i32_11 : i32 to vector<288x1xi32>
    %22 = arith.cmpi ne, %20, %21 : vector<288x1xi32>
    %c0_i32_12 = arith.constant 0 : i32
    %23 = vector.broadcast %c0_i32_12 : i32 to vector<288x1xi32>
    %24 = arith.cmpi slt, %20, %23 : vector<288x1xi32>
    %c0_i32_13 = arith.constant 0 : i32
    %25 = arith.cmpi slt, %18, %c0_i32_13 : i32
    %26 = vector.broadcast %25 : i1 to vector<288x1xi1>
    %27 = vector.broadcast %26 : vector<288x1xi1> to vector<288x1xi1>
    %28 = arith.xori %24, %27 : vector<288x1xi1>
    %29 = arith.andi %28, %22 : vector<288x1xi1>
    %30 = vector.broadcast %18 : i32 to vector<288x1xi32>
    %31 = arith.addi %20, %30 : vector<288x1xi32>
    %32 = arith.select %29, %31, %20 : vector<288x1xi1>, vector<288x1xi32>
    %c0_i32_14 = arith.constant 0 : i32
    %33 = vector.broadcast %c0_i32_14 : i32 to vector<288x1xi32>
    %34 = arith.cmpi eq, %32, %33 : vector<288x1xi32>
    %c15_i32 = arith.constant 15 : i32
    %35 = vector.broadcast %c15_i32 : i32 to vector<288x1xi32>
    %36 = arith.cmpi eq, %32, %35 : vector<288x1xi32>
    %c1_i32_15 = arith.constant 1 : i32
    %37 = tpu.dynamic_rotate %15 by %c1_i32_15 dim 0 : vector<288x128xf32>, i32 -> vector<288x128xf32>
    %38 = arith.truncf %37 : vector<288x128xf32> to vector<288x128xbf16>
    %cst_16 = arith.constant 0.000000e+00 : bf16
    %39 = vector.shape_cast %34 : vector<288x1xi1> to vector<288x1xi1>
    %40 = vector.broadcast %39 : vector<288x1xi1> to vector<288x128xi1>
    %41 = vector.broadcast %cst_16 : bf16 to vector<288x128xbf16>
    %42 = arith.select %40, %41, %38 : vector<288x128xi1>, vector<288x128xbf16>
    %c287_i32 = arith.constant 287 : i32
    %43 = tpu.dynamic_rotate %15 by %c287_i32 dim 0 : vector<288x128xf32>, i32 -> vector<288x128xf32>
    %44 = arith.truncf %43 : vector<288x128xf32> to vector<288x128xbf16>
    %cst_17 = arith.constant 0.000000e+00 : bf16
    %45 = vector.shape_cast %36 : vector<288x1xi1> to vector<288x1xi1>
    %46 = vector.broadcast %45 : vector<288x1xi1> to vector<288x128xi1>
    %47 = vector.broadcast %cst_17 : bf16 to vector<288x128xbf16>
    %48 = arith.select %46, %47, %44 : vector<288x128xi1>, vector<288x128xbf16>
    %49 = arith.truncf %15 : vector<288x128xf32> to vector<288x128xbf16>
    %50 = tpu.concatenate %42, %49, %48 in 1 : vector<288x128xbf16>, vector<288x128xbf16>, vector<288x128xbf16> -> vector<288x384xbf16>
    %cst_18 = arith.constant 0.000000e+00 : f32
    %51 = vector.broadcast %cst_18 : f32 to vector<256x128xf32>
    %52 = vector.extract_strided_slice %50 {offsets = [0, 0], sizes = [256, 384], strides = [1, 1]} : vector<288x384xbf16> to vector<256x384xbf16>
    %c0_19 = arith.constant 0 : index
    %c0_20 = arith.constant 0 : index
    %c0_21 = arith.constant 0 : index
    %53 = vector.load %arg5[%c0_19, %c0_20, %c0_21] : memref<3x384x128xbf16, #tpu.memory_space<vmem>>, vector<1x384x128xbf16>
    %54 = vector.shape_cast %53 : vector<1x384x128xbf16> to vector<384x128xbf16>
    %cst_22 = arith.constant dense<0.000000e+00> : vector<256x128xf32>
    %55 = tpu.matmul %52, %54, %cst_22 {dimension_numbers = #tpu.dot_dimension_numbers<[1], [0], [0], [1], [0, 0, 1, 1], [], []>} : vector<256x384xbf16>, vector<384x128xbf16>, vector<256x128xf32> -> vector<256x128xf32>
    %56 = arith.addf %51, %55 : vector<256x128xf32>
    %57 = vector.extract_strided_slice %50 {offsets = [16, 0], sizes = [256, 384], strides = [1, 1]} : vector<288x384xbf16> to vector<256x384xbf16>
    %c1 = arith.constant 1 : index
    %c0_23 = arith.constant 0 : index
    %c0_24 = arith.constant 0 : index
    %58 = vector.load %arg5[%c1, %c0_23, %c0_24] : memref<3x384x128xbf16, #tpu.memory_space<vmem>>, vector<1x384x128xbf16>
    %59 = vector.shape_cast %58 : vector<1x384x128xbf16> to vector<384x128xbf16>
    %cst_25 = arith.constant dense<0.000000e+00> : vector<256x128xf32>
    %60 = tpu.matmul %57, %59, %cst_25 {dimension_numbers = #tpu.dot_dimension_numbers<[1], [0], [0], [1], [0, 0, 1, 1], [], []>} : vector<256x384xbf16>, vector<384x128xbf16>, vector<256x128xf32> -> vector<256x128xf32>
    %61 = arith.addf %56, %60 : vector<256x128xf32>
    %62 = vector.extract_strided_slice %50 {offsets = [32, 0], sizes = [256, 384], strides = [1, 1]} : vector<288x384xbf16> to vector<256x384xbf16>
    %c2 = arith.constant 2 : index
    %c0_26 = arith.constant 0 : index
    %c0_27 = arith.constant 0 : index
    %63 = vector.load %arg5[%c2, %c0_26, %c0_27] : memref<3x384x128xbf16, #tpu.memory_space<vmem>>, vector<1x384x128xbf16>
    %64 = vector.shape_cast %63 : vector<1x384x128xbf16> to vector<384x128xbf16>
    %cst_28 = arith.constant dense<0.000000e+00> : vector<256x128xf32>
    %65 = tpu.matmul %62, %64, %cst_28 {dimension_numbers = #tpu.dot_dimension_numbers<[1], [0], [0], [1], [0, 0, 1, 1], [], []>} : vector<256x384xbf16>, vector<384x128xbf16>, vector<256x128xf32> -> vector<256x128xf32>
    %66 = arith.addf %61, %65 : vector<256x128xf32>
    %c0_29 = arith.constant 0 : index
    %c0_30 = arith.constant 0 : index
    %67 = vector.load %arg6[%c0_29, %c0_30] : memref<1x128xf32, #tpu.memory_space<vmem>>, vector<1x128xf32>
    %68 = vector.broadcast %67 : vector<1x128xf32> to vector<256x128xf32>
    %69 = arith.mulf %66, %68 : vector<256x128xf32>
    %c0_31 = arith.constant 0 : index
    %c0_32 = arith.constant 0 : index
    %70 = vector.load %arg7[%c0_31, %c0_32] : memref<1x128xf32, #tpu.memory_space<vmem>>, vector<1x128xf32>
    %71 = vector.broadcast %70 : vector<1x128xf32> to vector<256x128xf32>
    %72 = arith.addf %69, %71 : vector<256x128xf32>
    %cst_33 = arith.constant 0.000000e+00 : f32
    %73 = vector.broadcast %cst_33 : f32 to vector<256x128xf32>
    %74 = arith.maximumf %72, %73 : vector<256x128xf32>
    %75 = arith.truncf %74 : vector<256x128xf32> to vector<256x128xbf16>
    %76 = vector.extract_strided_slice %4 {offsets = [0, 128], sizes = [256, 128], strides = [1, 1]} : vector<256x256xf32> to vector<256x128xf32>
    %c0_34 = arith.constant 0 : index
    %c0_35 = arith.constant 0 : index
    %77 = vector.load %arg11[%c0_34, %c0_35] : memref<1x128xf32, #tpu.memory_space<vmem>>, vector<1x128xf32>
    %78 = vector.broadcast %77 : vector<1x128xf32> to vector<256x128xf32>
    %79 = arith.mulf %76, %78 : vector<256x128xf32>
    %c0_36 = arith.constant 0 : index
    %c0_37 = arith.constant 0 : index
    %80 = vector.load %arg12[%c0_36, %c0_37] : memref<1x128xf32, #tpu.memory_space<vmem>>, vector<1x128xf32>
    %81 = vector.broadcast %80 : vector<1x128xf32> to vector<256x128xf32>
    %82 = arith.addf %79, %81 : vector<256x128xf32>
    %c0_38 = arith.constant 0 : index
    %c0_39 = arith.constant 0 : index
    %83 = vector.load %arg8[%c0_38, %c0_39] : memref<128x128xbf16, #tpu.memory_space<vmem>>, vector<128x128xbf16>
    %cst_40 = arith.constant dense<0.000000e+00> : vector<256x128xf32>
    %84 = tpu.matmul %75, %83, %cst_40 {dimension_numbers = #tpu.dot_dimension_numbers<[1], [0], [0], [1], [0, 0, 1, 1], [], []>} : vector<256x128xbf16>, vector<128x128xbf16>, vector<256x128xf32> -> vector<256x128xf32>
    %c0_41 = arith.constant 0 : index
    %c0_42 = arith.constant 0 : index
    %85 = vector.load %arg9[%c0_41, %c0_42] : memref<1x128xf32, #tpu.memory_space<vmem>>, vector<1x128xf32>
    %86 = vector.broadcast %85 : vector<1x128xf32> to vector<256x128xf32>
    %87 = arith.mulf %84, %86 : vector<256x128xf32>
    %c0_43 = arith.constant 0 : index
    %c0_44 = arith.constant 0 : index
    %88 = vector.load %arg10[%c0_43, %c0_44] : memref<1x128xf32, #tpu.memory_space<vmem>>, vector<1x128xf32>
    %89 = vector.broadcast %88 : vector<1x128xf32> to vector<256x128xf32>
    %90 = arith.addf %87, %89 : vector<256x128xf32>
    %91 = arith.addf %90, %82 : vector<256x128xf32>
    %cst_45 = arith.constant 0.000000e+00 : f32
    %92 = vector.broadcast %cst_45 : f32 to vector<256x128xf32>
    %93 = arith.maximumf %91, %92 : vector<256x128xf32>
    %94 = vector.shape_cast %93 : vector<256x128xf32> to vector<16x16x128xf32>
    %c0_46 = arith.constant 0 : index
    %c0_47 = arith.constant 0 : index
    %c0_48 = arith.constant 0 : index
    %c0_49 = arith.constant 0 : index
    %95 = vector.load %arg13[%c0_46, %c0_47, %c0_48, %c0_49] : memref<1x16x16x128xf32, #tpu.memory_space<vmem>>, vector<1x16x16x128xf32>
    %96 = vector.shape_cast %95 : vector<1x16x16x128xf32> to vector<16x16x128xf32>
    %97 = vector.shape_cast %94 : vector<16x16x128xf32> to vector<1x16x16x128xf32>
    tpu.vector_store %arg13[%c0_46, %c0_47, %c0_48, %c0_49], %97 {strides = array<i32>} : memref<1x16x16x128xf32, #tpu.memory_space<vmem>>, vector<1x16x16x128xf32>,
    return
  }
  func.func @transform_0(%arg0: i32) -> (i32, i32, i32, i32) {
    %c0_i32 = arith.constant 0 : i32
    %c0_i32_0 = arith.constant 0 : i32
    %c0_i32_1 = arith.constant 0 : i32
    %c0_i32_2 = arith.constant 0 : i32
    return %arg0, %c0_i32, %c0_i32_0, %c0_i32_1 : i32, i32, i32, i32
  }
  func.func @transform_1(%arg0: i32) -> (i32, i32) {
    %c0_i32 = arith.constant 0 : i32
    %c0_i32_0 = arith.constant 0 : i32
    %c0_i32_1 = arith.constant 0 : i32
    return %c0_i32, %c0_i32_0 : i32, i32
  }
  func.func @transform_2(%arg0: i32) -> (i32, i32) {
    %c0_i32 = arith.constant 0 : i32
    %c0_i32_0 = arith.constant 0 : i32
    %c0_i32_1 = arith.constant 0 : i32
    return %c0_i32, %c0_i32_0 : i32, i32
  }
  func.func @transform_3(%arg0: i32) -> (i32, i32) {
    %c0_i32 = arith.constant 0 : i32
    %c0_i32_0 = arith.constant 0 : i32
    %c0_i32_1 = arith.constant 0 : i32
    return %c0_i32, %c0_i32_0 : i32, i32
  }
  func.func @transform_4(%arg0: i32) -> (i32, i32, i32) {
    %c0_i32 = arith.constant 0 : i32
    %c0_i32_0 = arith.constant 0 : i32
    %c0_i32_1 = arith.constant 0 : i32
    %c0_i32_2 = arith.constant 0 : i32
    return %c0_i32, %c0_i32_0, %c0_i32_1 : i32, i32, i32
  }
  func.func @transform_5(%arg0: i32) -> (i32, i32) {
    %c0_i32 = arith.constant 0 : i32
    %c0_i32_0 = arith.constant 0 : i32
    %c0_i32_1 = arith.constant 0 : i32
    return %c0_i32, %c0_i32_0 : i32, i32
  }
  func.func @transform_6(%arg0: i32) -> (i32, i32) {
    %c0_i32 = arith.constant 0 : i32
    %c0_i32_0 = arith.constant 0 : i32
    %c0_i32_1 = arith.constant 0 : i32
    return %c0_i32, %c0_i32_0 : i32, i32
  }
  func.func @transform_7(%arg0: i32) -> (i32, i32) {
    %c0_i32 = arith.constant 0 : i32
    %c0_i32_0 = arith.constant 0 : i32
    %c0_i32_1 = arith.constant 0 : i32
    return %c0_i32, %c0_i32_0 : i32, i32
  }
  func.func @transform_8(%arg0: i32) -> (i32, i32) {
    %c0_i32 = arith.constant 0 : i32
    %c0_i32_0 = arith.constant 0 : i32
    %c0_i32_1 = arith.constant 0 : i32
    return %c0_i32, %c0_i32_0 : i32, i32
  }
  func.func @transform_9(%arg0: i32) -> (i32, i32) {
    %c0_i32 = arith.constant 0 : i32
    %c0_i32_0 = arith.constant 0 : i32
    %c0_i32_1 = arith.constant 0 : i32
    return %c0_i32, %c0_i32_0 : i32, i32
  }
  func.func @transform_10(%arg0: i32) -> (i32, i32) {
    %c0_i32 = arith.constant 0 : i32
    %c0_i32_0 = arith.constant 0 : i32
    %c0_i32_1 = arith.constant 0 : i32
    return %c0_i32, %c0_i32_0 : i32, i32
  }
  func.func @transform_11(%arg0: i32) -> (i32, i32) {
    %c0_i32 = arith.constant 0 : i32
    %c0_i32_0 = arith.constant 0 : i32
    %c0_i32_1 = arith.constant 0 : i32
    return %c0_i32, %c0_i32_0 : i32, i32
  }
  func.func @transform_12(%arg0: i32) -> (i32, i32, i32, i32) {
    %c0_i32 = arith.constant 0 : i32
    %c0_i32_0 = arith.constant 0 : i32
    %c0_i32_1 = arith.constant 0 : i32
    %c0_i32_2 = arith.constant 0 : i32
    return %arg0, %c0_i32, %c0_i32_0, %c0_i32_1 : i32, i32, i32, i32
  }
}

</mosaic_0001>

<llo_original>
// kernel: tpu_custom_call.1
$region0: #{tpu_custom_call.1}
  #allocation0 [shape = 'u32[]', space=smem, size = 0x4, offset = 0x4, fixed_abs, tag = 'smem constant byte address 0x4 - core index']
  #allocation1 [shape = 'u32[144,128]{1,0:T(1,128)}', space=vmem, size = 0x12000, scoped, tag = 'internal scratch']
  %s0 = inlined_call_operand.hbm [shape: bf16[2,16,16,128], index: 0, kind: input, shape index: {}]
  %s1 = inlined_call_operand.hbm [shape: bf16[128,256], index: 1, kind: input, shape index: {}]
  %s2 = inlined_call_operand.vmem [shape: f32[1,128], index: 2, kind: input, shape index: {}]
  %s3 = inlined_call_operand.vmem [shape: f32[1,128], index: 3, kind: input, shape index: {}]
  %s4 = inlined_call_operand.hbm [shape: bf16[3,384,128], index: 4, kind: input, shape index: {}]
  %s5 = inlined_call_operand.vmem [shape: f32[1,128], index: 5, kind: input, shape index: {}]
  %s6 = inlined_call_operand.vmem [shape: f32[1,128], index: 6, kind: input, shape index: {}]
  %s7 = inlined_call_operand.hbm [shape: bf16[128,128], index: 7, kind: input, shape index: {}]
  %s8 = inlined_call_operand.vmem [shape: f32[1,128], index: 8, kind: input, shape index: {}]
  %s9 = inlined_call_operand.vmem [shape: f32[1,128], index: 9, kind: input, shape index: {}]
  %s10 = inlined_call_operand.vmem [shape: f32[1,128], index: 10, kind: input, shape index: {}]
  %s11 = inlined_call_operand.vmem [shape: f32[1,128], index: 11, kind: input, shape index: {}]
  %s12 = inlined_call_operand.hbm [shape: f32[2,16,16,128], index: 12, kind: output, shape index: {}]
  %s13 = sld [smem:[#allocation0]]
  $region97: #{tpu_custom_call.1} parent=0
    _
  %s15 = ssub.s32 1, %s13
  %s16 = scalar_select 0, %s15, %s13
  $region1: #{tpu_custom_call.1} parent=0
    #allocation2 [shape = 'u8[131072]{0}', space=vmem, size = 0x20000, scoped, tag = 'input window, operand 0']
    #allocation3 [shape = 's32[2]{0}', space=sflag, size = 0x8, scoped, tag = 'scoped memory for tpu_custom_call.1']
    #allocation4 [shape = 's32[2]{0}', space=sflag, size = 0x8, scoped, tag = 'scoped memory for tpu_custom_call.1']
    #allocation5 [shape = 'u8[65536]{0}', space=vmem, size = 0x10000, scoped, tag = 'input window, operand 1, single buffered']
    #allocation6 [shape = 's32[1]{0}', space=sflag, size = 0x4, scoped, tag = 'scoped memory for tpu_custom_call.1']
    #allocation7 [shape = 'u8[294912]{0}', space=vmem, size = 0x48000, scoped, tag = 'input window, operand 4, single buffered']
    #allocation8 [shape = 'u8[32768]{0}', space=vmem, size = 0x8000, scoped, tag = 'input window, operand 7, single buffered']
    #allocation9 [shape = 's32[1]{0}', space=sflag, size = 0x4, scoped, tag = 'scoped memory for tpu_custom_call.1']
    #allocation10 [shape = 'u8[262144]{0}', space=vmem, size = 0x40000, scoped, tag = 'output window, operand 0']
    %17 = vsyncpa [#allocation3], 0
    %s18 = scalar_lea.sflag [#allocation3], 1
    %19 = vsyncpa %s18, 0
    %20 = vsyncpa [#allocation6], 0
    %21 = vsyncpa [#allocation9], 0
    %22 = vsyncpa [#allocation4], 0
    %s23 = scalar_lea.sflag [#allocation4], 1
    %24 = vsyncpa %s23, 0
    loop: start=0, step=1, limit=4
    $region2: #{tpu_custom_call.1} parent=1 // loop_pre_header
      _
    $region3: #{tpu_custom_call.1} parent=1 // loop_header
      %s26 = sphi 0, %s30
      %p27 = scmp.ge.s32.totalorder %s26, 4
      %s36 = sphi 0, %s38
      %s39 = sphi 0, %s36
      %s40 = sphi 0, %s39
      %s56 = sphi 0, %s40
      %s60 = sphi 0, %s60
      %s62 = sphi 0, %s60
      %s63 = sphi 0, %s62
      %s77 = sphi 0, %s63
      %s81 = sphi 0, %s81
      %s83 = sphi 0, %s81
      %s84 = sphi 0, %s83
      %s98 = sphi 0, %s84
      %s102 = sphi 0, %s102
      %s104 = sphi 0, %s102
      %s105 = sphi 0, %s104
      %s119 = sphi 0, %s105
      %s123 = sphi 0, %s123
      %s125 = sphi 0, %s123
      %s126 = sphi 0, %s125
      %s140 = sphi 0, %s126
      %s144 = sphi 0, %s144
      %s146 = sphi 0, %s144
      %s147 = sphi 0, %s146
      %s161 = sphi 0, %s147
      %s165 = sphi 0, %s165
      %s167 = sphi 0, %s165
      %s168 = sphi 0, %s167
      %s182 = sphi 0, %s168
      %s186 = sphi 0, %s186
      %s188 = sphi 0, %s186
      %s189 = sphi 0, %s188
      %s203 = sphi 0, %s189
      %s207 = sphi 0, %s207
      %s209 = sphi 0, %s207
      %s210 = sphi 0, %s209
      %s224 = sphi 0, %s210
      %s228 = sphi 0, %s228
      %s230 = sphi 0, %s228
      %s231 = sphi 0, %s230
      %s245 = sphi 0, %s231
      %s249 = sphi 0, %s249
      %s251 = sphi 0, %s249
      %s252 = sphi 0, %s251
      %s266 = sphi 0, %s252
      %s270 = sphi 0, %s270
      %s272 = sphi 0, %s270
      %s273 = sphi 0, %s272
      %s287 = sphi 0, %s273
      %s293 = sphi 0, %s295
      %s296 = sphi 0, %s293
      %s297 = sphi 0, %s296
      %s313 = sphi 0, %s297
    $region4: #{tpu_custom_call.1} parent=1 // loop_header_branch
      %29 = sbr.rel (%p27) target = $region8
    $region5: #{tpu_custom_call.1} parent=1 // loop_body
      %s31 = ssub.s32 %s26, 1
      %s32 = ssub.s32 %s26, 2
      %s33 = sadd.s32 %s26, 1
      %s34 = ssub.s32 %s26, %s33
      %p35 = scmp.eq.s32.totalorder %s34, 0
      %s37 = sadd.s32 %s36, 1
      %s38 = scalar_select %p35, %s36, %s37
      %p41 = pneg %p35
      %p42 = scmp.eq.s32.totalorder %s26, 1
      %p43 = por %p41, %p42
      %p44 = scmp.ne.s32.totalorder %s36, %s39
      %p45 = scmp.eq.s32.totalorder %s26, 0
      %p46 = por %p44, %p45
      %p47 = scmp.ne.s32.totalorder %s36, %s39
      %p48 = scmp.eq.s32.totalorder %s31, 1
      %p49 = por %p47, %p48
      %p50 = scmp.ne.s32.totalorder %s39, %s40
      %p51 = scmp.eq.s32.totalorder %s31, 0
      %p52 = por %p50, %p51
      %p53 = scmp.ne.s32.totalorder %s39, %s40
      %p54 = scmp.eq.s32.totalorder %s32, 1
      %p55 = por %p53, %p54
      %p57 = scmp.ne.s32.totalorder %s40, %s56
      %p58 = scmp.eq.s32.totalorder %s32, 0
      %p59 = por %p57, %p58
      %s61 = sadd.s32 %s60, 1
      %p64 = scmp.eq.s32.totalorder %s26, 1
      %p65 = scmp.ne.s32.totalorder %s60, %s62
      %p66 = scmp.eq.s32.totalorder %s26, 0
      %p67 = por %p65, %p66
      %p68 = scmp.ne.s32.totalorder %s60, %s62
      %p69 = scmp.eq.s32.totalorder %s31, 1
      %p70 = por %p68, %p69
      %p71 = scmp.ne.s32.totalorder %s62, %s63
      %p72 = scmp.eq.s32.totalorder %s31, 0
      %p73 = por %p71, %p72
      %p74 = scmp.ne.s32.totalorder %s62, %s63
      %p75 = scmp.eq.s32.totalorder %s32, 1
      %p76 = por %p74, %p75
      %p78 = scmp.ne.s32.totalorder %s63, %s77
      %p79 = scmp.eq.s32.totalorder %s32, 0
      %p80 = por %p78, %p79
      %s82 = sadd.s32 %s81, 1
      %p85 = scmp.eq.s32.totalorder %s26, 1
      %p86 = scmp.ne.s32.totalorder %s81, %s83
      %p87 = scmp.eq.s32.totalorder %s26, 0
      %p88 = por %p86, %p87
      %p89 = scmp.ne.s32.totalorder %s81, %s83
      %p90 = scmp.eq.s32.totalorder %s31, 1
      %p91 = por %p89, %p90
      %p92 = scmp.ne.s32.totalorder %s83, %s84
      %p93 = scmp.eq.s32.totalorder %s31, 0
      %p94 = por %p92, %p93
      %p95 = scmp.ne.s32.totalorder %s83, %s84
      %p96 = scmp.eq.s32.totalorder %s32, 1
      %p97 = por %p95, %p96
      %p99 = scmp.ne.s32.totalorder %s84, %s98
      %p100 = scmp.eq.s32.totalorder %s32, 0
      %p101 = por %p99, %p100
      %s103 = sadd.s32 %s102, 1
      %p106 = scmp.eq.s32.totalorder %s26, 1
      %p107 = scmp.ne.s32.totalorder %s102, %s104
      %p108 = scmp.eq.s32.totalorder %s26, 0
      %p109 = por %p107, %p108
      %p110 = scmp.ne.s32.totalorder %s102, %s104
      %p111 = scmp.eq.s32.totalorder %s31, 1
      %p112 = por %p110, %p111
      %p113 = scmp.ne.s32.totalorder %s104, %s105
      %p114 = scmp.eq.s32.totalorder %s31, 0
      %p115 = por %p113, %p114
      %p116 = scmp.ne.s32.totalorder %s104, %s105
      %p117 = scmp.eq.s32.totalorder %s32, 1
      %p118 = por %p116, %p117
      %p120 = scmp.ne.s32.totalorder %s105, %s119
      %p121 = scmp.eq.s32.totalorder %s32, 0
      %p122 = por %p120, %p121
      %s124 = sadd.s32 %s123, 1
      %p127 = scmp.eq.s32.totalorder %s26, 1
      %p128 = scmp.ne.s32.totalorder %s123, %s125
      %p129 = scmp.eq.s32.totalorder %s26, 0
      %p130 = por %p128, %p129
      %p131 = scmp.ne.s32.totalorder %s123, %s125
      %p132 = scmp.eq.s32.totalorder %s31, 1
      %p133 = por %p131, %p132
      %p134 = scmp.ne.s32.totalorder %s125, %s126
      %p135 = scmp.eq.s32.totalorder %s31, 0
      %p136 = por %p134, %p135
      %p137 = scmp.ne.s32.totalorder %s125, %s126
      %p138 = scmp.eq.s32.totalorder %s32, 1
      %p139 = por %p137, %p138
      %p141 = scmp.ne.s32.totalorder %s126, %s140
      %p142 = scmp.eq.s32.totalorder %s32, 0
      %p143 = por %p141, %p142
      %s145 = sadd.s32 %s144, 1
      %p148 = scmp.eq.s32.totalorder %s26, 1
      %p149 = scmp.ne.s32.totalorder %s144, %s146
      %p150 = scmp.eq.s32.totalorder %s26, 0
      %p151 = por %p149, %p150
      %p152 = scmp.ne.s32.totalorder %s144, %s146
      %p153 = scmp.eq.s32.totalorder %s31, 1
      %p154 = por %p152, %p153
      %p155 = scmp.ne.s32.totalorder %s146, %s147
      %p156 = scmp.eq.s32.totalorder %s31, 0
      %p157 = por %p155, %p156
      %p158 = scmp.ne.s32.totalorder %s146, %s147
      %p159 = scmp.eq.s32.totalorder %s32, 1
      %p160 = por %p158, %p159
      %p162 = scmp.ne.s32.totalorder %s147, %s161
      %p163 = scmp.eq.s32.totalorder %s32, 0
      %p164 = por %p162, %p163
      %s166 = sadd.s32 %s165, 1
      %p169 = scmp.eq.s32.totalorder %s26, 1
      %p170 = scmp.ne.s32.totalorder %s165, %s167
      %p171 = scmp.eq.s32.totalorder %s26, 0
      %p172 = por %p170, %p171
      %p173 = scmp.ne.s32.totalorder %s165, %s167
      %p174 = scmp.eq.s32.totalorder %s31, 1
      %p175 = por %p173, %p174
      %p176 = scmp.ne.s32.totalorder %s167, %s168
      %p177 = scmp.eq.s32.totalorder %s31, 0
      %p178 = por %p176, %p177
      %p179 = scmp.ne.s32.totalorder %s167, %s168
      %p180 = scmp.eq.s32.totalorder %s32, 1
      %p181 = por %p179, %p180
      %p183 = scmp.ne.s32.totalorder %s168, %s182
      %p184 = scmp.eq.s32.totalorder %s32, 0
      %p185 = por %p183, %p184
      %s187 = sadd.s32 %s186, 1
      %p190 = scmp.eq.s32.totalorder %s26, 1
      %p191 = scmp.ne.s32.totalorder %s186, %s188
      %p192 = scmp.eq.s32.totalorder %s26, 0
      %p193 = por %p191, %p192
      %p194 = scmp.ne.s32.totalorder %s186, %s188
      %p195 = scmp.eq.s32.totalorder %s31, 1
      %p196 = por %p194, %p195
      %p197 = scmp.ne.s32.totalorder %s188, %s189
      %p198 = scmp.eq.s32.totalorder %s31, 0
      %p199 = por %p197, %p198
      %p200 = scmp.ne.s32.totalorder %s188, %s189
      %p201 = scmp.eq.s32.totalorder %s32, 1
      %p202 = por %p200, %p201
      %p204 = scmp.ne.s32.totalorder %s189, %s203
      %p205 = scmp.eq.s32.totalorder %s32, 0
      %p206 = por %p204, %p205
      %s208 = sadd.s32 %s207, 1
      %p211 = scmp.eq.s32.totalorder %s26, 1
      %p212 = scmp.ne.s32.totalorder %s207, %s209
      %p213 = scmp.eq.s32.totalorder %s26, 0
      %p214 = por %p212, %p213
      %p215 = scmp.ne.s32.totalorder %s207, %s209
      %p216 = scmp.eq.s32.totalorder %s31, 1
      %p217 = por %p215, %p216
      %p218 = scmp.ne.s32.totalorder %s209, %s210
      %p219 = scmp.eq.s32.totalorder %s31, 0
      %p220 = por %p218, %p219
      %p221 = scmp.ne.s32.totalorder %s209, %s210
      %p222 = scmp.eq.s32.totalorder %s32, 1
      %p223 = por %p221, %p222
      %p225 = scmp.ne.s32.totalorder %s210, %s224
      %p226 = scmp.eq.s32.totalorder %s32, 0
      %p227 = por %p225, %p226
      %s229 = sadd.s32 %s228, 1
      %p232 = scmp.eq.s32.totalorder %s26, 1
      %p233 = scmp.ne.s32.totalorder %s228, %s230
      %p234 = scmp.eq.s32.totalorder %s26, 0
      %p235 = por %p233, %p234
      %p236 = scmp.ne.s32.totalorder %s228, %s230
      %p237 = scmp.eq.s32.totalorder %s31, 1
      %p238 = por %p236, %p237
      %p239 = scmp.ne.s32.totalorder %s230, %s231
      %p240 = scmp.eq.s32.totalorder %s31, 0
      %p241 = por %p239, %p240
      %p242 = scmp.ne.s32.totalorder %s230, %s231
      %p243 = scmp.eq.s32.totalorder %s32, 1
      %p244 = por %p242, %p243
      %p246 = scmp.ne.s32.totalorder %s231, %s245
      %p247 = scmp.eq.s32.totalorder %s32, 0
      %p248 = por %p246, %p247
      %s250 = sadd.s32 %s249, 1
      %p253 = scmp.eq.s32.totalorder %s26, 1
      %p254 = scmp.ne.s32.totalorder %s249, %s251
      %p255 = scmp.eq.s32.totalorder %s26, 0
      %p256 = por %p254, %p255
      %p257 = scmp.ne.s32.totalorder %s249, %s251
      %p258 = scmp.eq.s32.totalorder %s31, 1
      %p259 = por %p257, %p258
      %p260 = scmp.ne.s32.totalorder %s251, %s252
      %p261 = scmp.eq.s32.totalorder %s31, 0
      %p262 = por %p260, %p261
      %p263 = scmp.ne.s32.totalorder %s251, %s252
      %p264 = scmp.eq.s32.totalorder %s32, 1
      %p265 = por %p263, %p264
      %p267 = scmp.ne.s32.totalorder %s252, %s266
      %p268 = scmp.eq.s32.totalorder %s32, 0
      %p269 = por %p267, %p268
      %s271 = sadd.s32 %s270, 1
      %p274 = scmp.eq.s32.totalorder %s26, 1
      %p275 = scmp.ne.s32.totalorder %s270, %s272
      %p276 = scmp.eq.s32.totalorder %s26, 0
      %p277 = por %p275, %p276
      %p278 = scmp.ne.s32.totalorder %s270, %s272
      %p279 = scmp.eq.s32.totalorder %s31, 1
      %p280 = por %p278, %p279
      %p281 = scmp.ne.s32.totalorder %s272, %s273
      %p282 = scmp.eq.s32.totalorder %s31, 0
      %p283 = por %p281, %p282
      %p284 = scmp.ne.s32.totalorder %s272, %s273
      %p285 = scmp.eq.s32.totalorder %s32, 1
      %p286 = por %p284, %p285
      %p288 = scmp.ne.s32.totalorder %s273, %s287
      %p289 = scmp.eq.s32.totalorder %s32, 0
      %p290 = por %p288, %p289
      %s291 = ssub.s32 %s26, %s33
      %p292 = scmp.eq.s32.totalorder %s291, 0
      %s294 = sadd.s32 %s293, 1
      %s295 = scalar_select %p292, %s293, %s294
      %p298 = pneg %p292
      %p299 = scmp.eq.s32.totalorder %s26, 1
      %p300 = por %p298, %p299
      %p301 = scmp.ne.s32.totalorder %s293, %s296
      %p302 = scmp.eq.s32.totalorder %s26, 0
      %p303 = por %p301, %p302
      %p304 = scmp.ne.s32.totalorder %s293, %s296
      %p305 = scmp.eq.s32.totalorder %s31, 1
      %p306 = por %p304, %p305
      %p307 = scmp.ne.s32.totalorder %s296, %s297
      %p308 = scmp.eq.s32.totalorder %s31, 0
      %p309 = por %p307, %p308
      %p310 = scmp.ne.s32.totalorder %s296, %s297
      %p311 = scmp.eq.s32.totalorder %s32, 1
      %p312 = por %p310, %p311
      %p314 = scmp.ne.s32.totalorder %s297, %s313
      %p315 = scmp.eq.s32.totalorder %s32, 0
      %p316 = por %p314, %p315
      %p317 = scmp.le.s32.totalorder 1, %s26
      %p318 = scmp.lt.s32.totalorder %s26, 3
      %p319 = pnand %p317, %p318
      %p320 = pneg %p319
      // Predicated region
      $region9: #{tpu_custom_call.1} parent=5 // pred_check
        _
      $region10: #{tpu_custom_call.1} parent=5 // pred_check_branch
        %322 = sbr.rel (%p319) target = $region12
      $region11: #{tpu_custom_call.1} parent=5 // pred_region
        %s323 = ssub.s32 %s26, 1
        // Predicated region
        $region13: #{tpu_custom_call.1} parent=11 // pred_check
          %p324 = pneg %p73
        $region14: #{tpu_custom_call.1} parent=11 // pred_check_branch
          %326 = sbr.rel (%p324) target = $region16
        $region15: #{tpu_custom_call.1} parent=11 // pred_region
          %s328 = ssub.s32 2048, 2048
          %329 = vsyncadd [#allocation6], %s328
          %s330 = sshll.u32 [#allocation5], 4
          %s331 = int_to_ptr.vmem [resolvable:$true] %s330
          %336 = dma.hbm_to_vmem [thread:$0]  %s1, 2048, %s331, [#allocation6], 128, 128, 8
        $region16: #{tpu_custom_call.1} parent=11 // pred_fallthru
          _
        // Predicated region
        $region17: #{tpu_custom_call.1} parent=11 // pred_check
          %p337 = pneg %p94
        $region18: #{tpu_custom_call.1} parent=11 // pred_check_branch
          %339 = sbr.rel (%p337) target = $region20
        $region19: #{tpu_custom_call.1} parent=11 // pred_region
          _
        $region20: #{tpu_custom_call.1} parent=11 // pred_fallthru
          _
        // Predicated region
        $region21: #{tpu_custom_call.1} parent=11 // pred_check
          %p340 = pneg %p115
        $region22: #{tpu_custom_call.1} parent=11 // pred_check_branch
          %342 = sbr.rel (%p340) target = $region24
        $region23: #{tpu_custom_call.1} parent=11 // pred_region
          _
        $region24: #{tpu_custom_call.1} parent=11 // pred_fallthru
          _
        // Predicated region
        $region25: #{tpu_custom_call.1} parent=11 // pred_check
          %p343 = pneg %p136
        $region26: #{tpu_custom_call.1} parent=11 // pred_check_branch
          %345 = sbr.rel (%p343) target = $region28
        $region27: #{tpu_custom_call.1} parent=11 // pred_region
          %s347 = ssub.s32 9216, 9216
          %348 = vsyncadd [#allocation6], %s347
          %s349 = sshll.u32 [#allocation7], 4
          %s350 = int_to_ptr.vmem [resolvable:$true] %s349
          %355 = dma.hbm_to_vmem [thread:$0]  %s4, 9216, %s350, [#allocation6], 64, 64, 4
        $region28: #{tpu_custom_call.1} parent=11 // pred_fallthru
          _
        // Predicated region
        $region29: #{tpu_custom_call.1} parent=11 // pred_check
          %p356 = pneg %p157
        $region30: #{tpu_custom_call.1} parent=11 // pred_check_branch
          %358 = sbr.rel (%p356) target = $region32
        $region31: #{tpu_custom_call.1} parent=11 // pred_region
          _
        $region32: #{tpu_custom_call.1} parent=11 // pred_fallthru
          _
        // Predicated region
        $region33: #{tpu_custom_call.1} parent=11 // pred_check
          %p359 = pneg %p178
        $region34: #{tpu_custom_call.1} parent=11 // pred_check_branch
          %361 = sbr.rel (%p359) target = $region36
        $region35: #{tpu_custom_call.1} parent=11 // pred_region
          _
        $region36: #{tpu_custom_call.1} parent=11 // pred_fallthru
          _
        // Predicated region
        $region37: #{tpu_custom_call.1} parent=11 // pred_check
          %p362 = pneg %p199
        $region38: #{tpu_custom_call.1} parent=11 // pred_check_branch
          %364 = sbr.rel (%p362) target = $region40
        $region39: #{tpu_custom_call.1} parent=11 // pred_region
          %s366 = ssub.s32 1024, 1024
          %367 = vsyncadd [#allocation9], %s366
          %s368 = sshll.u32 [#allocation8], 4
          %s369 = int_to_ptr.vmem [resolvable:$true] %s368
          %374 = dma.hbm_to_vmem [thread:$0]  %s7, 1024, %s369, [#allocation9], 64, 64, 4
        $region40: #{tpu_custom_call.1} parent=11 // pred_fallthru
          _
        // Predicated region
        $region41: #{tpu_custom_call.1} parent=11 // pred_check
          %p375 = pneg %p220
        $region42: #{tpu_custom_call.1} parent=11 // pred_check_branch
          %377 = sbr.rel (%p375) target = $region44
        $region43: #{tpu_custom_call.1} parent=11 // pred_region
          _
        $region44: #{tpu_custom_call.1} parent=11 // pred_fallthru
          _
        // Predicated region
        $region45: #{tpu_custom_call.1} parent=11 // pred_check
          %p378 = pneg %p241
        $region46: #{tpu_custom_call.1} parent=11 // pred_check_branch
          %380 = sbr.rel (%p378) target = $region48
        $region47: #{tpu_custom_call.1} parent=11 // pred_region
          _
        $region48: #{tpu_custom_call.1} parent=11 // pred_fallthru
          _
        // Predicated region
        $region49: #{tpu_custom_call.1} parent=11 // pred_check
          %p381 = pneg %p262
        $region50: #{tpu_custom_call.1} parent=11 // pred_check_branch
          %383 = sbr.rel (%p381) target = $region52
        $region51: #{tpu_custom_call.1} parent=11 // pred_region
          _
        $region52: #{tpu_custom_call.1} parent=11 // pred_fallthru
          _
        // Predicated region
        $region53: #{tpu_custom_call.1} parent=11 // pred_check
          %p384 = pneg %p283
        $region54: #{tpu_custom_call.1} parent=11 // pred_check_branch
          %386 = sbr.rel (%p384) target = $region56
        $region55: #{tpu_custom_call.1} parent=11 // pred_region
          _
        $region56: #{tpu_custom_call.1} parent=11 // pred_fallthru
          _
      $region12: #{tpu_custom_call.1} parent=5 // pred_fallthru
        _
      %p387 = scmp.lt.s32.totalorder %s26, 2
      // Predicated region
      $region57: #{tpu_custom_call.1} parent=5 // pred_check
        %p388 = pneg %p387
      $region58: #{tpu_custom_call.1} parent=5 // pred_check_branch
        %390 = sbr.rel (%p388) target = $region60
      $region59: #{tpu_custom_call.1} parent=5 // pred_region
        // Predicated region
        $region61: #{tpu_custom_call.1} parent=59 // pred_check
          %p391 = pneg %p46
        $region62: #{tpu_custom_call.1} parent=59 // pred_check_branch
          %393 = sbr.rel (%p391) target = $region64
        $region63: #{tpu_custom_call.1} parent=59 // pred_region
          %s394 = sand.u32 %s36, 1
          %s395 = scalar_lea.sflag [#allocation3], %s394
          %s396 = sand.u32 %s36, 1
          %s397 = smul.addr %s396, 128
          %s398 = scalar_lea.vmem [#allocation2], %s397
          %s400 = ssub.s32 2048, 2048
          %401 = vsyncadd %s395, %s400
          %s402 = smul.addr %s26, 32
          %s403 = smul.addr %s402, 64
          %s404 = scalar_lea.hbm %s0, %s403
          %s405 = sshll.u32 %s398, 4
          %s406 = int_to_ptr.vmem [resolvable:$true] %s405
          %411 = dma.hbm_to_vmem [thread:$0]  %s404, 2048, %s406, %s395, 64, 64, 4
        $region64: #{tpu_custom_call.1} parent=59 // pred_fallthru
          _
      $region60: #{tpu_custom_call.1} parent=5 // pred_fallthru
        _
      %p412 = scmp.le.s32.totalorder 1, %s26
      %p413 = scmp.lt.s32.totalorder %s26, 3
      %p414 = pnand %p412, %p413
      %p415 = pneg %p414
      // Predicated region
      $region65: #{tpu_custom_call.1} parent=5 // pred_check
        _
      $region66: #{tpu_custom_call.1} parent=5 // pred_check_branch
        %417 = sbr.rel (%p414) target = $region68
      $region67: #{tpu_custom_call.1} parent=5 // pred_region
        %s418 = ssub.s32 %s26, 1
        %s419 = sand.u32 %s39, 1
        %s420 = scalar_lea.sflag [#allocation3], %s419
        %s421 = sand.u32 %s39, 1
        %s422 = smul.addr %s421, 128
        %s423 = scalar_lea.vmem [#allocation2], %s422
        // Predicated region
        $region69: #{tpu_custom_call.1} parent=67 // pred_check
          %p424 = pneg %p52
        $region70: #{tpu_custom_call.1} parent=67 // pred_check_branch
          %426 = sbr.rel (%p424) target = $region72
        $region71: #{tpu_custom_call.1} parent=67 // pred_region
          %427 = dma.done %s420, 2048
        $region72: #{tpu_custom_call.1} parent=67 // pred_fallthru
          _
        // Predicated region
        $region73: #{tpu_custom_call.1} parent=67 // pred_check
          %p428 = pneg %p73
        $region74: #{tpu_custom_call.1} parent=67 // pred_check_branch
          %430 = sbr.rel (%p428) target = $region76
        $region75: #{tpu_custom_call.1} parent=67 // pred_region
          %431 = dma.done [#allocation6], 2048
        $region76: #{tpu_custom_call.1} parent=67 // pred_fallthru
          _
        // Predicated region
        $region77: #{tpu_custom_call.1} parent=67 // pred_check
          %p432 = pneg %p136
        $region78: #{tpu_custom_call.1} parent=67 // pred_check_branch
          %434 = sbr.rel (%p432) target = $region80
        $region79: #{tpu_custom_call.1} parent=67 // pred_region
          %435 = dma.done [#allocation6], 9216
        $region80: #{tpu_custom_call.1} parent=67 // pred_fallthru
          _
        // Predicated region
        $region81: #{tpu_custom_call.1} parent=67 // pred_check
          %p436 = pneg %p199
        $region82: #{tpu_custom_call.1} parent=67 // pred_check_branch
          %438 = sbr.rel (%p436) target = $region84
        $region83: #{tpu_custom_call.1} parent=67 // pred_region
          %439 = dma.done [#allocation9], 1024
        $region84: #{tpu_custom_call.1} parent=67 // pred_fallthru
          _
        %s440 = sand.u32 %s39, 1
        %s441 = scalar_lea.sflag [#allocation3], %s440
        %s442 = sand.u32 %s39, 1
        %s443 = smul.addr %s442, 128
        %s444 = scalar_lea.vmem [#allocation2], %s443
        %p445 = pneg %p52
        %p446 = pneg %p49
        %p447 = pneg %p73
        %p448 = pneg %p70
        %p449 = pneg %p94
        %p450 = pneg %p91
        %p451 = pneg %p115
        %p452 = pneg %p112
        %p453 = pneg %p136
        %p454 = pneg %p133
        %p455 = pneg %p157
        %p456 = pneg %p154
        %p457 = pneg %p178
        %p458 = pneg %p175
        %p459 = pneg %p199
        %p460 = pneg %p196
        %p461 = pneg %p220
        %p462 = pneg %p217
        %p463 = pneg %p241
        %p464 = pneg %p238
        %p465 = pneg %p262
        %p466 = pneg %p259
        %p467 = pneg %p283
        %p468 = pneg %p280
        %p469 = pneg %p309
        %p470 = pneg %p306
        %s471 = sand.u32 %s296, 1
        %s472 = scalar_lea.sflag [#allocation4], %s471
        %s473 = sand.u32 %s296, 1
        %s474 = smul.addr %s473, 256
        %s475 = scalar_lea.vmem [#allocation10], %s474
        %v479 = vld [vmem:[%s423] sm:$0xf]
        %v480 = vld [vmem:[%s423 + $0x4] sm:$0xf]
        %v481 = vld [vmem:[%s423 + $0x8] sm:$0xf]
        %v482 = vld [vmem:[%s423 + $0xc] sm:$0xf]
        %v483 = vld [vmem:[%s423 + $0x10] sm:$0xf]
        %v484 = vld [vmem:[%s423 + $0x14] sm:$0xf]
        %v485 = vld [vmem:[%s423 + $0x18] sm:$0xf]
        %v486 = vld [vmem:[%s423 + $0x1c] sm:$0xf]
        %v487 = vld [vmem:[%s423 + $0x20] sm:$0xf]
        %v488 = vld [vmem:[%s423 + $0x24] sm:$0xf]
        %v489 = vld [vmem:[%s423 + $0x28] sm:$0xf]
        %v490 = vld [vmem:[%s423 + $0x2c] sm:$0xf]
        %v491 = vld [vmem:[%s423 + $0x30] sm:$0xf]
        %v492 = vld [vmem:[%s423 + $0x34] sm:$0xf]
        %v493 = vld [vmem:[%s423 + $0x38] sm:$0xf]
        %v494 = vld [vmem:[%s423 + $0x3c] sm:$0xf]
        %v495 = vld [vmem:[%s423 + $0x40] sm:$0xf]
        %v496 = vld [vmem:[%s423 + $0x44] sm:$0xf]
        %v497 = vld [vmem:[%s423 + $0x48] sm:$0xf]
        %v498 = vld [vmem:[%s423 + $0x4c] sm:$0xf]
        %v499 = vld [vmem:[%s423 + $0x50] sm:$0xf]
        %v500 = vld [vmem:[%s423 + $0x54] sm:$0xf]
        %v501 = vld [vmem:[%s423 + $0x58] sm:$0xf]
        %v502 = vld [vmem:[%s423 + $0x5c] sm:$0xf]
        %v503 = vld [vmem:[%s423 + $0x60] sm:$0xf]
        %v504 = vld [vmem:[%s423 + $0x64] sm:$0xf]
        %v505 = vld [vmem:[%s423 + $0x68] sm:$0xf]
        %v506 = vld [vmem:[%s423 + $0x6c] sm:$0xf]
        %v507 = vld [vmem:[%s423 + $0x70] sm:$0xf]
        %v508 = vld [vmem:[%s423 + $0x74] sm:$0xf]
        %v509 = vld [vmem:[%s423 + $0x78] sm:$0xf]
        %v510 = vld [vmem:[%s423 + $0x7c] sm:$0xf]
        %v511 = vld [vmem:[#allocation5] sm:$0xff]
        %v512 = vld [vmem:[#allocation5 + $0x8] sm:$0xff]
        %v513 = vld [vmem:[#allocation5 + $0x10] sm:$0xff]
        %v514 = vld [vmem:[#allocation5 + $0x18] sm:$0xff]
        %v515 = vld [vmem:[#allocation5 + $0x20] sm:$0xff]
        %v516 = vld [vmem:[#allocation5 + $0x28] sm:$0xff]
        %v517 = vld [vmem:[#allocation5 + $0x30] sm:$0xff]
        %v518 = vld [vmem:[#allocation5 + $0x38] sm:$0xff]
        %v519 = vld [vmem:[#allocation5 + $0x40] sm:$0xff]
        %v520 = vld [vmem:[#allocation5 + $0x48] sm:$0xff]
        %v521 = vld [vmem:[#allocation5 + $0x50] sm:$0xff]
        %v522 = vld [vmem:[#allocation5 + $0x58] sm:$0xff]
        %v523 = vld [vmem:[#allocation5 + $0x60] sm:$0xff]
        %v524 = vld [vmem:[#allocation5 + $0x68] sm:$0xff]
        %v525 = vld [vmem:[#allocation5 + $0x70] sm:$0xff]
        %v526 = vld [vmem:[#allocation5 + $0x78] sm:$0xff]
        %v559 = vunpack.c.l.b16 %v479
        %v560 = vunpack.c.l.b16 %v480
        %v561 = vunpack.c.l.b16 %v481
        %v562 = vunpack.c.l.b16 %v482
        %v563 = vunpack.c.l.b16 %v483
        %v564 = vunpack.c.l.b16 %v484
        %v565 = vunpack.c.l.b16 %v485
        %v566 = vunpack.c.l.b16 %v486
        %v567 = vunpack.c.l.b16 %v487
        %v568 = vunpack.c.l.b16 %v488
        %v569 = vunpack.c.l.b16 %v489
        %v570 = vunpack.c.l.b16 %v490
        %v571 = vunpack.c.l.b16 %v491
        %v572 = vunpack.c.l.b16 %v492
        %v573 = vunpack.c.l.b16 %v493
        %v574 = vunpack.c.l.b16 %v494
        %v575 = vunpack.c.l.b16 %v495
        %v576 = vunpack.c.l.b16 %v496
        %v577 = vunpack.c.l.b16 %v497
        %v578 = vunpack.c.l.b16 %v498
        %v579 = vunpack.c.l.b16 %v499
        %v580 = vunpack.c.l.b16 %v500
        %v581 = vunpack.c.l.b16 %v501
        %v582 = vunpack.c.l.b16 %v502
        %v583 = vunpack.c.l.b16 %v503
        %v584 = vunpack.c.l.b16 %v504
        %v585 = vunpack.c.l.b16 %v505
        %v586 = vunpack.c.l.b16 %v506
        %v587 = vunpack.c.l.b16 %v507
        %v588 = vunpack.c.l.b16 %v508
        %v589 = vunpack.c.l.b16 %v509
        %v590 = vunpack.c.l.b16 %v510
        %v591 = vpack.c.b16 %v560, %v559
        %v592 = vpack.c.b16 %v562, %v561
        %v593 = vpack.c.b16 %v564, %v563
        %v594 = vpack.c.b16 %v566, %v565
        %v595 = vpack.c.b16 %v568, %v567
        %v596 = vpack.c.b16 %v570, %v569
        %v597 = vpack.c.b16 %v572, %v571
        %v598 = vpack.c.b16 %v574, %v573
        %v599 = vpack.c.b16 %v576, %v575
        %v600 = vpack.c.b16 %v578, %v577
        %v601 = vpack.c.b16 %v580, %v579
        %v602 = vpack.c.b16 %v582, %v581
        %v603 = vpack.c.b16 %v584, %v583
        %v604 = vpack.c.b16 %v586, %v585
        %v605 = vpack.c.b16 %v588, %v587
        %v606 = vpack.c.b16 %v590, %v589
        %v639 = vunpack.c.l.b16 %v511
        %v640 = vunpack.c.h.b16 %v511
        %v641 = vunpack.c.l.b16 %v512
        %v642 = vunpack.c.h.b16 %v512
        %v643 = vunpack.c.l.b16 %v513
        %v644 = vunpack.c.h.b16 %v513
        %v645 = vunpack.c.l.b16 %v514
        %v646 = vunpack.c.h.b16 %v514
        %v647 = vunpack.c.l.b16 %v515
        %v648 = vunpack.c.h.b16 %v515
        %v649 = vunpack.c.l.b16 %v516
        %v650 = vunpack.c.h.b16 %v516
        %v651 = vunpack.c.l.b16 %v517
        %v652 = vunpack.c.h.b16 %v517
        %v653 = vunpack.c.l.b16 %v518
        %v654 = vunpack.c.h.b16 %v518
        %v655 = vunpack.c.l.b16 %v519
        %v656 = vunpack.c.h.b16 %v519
        %v657 = vunpack.c.l.b16 %v520
        %v658 = vunpack.c.h.b16 %v520
        %v659 = vunpack.c.l.b16 %v521
        %v660 = vunpack.c.h.b16 %v521
        %v661 = vunpack.c.l.b16 %v522
        %v662 = vunpack.c.h.b16 %v522
        %v663 = vunpack.c.l.b16 %v523
        %v664 = vunpack.c.h.b16 %v523
        %v665 = vunpack.c.l.b16 %v524
        %v666 = vunpack.c.h.b16 %v524
        %v667 = vunpack.c.l.b16 %v525
        %v668 = vunpack.c.h.b16 %v525
        %v669 = vunpack.c.l.b16 %v526
        %v670 = vunpack.c.h.b16 %v526
        %v671 = vpack.c.b16 %v641, %v639
        %v672 = vpack.c.b16 %v642, %v640
        %v673 = vpack.c.b16 %v645, %v643
        %v674 = vpack.c.b16 %v646, %v644
        %v675 = vpack.c.b16 %v649, %v647
        %v676 = vpack.c.b16 %v650, %v648
        %v677 = vpack.c.b16 %v653, %v651
        %v678 = vpack.c.b16 %v654, %v652
        %v679 = vpack.c.b16 %v657, %v655
        %v680 = vpack.c.b16 %v658, %v656
        %v681 = vpack.c.b16 %v661, %v659
        %v682 = vpack.c.b16 %v662, %v660
        %v683 = vpack.c.b16 %v665, %v663
        %v684 = vpack.c.b16 %v666, %v664
        %v685 = vpack.c.b16 %v669, %v667
        %v686 = vpack.c.b16 %v670, %v668
        %703 = vmatprep.subr.bf16.mxu0 %v686
        %704 = vmatpush1.bf16.msra.mxu0 %v685
        %705 = vmatprep.subr.bf16.mxu0 %v684
        %706 = vmatpush1.bf16.msra.mxu0 %v683
        %707 = vmatprep.subr.bf16.mxu0 %v682
        %708 = vmatpush1.bf16.msra.mxu0 %v681
        %709 = vmatprep.subr.bf16.mxu0 %v680
        %710 = vmatpush1.bf16.msra.mxu0 %v679
        %711 = vmatprep.subr.bf16.mxu0 %v678
        %712 = vmatpush1.bf16.msra.mxu0 %v677
        %713 = vmatprep.subr.bf16.mxu0 %v676
        %714 = vmatpush1.bf16.msra.mxu0 %v675
        %715 = vmatprep.subr.bf16.mxu0 %v674
        %716 = vmatpush1.bf16.msra.mxu0 %v673
        %717 = vmatprep.subr.bf16.mxu0 %v672
        %718 = vmatpush1.bf16.msra.mxu0 %v671
        %719 = vmatprep.subr.bf16.mxu0 0
        %720 = vmatpush2.bf16.msra.mxu0 0
        %721 = vmatprep.subr.bf16.mxu0 0
        %722 = vmatpush2.bf16.msra.mxu0 0
        %723 = vmatprep.subr.bf16.mxu0 0
        %724 = vmatpush2.bf16.msra.mxu0 0
        %725 = vmatprep.subr.bf16.mxu0 0
        %726 = vmatpush2.bf16.msra.mxu0 0
        %727 = vmatprep.subr.bf16.mxu0 0
        %728 = vmatpush2.bf16.msra.mxu0 0
        %729 = vmatprep.subr.bf16.mxu0 0
        %730 = vmatpush2.bf16.msra.mxu0 0
        %731 = vmatprep.subr.bf16.mxu0 0
        %732 = vmatpush2.bf16.msra.mxu0 0
        %733 = vmatprep.subr.bf16.mxu0 0
        %734 = vmatpush2.bf16.msra.mxu0 0
        %735 = vmatprep.mubr.bf16.mxu0 0
        %736 = vmatmul.mubr.bf16.gmra.mxu0 %v591
        %v737 = vpop.f32.mrf.mxu0
        %v738 = vadd.f32 0.0, %v737
        %v739 = vpop.f32.mrf.mxu0
        %v740 = vadd.f32 0.0, %v739
        %v741 = vpop.f32.mrf.mxu0
        %v742 = vadd.f32 0.0, %v741
        %v743 = vpop.f32.mrf.mxu0
        %v744 = vadd.f32 0.0, %v743
        %745 = vmatprep.mubr.bf16.mxu0 0
        %746 = vmatmul.mubr.bf16.gmra.mxu0 %v592
        %v747 = vpop.f32.mrf.mxu0
        %v748 = vadd.f32 0.0, %v747
        %v749 = vpop.f32.mrf.mxu0
        %v750 = vadd.f32 0.0, %v749
        %v751 = vpop.f32.mrf.mxu0
        %v752 = vadd.f32 0.0, %v751
        %v753 = vpop.f32.mrf.mxu0
        %v754 = vadd.f32 0.0, %v753
        %755 = vmatprep.mubr.bf16.mxu0 0
        %756 = vmatmul.mubr.bf16.gmra.mxu0 %v593
        %v757 = vpop.f32.mrf.mxu0
        %v758 = vadd.f32 0.0, %v757
        %v759 = vpop.f32.mrf.mxu0
        %v760 = vadd.f32 0.0, %v759
        %v761 = vpop.f32.mrf.mxu0
        %v762 = vadd.f32 0.0, %v761
        %v763 = vpop.f32.mrf.mxu0
        %v764 = vadd.f32 0.0, %v763
        %765 = vmatprep.mubr.bf16.mxu0 0
        %766 = vmatmul.mubr.bf16.gmra.mxu0 %v594
        %v767 = vpop.f32.mrf.mxu0
        %v768 = vadd.f32 0.0, %v767
        %v769 = vpop.f32.mrf.mxu0
        %v770 = vadd.f32 0.0, %v769
        %v771 = vpop.f32.mrf.mxu0
        %v772 = vadd.f32 0.0, %v771
        %v773 = vpop.f32.mrf.mxu0
        %v774 = vadd.f32 0.0, %v773
        %775 = vmatprep.mubr.bf16.mxu0 0
        %776 = vmatmul.mubr.bf16.gmra.mxu0 %v595
        %v777 = vpop.f32.mrf.mxu0
        %v778 = vadd.f32 0.0, %v777
        %v779 = vpop.f32.mrf.mxu0
        %v780 = vadd.f32 0.0, %v779
        %v781 = vpop.f32.mrf.mxu0
        %v782 = vadd.f32 0.0, %v781
        %v783 = vpop.f32.mrf.mxu0
        %v784 = vadd.f32 0.0, %v783
        %785 = vmatprep.mubr.bf16.mxu0 0
        %786 = vmatmul.mubr.bf16.gmra.mxu0 %v596
        %v787 = vpop.f32.mrf.mxu0
        %v788 = vadd.f32 0.0, %v787
        %v789 = vpop.f32.mrf.mxu0
        %v790 = vadd.f32 0.0, %v789
        %v791 = vpop.f32.mrf.mxu0
        %v792 = vadd.f32 0.0, %v791
        %v793 = vpop.f32.mrf.mxu0
        %v794 = vadd.f32 0.0, %v793
        %795 = vmatprep.mubr.bf16.mxu0 0
        %796 = vmatmul.mubr.bf16.gmra.mxu0 %v597
        %v797 = vpop.f32.mrf.mxu0
        %v798 = vadd.f32 0.0, %v797
        %v799 = vpop.f32.mrf.mxu0
        %v800 = vadd.f32 0.0, %v799
        %v801 = vpop.f32.mrf.mxu0
        %v802 = vadd.f32 0.0, %v801
        %v803 = vpop.f32.mrf.mxu0
        %v804 = vadd.f32 0.0, %v803
        %805 = vmatprep.mubr.bf16.mxu0 0
        %806 = vmatmul.mubr.bf16.gmra.mxu0 %v598
        %v807 = vpop.f32.mrf.mxu0
        %v808 = vadd.f32 0.0, %v807
        %v809 = vpop.f32.mrf.mxu0
        %v810 = vadd.f32 0.0, %v809
        %v811 = vpop.f32.mrf.mxu0
        %v812 = vadd.f32 0.0, %v811
        %v813 = vpop.f32.mrf.mxu0
        %v814 = vadd.f32 0.0, %v813
        %815 = vmatprep.mubr.bf16.mxu0 0
        %816 = vmatmul.mubr.bf16.gmra.mxu0 %v599
        %v817 = vpop.f32.mrf.mxu0
        %v818 = vadd.f32 0.0, %v817
        %v819 = vpop.f32.mrf.mxu0
        %v820 = vadd.f32 0.0, %v819
        %v821 = vpop.f32.mrf.mxu0
        %v822 = vadd.f32 0.0, %v821
        %v823 = vpop.f32.mrf.mxu0
        %v824 = vadd.f32 0.0, %v823
        %825 = vmatprep.mubr.bf16.mxu0 0
        %826 = vmatmul.mubr.bf16.gmra.mxu0 %v600
        %v827 = vpop.f32.mrf.mxu0
        %v828 = vadd.f32 0.0, %v827
        %v829 = vpop.f32.mrf.mxu0
        %v830 = vadd.f32 0.0, %v829
        %v831 = vpop.f32.mrf.mxu0
        %v832 = vadd.f32 0.0, %v831
        %v833 = vpop.f32.mrf.mxu0
        %v834 = vadd.f32 0.0, %v833
        %835 = vmatprep.mubr.bf16.mxu0 0
        %836 = vmatmul.mubr.bf16.gmra.mxu0 %v601
        %v837 = vpop.f32.mrf.mxu0
        %v838 = vadd.f32 0.0, %v837
        %v839 = vpop.f32.mrf.mxu0
        %v840 = vadd.f32 0.0, %v839
        %v841 = vpop.f32.mrf.mxu0
        %v842 = vadd.f32 0.0, %v841
        %v843 = vpop.f32.mrf.mxu0
        %v844 = vadd.f32 0.0, %v843
        %845 = vmatprep.mubr.bf16.mxu0 0
        %846 = vmatmul.mubr.bf16.gmra.mxu0 %v602
        %v847 = vpop.f32.mrf.mxu0
        %v848 = vadd.f32 0.0, %v847
        %v849 = vpop.f32.mrf.mxu0
        %v850 = vadd.f32 0.0, %v849
        %v851 = vpop.f32.mrf.mxu0
        %v852 = vadd.f32 0.0, %v851
        %v853 = vpop.f32.mrf.mxu0
        %v854 = vadd.f32 0.0, %v853
        %855 = vmatprep.mubr.bf16.mxu0 0
        %856 = vmatmul.mubr.bf16.gmra.mxu0 %v603
        %v857 = vpop.f32.mrf.mxu0
        %v858 = vadd.f32 0.0, %v857
        %v859 = vpop.f32.mrf.mxu0
        %v860 = vadd.f32 0.0, %v859
        %v861 = vpop.f32.mrf.mxu0
        %v862 = vadd.f32 0.0, %v861
        %v863 = vpop.f32.mrf.mxu0
        %v864 = vadd.f32 0.0, %v863
        %865 = vmatprep.mubr.bf16.mxu0 0
        %866 = vmatmul.mubr.bf16.gmra.mxu0 %v604
        %v867 = vpop.f32.mrf.mxu0
        %v868 = vadd.f32 0.0, %v867
        %v869 = vpop.f32.mrf.mxu0
        %v870 = vadd.f32 0.0, %v869
        %v871 = vpop.f32.mrf.mxu0
        %v872 = vadd.f32 0.0, %v871
        %v873 = vpop.f32.mrf.mxu0
        %v874 = vadd.f32 0.0, %v873
        %875 = vmatprep.mubr.bf16.mxu0 0
        %876 = vmatmul.mubr.bf16.gmra.mxu0 %v605
        %v877 = vpop.f32.mrf.mxu0
        %v878 = vadd.f32 0.0, %v877
        %v879 = vpop.f32.mrf.mxu0
        %v880 = vadd.f32 0.0, %v879
        %v881 = vpop.f32.mrf.mxu0
        %v882 = vadd.f32 0.0, %v881
        %v883 = vpop.f32.mrf.mxu0
        %v884 = vadd.f32 0.0, %v883
        %885 = vmatprep.mubr.bf16.mxu0 0
        %886 = vmatmul.mubr.bf16.gmra.mxu0 %v606
        %v887 = vpop.f32.mrf.mxu0
        %v888 = vadd.f32 0.0, %v887
        %v889 = vpop.f32.mrf.mxu0
        %v890 = vadd.f32 0.0, %v889
        %v891 = vpop.f32.mrf.mxu0
        %v892 = vadd.f32 0.0, %v891
        %v893 = vpop.f32.mrf.mxu0
        %v894 = vadd.f32 0.0, %v893
        %895 = vdwg.mxu0
        %v896 = vld [vmem:[%s2] sm:$0x1]
        %v898 = vlaneseq
        %v899 = vshrl.u32 %v898, 7
        %v900 = vsub.s32 0, %v899
        %v901 = vrot.slane %v896, %v900
        %v903 = vmul.f32 %v738, %v901
        %v904 = vmul.f32 %v742, %v901
        %v905 = vmul.f32 %v748, %v901
        %v906 = vmul.f32 %v752, %v901
        %v907 = vmul.f32 %v758, %v901
        %v908 = vmul.f32 %v762, %v901
        %v909 = vmul.f32 %v768, %v901
        %v910 = vmul.f32 %v772, %v901
        %v911 = vmul.f32 %v778, %v901
        %v912 = vmul.f32 %v782, %v901
        %v913 = vmul.f32 %v788, %v901
        %v914 = vmul.f32 %v792, %v901
        %v915 = vmul.f32 %v798, %v901
        %v916 = vmul.f32 %v802, %v901
        %v917 = vmul.f32 %v808, %v901
        %v918 = vmul.f32 %v812, %v901
        %v919 = vmul.f32 %v818, %v901
        %v920 = vmul.f32 %v822, %v901
        %v921 = vmul.f32 %v828, %v901
        %v922 = vmul.f32 %v832, %v901
        %v923 = vmul.f32 %v838, %v901
        %v924 = vmul.f32 %v842, %v901
        %v925 = vmul.f32 %v848, %v901
        %v926 = vmul.f32 %v852, %v901
        %v927 = vmul.f32 %v858, %v901
        %v928 = vmul.f32 %v862, %v901
        %v929 = vmul.f32 %v868, %v901
        %v930 = vmul.f32 %v872, %v901
        %v931 = vmul.f32 %v878, %v901
        %v932 = vmul.f32 %v882, %v901
        %v933 = vmul.f32 %v888, %v901
        %v934 = vmul.f32 %v892, %v901
        %v935 = vld [vmem:[%s3] sm:$0x1]
        %v937 = vlaneseq
        %v938 = vshrl.u32 %v937, 7
        %v939 = vsub.s32 0, %v938
        %v940 = vrot.slane %v935, %v939
        %v942 = vadd.f32 %v903, %v940
        %v943 = vadd.f32 %v904, %v940
        %v944 = vadd.f32 %v905, %v940
        %v945 = vadd.f32 %v906, %v940
        %v946 = vadd.f32 %v907, %v940
        %v947 = vadd.f32 %v908, %v940
        %v948 = vadd.f32 %v909, %v940
        %v949 = vadd.f32 %v910, %v940
        %v950 = vadd.f32 %v911, %v940
        %v951 = vadd.f32 %v912, %v940
        %v952 = vadd.f32 %v913, %v940
        %v953 = vadd.f32 %v914, %v940
        %v954 = vadd.f32 %v915, %v940
        %v955 = vadd.f32 %v916, %v940
        %v956 = vadd.f32 %v917, %v940
        %v957 = vadd.f32 %v918, %v940
        %v958 = vadd.f32 %v919, %v940
        %v959 = vadd.f32 %v920, %v940
        %v960 = vadd.f32 %v921, %v940
        %v961 = vadd.f32 %v922, %v940
        %v962 = vadd.f32 %v923, %v940
        %v963 = vadd.f32 %v924, %v940
        %v964 = vadd.f32 %v925, %v940
        %v965 = vadd.f32 %v926, %v940
        %v966 = vadd.f32 %v927, %v940
        %v967 = vadd.f32 %v928, %v940
        %v968 = vadd.f32 %v929, %v940
        %v969 = vadd.f32 %v930, %v940
        %v970 = vadd.f32 %v931, %v940
        %v971 = vadd.f32 %v932, %v940
        %v972 = vadd.f32 %v933, %v940
        %v973 = vadd.f32 %v934, %v940
        %v974 = vmax.f32 %v942, 0.0
        %v975 = vmax.f32 %v943, 0.0
        %v976 = vmax.f32 %v944, 0.0
        %v977 = vmax.f32 %v945, 0.0
        %v978 = vmax.f32 %v946, 0.0
        %v979 = vmax.f32 %v947, 0.0
        %v980 = vmax.f32 %v948, 0.0
        %v981 = vmax.f32 %v949, 0.0
        %v982 = vmax.f32 %v950, 0.0
        %v983 = vmax.f32 %v951, 0.0
        %v984 = vmax.f32 %v952, 0.0
        %v985 = vmax.f32 %v953, 0.0
        %v986 = vmax.f32 %v954, 0.0
        %v987 = vmax.f32 %v955, 0.0
        %v988 = vmax.f32 %v956, 0.0
        %v989 = vmax.f32 %v957, 0.0
        %v990 = vmax.f32 %v958, 0.0
        %v991 = vmax.f32 %v959, 0.0
        %v992 = vmax.f32 %v960, 0.0
        %v993 = vmax.f32 %v961, 0.0
        %v994 = vmax.f32 %v962, 0.0
        %v995 = vmax.f32 %v963, 0.0
        %v996 = vmax.f32 %v964, 0.0
        %v997 = vmax.f32 %v965, 0.0
        %v998 = vmax.f32 %v966, 0.0
        %v999 = vmax.f32 %v967, 0.0
        %v1000 = vmax.f32 %v968, 0.0
        %v1001 = vmax.f32 %v969, 0.0
        %v1002 = vmax.f32 %v970, 0.0
        %v1003 = vmax.f32 %v971, 0.0
        %v1004 = vmax.f32 %v972, 0.0
        %v1005 = vmax.f32 %v973, 0.0
        %v1006 = vlaneseq
        %v1007 = vshrl.u32 %v1006, 7
        %v1008 = vadd.s32 %v1007, 8
        %v1009 = vadd.s32 %v1007, 16
        %v1010 = vadd.s32 %v1007, 24
        %v1011 = vadd.s32 %v1007, 32
        %v1012 = vadd.s32 %v1007, 40
        %v1013 = vadd.s32 %v1007, 48
        %v1014 = vadd.s32 %v1007, 56
        %v1015 = vadd.s32 %v1007, 64
        %v1016 = vadd.s32 %v1007, 72
        %v1017 = vadd.s32 %v1007, 80
        %v1018 = vadd.s32 %v1007, 88
        %v1019 = vadd.s32 %v1007, 96
        %v1020 = vadd.s32 %v1007, 104
        %v1021 = vadd.s32 %v1007, 112
        %v1022 = vadd.s32 %v1007, 120
        %v1023 = vadd.s32 %v1007, 128
        %v1024 = vadd.s32 %v1007, 136
        %v1025 = vadd.s32 %v1007, 144
        %v1026 = vadd.s32 %v1007, 152
        %v1027 = vadd.s32 %v1007, 160
        %v1028 = vadd.s32 %v1007, 168
        %v1029 = vadd.s32 %v1007, 176
        %v1030 = vadd.s32 %v1007, 184
        %v1031 = vadd.s32 %v1007, 192
        %v1032 = vadd.s32 %v1007, 200
        %v1033 = vadd.s32 %v1007, 208
        %v1034 = vadd.s32 %v1007, 216
        %v1035 = vadd.s32 %v1007, 224
        %v1036 = vadd.s32 %v1007, 232
        %v1037 = vadd.s32 %v1007, 240
        %v1038 = vadd.s32 %v1007, 248
        %v1039 = vadd.s32 %v1007, 256
        %v1040 = vadd.s32 %v1007, 264
        %v1041 = vadd.s32 %v1007, 272
        %v1042 = vadd.s32 %v1007, 280
        %vm1043 = vcmp.lt.s32.totalorder %v1007, 0
        %v1044 = vsub.s32 0, %v1007
        %v1045 = vsel %vm1043, %v1044, %v1007
        %v1046 = vshrl.u32 %v1045, 4
        %v1047 = vand.u32 %v1045, 15
        %v1048 = vsub.s32 0, %v1047
        %v1049 = vsel %vm1043, %v1048, %v1047
        %vm1050 = vcmp.lt.s32.totalorder %v1008, 0
        %v1051 = vsub.s32 0, %v1008
        %v1052 = vsel %vm1050, %v1051, %v1008
        %v1053 = vshrl.u32 %v1052, 4
        %v1054 = vand.u32 %v1052, 15
        %v1055 = vsub.s32 0, %v1054
        %v1056 = vsel %vm1050, %v1055, %v1054
        %vm1057 = vcmp.lt.s32.totalorder %v1009, 0
        %v1058 = vsub.s32 0, %v1009
        %v1059 = vsel %vm1057, %v1058, %v1009
        %v1060 = vshrl.u32 %v1059, 4
        %v1061 = vand.u32 %v1059, 15
        %v1062 = vsub.s32 0, %v1061
        %v1063 = vsel %vm1057, %v1062, %v1061
        %vm1064 = vcmp.lt.s32.totalorder %v1010, 0
        %v1065 = vsub.s32 0, %v1010
        %v1066 = vsel %vm1064, %v1065, %v1010
        %v1067 = vshrl.u32 %v1066, 4
        %v1068 = vand.u32 %v1066, 15
        %v1069 = vsub.s32 0, %v1068
        %v1070 = vsel %vm1064, %v1069, %v1068
        %vm1071 = vcmp.lt.s32.totalorder %v1011, 0
        %v1072 = vsub.s32 0, %v1011
        %v1073 = vsel %vm1071, %v1072, %v1011
        %v1074 = vshrl.u32 %v1073, 4
        %v1075 = vand.u32 %v1073, 15
        %v1076 = vsub.s32 0, %v1075
        %v1077 = vsel %vm1071, %v1076, %v1075
        %vm1078 = vcmp.lt.s32.totalorder %v1012, 0
        %v1079 = vsub.s32 0, %v1012
        %v1080 = vsel %vm1078, %v1079, %v1012
        %v1081 = vshrl.u32 %v1080, 4
        %v1082 = vand.u32 %v1080, 15
        %v1083 = vsub.s32 0, %v1082
        %v1084 = vsel %vm1078, %v1083, %v1082
        %vm1085 = vcmp.lt.s32.totalorder %v1013, 0
        %v1086 = vsub.s32 0, %v1013
        %v1087 = vsel %vm1085, %v1086, %v1013
        %v1088 = vshrl.u32 %v1087, 4
        %v1089 = vand.u32 %v1087, 15
        %v1090 = vsub.s32 0, %v1089
        %v1091 = vsel %vm1085, %v1090, %v1089
        %vm1092 = vcmp.lt.s32.totalorder %v1014, 0
        %v1093 = vsub.s32 0, %v1014
        %v1094 = vsel %vm1092, %v1093, %v1014
        %v1095 = vshrl.u32 %v1094, 4
        %v1096 = vand.u32 %v1094, 15
        %v1097 = vsub.s32 0, %v1096
        %v1098 = vsel %vm1092, %v1097, %v1096
        %vm1099 = vcmp.lt.s32.totalorder %v1015, 0
        %v1100 = vsub.s32 0, %v1015
        %v1101 = vsel %vm1099, %v1100, %v1015
        %v1102 = vshrl.u32 %v1101, 4
        %v1103 = vand.u32 %v1101, 15
        %v1104 = vsub.s32 0, %v1103
        %v1105 = vsel %vm1099, %v1104, %v1103
        %vm1106 = vcmp.lt.s32.totalorder %v1016, 0
        %v1107 = vsub.s32 0, %v1016
        %v1108 = vsel %vm1106, %v1107, %v1016
        %v1109 = vshrl.u32 %v1108, 4
        %v1110 = vand.u32 %v1108, 15
        %v1111 = vsub.s32 0, %v1110
        %v1112 = vsel %vm1106, %v1111, %v1110
        %vm1113 = vcmp.lt.s32.totalorder %v1017, 0
        %v1114 = vsub.s32 0, %v1017
        %v1115 = vsel %vm1113, %v1114, %v1017
        %v1116 = vshrl.u32 %v1115, 4
        %v1117 = vand.u32 %v1115, 15
        %v1118 = vsub.s32 0, %v1117
        %v1119 = vsel %vm1113, %v1118, %v1117
        %vm1120 = vcmp.lt.s32.totalorder %v1018, 0
        %v1121 = vsub.s32 0, %v1018
        %v1122 = vsel %vm1120, %v1121, %v1018
        %v1123 = vshrl.u32 %v1122, 4
        %v1124 = vand.u32 %v1122, 15
        %v1125 = vsub.s32 0, %v1124
        %v1126 = vsel %vm1120, %v1125, %v1124
        %vm1127 = vcmp.lt.s32.totalorder %v1019, 0
        %v1128 = vsub.s32 0, %v1019
        %v1129 = vsel %vm1127, %v1128, %v1019
        %v1130 = vshrl.u32 %v1129, 4
        %v1131 = vand.u32 %v1129, 15
        %v1132 = vsub.s32 0, %v1131
        %v1133 = vsel %vm1127, %v1132, %v1131
        %vm1134 = vcmp.lt.s32.totalorder %v1020, 0
        %v1135 = vsub.s32 0, %v1020
        %v1136 = vsel %vm1134, %v1135, %v1020
        %v1137 = vshrl.u32 %v1136, 4
        %v1138 = vand.u32 %v1136, 15
        %v1139 = vsub.s32 0, %v1138
        %v1140 = vsel %vm1134, %v1139, %v1138
        %vm1141 = vcmp.lt.s32.totalorder %v1021, 0
        %v1142 = vsub.s32 0, %v1021
        %v1143 = vsel %vm1141, %v1142, %v1021
        %v1144 = vshrl.u32 %v1143, 4
        %v1145 = vand.u32 %v1143, 15
        %v1146 = vsub.s32 0, %v1145
        %v1147 = vsel %vm1141, %v1146, %v1145
        %vm1148 = vcmp.lt.s32.totalorder %v1022, 0
        %v1149 = vsub.s32 0, %v1022
        %v1150 = vsel %vm1148, %v1149, %v1022
        %v1151 = vshrl.u32 %v1150, 4
        %v1152 = vand.u32 %v1150, 15
        %v1153 = vsub.s32 0, %v1152
        %v1154 = vsel %vm1148, %v1153, %v1152
        %vm1155 = vcmp.lt.s32.totalorder %v1023, 0
        %v1156 = vsub.s32 0, %v1023
        %v1157 = vsel %vm1155, %v1156, %v1023
        %v1158 = vshrl.u32 %v1157, 4
        %v1159 = vand.u32 %v1157, 15
        %v1160 = vsub.s32 0, %v1159
        %v1161 = vsel %vm1155, %v1160, %v1159
        %vm1162 = vcmp.lt.s32.totalorder %v1024, 0
        %v1163 = vsub.s32 0, %v1024
        %v1164 = vsel %vm1162, %v1163, %v1024
        %v1165 = vshrl.u32 %v1164, 4
        %v1166 = vand.u32 %v1164, 15
        %v1167 = vsub.s32 0, %v1166
        %v1168 = vsel %vm1162, %v1167, %v1166
        %vm1169 = vcmp.lt.s32.totalorder %v1025, 0
        %v1170 = vsub.s32 0, %v1025
        %v1171 = vsel %vm1169, %v1170, %v1025
        %v1172 = vshrl.u32 %v1171, 4
        %v1173 = vand.u32 %v1171, 15
        %v1174 = vsub.s32 0, %v1173
        %v1175 = vsel %vm1169, %v1174, %v1173
        %vm1176 = vcmp.lt.s32.totalorder %v1026, 0
        %v1177 = vsub.s32 0, %v1026
        %v1178 = vsel %vm1176, %v1177, %v1026
        %v1179 = vshrl.u32 %v1178, 4
        %v1180 = vand.u32 %v1178, 15
        %v1181 = vsub.s32 0, %v1180
        %v1182 = vsel %vm1176, %v1181, %v1180
        %vm1183 = vcmp.lt.s32.totalorder %v1027, 0
        %v1184 = vsub.s32 0, %v1027
        %v1185 = vsel %vm1183, %v1184, %v1027
        %v1186 = vshrl.u32 %v1185, 4
        %v1187 = vand.u32 %v1185, 15
        %v1188 = vsub.s32 0, %v1187
        %v1189 = vsel %vm1183, %v1188, %v1187
        %vm1190 = vcmp.lt.s32.totalorder %v1028, 0
        %v1191 = vsub.s32 0, %v1028
        %v1192 = vsel %vm1190, %v1191, %v1028
        %v1193 = vshrl.u32 %v1192, 4
        %v1194 = vand.u32 %v1192, 15
        %v1195 = vsub.s32 0, %v1194
        %v1196 = vsel %vm1190, %v1195, %v1194
        %vm1197 = vcmp.lt.s32.totalorder %v1029, 0
        %v1198 = vsub.s32 0, %v1029
        %v1199 = vsel %vm1197, %v1198, %v1029
        %v1200 = vshrl.u32 %v1199, 4
        %v1201 = vand.u32 %v1199, 15
        %v1202 = vsub.s32 0, %v1201
        %v1203 = vsel %vm1197, %v1202, %v1201
        %vm1204 = vcmp.lt.s32.totalorder %v1030, 0
        %v1205 = vsub.s32 0, %v1030
        %v1206 = vsel %vm1204, %v1205, %v1030
        %v1207 = vshrl.u32 %v1206, 4
        %v1208 = vand.u32 %v1206, 15
        %v1209 = vsub.s32 0, %v1208
        %v1210 = vsel %vm1204, %v1209, %v1208
        %vm1211 = vcmp.lt.s32.totalorder %v1031, 0
        %v1212 = vsub.s32 0, %v1031
        %v1213 = vsel %vm1211, %v1212, %v1031
        %v1214 = vshrl.u32 %v1213, 4
        %v1215 = vand.u32 %v1213, 15
        %v1216 = vsub.s32 0, %v1215
        %v1217 = vsel %vm1211, %v1216, %v1215
        %vm1218 = vcmp.lt.s32.totalorder %v1032, 0
        %v1219 = vsub.s32 0, %v1032
        %v1220 = vsel %vm1218, %v1219, %v1032
        %v1221 = vshrl.u32 %v1220, 4
        %v1222 = vand.u32 %v1220, 15
        %v1223 = vsub.s32 0, %v1222
        %v1224 = vsel %vm1218, %v1223, %v1222
        %vm1225 = vcmp.lt.s32.totalorder %v1033, 0
        %v1226 = vsub.s32 0, %v1033
        %v1227 = vsel %vm1225, %v1226, %v1033
        %v1228 = vshrl.u32 %v1227, 4
        %v1229 = vand.u32 %v1227, 15
        %v1230 = vsub.s32 0, %v1229
        %v1231 = vsel %vm1225, %v1230, %v1229
        %vm1232 = vcmp.lt.s32.totalorder %v1034, 0
        %v1233 = vsub.s32 0, %v1034
        %v1234 = vsel %vm1232, %v1233, %v1034
        %v1235 = vshrl.u32 %v1234, 4
        %v1236 = vand.u32 %v1234, 15
        %v1237 = vsub.s32 0, %v1236
        %v1238 = vsel %vm1232, %v1237, %v1236
        %vm1239 = vcmp.lt.s32.totalorder %v1035, 0
        %v1240 = vsub.s32 0, %v1035
        %v1241 = vsel %vm1239, %v1240, %v1035
        %v1242 = vshrl.u32 %v1241, 4
        %v1243 = vand.u32 %v1241, 15
        %v1244 = vsub.s32 0, %v1243
        %v1245 = vsel %vm1239, %v1244, %v1243
        %vm1246 = vcmp.lt.s32.totalorder %v1036, 0
        %v1247 = vsub.s32 0, %v1036
        %v1248 = vsel %vm1246, %v1247, %v1036
        %v1249 = vshrl.u32 %v1248, 4
        %v1250 = vand.u32 %v1248, 15
        %v1251 = vsub.s32 0, %v1250
        %v1252 = vsel %vm1246, %v1251, %v1250
        %vm1253 = vcmp.lt.s32.totalorder %v1037, 0
        %v1254 = vsub.s32 0, %v1037
        %v1255 = vsel %vm1253, %v1254, %v1037
        %v1256 = vshrl.u32 %v1255, 4
        %v1257 = vand.u32 %v1255, 15
        %v1258 = vsub.s32 0, %v1257
        %v1259 = vsel %vm1253, %v1258, %v1257
        %vm1260 = vcmp.lt.s32.totalorder %v1038, 0
        %v1261 = vsub.s32 0, %v1038
        %v1262 = vsel %vm1260, %v1261, %v1038
        %v1263 = vshrl.u32 %v1262, 4
        %v1264 = vand.u32 %v1262, 15
        %v1265 = vsub.s32 0, %v1264
        %v1266 = vsel %vm1260, %v1265, %v1264
        %vm1267 = vcmp.lt.s32.totalorder %v1039, 0
        %v1268 = vsub.s32 0, %v1039
        %v1269 = vsel %vm1267, %v1268, %v1039
        %v1270 = vshrl.u32 %v1269, 4
        %v1271 = vand.u32 %v1269, 15
        %v1272 = vsub.s32 0, %v1271
        %v1273 = vsel %vm1267, %v1272, %v1271
        %vm1274 = vcmp.lt.s32.totalorder %v1040, 0
        %v1275 = vsub.s32 0, %v1040
        %v1276 = vsel %vm1274, %v1275, %v1040
        %v1277 = vshrl.u32 %v1276, 4
        %v1278 = vand.u32 %v1276, 15
        %v1279 = vsub.s32 0, %v1278
        %v1280 = vsel %vm1274, %v1279, %v1278
        %vm1281 = vcmp.lt.s32.totalorder %v1041, 0
        %v1282 = vsub.s32 0, %v1041
        %v1283 = vsel %vm1281, %v1282, %v1041
        %v1284 = vshrl.u32 %v1283, 4
        %v1285 = vand.u32 %v1283, 15
        %v1286 = vsub.s32 0, %v1285
        %v1287 = vsel %vm1281, %v1286, %v1285
        %vm1288 = vcmp.lt.s32.totalorder %v1042, 0
        %v1289 = vsub.s32 0, %v1042
        %v1290 = vsel %vm1288, %v1289, %v1042
        %v1291 = vshrl.u32 %v1290, 4
        %v1292 = vand.u32 %v1290, 15
        %v1293 = vsub.s32 0, %v1292
        %v1294 = vsel %vm1288, %v1293, %v1292
        %vm1295 = vcmp.ne.s32.totalorder %v1049, 0
        %vm1296 = vcmp.ne.s32.totalorder %v1056, 0
        %vm1297 = vcmp.ne.s32.totalorder %v1063, 0
        %vm1298 = vcmp.ne.s32.totalorder %v1070, 0
        %vm1299 = vcmp.ne.s32.totalorder %v1077, 0
        %vm1300 = vcmp.ne.s32.totalorder %v1084, 0
        %vm1301 = vcmp.ne.s32.totalorder %v1091, 0
        %vm1302 = vcmp.ne.s32.totalorder %v1098, 0
        %vm1303 = vcmp.ne.s32.totalorder %v1105, 0
        %vm1304 = vcmp.ne.s32.totalorder %v1112, 0
        %vm1305 = vcmp.ne.s32.totalorder %v1119, 0
        %vm1306 = vcmp.ne.s32.totalorder %v1126, 0
        %vm1307 = vcmp.ne.s32.totalorder %v1133, 0
        %vm1308 = vcmp.ne.s32.totalorder %v1140, 0
        %vm1309 = vcmp.ne.s32.totalorder %v1147, 0
        %vm1310 = vcmp.ne.s32.totalorder %v1154, 0
        %vm1311 = vcmp.ne.s32.totalorder %v1161, 0
        %vm1312 = vcmp.ne.s32.totalorder %v1168, 0
        %vm1313 = vcmp.ne.s32.totalorder %v1175, 0
        %vm1314 = vcmp.ne.s32.totalorder %v1182, 0
        %vm1315 = vcmp.ne.s32.totalorder %v1189, 0
        %vm1316 = vcmp.ne.s32.totalorder %v1196, 0
        %vm1317 = vcmp.ne.s32.totalorder %v1203, 0
        %vm1318 = vcmp.ne.s32.totalorder %v1210, 0
        %vm1319 = vcmp.ne.s32.totalorder %v1217, 0
        %vm1320 = vcmp.ne.s32.totalorder %v1224, 0
        %vm1321 = vcmp.ne.s32.totalorder %v1231, 0
        %vm1322 = vcmp.ne.s32.totalorder %v1238, 0
        %vm1323 = vcmp.ne.s32.totalorder %v1245, 0
        %vm1324 = vcmp.ne.s32.totalorder %v1252, 0
        %vm1325 = vcmp.ne.s32.totalorder %v1259, 0
        %vm1326 = vcmp.ne.s32.totalorder %v1266, 0
        %vm1327 = vcmp.ne.s32.totalorder %v1273, 0
        %vm1328 = vcmp.ne.s32.totalorder %v1280, 0
        %vm1329 = vcmp.ne.s32.totalorder %v1287, 0
        %vm1330 = vcmp.ne.s32.totalorder %v1294, 0
        %vm1331 = vcmp.lt.s32.totalorder %v1049, 0
        %vm1332 = vcmp.lt.s32.totalorder %v1056, 0
        %vm1333 = vcmp.lt.s32.totalorder %v1063, 0
        %vm1334 = vcmp.lt.s32.totalorder %v1070, 0
        %vm1335 = vcmp.lt.s32.totalorder %v1077, 0
        %vm1336 = vcmp.lt.s32.totalorder %v1084, 0
        %vm1337 = vcmp.lt.s32.totalorder %v1091, 0
        %vm1338 = vcmp.lt.s32.totalorder %v1098, 0
        %vm1339 = vcmp.lt.s32.totalorder %v1105, 0
        %vm1340 = vcmp.lt.s32.totalorder %v1112, 0
        %vm1341 = vcmp.lt.s32.totalorder %v1119, 0
        %vm1342 = vcmp.lt.s32.totalorder %v1126, 0
        %vm1343 = vcmp.lt.s32.totalorder %v1133, 0
        %vm1344 = vcmp.lt.s32.totalorder %v1140, 0
        %vm1345 = vcmp.lt.s32.totalorder %v1147, 0
        %vm1346 = vcmp.lt.s32.totalorder %v1154, 0
        %vm1347 = vcmp.lt.s32.totalorder %v1161, 0
        %vm1348 = vcmp.lt.s32.totalorder %v1168, 0
        %vm1349 = vcmp.lt.s32.totalorder %v1175, 0
        %vm1350 = vcmp.lt.s32.totalorder %v1182, 0
        %vm1351 = vcmp.lt.s32.totalorder %v1189, 0
        %vm1352 = vcmp.lt.s32.totalorder %v1196, 0
        %vm1353 = vcmp.lt.s32.totalorder %v1203, 0
        %vm1354 = vcmp.lt.s32.totalorder %v1210, 0
        %vm1355 = vcmp.lt.s32.totalorder %v1217, 0
        %vm1356 = vcmp.lt.s32.totalorder %v1224, 0
        %vm1357 = vcmp.lt.s32.totalorder %v1231, 0
        %vm1358 = vcmp.lt.s32.totalorder %v1238, 0
        %vm1359 = vcmp.lt.s32.totalorder %v1245, 0
        %vm1360 = vcmp.lt.s32.totalorder %v1252, 0
        %vm1361 = vcmp.lt.s32.totalorder %v1259, 0
        %vm1362 = vcmp.lt.s32.totalorder %v1266, 0
        %vm1363 = vcmp.lt.s32.totalorder %v1273, 0
        %vm1364 = vcmp.lt.s32.totalorder %v1280, 0
        %vm1365 = vcmp.lt.s32.totalorder %v1287, 0
        %vm1366 = vcmp.lt.s32.totalorder %v1294, 0
        %vm1367 = vmand %vm1331, %vm1295
        %vm1368 = vmand %vm1332, %vm1296
        %vm1369 = vmand %vm1333, %vm1297
        %vm1370 = vmand %vm1334, %vm1298
        %vm1371 = vmand %vm1335, %vm1299
        %vm1372 = vmand %vm1336, %vm1300
        %vm1373 = vmand %vm1337, %vm1301
        %vm1374 = vmand %vm1338, %vm1302
        %vm1375 = vmand %vm1339, %vm1303
        %vm1376 = vmand %vm1340, %vm1304
        %vm1377 = vmand %vm1341, %vm1305
        %vm1378 = vmand %vm1342, %vm1306
        %vm1379 = vmand %vm1343, %vm1307
        %vm1380 = vmand %vm1344, %vm1308
        %vm1381 = vmand %vm1345, %vm1309
        %vm1382 = vmand %vm1346, %vm1310
        %vm1383 = vmand %vm1347, %vm1311
        %vm1384 = vmand %vm1348, %vm1312
        %vm1385 = vmand %vm1349, %vm1313
        %vm1386 = vmand %vm1350, %vm1314
        %vm1387 = vmand %vm1351, %vm1315
        %vm1388 = vmand %vm1352, %vm1316
        %vm1389 = vmand %vm1353, %vm1317
        %vm1390 = vmand %vm1354, %vm1318
        %vm1391 = vmand %vm1355, %vm1319
        %vm1392 = vmand %vm1356, %vm1320
        %vm1393 = vmand %vm1357, %vm1321
        %vm1394 = vmand %vm1358, %vm1322
        %vm1395 = vmand %vm1359, %vm1323
        %vm1396 = vmand %vm1360, %vm1324
        %vm1397 = vmand %vm1361, %vm1325
        %vm1398 = vmand %vm1362, %vm1326
        %vm1399 = vmand %vm1363, %vm1327
        %vm1400 = vmand %vm1364, %vm1328
        %vm1401 = vmand %vm1365, %vm1329
        %vm1402 = vmand %vm1366, %vm1330
        %v1403 = vadd.s32 %v1049, 16
        %v1404 = vadd.s32 %v1056, 16
        %v1405 = vadd.s32 %v1063, 16
        %v1406 = vadd.s32 %v1070, 16
        %v1407 = vadd.s32 %v1077, 16
        %v1408 = vadd.s32 %v1084, 16
        %v1409 = vadd.s32 %v1091, 16
        %v1410 = vadd.s32 %v1098, 16
        %v1411 = vadd.s32 %v1105, 16
        %v1412 = vadd.s32 %v1112, 16
        %v1413 = vadd.s32 %v1119, 16
        %v1414 = vadd.s32 %v1126, 16
        %v1415 = vadd.s32 %v1133, 16
        %v1416 = vadd.s32 %v1140, 16
        %v1417 = vadd.s32 %v1147, 16
        %v1418 = vadd.s32 %v1154, 16
        %v1419 = vadd.s32 %v1161, 16
        %v1420 = vadd.s32 %v1168, 16
        %v1421 = vadd.s32 %v1175, 16
        %v1422 = vadd.s32 %v1182, 16
        %v1423 = vadd.s32 %v1189, 16
        %v1424 = vadd.s32 %v1196, 16
        %v1425 = vadd.s32 %v1203, 16
        %v1426 = vadd.s32 %v1210, 16
        %v1427 = vadd.s32 %v1217, 16
        %v1428 = vadd.s32 %v1224, 16
        %v1429 = vadd.s32 %v1231, 16
        %v1430 = vadd.s32 %v1238, 16
        %v1431 = vadd.s32 %v1245, 16
        %v1432 = vadd.s32 %v1252, 16
        %v1433 = vadd.s32 %v1259, 16
        %v1434 = vadd.s32 %v1266, 16
        %v1435 = vadd.s32 %v1273, 16
        %v1436 = vadd.s32 %v1280, 16
        %v1437 = vadd.s32 %v1287, 16
        %v1438 = vadd.s32 %v1294, 16
        %v1439 = vsel %vm1367, %v1403, %v1049
        %v1440 = vsel %vm1368, %v1404, %v1056
        %v1441 = vsel %vm1369, %v1405, %v1063
        %v1442 = vsel %vm1370, %v1406, %v1070
        %v1443 = vsel %vm1371, %v1407, %v1077
        %v1444 = vsel %vm1372, %v1408, %v1084
        %v1445 = vsel %vm1373, %v1409, %v1091
        %v1446 = vsel %vm1374, %v1410, %v1098
        %v1447 = vsel %vm1375, %v1411, %v1105
        %v1448 = vsel %vm1376, %v1412, %v1112
        %v1449 = vsel %vm1377, %v1413, %v1119
        %v1450 = vsel %vm1378, %v1414, %v1126
        %v1451 = vsel %vm1379, %v1415, %v1133
        %v1452 = vsel %vm1380, %v1416, %v1140
        %v1453 = vsel %vm1381, %v1417, %v1147
        %v1454 = vsel %vm1382, %v1418, %v1154
        %v1455 = vsel %vm1383, %v1419, %v1161
        %v1456 = vsel %vm1384, %v1420, %v1168
        %v1457 = vsel %vm1385, %v1421, %v1175
        %v1458 = vsel %vm1386, %v1422, %v1182
        %v1459 = vsel %vm1387, %v1423, %v1189
        %v1460 = vsel %vm1388, %v1424, %v1196
        %v1461 = vsel %vm1389, %v1425, %v1203
        %v1462 = vsel %vm1390, %v1426, %v1210
        %v1463 = vsel %vm1391, %v1427, %v1217
        %v1464 = vsel %vm1392, %v1428, %v1224
        %v1465 = vsel %vm1393, %v1429, %v1231
        %v1466 = vsel %vm1394, %v1430, %v1238
        %v1467 = vsel %vm1395, %v1431, %v1245
        %v1468 = vsel %vm1396, %v1432, %v1252
        %v1469 = vsel %vm1397, %v1433, %v1259
        %v1470 = vsel %vm1398, %v1434, %v1266
        %v1471 = vsel %vm1399, %v1435, %v1273
        %v1472 = vsel %vm1400, %v1436, %v1280
        %v1473 = vsel %vm1401, %v1437, %v1287
        %v1474 = vsel %vm1402, %v1438, %v1294
        %vm1475 = vcmp.eq.s32.totalorder %v1439, 0
        %vm1476 = vcmp.eq.s32.totalorder %v1440, 0
        %vm1477 = vcmp.eq.s32.totalorder %v1441, 0
        %vm1478 = vcmp.eq.s32.totalorder %v1442, 0
        %vm1479 = vcmp.eq.s32.totalorder %v1443, 0
        %vm1480 = vcmp.eq.s32.totalorder %v1444, 0
        %vm1481 = vcmp.eq.s32.totalorder %v1445, 0
        %vm1482 = vcmp.eq.s32.totalorder %v1446, 0
        %vm1483 = vcmp.eq.s32.totalorder %v1447, 0
        %vm1484 = vcmp.eq.s32.totalorder %v1448, 0
        %vm1485 = vcmp.eq.s32.totalorder %v1449, 0
        %vm1486 = vcmp.eq.s32.totalorder %v1450, 0
        %vm1487 = vcmp.eq.s32.totalorder %v1451, 0
        %vm1488 = vcmp.eq.s32.totalorder %v1452, 0
        %vm1489 = vcmp.eq.s32.totalorder %v1453, 0
        %vm1490 = vcmp.eq.s32.totalorder %v1454, 0
        %vm1491 = vcmp.eq.s32.totalorder %v1455, 0
        %vm1492 = vcmp.eq.s32.totalorder %v1456, 0
        %vm1493 = vcmp.eq.s32.totalorder %v1457, 0
        %vm1494 = vcmp.eq.s32.totalorder %v1458, 0
        %vm1495 = vcmp.eq.s32.totalorder %v1459, 0
        %vm1496 = vcmp.eq.s32.totalorder %v1460, 0
        %vm1497 = vcmp.eq.s32.totalorder %v1461, 0
        %vm1498 = vcmp.eq.s32.totalorder %v1462, 0
        %vm1499 = vcmp.eq.s32.totalorder %v1463, 0
        %vm1500 = vcmp.eq.s32.totalorder %v1464, 0
        %vm1501 = vcmp.eq.s32.totalorder %v1465, 0
        %vm1502 = vcmp.eq.s32.totalorder %v1466, 0
        %vm1503 = vcmp.eq.s32.totalorder %v1467, 0
        %vm1504 = vcmp.eq.s32.totalorder %v1468, 0
        %vm1505 = vcmp.eq.s32.totalorder %v1469, 0
        %vm1506 = vcmp.eq.s32.totalorder %v1470, 0
        %vm1507 = vcmp.eq.s32.totalorder %v1471, 0
        %vm1508 = vcmp.eq.s32.totalorder %v1472, 0
        %vm1509 = vcmp.eq.s32.totalorder %v1473, 0
        %vm1510 = vcmp.eq.s32.totalorder %v1474, 0
        %vm1511 = vcmp.eq.s32.totalorder %v1439, 15
        %vm1512 = vcmp.eq.s32.totalorder %v1440, 15
        %vm1513 = vcmp.eq.s32.totalorder %v1441, 15
        %vm1514 = vcmp.eq.s32.totalorder %v1442, 15
        %vm1515 = vcmp.eq.s32.totalorder %v1443, 15
        %vm1516 = vcmp.eq.s32.totalorder %v1444, 15
        %vm1517 = vcmp.eq.s32.totalorder %v1445, 15
        %vm1518 = vcmp.eq.s32.totalorder %v1446, 15
        %vm1519 = vcmp.eq.s32.totalorder %v1447, 15
        %vm1520 = vcmp.eq.s32.totalorder %v1448, 15
        %vm1521 = vcmp.eq.s32.totalorder %v1449, 15
        %vm1522 = vcmp.eq.s32.totalorder %v1450, 15
        %vm1523 = vcmp.eq.s32.totalorder %v1451, 15
        %vm1524 = vcmp.eq.s32.totalorder %v1452, 15
        %vm1525 = vcmp.eq.s32.totalorder %v1453, 15
        %vm1526 = vcmp.eq.s32.totalorder %v1454, 15
        %vm1527 = vcmp.eq.s32.totalorder %v1455, 15
        %vm1528 = vcmp.eq.s32.totalorder %v1456, 15
        %vm1529 = vcmp.eq.s32.totalorder %v1457, 15
        %vm1530 = vcmp.eq.s32.totalorder %v1458, 15
        %vm1531 = vcmp.eq.s32.totalorder %v1459, 15
        %vm1532 = vcmp.eq.s32.totalorder %v1460, 15
        %vm1533 = vcmp.eq.s32.totalorder %v1461, 15
        %vm1534 = vcmp.eq.s32.totalorder %v1462, 15
        %vm1535 = vcmp.eq.s32.totalorder %v1463, 15
        %vm1536 = vcmp.eq.s32.totalorder %v1464, 15
        %vm1537 = vcmp.eq.s32.totalorder %v1465, 15
        %vm1538 = vcmp.eq.s32.totalorder %v1466, 15
        %vm1539 = vcmp.eq.s32.totalorder %v1467, 15
        %vm1540 = vcmp.eq.s32.totalorder %v1468, 15
        %vm1541 = vcmp.eq.s32.totalorder %v1469, 15
        %vm1542 = vcmp.eq.s32.totalorder %v1470, 15
        %vm1543 = vcmp.eq.s32.totalorder %v1471, 15
        %vm1544 = vcmp.eq.s32.totalorder %v1472, 15
        %vm1545 = vcmp.eq.s32.totalorder %v1473, 15
        %vm1546 = vcmp.eq.s32.totalorder %v1474, 15
        %v1547 = vrot.slane %v974, 7
        %v1548 = vrot.slane %v975, 7
        %v1549 = vrot.slane %v976, 7
        %v1550 = vrot.slane %v977, 7
        %v1551 = vrot.slane %v978, 7
        %v1552 = vrot.slane %v979, 7
        %v1553 = vrot.slane %v980, 7
        %v1554 = vrot.slane %v981, 7
        %v1555 = vrot.slane %v982, 7
        %v1556 = vrot.slane %v983, 7
        %v1557 = vrot.slane %v984, 7
        %v1558 = vrot.slane %v985, 7
        %v1559 = vrot.slane %v986, 7
        %v1560 = vrot.slane %v987, 7
        %v1561 = vrot.slane %v988, 7
        %v1562 = vrot.slane %v989, 7
        %v1563 = vrot.slane %v990, 7
        %v1564 = vrot.slane %v991, 7
        %v1565 = vrot.slane %v992, 7
        %v1566 = vrot.slane %v993, 7
        %v1567 = vrot.slane %v994, 7
        %v1568 = vrot.slane %v995, 7
        %v1569 = vrot.slane %v996, 7
        %v1570 = vrot.slane %v997, 7
        %v1571 = vrot.slane %v998, 7
        %v1572 = vrot.slane %v999, 7
        %v1573 = vrot.slane %v1000, 7
        %v1574 = vrot.slane %v1001, 7
        %v1575 = vrot.slane %v1002, 7
        %v1576 = vrot.slane %v1003, 7
        %v1577 = vrot.slane %v1004, 7
        %v1578 = vrot.slane %v1005, 7
        %vm1579 = vcmp.lt.s32.totalorder %v1007, 1
        %v1580 = vsel %vm1579, %v1578, 0.0
        %v1581 = vsel %vm1579, %v1577, %v1578
        %v1582 = vsel %vm1579, %v1576, %v1577
        %v1583 = vsel %vm1579, %v1575, %v1576
        %v1584 = vsel %vm1579, %v1574, %v1575
        %v1585 = vsel %vm1579, %v1573, %v1574
        %v1586 = vsel %vm1579, %v1572, %v1573
        %v1587 = vsel %vm1579, %v1571, %v1572
        %v1588 = vsel %vm1579, %v1570, %v1571
        %v1589 = vsel %vm1579, %v1569, %v1570
        %v1590 = vsel %vm1579, %v1568, %v1569
        %v1591 = vsel %vm1579, %v1567, %v1568
        %v1592 = vsel %vm1579, %v1566, %v1567
        %v1593 = vsel %vm1579, %v1565, %v1566
        %v1594 = vsel %vm1579, %v1564, %v1565
        %v1595 = vsel %vm1579, %v1563, %v1564
        %v1596 = vsel %vm1579, %v1562, %v1563
        %v1597 = vsel %vm1579, %v1561, %v1562
        %v1598 = vsel %vm1579, %v1560, %v1561
        %v1599 = vsel %vm1579, %v1559, %v1560
        %v1600 = vsel %vm1579, %v1558, %v1559
        %v1601 = vsel %vm1579, %v1557, %v1558
        %v1602 = vsel %vm1579, %v1556, %v1557
        %v1603 = vsel %vm1579, %v1555, %v1556
        %v1604 = vsel %vm1579, %v1554, %v1555
        %v1605 = vsel %vm1579, %v1553, %v1554
        %v1606 = vsel %vm1579, %v1552, %v1553
        %v1607 = vsel %vm1579, %v1551, %v1552
        %v1608 = vsel %vm1579, %v1550, %v1551
        %v1609 = vsel %vm1579, %v1549, %v1550
        %v1610 = vsel %vm1579, %v1548, %v1549
        %v1611 = vsel %vm1579, %v1547, %v1548
        %v1612 = vsel %vm1579, 0.0, %v1547
        %v1613 = vpack.c.bf16 0.0, 0.0
        %v1614 = vpack.c.bf16 %v1611, %v1612
        %v1615 = vpack.c.bf16 %v1609, %v1610
        %v1616 = vpack.c.bf16 %v1607, %v1608
        %v1617 = vpack.c.bf16 %v1605, %v1606
        %v1618 = vpack.c.bf16 %v1603, %v1604
        %v1619 = vpack.c.bf16 %v1601, %v1602
        %v1620 = vpack.c.bf16 %v1599, %v1600
        %v1621 = vpack.c.bf16 %v1597, %v1598
        %v1622 = vpack.c.bf16 %v1595, %v1596
        %v1623 = vpack.c.bf16 %v1593, %v1594
        %v1624 = vpack.c.bf16 %v1591, %v1592
        %v1625 = vpack.c.bf16 %v1589, %v1590
        %v1626 = vpack.c.bf16 %v1587, %v1588
        %v1627 = vpack.c.bf16 %v1585, %v1586
        %v1628 = vpack.c.bf16 %v1583, %v1584
        %v1629 = vpack.c.bf16 %v1581, %v1582
        %v1630 = vpack.c.bf16 0.0, %v1580
        %v1631 = vsel %vm1475, 1, 0
        %v1632 = vsel %vm1476, 1, 0
        %v1633 = vsel %vm1477, 1, 0
        %v1634 = vsel %vm1478, 1, 0
        %v1635 = vsel %vm1479, 1, 0
        %v1636 = vsel %vm1480, 1, 0
        %v1637 = vsel %vm1481, 1, 0
        %v1638 = vsel %vm1482, 1, 0
        %v1639 = vsel %vm1483, 1, 0
        %v1640 = vsel %vm1484, 1, 0
        %v1641 = vsel %vm1485, 1, 0
        %v1642 = vsel %vm1486, 1, 0
        %v1643 = vsel %vm1487, 1, 0
        %v1644 = vsel %vm1488, 1, 0
        %v1645 = vsel %vm1489, 1, 0
        %v1646 = vsel %vm1490, 1, 0
        %v1647 = vsel %vm1491, 1, 0
        %v1648 = vsel %vm1492, 1, 0
        %v1649 = vsel %vm1493, 1, 0
        %v1650 = vsel %vm1494, 1, 0
        %v1651 = vsel %vm1495, 1, 0
        %v1652 = vsel %vm1496, 1, 0
        %v1653 = vsel %vm1497, 1, 0
        %v1654 = vsel %vm1498, 1, 0
        %v1655 = vsel %vm1499, 1, 0
        %v1656 = vsel %vm1500, 1, 0
        %v1657 = vsel %vm1501, 1, 0
        %v1658 = vsel %vm1502, 1, 0
        %v1659 = vsel %vm1503, 1, 0
        %v1660 = vsel %vm1504, 1, 0
        %v1661 = vsel %vm1505, 1, 0
        %v1662 = vsel %vm1506, 1, 0
        %v1663 = vsel %vm1507, 1, 0
        %v1664 = vsel %vm1508, 1, 0
        %v1665 = vsel %vm1509, 1, 0
        %v1666 = vsel %vm1510, 1, 0
        %vm1667 = vcmp.eq.s32.totalorder %v1631, 1
        %vm1668 = vcmp.eq.s32.totalorder %v1632, 1
        %vm1669 = vcmp.eq.s32.totalorder %v1633, 1
        %vm1670 = vcmp.eq.s32.totalorder %v1634, 1
        %vm1671 = vcmp.eq.s32.totalorder %v1635, 1
        %vm1672 = vcmp.eq.s32.totalorder %v1636, 1
        %vm1673 = vcmp.eq.s32.totalorder %v1637, 1
        %vm1674 = vcmp.eq.s32.totalorder %v1638, 1
        %vm1675 = vcmp.eq.s32.totalorder %v1639, 1
        %vm1676 = vcmp.eq.s32.totalorder %v1640, 1
        %vm1677 = vcmp.eq.s32.totalorder %v1641, 1
        %vm1678 = vcmp.eq.s32.totalorder %v1642, 1
        %vm1679 = vcmp.eq.s32.totalorder %v1643, 1
        %vm1680 = vcmp.eq.s32.totalorder %v1644, 1
        %vm1681 = vcmp.eq.s32.totalorder %v1645, 1
        %vm1682 = vcmp.eq.s32.totalorder %v1646, 1
        %vm1683 = vcmp.eq.s32.totalorder %v1647, 1
        %vm1684 = vcmp.eq.s32.totalorder %v1648, 1
        %vm1685 = vcmp.eq.s32.totalorder %v1649, 1
        %vm1686 = vcmp.eq.s32.totalorder %v1650, 1
        %vm1687 = vcmp.eq.s32.totalorder %v1651, 1
        %vm1688 = vcmp.eq.s32.totalorder %v1652, 1
        %vm1689 = vcmp.eq.s32.totalorder %v1653, 1
        %vm1690 = vcmp.eq.s32.totalorder %v1654, 1
        %vm1691 = vcmp.eq.s32.totalorder %v1655, 1
        %vm1692 = vcmp.eq.s32.totalorder %v1656, 1
        %vm1693 = vcmp.eq.s32.totalorder %v1657, 1
        %vm1694 = vcmp.eq.s32.totalorder %v1658, 1
        %vm1695 = vcmp.eq.s32.totalorder %v1659, 1
        %vm1696 = vcmp.eq.s32.totalorder %v1660, 1
        %vm1697 = vcmp.eq.s32.totalorder %v1661, 1
        %vm1698 = vcmp.eq.s32.totalorder %v1662, 1
        %vm1699 = vcmp.eq.s32.totalorder %v1663, 1
        %vm1700 = vcmp.eq.s32.totalorder %v1664, 1
        %vm1701 = vcmp.eq.s32.totalorder %v1665, 1
        %vm1702 = vcmp.eq.s32.totalorder %v1666, 1
        %vm1703 = vmpackc.low %vm1667, %vm1667
        %vm1704 = vmpackc.low %vm1668, %vm1668
        %vm1705 = vmpackc.low %vm1669, %vm1669
        %vm1706 = vmpackc.low %vm1670, %vm1670
        %vm1707 = vmpackc.low %vm1671, %vm1671
        %vm1708 = vmpackc.low %vm1672, %vm1672
        %vm1709 = vmpackc.low %vm1673, %vm1673
        %vm1710 = vmpackc.low %vm1674, %vm1674
        %vm1711 = vmpackc.low %vm1675, %vm1675
        %vm1712 = vmpackc.low %vm1676, %vm1676
        %vm1713 = vmpackc.low %vm1677, %vm1677
        %vm1714 = vmpackc.low %vm1678, %vm1678
        %vm1715 = vmpackc.low %vm1679, %vm1679
        %vm1716 = vmpackc.low %vm1680, %vm1680
        %vm1717 = vmpackc.low %vm1681, %vm1681
        %vm1718 = vmpackc.low %vm1682, %vm1682
        %vm1719 = vmpackc.low %vm1683, %vm1683
        %vm1720 = vmpackc.low %vm1684, %vm1684
        %vm1721 = vmpackc.low %vm1685, %vm1685
        %vm1722 = vmpackc.low %vm1686, %vm1686
        %vm1723 = vmpackc.low %vm1687, %vm1687
        %vm1724 = vmpackc.low %vm1688, %vm1688
        %vm1725 = vmpackc.low %vm1689, %vm1689
        %vm1726 = vmpackc.low %vm1690, %vm1690
        %vm1727 = vmpackc.low %vm1691, %vm1691
        %vm1728 = vmpackc.low %vm1692, %vm1692
        %vm1729 = vmpackc.low %vm1693, %vm1693
        %vm1730 = vmpackc.low %vm1694, %vm1694
        %vm1731 = vmpackc.low %vm1695, %vm1695
        %vm1732 = vmpackc.low %vm1696, %vm1696
        %vm1733 = vmpackc.low %vm1697, %vm1697
        %vm1734 = vmpackc.low %vm1698, %vm1698
        %vm1735 = vmpackc.low %vm1699, %vm1699
        %vm1736 = vmpackc.low %vm1700, %vm1700
        %vm1737 = vmpackc.low %vm1701, %vm1701
        %vm1738 = vmpackc.low %vm1702, %vm1702
        %v1739 = vsel %vm1703, 65537, 0
        %v1740 = vsel %vm1704, 65537, 0
        %v1741 = vsel %vm1705, 65537, 0
        %v1742 = vsel %vm1706, 65537, 0
        %v1743 = vsel %vm1707, 65537, 0
        %v1744 = vsel %vm1708, 65537, 0
        %v1745 = vsel %vm1709, 65537, 0
        %v1746 = vsel %vm1710, 65537, 0
        %v1747 = vsel %vm1711, 65537, 0
        %v1748 = vsel %vm1712, 65537, 0
        %v1749 = vsel %vm1713, 65537, 0
        %v1750 = vsel %vm1714, 65537, 0
        %v1751 = vsel %vm1715, 65537, 0
        %v1752 = vsel %vm1716, 65537, 0
        %v1753 = vsel %vm1717, 65537, 0
        %v1754 = vsel %vm1718, 65537, 0
        %v1755 = vsel %vm1719, 65537, 0
        %v1756 = vsel %vm1720, 65537, 0
        %v1757 = vsel %vm1721, 65537, 0
        %v1758 = vsel %vm1722, 65537, 0
        %v1759 = vsel %vm1723, 65537, 0
        %v1760 = vsel %vm1724, 65537, 0
        %v1761 = vsel %vm1725, 65537, 0
        %v1762 = vsel %vm1726, 65537, 0
        %v1763 = vsel %vm1727, 65537, 0
        %v1764 = vsel %vm1728, 65537, 0
        %v1765 = vsel %vm1729, 65537, 0
        %v1766 = vsel %vm1730, 65537, 0
        %v1767 = vsel %vm1731, 65537, 0
        %v1768 = vsel %vm1732, 65537, 0
        %v1769 = vsel %vm1733, 65537, 0
        %v1770 = vsel %vm1734, 65537, 0
        %v1771 = vsel %vm1735, 65537, 0
        %v1772 = vsel %vm1736, 65537, 0
        %v1773 = vsel %vm1737, 65537, 0
        %v1774 = vsel %vm1738, 65537, 0
        %v1775 = vunpack.c.l.b16 %v1739
        %v1776 = vunpack.c.l.b16 %v1740
        %v1777 = vunpack.c.l.b16 %v1741
        %v1778 = vunpack.c.l.b16 %v1742
        %v1779 = vunpack.c.l.b16 %v1743
        %v1780 = vunpack.c.l.b16 %v1744
        %v1781 = vunpack.c.l.b16 %v1745
        %v1782 = vunpack.c.l.b16 %v1746
        %v1783 = vunpack.c.l.b16 %v1747
        %v1784 = vunpack.c.l.b16 %v1748
        %v1785 = vunpack.c.l.b16 %v1749
        %v1786 = vunpack.c.l.b16 %v1750
        %v1787 = vunpack.c.l.b16 %v1751
        %v1788 = vunpack.c.l.b16 %v1752
        %v1789 = vunpack.c.l.b16 %v1753
        %v1790 = vunpack.c.l.b16 %v1754
        %v1791 = vunpack.c.l.b16 %v1755
        %v1792 = vunpack.c.l.b16 %v1756
        %v1793 = vunpack.c.l.b16 %v1757
        %v1794 = vunpack.c.l.b16 %v1758
        %v1795 = vunpack.c.l.b16 %v1759
        %v1796 = vunpack.c.l.b16 %v1760
        %v1797 = vunpack.c.l.b16 %v1761
        %v1798 = vunpack.c.l.b16 %v1762
        %v1799 = vunpack.c.l.b16 %v1763
        %v1800 = vunpack.c.l.b16 %v1764
        %v1801 = vunpack.c.l.b16 %v1765
        %v1802 = vunpack.c.l.b16 %v1766
        %v1803 = vunpack.c.l.b16 %v1767
        %v1804 = vunpack.c.l.b16 %v1768
        %v1805 = vunpack.c.l.b16 %v1769
        %v1806 = vunpack.c.l.b16 %v1770
        %v1807 = vunpack.c.l.b16 %v1771
        %v1808 = vunpack.c.l.b16 %v1772
        %v1809 = vunpack.c.l.b16 %v1773
        %v1810 = vunpack.c.l.b16 %v1774
        %v1811 = vpack.c.b16 %v1776, %v1775
        %v1812 = vpack.c.b16 %v1778, %v1777
        %v1813 = vpack.c.b16 %v1780, %v1779
        %v1814 = vpack.c.b16 %v1782, %v1781
        %v1815 = vpack.c.b16 %v1784, %v1783
        %v1816 = vpack.c.b16 %v1786, %v1785
        %v1817 = vpack.c.b16 %v1788, %v1787
        %v1818 = vpack.c.b16 %v1790, %v1789
        %v1819 = vpack.c.b16 %v1792, %v1791
        %v1820 = vpack.c.b16 %v1794, %v1793
        %v1821 = vpack.c.b16 %v1796, %v1795
        %v1822 = vpack.c.b16 %v1798, %v1797
        %v1823 = vpack.c.b16 %v1800, %v1799
        %v1824 = vpack.c.b16 %v1802, %v1801
        %v1825 = vpack.c.b16 %v1804, %v1803
        %v1826 = vpack.c.b16 %v1806, %v1805
        %v1827 = vpack.c.b16 %v1808, %v1807
        %v1828 = vpack.c.b16 %v1810, %v1809
        %vm1829 = vcmp.ne.s16.totalorder %v1811, 0
        %vm1830 = vcmp.ne.s16.totalorder %v1812, 0
        %vm1831 = vcmp.ne.s16.totalorder %v1813, 0
        %vm1832 = vcmp.ne.s16.totalorder %v1814, 0
        %vm1833 = vcmp.ne.s16.totalorder %v1815, 0
        %vm1834 = vcmp.ne.s16.totalorder %v1816, 0
        %vm1835 = vcmp.ne.s16.totalorder %v1817, 0
        %vm1836 = vcmp.ne.s16.totalorder %v1818, 0
        %vm1837 = vcmp.ne.s16.totalorder %v1819, 0
        %vm1838 = vcmp.ne.s16.totalorder %v1820, 0
        %vm1839 = vcmp.ne.s16.totalorder %v1821, 0
        %vm1840 = vcmp.ne.s16.totalorder %v1822, 0
        %vm1841 = vcmp.ne.s16.totalorder %v1823, 0
        %vm1842 = vcmp.ne.s16.totalorder %v1824, 0
        %vm1843 = vcmp.ne.s16.totalorder %v1825, 0
        %vm1844 = vcmp.ne.s16.totalorder %v1826, 0
        %vm1845 = vcmp.ne.s16.totalorder %v1827, 0
        %vm1846 = vcmp.ne.s16.totalorder %v1828, 0
        %v1847 = vsel %vm1829, 0, %v1613
        %v1848 = vsel %vm1830, 0, %v1614
        %v1849 = vsel %vm1831, 0, %v1615
        %v1850 = vsel %vm1832, 0, %v1616
        %v1851 = vsel %vm1833, 0, %v1617
        %v1852 = vsel %vm1834, 0, %v1618
        %v1853 = vsel %vm1835, 0, %v1619
        %v1854 = vsel %vm1836, 0, %v1620
        %v1855 = vsel %vm1837, 0, %v1621
        %v1856 = vsel %vm1838, 0, %v1622
        %v1857 = vsel %vm1839, 0, %v1623
        %v1858 = vsel %vm1840, 0, %v1624
        %v1859 = vsel %vm1841, 0, %v1625
        %v1860 = vsel %vm1842, 0, %v1626
        %v1861 = vsel %vm1843, 0, %v1627
        %v1862 = vsel %vm1844, 0, %v1628
        %v1863 = vsel %vm1845, 0, %v1629
        %v1864 = vsel %vm1846, 0, %v1630
        %v1865 = vrot.slane %v974, 1
        %v1866 = vrot.slane %v975, 1
        %v1867 = vrot.slane %v976, 1
        %v1868 = vrot.slane %v977, 1
        %v1869 = vrot.slane %v978, 1
        %v1870 = vrot.slane %v979, 1
        %v1871 = vrot.slane %v980, 1
        %v1872 = vrot.slane %v981, 1
        %v1873 = vrot.slane %v982, 1
        %v1874 = vrot.slane %v983, 1
        %v1875 = vrot.slane %v984, 1
        %v1876 = vrot.slane %v985, 1
        %v1877 = vrot.slane %v986, 1
        %v1878 = vrot.slane %v987, 1
        %v1879 = vrot.slane %v988, 1
        %v1880 = vrot.slane %v989, 1
        %v1881 = vrot.slane %v990, 1
        %v1882 = vrot.slane %v991, 1
        %v1883 = vrot.slane %v992, 1
        %v1884 = vrot.slane %v993, 1
        %v1885 = vrot.slane %v994, 1
        %v1886 = vrot.slane %v995, 1
        %v1887 = vrot.slane %v996, 1
        %v1888 = vrot.slane %v997, 1
        %v1889 = vrot.slane %v998, 1
        %v1890 = vrot.slane %v999, 1
        %v1891 = vrot.slane %v1000, 1
        %v1892 = vrot.slane %v1001, 1
        %v1893 = vrot.slane %v1002, 1
        %v1894 = vrot.slane %v1003, 1
        %v1895 = vrot.slane %v1004, 1
        %v1896 = vrot.slane %v1005, 1
        %vm1897 = vcmp.lt.s32.totalorder %v1007, 7
        %v1898 = vsel %vm1897, %v1896, 0.0
        %v1899 = vsel %vm1897, %v1895, %v1896
        %v1900 = vsel %vm1897, %v1894, %v1895
        %v1901 = vsel %vm1897, %v1893, %v1894
        %v1902 = vsel %vm1897, %v1892, %v1893
        %v1903 = vsel %vm1897, %v1891, %v1892
        %v1904 = vsel %vm1897, %v1890, %v1891
        %v1905 = vsel %vm1897, %v1889, %v1890
        %v1906 = vsel %vm1897, %v1888, %v1889
        %v1907 = vsel %vm1897, %v1887, %v1888
        %v1908 = vsel %vm1897, %v1886, %v1887
        %v1909 = vsel %vm1897, %v1885, %v1886
        %v1910 = vsel %vm1897, %v1884, %v1885
        %v1911 = vsel %vm1897, %v1883, %v1884
        %v1912 = vsel %vm1897, %v1882, %v1883
        %v1913 = vsel %vm1897, %v1881, %v1882
        %v1914 = vsel %vm1897, %v1880, %v1881
        %v1915 = vsel %vm1897, %v1879, %v1880
        %v1916 = vsel %vm1897, %v1878, %v1879
        %v1917 = vsel %vm1897, %v1877, %v1878
        %v1918 = vsel %vm1897, %v1876, %v1877
        %v1919 = vsel %vm1897, %v1875, %v1876
        %v1920 = vsel %vm1897, %v1874, %v1875
        %v1921 = vsel %vm1897, %v1873, %v1874
        %v1922 = vsel %vm1897, %v1872, %v1873
        %v1923 = vsel %vm1897, %v1871, %v1872
        %v1924 = vsel %vm1897, %v1870, %v1871
        %v1925 = vsel %vm1897, %v1869, %v1870
        %v1926 = vsel %vm1897, %v1868, %v1869
        %v1927 = vsel %vm1897, %v1867, %v1868
        %v1928 = vsel %vm1897, %v1866, %v1867
        %v1929 = vsel %vm1897, %v1865, %v1866
        %v1930 = vsel %vm1897, 0.0, %v1865
        %v1931 = vpack.c.bf16 %v1930, 0.0
        %v1932 = vpack.c.bf16 %v1928, %v1929
        %v1933 = vpack.c.bf16 %v1926, %v1927
        %v1934 = vpack.c.bf16 %v1924, %v1925
        %v1935 = vpack.c.bf16 %v1922, %v1923
        %v1936 = vpack.c.bf16 %v1920, %v1921
        %v1937 = vpack.c.bf16 %v1918, %v1919
        %v1938 = vpack.c.bf16 %v1916, %v1917
        %v1939 = vpack.c.bf16 %v1914, %v1915
        %v1940 = vpack.c.bf16 %v1912, %v1913
        %v1941 = vpack.c.bf16 %v1910, %v1911
        %v1942 = vpack.c.bf16 %v1908, %v1909
        %v1943 = vpack.c.bf16 %v1906, %v1907
        %v1944 = vpack.c.bf16 %v1904, %v1905
        %v1945 = vpack.c.bf16 %v1902, %v1903
        %v1946 = vpack.c.bf16 %v1900, %v1901
        %v1947 = vpack.c.bf16 %v1898, %v1899
        %v1948 = vpack.c.bf16 0.0, 0.0
        %v1949 = vsel %vm1511, 1, 0
        %v1950 = vsel %vm1512, 1, 0
        %v1951 = vsel %vm1513, 1, 0
        %v1952 = vsel %vm1514, 1, 0
        %v1953 = vsel %vm1515, 1, 0
        %v1954 = vsel %vm1516, 1, 0
        %v1955 = vsel %vm1517, 1, 0
        %v1956 = vsel %vm1518, 1, 0
        %v1957 = vsel %vm1519, 1, 0
        %v1958 = vsel %vm1520, 1, 0
        %v1959 = vsel %vm1521, 1, 0
        %v1960 = vsel %vm1522, 1, 0
        %v1961 = vsel %vm1523, 1, 0
        %v1962 = vsel %vm1524, 1, 0
        %v1963 = vsel %vm1525, 1, 0
        %v1964 = vsel %vm1526, 1, 0
        %v1965 = vsel %vm1527, 1, 0
        %v1966 = vsel %vm1528, 1, 0
        %v1967 = vsel %vm1529, 1, 0
        %v1968 = vsel %vm1530, 1, 0
        %v1969 = vsel %vm1531, 1, 0
        %v1970 = vsel %vm1532, 1, 0
        %v1971 = vsel %vm1533, 1, 0
        %v1972 = vsel %vm1534, 1, 0
        %v1973 = vsel %vm1535, 1, 0
        %v1974 = vsel %vm1536, 1, 0
        %v1975 = vsel %vm1537, 1, 0
        %v1976 = vsel %vm1538, 1, 0
        %v1977 = vsel %vm1539, 1, 0
        %v1978 = vsel %vm1540, 1, 0
        %v1979 = vsel %vm1541, 1, 0
        %v1980 = vsel %vm1542, 1, 0
        %v1981 = vsel %vm1543, 1, 0
        %v1982 = vsel %vm1544, 1, 0
        %v1983 = vsel %vm1545, 1, 0
        %v1984 = vsel %vm1546, 1, 0
        %vm1985 = vcmp.eq.s32.totalorder %v1949, 1
        %vm1986 = vcmp.eq.s32.totalorder %v1950, 1
        %vm1987 = vcmp.eq.s32.totalorder %v1951, 1
        %vm1988 = vcmp.eq.s32.totalorder %v1952, 1
        %vm1989 = vcmp.eq.s32.totalorder %v1953, 1
        %vm1990 = vcmp.eq.s32.totalorder %v1954, 1
        %vm1991 = vcmp.eq.s32.totalorder %v1955, 1
        %vm1992 = vcmp.eq.s32.totalorder %v1956, 1
        %vm1993 = vcmp.eq.s32.totalorder %v1957, 1
        %vm1994 = vcmp.eq.s32.totalorder %v1958, 1
        %vm1995 = vcmp.eq.s32.totalorder %v1959, 1
        %vm1996 = vcmp.eq.s32.totalorder %v1960, 1
        %vm1997 = vcmp.eq.s32.totalorder %v1961, 1
        %vm1998 = vcmp.eq.s32.totalorder %v1962, 1
        %vm1999 = vcmp.eq.s32.totalorder %v1963, 1
        %vm2000 = vcmp.eq.s32.totalorder %v1964, 1
        %vm2001 = vcmp.eq.s32.totalorder %v1965, 1
        %vm2002 = vcmp.eq.s32.totalorder %v1966, 1
        %vm2003 = vcmp.eq.s32.totalorder %v1967, 1
        %vm2004 = vcmp.eq.s32.totalorder %v1968, 1
        %vm2005 = vcmp.eq.s32.totalorder %v1969, 1
        %vm2006 = vcmp.eq.s32.totalorder %v1970, 1
        %vm2007 = vcmp.eq.s32.totalorder %v1971, 1
        %vm2008 = vcmp.eq.s32.totalorder %v1972, 1
        %vm2009 = vcmp.eq.s32.totalorder %v1973, 1
        %vm2010 = vcmp.eq.s32.totalorder %v1974, 1
        %vm2011 = vcmp.eq.s32.totalorder %v1975, 1
        %vm2012 = vcmp.eq.s32.totalorder %v1976, 1
        %vm2013 = vcmp.eq.s32.totalorder %v1977, 1
        %vm2014 = vcmp.eq.s32.totalorder %v1978, 1
        %vm2015 = vcmp.eq.s32.totalorder %v1979, 1
        %vm2016 = vcmp.eq.s32.totalorder %v1980, 1
        %vm2017 = vcmp.eq.s32.totalorder %v1981, 1
        %vm2018 = vcmp.eq.s32.totalorder %v1982, 1
        %vm2019 = vcmp.eq.s32.totalorder %v1983, 1
        %vm2020 = vcmp.eq.s32.totalorder %v1984, 1
        %vm2021 = vmpackc.low %vm1985, %vm1985
        %vm2022 = vmpackc.low %vm1986, %vm1986
        %vm2023 = vmpackc.low %vm1987, %vm1987
        %vm2024 = vmpackc.low %vm1988, %vm1988
        %vm2025 = vmpackc.low %vm1989, %vm1989
        %vm2026 = vmpackc.low %vm1990, %vm1990
        %vm2027 = vmpackc.low %vm1991, %vm1991
        %vm2028 = vmpackc.low %vm1992, %vm1992
        %vm2029 = vmpackc.low %vm1993, %vm1993
        %vm2030 = vmpackc.low %vm1994, %vm1994
        %vm2031 = vmpackc.low %vm1995, %vm1995
        %vm2032 = vmpackc.low %vm1996, %vm1996
        %vm2033 = vmpackc.low %vm1997, %vm1997
        %vm2034 = vmpackc.low %vm1998, %vm1998
        %vm2035 = vmpackc.low %vm1999, %vm1999
        %vm2036 = vmpackc.low %vm2000, %vm2000
        %vm2037 = vmpackc.low %vm2001, %vm2001
        %vm2038 = vmpackc.low %vm2002, %vm2002
        %vm2039 = vmpackc.low %vm2003, %vm2003
        %vm2040 = vmpackc.low %vm2004, %vm2004
        %vm2041 = vmpackc.low %vm2005, %vm2005
        %vm2042 = vmpackc.low %vm2006, %vm2006
        %vm2043 = vmpackc.low %vm2007, %vm2007
        %vm2044 = vmpackc.low %vm2008, %vm2008
        %vm2045 = vmpackc.low %vm2009, %vm2009
        %vm2046 = vmpackc.low %vm2010, %vm2010
        %vm2047 = vmpackc.low %vm2011, %vm2011
        %vm2048 = vmpackc.low %vm2012, %vm2012
        %vm2049 = vmpackc.low %vm2013, %vm2013
        %vm2050 = vmpackc.low %vm2014, %vm2014
        %vm2051 = vmpackc.low %vm2015, %vm2015
        %vm2052 = vmpackc.low %vm2016, %vm2016
        %vm2053 = vmpackc.low %vm2017, %vm2017
        %vm2054 = vmpackc.low %vm2018, %vm2018
        %vm2055 = vmpackc.low %vm2019, %vm2019
        %vm2056 = vmpackc.low %vm2020, %vm2020
        %v2057 = vsel %vm2021, 65537, 0
        %v2058 = vsel %vm2022, 65537, 0
        %v2059 = vsel %vm2023, 65537, 0
        %v2060 = vsel %vm2024, 65537, 0
        %v2061 = vsel %vm2025, 65537, 0
        %v2062 = vsel %vm2026, 65537, 0
        %v2063 = vsel %vm2027, 65537, 0
        %v2064 = vsel %vm2028, 65537, 0
        %v2065 = vsel %vm2029, 65537, 0
        %v2066 = vsel %vm2030, 65537, 0
        %v2067 = vsel %vm2031, 65537, 0
        %v2068 = vsel %vm2032, 65537, 0
        %v2069 = vsel %vm2033, 65537, 0
        %v2070 = vsel %vm2034, 65537, 0
        %v2071 = vsel %vm2035, 65537, 0
        %v2072 = vsel %vm2036, 65537, 0
        %v2073 = vsel %vm2037, 65537, 0
        %v2074 = vsel %vm2038, 65537, 0
        %v2075 = vsel %vm2039, 65537, 0
        %v2076 = vsel %vm2040, 65537, 0
        %v2077 = vsel %vm2041, 65537, 0
        %v2078 = vsel %vm2042, 65537, 0
        %v2079 = vsel %vm2043, 65537, 0
        %v2080 = vsel %vm2044, 65537, 0
        %v2081 = vsel %vm2045, 65537, 0
        %v2082 = vsel %vm2046, 65537, 0
        %v2083 = vsel %vm2047, 65537, 0
        %v2084 = vsel %vm2048, 65537, 0
        %v2085 = vsel %vm2049, 65537, 0
        %v2086 = vsel %vm2050, 65537, 0
        %v2087 = vsel %vm2051, 65537, 0
        %v2088 = vsel %vm2052, 65537, 0
        %v2089 = vsel %vm2053, 65537, 0
        %v2090 = vsel %vm2054, 65537, 0
        %v2091 = vsel %vm2055, 65537, 0
        %v2092 = vsel %vm2056, 65537, 0
        %v2093 = vunpack.c.l.b16 %v2057
        %v2094 = vunpack.c.l.b16 %v2058
        %v2095 = vunpack.c.l.b16 %v2059
        %v2096 = vunpack.c.l.b16 %v2060
        %v2097 = vunpack.c.l.b16 %v2061
        %v2098 = vunpack.c.l.b16 %v2062
        %v2099 = vunpack.c.l.b16 %v2063
        %v2100 = vunpack.c.l.b16 %v2064
        %v2101 = vunpack.c.l.b16 %v2065
        %v2102 = vunpack.c.l.b16 %v2066
        %v2103 = vunpack.c.l.b16 %v2067
        %v2104 = vunpack.c.l.b16 %v2068
        %v2105 = vunpack.c.l.b16 %v2069
        %v2106 = vunpack.c.l.b16 %v2070
        %v2107 = vunpack.c.l.b16 %v2071
        %v2108 = vunpack.c.l.b16 %v2072
        %v2109 = vunpack.c.l.b16 %v2073
        %v2110 = vunpack.c.l.b16 %v2074
        %v2111 = vunpack.c.l.b16 %v2075
        %v2112 = vunpack.c.l.b16 %v2076
        %v2113 = vunpack.c.l.b16 %v2077
        %v2114 = vunpack.c.l.b16 %v2078
        %v2115 = vunpack.c.l.b16 %v2079
        %v2116 = vunpack.c.l.b16 %v2080
        %v2117 = vunpack.c.l.b16 %v2081
        %v2118 = vunpack.c.l.b16 %v2082
        %v2119 = vunpack.c.l.b16 %v2083
        %v2120 = vunpack.c.l.b16 %v2084
        %v2121 = vunpack.c.l.b16 %v2085
        %v2122 = vunpack.c.l.b16 %v2086
        %v2123 = vunpack.c.l.b16 %v2087
        %v2124 = vunpack.c.l.b16 %v2088
        %v2125 = vunpack.c.l.b16 %v2089
        %v2126 = vunpack.c.l.b16 %v2090
        %v2127 = vunpack.c.l.b16 %v2091
        %v2128 = vunpack.c.l.b16 %v2092
        %v2129 = vpack.c.b16 %v2094, %v2093
        %v2130 = vpack.c.b16 %v2096, %v2095
        %v2131 = vpack.c.b16 %v2098, %v2097
        %v2132 = vpack.c.b16 %v2100, %v2099
        %v2133 = vpack.c.b16 %v2102, %v2101
        %v2134 = vpack.c.b16 %v2104, %v2103
        %v2135 = vpack.c.b16 %v2106, %v2105
        %v2136 = vpack.c.b16 %v2108, %v2107
        %v2137 = vpack.c.b16 %v2110, %v2109
        %v2138 = vpack.c.b16 %v2112, %v2111
        %v2139 = vpack.c.b16 %v2114, %v2113
        %v2140 = vpack.c.b16 %v2116, %v2115
        %v2141 = vpack.c.b16 %v2118, %v2117
        %v2142 = vpack.c.b16 %v2120, %v2119
        %v2143 = vpack.c.b16 %v2122, %v2121
        %v2144 = vpack.c.b16 %v2124, %v2123
        %v2145 = vpack.c.b16 %v2126, %v2125
        %v2146 = vpack.c.b16 %v2128, %v2127
        %vm2147 = vcmp.ne.s16.totalorder %v2129, 0
        %vm2148 = vcmp.ne.s16.totalorder %v2130, 0
        %vm2149 = vcmp.ne.s16.totalorder %v2131, 0
        %vm2150 = vcmp.ne.s16.totalorder %v2132, 0
        %vm2151 = vcmp.ne.s16.totalorder %v2133, 0
        %vm2152 = vcmp.ne.s16.totalorder %v2134, 0
        %vm2153 = vcmp.ne.s16.totalorder %v2135, 0
        %vm2154 = vcmp.ne.s16.totalorder %v2136, 0
        %vm2155 = vcmp.ne.s16.totalorder %v2137, 0
        %vm2156 = vcmp.ne.s16.totalorder %v2138, 0
        %vm2157 = vcmp.ne.s16.totalorder %v2139, 0
        %vm2158 = vcmp.ne.s16.totalorder %v2140, 0
        %vm2159 = vcmp.ne.s16.totalorder %v2141, 0
        %vm2160 = vcmp.ne.s16.totalorder %v2142, 0
        %vm2161 = vcmp.ne.s16.totalorder %v2143, 0
        %vm2162 = vcmp.ne.s16.totalorder %v2144, 0
        %vm2163 = vcmp.ne.s16.totalorder %v2145, 0
        %vm2164 = vcmp.ne.s16.totalorder %v2146, 0
        %v2165 = vsel %vm2147, 0, %v1931
        %v2166 = vsel %vm2148, 0, %v1932
        %v2167 = vsel %vm2149, 0, %v1933
        %v2168 = vsel %vm2150, 0, %v1934
        %v2169 = vsel %vm2151, 0, %v1935
        %v2170 = vsel %vm2152, 0, %v1936
        %v2171 = vsel %vm2153, 0, %v1937
        %v2172 = vsel %vm2154, 0, %v1938
        %v2173 = vsel %vm2155, 0, %v1939
        %v2174 = vsel %vm2156, 0, %v1940
        %v2175 = vsel %vm2157, 0, %v1941
        %v2176 = vsel %vm2158, 0, %v1942
        %v2177 = vsel %vm2159, 0, %v1943
        %v2178 = vsel %vm2160, 0, %v1944
        %v2179 = vsel %vm2161, 0, %v1945
        %v2180 = vsel %vm2162, 0, %v1946
        %v2181 = vsel %vm2163, 0, %v1947
        %v2182 = vsel %vm2164, 0, %v1948
        %v2183 = vpack.c.bf16 0.0, 0.0
        %v2184 = vpack.c.bf16 %v975, %v974
        %v2185 = vpack.c.bf16 %v977, %v976
        %v2186 = vpack.c.bf16 %v979, %v978
        %v2187 = vpack.c.bf16 %v981, %v980
        %v2188 = vpack.c.bf16 %v983, %v982
        %v2189 = vpack.c.bf16 %v985, %v984
        %v2190 = vpack.c.bf16 %v987, %v986
        %v2191 = vpack.c.bf16 %v989, %v988
        %v2192 = vpack.c.bf16 %v991, %v990
        %v2193 = vpack.c.bf16 %v993, %v992
        %v2194 = vpack.c.bf16 %v995, %v994
        %v2195 = vpack.c.bf16 %v997, %v996
        %v2196 = vpack.c.bf16 %v999, %v998
        %v2197 = vpack.c.bf16 %v1001, %v1000
        %v2198 = vpack.c.bf16 %v1003, %v1002
        %v2199 = vpack.c.bf16 %v1005, %v1004
        %v2200 = vld [vmem:[#allocation7] sm:$0xf]
        %v2201 = vld [vmem:[#allocation7 + $0x4] sm:$0xf]
        %v2202 = vld [vmem:[#allocation7 + $0x8] sm:$0xf]
        %v2203 = vld [vmem:[#allocation7 + $0xc] sm:$0xf]
        %v2204 = vld [vmem:[#allocation7 + $0x10] sm:$0xf]
        %v2205 = vld [vmem:[#allocation7 + $0x14] sm:$0xf]
        %v2206 = vld [vmem:[#allocation7 + $0x18] sm:$0xf]
        %v2207 = vld [vmem:[#allocation7 + $0x1c] sm:$0xf]
        %v2208 = vld [vmem:[#allocation7 + $0x20] sm:$0xf]
        %v2209 = vld [vmem:[#allocation7 + $0x24] sm:$0xf]
        %v2210 = vld [vmem:[#allocation7 + $0x28] sm:$0xf]
        %v2211 = vld [vmem:[#allocation7 + $0x2c] sm:$0xf]
        %v2212 = vld [vmem:[#allocation7 + $0x30] sm:$0xf]
        %v2213 = vld [vmem:[#allocation7 + $0x34] sm:$0xf]
        %v2214 = vld [vmem:[#allocation7 + $0x38] sm:$0xf]
        %v2215 = vld [vmem:[#allocation7 + $0x3c] sm:$0xf]
        %v2216 = vld [vmem:[#allocation7 + $0x40] sm:$0xf]
        %v2217 = vld [vmem:[#allocation7 + $0x44] sm:$0xf]
        %v2218 = vld [vmem:[#allocation7 + $0x48] sm:$0xf]
        %v2219 = vld [vmem:[#allocation7 + $0x4c] sm:$0xf]
        %v2220 = vld [vmem:[#allocation7 + $0x50] sm:$0xf]
        %v2221 = vld [vmem:[#allocation7 + $0x54] sm:$0xf]
        %v2222 = vld [vmem:[#allocation7 + $0x58] sm:$0xf]
        %v2223 = vld [vmem:[#allocation7 + $0x5c] sm:$0xf]
        %v2224 = vld [vmem:[#allocation7 + $0x60] sm:$0xf]
        %v2225 = vld [vmem:[#allocation7 + $0x64] sm:$0xf]
        %v2226 = vld [vmem:[#allocation7 + $0x68] sm:$0xf]
        %v2227 = vld [vmem:[#allocation7 + $0x6c] sm:$0xf]
        %v2228 = vld [vmem:[#allocation7 + $0x70] sm:$0xf]
        %v2229 = vld [vmem:[#allocation7 + $0x74] sm:$0xf]
        %v2230 = vld [vmem:[#allocation7 + $0x78] sm:$0xf]
        %v2231 = vld [vmem:[#allocation7 + $0x7c] sm:$0xf]
        %v2232 = vld [vmem:[#allocation7 + $0x80] sm:$0xf]
        %v2233 = vld [vmem:[#allocation7 + $0x84] sm:$0xf]
        %v2234 = vld [vmem:[#allocation7 + $0x88] sm:$0xf]
        %v2235 = vld [vmem:[#allocation7 + $0x8c] sm:$0xf]
        %v2236 = vld [vmem:[#allocation7 + $0x90] sm:$0xf]
        %v2237 = vld [vmem:[#allocation7 + $0x94] sm:$0xf]
        %v2238 = vld [vmem:[#allocation7 + $0x98] sm:$0xf]
        %v2239 = vld [vmem:[#allocation7 + $0x9c] sm:$0xf]
        %v2240 = vld [vmem:[#allocation7 + $0xa0] sm:$0xf]
        %v2241 = vld [vmem:[#allocation7 + $0xa4] sm:$0xf]
        %v2242 = vld [vmem:[#allocation7 + $0xa8] sm:$0xf]
        %v2243 = vld [vmem:[#allocation7 + $0xac] sm:$0xf]
        %v2244 = vld [vmem:[#allocation7 + $0xb0] sm:$0xf]
        %v2245 = vld [vmem:[#allocation7 + $0xb4] sm:$0xf]
        %v2246 = vld [vmem:[#allocation7 + $0xb8] sm:$0xf]
        %v2247 = vld [vmem:[#allocation7 + $0xbc] sm:$0xf]
        %s2248 = scalar_lea.vmem [#allocation7], 192
        %v2249 = vld [vmem:[%s2248] sm:$0xf]
        %v2250 = vld [vmem:[%s2248 + $0x4] sm:$0xf]
        %v2251 = vld [vmem:[%s2248 + $0x8] sm:$0xf]
        %v2252 = vld [vmem:[%s2248 + $0xc] sm:$0xf]
        %v2253 = vld [vmem:[%s2248 + $0x10] sm:$0xf]
        %v2254 = vld [vmem:[%s2248 + $0x14] sm:$0xf]
        %v2255 = vld [vmem:[%s2248 + $0x18] sm:$0xf]
        %v2256 = vld [vmem:[%s2248 + $0x1c] sm:$0xf]
        %v2257 = vld [vmem:[%s2248 + $0x20] sm:$0xf]
        %v2258 = vld [vmem:[%s2248 + $0x24] sm:$0xf]
        %v2259 = vld [vmem:[%s2248 + $0x28] sm:$0xf]
        %v2260 = vld [vmem:[%s2248 + $0x2c] sm:$0xf]
        %v2261 = vld [vmem:[%s2248 + $0x30] sm:$0xf]
        %v2262 = vld [vmem:[%s2248 + $0x34] sm:$0xf]
        %v2263 = vld [vmem:[%s2248 + $0x38] sm:$0xf]
        %v2264 = vld [vmem:[%s2248 + $0x3c] sm:$0xf]
        %v2265 = vld [vmem:[%s2248 + $0x40] sm:$0xf]
        %v2266 = vld [vmem:[%s2248 + $0x44] sm:$0xf]
        %v2267 = vld [vmem:[%s2248 + $0x48] sm:$0xf]
        %v2268 = vld [vmem:[%s2248 + $0x4c] sm:$0xf]
        %v2269 = vld [vmem:[%s2248 + $0x50] sm:$0xf]
        %v2270 = vld [vmem:[%s2248 + $0x54] sm:$0xf]
        %v2271 = vld [vmem:[%s2248 + $0x58] sm:$0xf]
        %v2272 = vld [vmem:[%s2248 + $0x5c] sm:$0xf]
        %v2273 = vld [vmem:[%s2248 + $0x60] sm:$0xf]
        %v2274 = vld [vmem:[%s2248 + $0x64] sm:$0xf]
        %v2275 = vld [vmem:[%s2248 + $0x68] sm:$0xf]
        %v2276 = vld [vmem:[%s2248 + $0x6c] sm:$0xf]
        %v2277 = vld [vmem:[%s2248 + $0x70] sm:$0xf]
        %v2278 = vld [vmem:[%s2248 + $0x74] sm:$0xf]
        %v2279 = vld [vmem:[%s2248 + $0x78] sm:$0xf]
        %v2280 = vld [vmem:[%s2248 + $0x7c] sm:$0xf]
        %v2281 = vld [vmem:[%s2248 + $0x80] sm:$0xf]
        %v2282 = vld [vmem:[%s2248 + $0x84] sm:$0xf]
        %v2283 = vld [vmem:[%s2248 + $0x88] sm:$0xf]
        %v2284 = vld [vmem:[%s2248 + $0x8c] sm:$0xf]
        %v2285 = vld [vmem:[%s2248 + $0x90] sm:$0xf]
        %v2286 = vld [vmem:[%s2248 + $0x94] sm:$0xf]
        %v2287 = vld [vmem:[%s2248 + $0x98] sm:$0xf]
        %v2288 = vld [vmem:[%s2248 + $0x9c] sm:$0xf]
        %v2289 = vld [vmem:[%s2248 + $0xa0] sm:$0xf]
        %v2290 = vld [vmem:[%s2248 + $0xa4] sm:$0xf]
        %v2291 = vld [vmem:[%s2248 + $0xa8] sm:$0xf]
        %v2292 = vld [vmem:[%s2248 + $0xac] sm:$0xf]
        %v2293 = vld [vmem:[%s2248 + $0xb0] sm:$0xf]
        %v2294 = vld [vmem:[%s2248 + $0xb4] sm:$0xf]
        %v2295 = vld [vmem:[%s2248 + $0xb8] sm:$0xf]
        %v2296 = vld [vmem:[%s2248 + $0xbc] sm:$0xf]
        %v2345 = vunpack.c.l.b16 %v2249
        %v2346 = vunpack.c.l.b16 %v2250
        %v2347 = vunpack.c.l.b16 %v2251
        %v2348 = vunpack.c.l.b16 %v2252
        %v2349 = vunpack.c.l.b16 %v2253
        %v2350 = vunpack.c.l.b16 %v2254
        %v2351 = vunpack.c.l.b16 %v2255
        %v2352 = vunpack.c.l.b16 %v2256
        %v2353 = vunpack.c.l.b16 %v2257
        %v2354 = vunpack.c.l.b16 %v2258
        %v2355 = vunpack.c.l.b16 %v2259
        %v2356 = vunpack.c.l.b16 %v2260
        %v2357 = vunpack.c.l.b16 %v2261
        %v2358 = vunpack.c.l.b16 %v2262
        %v2359 = vunpack.c.l.b16 %v2263
        %v2360 = vunpack.c.l.b16 %v2264
        %v2361 = vunpack.c.l.b16 %v2265
        %v2362 = vunpack.c.l.b16 %v2266
        %v2363 = vunpack.c.l.b16 %v2267
        %v2364 = vunpack.c.l.b16 %v2268
        %v2365 = vunpack.c.l.b16 %v2269
        %v2366 = vunpack.c.l.b16 %v2270
        %v2367 = vunpack.c.l.b16 %v2271
        %v2368 = vunpack.c.l.b16 %v2272
        %v2369 = vunpack.c.l.b16 %v2273
        %v2370 = vunpack.c.l.b16 %v2274
        %v2371 = vunpack.c.l.b16 %v2275
        %v2372 = vunpack.c.l.b16 %v2276
        %v2373 = vunpack.c.l.b16 %v2277
        %v2374 = vunpack.c.l.b16 %v2278
        %v2375 = vunpack.c.l.b16 %v2279
        %v2376 = vunpack.c.l.b16 %v2280
        %v2377 = vunpack.c.l.b16 %v2281
        %v2378 = vunpack.c.l.b16 %v2282
        %v2379 = vunpack.c.l.b16 %v2283
        %v2380 = vunpack.c.l.b16 %v2284
        %v2381 = vunpack.c.l.b16 %v2285
        %v2382 = vunpack.c.l.b16 %v2286
        %v2383 = vunpack.c.l.b16 %v2287
        %v2384 = vunpack.c.l.b16 %v2288
        %v2385 = vunpack.c.l.b16 %v2289
        %v2386 = vunpack.c.l.b16 %v2290
        %v2387 = vunpack.c.l.b16 %v2291
        %v2388 = vunpack.c.l.b16 %v2292
        %v2389 = vunpack.c.l.b16 %v2293
        %v2390 = vunpack.c.l.b16 %v2294
        %v2391 = vunpack.c.l.b16 %v2295
        %v2392 = vunpack.c.l.b16 %v2296
        %v2393 = vpack.c.b16 %v2346, %v2345
        %v2394 = vpack.c.b16 %v2348, %v2347
        %v2395 = vpack.c.b16 %v2350, %v2349
        %v2396 = vpack.c.b16 %v2352, %v2351
        %v2397 = vpack.c.b16 %v2354, %v2353
        %v2398 = vpack.c.b16 %v2356, %v2355
        %v2399 = vpack.c.b16 %v2358, %v2357
        %v2400 = vpack.c.b16 %v2360, %v2359
        %v2401 = vpack.c.b16 %v2362, %v2361
        %v2402 = vpack.c.b16 %v2364, %v2363
        %v2403 = vpack.c.b16 %v2366, %v2365
        %v2404 = vpack.c.b16 %v2368, %v2367
        %v2405 = vpack.c.b16 %v2370, %v2369
        %v2406 = vpack.c.b16 %v2372, %v2371
        %v2407 = vpack.c.b16 %v2374, %v2373
        %v2408 = vpack.c.b16 %v2376, %v2375
        %v2409 = vpack.c.b16 %v2378, %v2377
        %v2410 = vpack.c.b16 %v2380, %v2379
        %v2411 = vpack.c.b16 %v2382, %v2381
        %v2412 = vpack.c.b16 %v2384, %v2383
        %v2413 = vpack.c.b16 %v2386, %v2385
        %v2414 = vpack.c.b16 %v2388, %v2387
        %v2415 = vpack.c.b16 %v2390, %v2389
        %v2416 = vpack.c.b16 %v2392, %v2391
        %2441 = vmatprep.subr.bf16.mxu0 0
        %2442 = vmatpush1.bf16.msra.mxu0 %v2400
        %2443 = vmatprep.subr.bf16.mxu0 0
        %2444 = vmatpush1.bf16.msra.mxu0 %v2399
        %2445 = vmatprep.subr.bf16.mxu0 0
        %2446 = vmatpush1.bf16.msra.mxu0 %v2398
        %2447 = vmatprep.subr.bf16.mxu0 0
        %2448 = vmatpush1.bf16.msra.mxu0 %v2397
        %2449 = vmatprep.subr.bf16.mxu0 0
        %2450 = vmatpush1.bf16.msra.mxu0 %v2396
        %2451 = vmatprep.subr.bf16.mxu0 0
        %2452 = vmatpush1.bf16.msra.mxu0 %v2395
        %2453 = vmatprep.subr.bf16.mxu0 0
        %2454 = vmatpush1.bf16.msra.mxu0 %v2394
        %2455 = vmatprep.subr.bf16.mxu0 0
        %2456 = vmatpush1.bf16.msra.mxu0 %v2393
        %2457 = vmatprep.subr.bf16.mxu0 0
        %2458 = vmatpush2.bf16.msra.mxu0 %v2408
        %2459 = vmatprep.subr.bf16.mxu0 0
        %2460 = vmatpush2.bf16.msra.mxu0 %v2407
        %2461 = vmatprep.subr.bf16.mxu0 0
        %2462 = vmatpush2.bf16.msra.mxu0 %v2406
        %2463 = vmatprep.subr.bf16.mxu0 0
        %2464 = vmatpush2.bf16.msra.mxu0 %v2405
        %2465 = vmatprep.subr.bf16.mxu0 0
        %2466 = vmatpush2.bf16.msra.mxu0 %v2404
        %2467 = vmatprep.subr.bf16.mxu0 0
        %2468 = vmatpush2.bf16.msra.mxu0 %v2403
        %2469 = vmatprep.subr.bf16.mxu0 0
        %2470 = vmatpush2.bf16.msra.mxu0 %v2402
        %2471 = vmatprep.subr.bf16.mxu0 0
        %2472 = vmatpush2.bf16.msra.mxu0 %v2401
        %2473 = vmatprep.mubr.bf16.mxu0 %v2184
        %2474 = vmatmul.mubr.bf16.gmra.mxu0 %v1848
        %v2475 = vpop.f32.mrf.mxu0
        %v2476 = vadd.f32 0.0, %v2475
        %v2477 = vpop.f32.mrf.mxu0
        %v2478 = vpop.f32.mrf.mxu0
        %v2479 = vadd.f32 0.0, %v2478
        %v2480 = vpop.f32.mrf.mxu0
        %2481 = vmatprep.mubr.bf16.mxu0 %v2185
        %2482 = vmatmul.mubr.bf16.gmra.mxu0 %v1849
        %v2483 = vpop.f32.mrf.mxu0
        %v2484 = vadd.f32 0.0, %v2483
        %v2485 = vpop.f32.mrf.mxu0
        %v2486 = vpop.f32.mrf.mxu0
        %v2487 = vadd.f32 0.0, %v2486
        %v2488 = vpop.f32.mrf.mxu0
        %2489 = vmatprep.mubr.bf16.mxu0 %v2186
        %2490 = vmatmul.mubr.bf16.gmra.mxu0 %v1850
        %v2491 = vpop.f32.mrf.mxu0
        %v2492 = vadd.f32 0.0, %v2491
        %v2493 = vpop.f32.mrf.mxu0
        %v2494 = vpop.f32.mrf.mxu0
        %v2495 = vadd.f32 0.0, %v2494
        %v2496 = vpop.f32.mrf.mxu0
        %2497 = vmatprep.mubr.bf16.mxu0 %v2187
        %2498 = vmatmul.mubr.bf16.gmra.mxu0 %v1851
        %v2499 = vpop.f32.mrf.mxu0
        %v2500 = vadd.f32 0.0, %v2499
        %v2501 = vpop.f32.mrf.mxu0
        %v2502 = vpop.f32.mrf.mxu0
        %v2503 = vadd.f32 0.0, %v2502
        %v2504 = vpop.f32.mrf.mxu0
        %2505 = vmatprep.mubr.bf16.mxu0 %v2188
        %2506 = vmatmul.mubr.bf16.gmra.mxu0 %v1852
        %v2507 = vpop.f32.mrf.mxu0
        %v2508 = vadd.f32 0.0, %v2507
        %v2509 = vpop.f32.mrf.mxu0
        %v2510 = vpop.f32.mrf.mxu0
        %v2511 = vadd.f32 0.0, %v2510
        %v2512 = vpop.f32.mrf.mxu0
        %2513 = vmatprep.mubr.bf16.mxu0 %v2189
        %2514 = vmatmul.mubr.bf16.gmra.mxu0 %v1853
        %v2515 = vpop.f32.mrf.mxu0
        %v2516 = vadd.f32 0.0, %v2515
        %v2517 = vpop.f32.mrf.mxu0
        %v2518 = vpop.f32.mrf.mxu0
        %v2519 = vadd.f32 0.0, %v2518
        %v2520 = vpop.f32.mrf.mxu0
        %2521 = vmatprep.mubr.bf16.mxu0 %v2190
        %2522 = vmatmul.mubr.bf16.gmra.mxu0 %v1854
        %v2523 = vpop.f32.mrf.mxu0
        %v2524 = vadd.f32 0.0, %v2523
        %v2525 = vpop.f32.mrf.mxu0
        %v2526 = vpop.f32.mrf.mxu0
        %v2527 = vadd.f32 0.0, %v2526
        %v2528 = vpop.f32.mrf.mxu0
        %2529 = vmatprep.mubr.bf16.mxu0 %v2191
        %2530 = vmatmul.mubr.bf16.gmra.mxu0 %v1855
        %v2531 = vpop.f32.mrf.mxu0
        %v2532 = vadd.f32 0.0, %v2531
        %v2533 = vpop.f32.mrf.mxu0
        %v2534 = vpop.f32.mrf.mxu0
        %v2535 = vadd.f32 0.0, %v2534
        %v2536 = vpop.f32.mrf.mxu0
        %2537 = vmatprep.mubr.bf16.mxu0 %v2192
        %2538 = vmatmul.mubr.bf16.gmra.mxu0 %v1856
        %v2539 = vpop.f32.mrf.mxu0
        %v2540 = vadd.f32 0.0, %v2539
        %v2541 = vpop.f32.mrf.mxu0
        %v2542 = vpop.f32.mrf.mxu0
        %v2543 = vadd.f32 0.0, %v2542
        %v2544 = vpop.f32.mrf.mxu0
        %2545 = vmatprep.mubr.bf16.mxu0 %v2193
        %2546 = vmatmul.mubr.bf16.gmra.mxu0 %v1857
        %v2547 = vpop.f32.mrf.mxu0
        %v2548 = vadd.f32 0.0, %v2547
        %v2549 = vpop.f32.mrf.mxu0
        %v2550 = vpop.f32.mrf.mxu0
        %v2551 = vadd.f32 0.0, %v2550
        %v2552 = vpop.f32.mrf.mxu0
        %2553 = vmatprep.mubr.bf16.mxu0 %v2194
        %2554 = vmatmul.mubr.bf16.gmra.mxu0 %v1858
        %v2555 = vpop.f32.mrf.mxu0
        %v2556 = vadd.f32 0.0, %v2555
        %v2557 = vpop.f32.mrf.mxu0
        %v2558 = vpop.f32.mrf.mxu0
        %v2559 = vadd.f32 0.0, %v2558
        %v2560 = vpop.f32.mrf.mxu0
        %2561 = vmatprep.mubr.bf16.mxu0 %v2195
        %2562 = vmatmul.mubr.bf16.gmra.mxu0 %v1859
        %v2563 = vpop.f32.mrf.mxu0
        %v2564 = vadd.f32 0.0, %v2563
        %v2565 = vpop.f32.mrf.mxu0
        %v2566 = vpop.f32.mrf.mxu0
        %v2567 = vadd.f32 0.0, %v2566
        %v2568 = vpop.f32.mrf.mxu0
        %2569 = vmatprep.mubr.bf16.mxu0 %v2196
        %2570 = vmatmul.mubr.bf16.gmra.mxu0 %v1860
        %v2571 = vpop.f32.mrf.mxu0
        %v2572 = vadd.f32 0.0, %v2571
        %v2573 = vpop.f32.mrf.mxu0
        %v2574 = vpop.f32.mrf.mxu0
        %v2575 = vadd.f32 0.0, %v2574
        %v2576 = vpop.f32.mrf.mxu0
        %2577 = vmatprep.mubr.bf16.mxu0 %v2197
        %2578 = vmatmul.mubr.bf16.gmra.mxu0 %v1861
        %v2579 = vpop.f32.mrf.mxu0
        %v2580 = vadd.f32 0.0, %v2579
        %v2581 = vpop.f32.mrf.mxu0
        %v2582 = vpop.f32.mrf.mxu0
        %v2583 = vadd.f32 0.0, %v2582
        %v2584 = vpop.f32.mrf.mxu0
        %2585 = vmatprep.mubr.bf16.mxu0 %v2198
        %2586 = vmatmul.mubr.bf16.gmra.mxu0 %v1862
        %v2587 = vpop.f32.mrf.mxu0
        %v2588 = vadd.f32 0.0, %v2587
        %v2589 = vpop.f32.mrf.mxu0
        %v2590 = vpop.f32.mrf.mxu0
        %v2591 = vadd.f32 0.0, %v2590
        %v2592 = vpop.f32.mrf.mxu0
        %2593 = vmatprep.mubr.bf16.mxu0 %v2199
        %2594 = vmatmul.mubr.bf16.gmra.mxu0 %v1863
        %v2595 = vpop.f32.mrf.mxu0
        %v2596 = vadd.f32 0.0, %v2595
        %v2597 = vpop.f32.mrf.mxu0
        %v2598 = vpop.f32.mrf.mxu0
        %v2599 = vadd.f32 0.0, %v2598
        %v2600 = vpop.f32.mrf.mxu0
        %2601 = vdwg.mxu0
        %2602 = vmatprep.subr.bf16.mxu0 0
        %2603 = vmatpush1.bf16.msra.mxu0 %v2416
        %2604 = vmatprep.subr.bf16.mxu0 0
        %2605 = vmatpush1.bf16.msra.mxu0 %v2415
        %2606 = vmatprep.subr.bf16.mxu0 0
        %2607 = vmatpush1.bf16.msra.mxu0 %v2414
        %2608 = vmatprep.subr.bf16.mxu0 0
        %2609 = vmatpush1.bf16.msra.mxu0 %v2413
        %2610 = vmatprep.subr.bf16.mxu0 0
        %2611 = vmatpush1.bf16.msra.mxu0 %v2412
        %2612 = vmatprep.subr.bf16.mxu0 0
        %2613 = vmatpush1.bf16.msra.mxu0 %v2411
        %2614 = vmatprep.subr.bf16.mxu0 0
        %2615 = vmatpush1.bf16.msra.mxu0 %v2410
        %2616 = vmatprep.subr.bf16.mxu0 0
        %2617 = vmatpush1.bf16.msra.mxu0 %v2409
        %2618 = vmatprep.subr.bf16.mxu0 0
        %2619 = vmatpush2.bf16.msra.mxu0 0
        %2620 = vmatprep.subr.bf16.mxu0 0
        %2621 = vmatpush2.bf16.msra.mxu0 0
        %2622 = vmatprep.subr.bf16.mxu0 0
        %2623 = vmatpush2.bf16.msra.mxu0 0
        %2624 = vmatprep.subr.bf16.mxu0 0
        %2625 = vmatpush2.bf16.msra.mxu0 0
        %2626 = vmatprep.subr.bf16.mxu0 0
        %2627 = vmatpush2.bf16.msra.mxu0 0
        %2628 = vmatprep.subr.bf16.mxu0 0
        %2629 = vmatpush2.bf16.msra.mxu0 0
        %2630 = vmatprep.subr.bf16.mxu0 0
        %2631 = vmatpush2.bf16.msra.mxu0 0
        %2632 = vmatprep.subr.bf16.mxu0 0
        %2633 = vmatpush2.bf16.msra.mxu0 0
        %2634 = vmatprep.mubr.bf16.mxu0 0
        %2635 = vmatmul.mubr.bf16.gmra.mxu0 %v2166
        %v2636 = vpop.f32.mrf.mxu0
        %v2637 = vadd.f32 %v2476, %v2636
        %v2638 = vpop.f32.mrf.mxu0
        %v2639 = vpop.f32.mrf.mxu0
        %v2640 = vadd.f32 %v2479, %v2639
        %v2641 = vpop.f32.mrf.mxu0
        %2642 = vmatprep.mubr.bf16.mxu0 0
        %2643 = vmatmul.mubr.bf16.gmra.mxu0 %v2167
        %v2644 = vpop.f32.mrf.mxu0
        %v2645 = vadd.f32 %v2484, %v2644
        %v2646 = vpop.f32.mrf.mxu0
        %v2647 = vpop.f32.mrf.mxu0
        %v2648 = vadd.f32 %v2487, %v2647
        %v2649 = vpop.f32.mrf.mxu0
        %2650 = vmatprep.mubr.bf16.mxu0 0
        %2651 = vmatmul.mubr.bf16.gmra.mxu0 %v2168
        %v2652 = vpop.f32.mrf.mxu0
        %v2653 = vadd.f32 %v2492, %v2652
        %v2654 = vpop.f32.mrf.mxu0
        %v2655 = vpop.f32.mrf.mxu0
        %v2656 = vadd.f32 %v2495, %v2655
        %v2657 = vpop.f32.mrf.mxu0
        %2658 = vmatprep.mubr.bf16.mxu0 0
        %2659 = vmatmul.mubr.bf16.gmra.mxu0 %v2169
        %v2660 = vpop.f32.mrf.mxu0
        %v2661 = vadd.f32 %v2500, %v2660
        %v2662 = vpop.f32.mrf.mxu0
        %v2663 = vpop.f32.mrf.mxu0
        %v2664 = vadd.f32 %v2503, %v2663
        %v2665 = vpop.f32.mrf.mxu0
        %2666 = vmatprep.mubr.bf16.mxu0 0
        %2667 = vmatmul.mubr.bf16.gmra.mxu0 %v2170
        %v2668 = vpop.f32.mrf.mxu0
        %v2669 = vadd.f32 %v2508, %v2668
        %v2670 = vpop.f32.mrf.mxu0
        %v2671 = vpop.f32.mrf.mxu0
        %v2672 = vadd.f32 %v2511, %v2671
        %v2673 = vpop.f32.mrf.mxu0
        %2674 = vmatprep.mubr.bf16.mxu0 0
        %2675 = vmatmul.mubr.bf16.gmra.mxu0 %v2171
        %v2676 = vpop.f32.mrf.mxu0
        %v2677 = vadd.f32 %v2516, %v2676
        %v2678 = vpop.f32.mrf.mxu0
        %v2679 = vpop.f32.mrf.mxu0
        %v2680 = vadd.f32 %v2519, %v2679
        %v2681 = vpop.f32.mrf.mxu0
        %2682 = vmatprep.mubr.bf16.mxu0 0
        %2683 = vmatmul.mubr.bf16.gmra.mxu0 %v2172
        %v2684 = vpop.f32.mrf.mxu0
        %v2685 = vadd.f32 %v2524, %v2684
        %v2686 = vpop.f32.mrf.mxu0
        %v2687 = vpop.f32.mrf.mxu0
        %v2688 = vadd.f32 %v2527, %v2687
        %v2689 = vpop.f32.mrf.mxu0
        %2690 = vmatprep.mubr.bf16.mxu0 0
        %2691 = vmatmul.mubr.bf16.gmra.mxu0 %v2173
        %v2692 = vpop.f32.mrf.mxu0
        %v2693 = vadd.f32 %v2532, %v2692
        %v2694 = vpop.f32.mrf.mxu0
        %v2695 = vpop.f32.mrf.mxu0
        %v2696 = vadd.f32 %v2535, %v2695
        %v2697 = vpop.f32.mrf.mxu0
        %2698 = vmatprep.mubr.bf16.mxu0 0
        %2699 = vmatmul.mubr.bf16.gmra.mxu0 %v2174
        %v2700 = vpop.f32.mrf.mxu0
        %v2701 = vadd.f32 %v2540, %v2700
        %v2702 = vpop.f32.mrf.mxu0
        %v2703 = vpop.f32.mrf.mxu0
        %v2704 = vadd.f32 %v2543, %v2703
        %v2705 = vpop.f32.mrf.mxu0
        %2706 = vmatprep.mubr.bf16.mxu0 0
        %2707 = vmatmul.mubr.bf16.gmra.mxu0 %v2175
        %v2708 = vpop.f32.mrf.mxu0
        %v2709 = vadd.f32 %v2548, %v2708
        %v2710 = vpop.f32.mrf.mxu0
        %v2711 = vpop.f32.mrf.mxu0
        %v2712 = vadd.f32 %v2551, %v2711
        %v2713 = vpop.f32.mrf.mxu0
        %2714 = vmatprep.mubr.bf16.mxu0 0
        %2715 = vmatmul.mubr.bf16.gmra.mxu0 %v2176
        %v2716 = vpop.f32.mrf.mxu0
        %v2717 = vadd.f32 %v2556, %v2716
        %v2718 = vpop.f32.mrf.mxu0
        %v2719 = vpop.f32.mrf.mxu0
        %v2720 = vadd.f32 %v2559, %v2719
        %v2721 = vpop.f32.mrf.mxu0
        %2722 = vmatprep.mubr.bf16.mxu0 0
        %2723 = vmatmul.mubr.bf16.gmra.mxu0 %v2177
        %v2724 = vpop.f32.mrf.mxu0
        %v2725 = vadd.f32 %v2564, %v2724
        %v2726 = vpop.f32.mrf.mxu0
        %v2727 = vpop.f32.mrf.mxu0
        %v2728 = vadd.f32 %v2567, %v2727
        %v2729 = vpop.f32.mrf.mxu0
        %2730 = vmatprep.mubr.bf16.mxu0 0
        %2731 = vmatmul.mubr.bf16.gmra.mxu0 %v2178
        %v2732 = vpop.f32.mrf.mxu0
        %v2733 = vadd.f32 %v2572, %v2732
        %v2734 = vpop.f32.mrf.mxu0
        %v2735 = vpop.f32.mrf.mxu0
        %v2736 = vadd.f32 %v2575, %v2735
        %v2737 = vpop.f32.mrf.mxu0
        %2738 = vmatprep.mubr.bf16.mxu0 0
        %2739 = vmatmul.mubr.bf16.gmra.mxu0 %v2179
        %v2740 = vpop.f32.mrf.mxu0
        %v2741 = vadd.f32 %v2580, %v2740
        %v2742 = vpop.f32.mrf.mxu0
        %v2743 = vpop.f32.mrf.mxu0
        %v2744 = vadd.f32 %v2583, %v2743
        %v2745 = vpop.f32.mrf.mxu0
        %2746 = vmatprep.mubr.bf16.mxu0 0
        %2747 = vmatmul.mubr.bf16.gmra.mxu0 %v2180
        %v2748 = vpop.f32.mrf.mxu0
        %v2749 = vadd.f32 %v2588, %v2748
        %v2750 = vpop.f32.mrf.mxu0
        %v2751 = vpop.f32.mrf.mxu0
        %v2752 = vadd.f32 %v2591, %v2751
        %v2753 = vpop.f32.mrf.mxu0
        %2754 = vmatprep.mubr.bf16.mxu0 0
        %2755 = vmatmul.mubr.bf16.gmra.mxu0 %v2181
        %v2756 = vpop.f32.mrf.mxu0
        %v2757 = vadd.f32 %v2596, %v2756
        %v2758 = vpop.f32.mrf.mxu0
        %v2759 = vpop.f32.mrf.mxu0
        %v2760 = vadd.f32 %v2599, %v2759
        %v2761 = vpop.f32.mrf.mxu0
        %2762 = vdwg.mxu0
        %v2811 = vunpack.c.l.b16 %v2200
        %v2812 = vunpack.c.l.b16 %v2201
        %v2813 = vunpack.c.l.b16 %v2202
        %v2814 = vunpack.c.l.b16 %v2203
        %v2815 = vunpack.c.l.b16 %v2204
        %v2816 = vunpack.c.l.b16 %v2205
        %v2817 = vunpack.c.l.b16 %v2206
        %v2818 = vunpack.c.l.b16 %v2207
        %v2819 = vunpack.c.l.b16 %v2208
        %v2820 = vunpack.c.l.b16 %v2209
        %v2821 = vunpack.c.l.b16 %v2210
        %v2822 = vunpack.c.l.b16 %v2211
        %v2823 = vunpack.c.l.b16 %v2212
        %v2824 = vunpack.c.l.b16 %v2213
        %v2825 = vunpack.c.l.b16 %v2214
        %v2826 = vunpack.c.l.b16 %v2215
        %v2827 = vunpack.c.l.b16 %v2216
        %v2828 = vunpack.c.l.b16 %v2217
        %v2829 = vunpack.c.l.b16 %v2218
        %v2830 = vunpack.c.l.b16 %v2219
        %v2831 = vunpack.c.l.b16 %v2220
        %v2832 = vunpack.c.l.b16 %v2221
        %v2833 = vunpack.c.l.b16 %v2222
        %v2834 = vunpack.c.l.b16 %v2223
        %v2835 = vunpack.c.l.b16 %v2224
        %v2836 = vunpack.c.l.b16 %v2225
        %v2837 = vunpack.c.l.b16 %v2226
        %v2838 = vunpack.c.l.b16 %v2227
        %v2839 = vunpack.c.l.b16 %v2228
        %v2840 = vunpack.c.l.b16 %v2229
        %v2841 = vunpack.c.l.b16 %v2230
        %v2842 = vunpack.c.l.b16 %v2231
        %v2843 = vunpack.c.l.b16 %v2232
        %v2844 = vunpack.c.l.b16 %v2233
        %v2845 = vunpack.c.l.b16 %v2234
        %v2846 = vunpack.c.l.b16 %v2235
        %v2847 = vunpack.c.l.b16 %v2236
        %v2848 = vunpack.c.l.b16 %v2237
        %v2849 = vunpack.c.l.b16 %v2238
        %v2850 = vunpack.c.l.b16 %v2239
        %v2851 = vunpack.c.l.b16 %v2240
        %v2852 = vunpack.c.l.b16 %v2241
        %v2853 = vunpack.c.l.b16 %v2242
        %v2854 = vunpack.c.l.b16 %v2243
        %v2855 = vunpack.c.l.b16 %v2244
        %v2856 = vunpack.c.l.b16 %v2245
        %v2857 = vunpack.c.l.b16 %v2246
        %v2858 = vunpack.c.l.b16 %v2247
        %v2859 = vpack.c.b16 %v2812, %v2811
        %v2860 = vpack.c.b16 %v2814, %v2813
        %v2861 = vpack.c.b16 %v2816, %v2815
        %v2862 = vpack.c.b16 %v2818, %v2817
        %v2863 = vpack.c.b16 %v2820, %v2819
        %v2864 = vpack.c.b16 %v2822, %v2821
        %v2865 = vpack.c.b16 %v2824, %v2823
        %v2866 = vpack.c.b16 %v2826, %v2825
        %v2867 = vpack.c.b16 %v2828, %v2827
        %v2868 = vpack.c.b16 %v2830, %v2829
        %v2869 = vpack.c.b16 %v2832, %v2831
        %v2870 = vpack.c.b16 %v2834, %v2833
        %v2871 = vpack.c.b16 %v2836, %v2835
        %v2872 = vpack.c.b16 %v2838, %v2837
        %v2873 = vpack.c.b16 %v2840, %v2839
        %v2874 = vpack.c.b16 %v2842, %v2841
        %v2875 = vpack.c.b16 %v2844, %v2843
        %v2876 = vpack.c.b16 %v2846, %v2845
        %v2877 = vpack.c.b16 %v2848, %v2847
        %v2878 = vpack.c.b16 %v2850, %v2849
        %v2879 = vpack.c.b16 %v2852, %v2851
        %v2880 = vpack.c.b16 %v2854, %v2853
        %v2881 = vpack.c.b16 %v2856, %v2855
        %v2882 = vpack.c.b16 %v2858, %v2857
        %2907 = vmatprep.subr.bf16.mxu0 0
        %2908 = vmatpush1.bf16.msra.mxu0 %v2866
        %2909 = vmatprep.subr.bf16.mxu0 0
        %2910 = vmatpush1.bf16.msra.mxu0 %v2865
        %2911 = vmatprep.subr.bf16.mxu0 0
        %2912 = vmatpush1.bf16.msra.mxu0 %v2864
        %2913 = vmatprep.subr.bf16.mxu0 0
        %2914 = vmatpush1.bf16.msra.mxu0 %v2863
        %2915 = vmatprep.subr.bf16.mxu0 0
        %2916 = vmatpush1.bf16.msra.mxu0 %v2862
        %2917 = vmatprep.subr.bf16.mxu0 0
        %2918 = vmatpush1.bf16.msra.mxu0 %v2861
        %2919 = vmatprep.subr.bf16.mxu0 0
        %2920 = vmatpush1.bf16.msra.mxu0 %v2860
        %2921 = vmatprep.subr.bf16.mxu0 0
        %2922 = vmatpush1.bf16.msra.mxu0 %v2859
        %2923 = vmatprep.subr.bf16.mxu0 0
        %2924 = vmatpush2.bf16.msra.mxu0 %v2874
        %2925 = vmatprep.subr.bf16.mxu0 0
        %2926 = vmatpush2.bf16.msra.mxu0 %v2873
        %2927 = vmatprep.subr.bf16.mxu0 0
        %2928 = vmatpush2.bf16.msra.mxu0 %v2872
        %2929 = vmatprep.subr.bf16.mxu0 0
        %2930 = vmatpush2.bf16.msra.mxu0 %v2871
        %2931 = vmatprep.subr.bf16.mxu0 0
        %2932 = vmatpush2.bf16.msra.mxu0 %v2870
        %2933 = vmatprep.subr.bf16.mxu0 0
        %2934 = vmatpush2.bf16.msra.mxu0 %v2869
        %2935 = vmatprep.subr.bf16.mxu0 0
        %2936 = vmatpush2.bf16.msra.mxu0 %v2868
        %2937 = vmatprep.subr.bf16.mxu0 0
        %2938 = vmatpush2.bf16.msra.mxu0 %v2867
        %2939 = vmatprep.mubr.bf16.mxu0 %v2183
        %2940 = vmatmul.mubr.bf16.gmra.mxu0 %v1847
        %v2941 = vpop.f32.mrf.mxu0
        %v2942 = vadd.f32 %v2637, %v2941
        %v2943 = vpop.f32.mrf.mxu0
        %v2944 = vpop.f32.mrf.mxu0
        %v2945 = vadd.f32 %v2640, %v2944
        %v2946 = vpop.f32.mrf.mxu0
        %2947 = vmatprep.mubr.bf16.mxu0 %v2184
        %2948 = vmatmul.mubr.bf16.gmra.mxu0 %v1848
        %v2949 = vpop.f32.mrf.mxu0
        %v2950 = vadd.f32 %v2645, %v2949
        %v2951 = vpop.f32.mrf.mxu0
        %v2952 = vpop.f32.mrf.mxu0
        %v2953 = vadd.f32 %v2648, %v2952
        %v2954 = vpop.f32.mrf.mxu0
        %2955 = vmatprep.mubr.bf16.mxu0 %v2185
        %2956 = vmatmul.mubr.bf16.gmra.mxu0 %v1849
        %v2957 = vpop.f32.mrf.mxu0
        %v2958 = vadd.f32 %v2653, %v2957
        %v2959 = vpop.f32.mrf.mxu0
        %v2960 = vpop.f32.mrf.mxu0
        %v2961 = vadd.f32 %v2656, %v2960
        %v2962 = vpop.f32.mrf.mxu0
        %2963 = vmatprep.mubr.bf16.mxu0 %v2186
        %2964 = vmatmul.mubr.bf16.gmra.mxu0 %v1850
        %v2965 = vpop.f32.mrf.mxu0
        %v2966 = vadd.f32 %v2661, %v2965
        %v2967 = vpop.f32.mrf.mxu0
        %v2968 = vpop.f32.mrf.mxu0
        %v2969 = vadd.f32 %v2664, %v2968
        %v2970 = vpop.f32.mrf.mxu0
        %2971 = vmatprep.mubr.bf16.mxu0 %v2187
        %2972 = vmatmul.mubr.bf16.gmra.mxu0 %v1851
        %v2973 = vpop.f32.mrf.mxu0
        %v2974 = vadd.f32 %v2669, %v2973
        %v2975 = vpop.f32.mrf.mxu0
        %v2976 = vpop.f32.mrf.mxu0
        %v2977 = vadd.f32 %v2672, %v2976
        %v2978 = vpop.f32.mrf.mxu0
        %2979 = vmatprep.mubr.bf16.mxu0 %v2188
        %2980 = vmatmul.mubr.bf16.gmra.mxu0 %v1852
        %v2981 = vpop.f32.mrf.mxu0
        %v2982 = vadd.f32 %v2677, %v2981
        %v2983 = vpop.f32.mrf.mxu0
        %v2984 = vpop.f32.mrf.mxu0
        %v2985 = vadd.f32 %v2680, %v2984
        %v2986 = vpop.f32.mrf.mxu0
        %2987 = vmatprep.mubr.bf16.mxu0 %v2189
        %2988 = vmatmul.mubr.bf16.gmra.mxu0 %v1853
        %v2989 = vpop.f32.mrf.mxu0
        %v2990 = vadd.f32 %v2685, %v2989
        %v2991 = vpop.f32.mrf.mxu0
        %v2992 = vpop.f32.mrf.mxu0
        %v2993 = vadd.f32 %v2688, %v2992
        %v2994 = vpop.f32.mrf.mxu0
        %2995 = vmatprep.mubr.bf16.mxu0 %v2190
        %2996 = vmatmul.mubr.bf16.gmra.mxu0 %v1854
        %v2997 = vpop.f32.mrf.mxu0
        %v2998 = vadd.f32 %v2693, %v2997
        %v2999 = vpop.f32.mrf.mxu0
        %v3000 = vpop.f32.mrf.mxu0
        %v3001 = vadd.f32 %v2696, %v3000
        %v3002 = vpop.f32.mrf.mxu0
        %3003 = vmatprep.mubr.bf16.mxu0 %v2191
        %3004 = vmatmul.mubr.bf16.gmra.mxu0 %v1855
        %v3005 = vpop.f32.mrf.mxu0
        %v3006 = vadd.f32 %v2701, %v3005
        %v3007 = vpop.f32.mrf.mxu0
        %v3008 = vpop.f32.mrf.mxu0
        %v3009 = vadd.f32 %v2704, %v3008
        %v3010 = vpop.f32.mrf.mxu0
        %3011 = vmatprep.mubr.bf16.mxu0 %v2192
        %3012 = vmatmul.mubr.bf16.gmra.mxu0 %v1856
        %v3013 = vpop.f32.mrf.mxu0
        %v3014 = vadd.f32 %v2709, %v3013
        %v3015 = vpop.f32.mrf.mxu0
        %v3016 = vpop.f32.mrf.mxu0
        %v3017 = vadd.f32 %v2712, %v3016
        %v3018 = vpop.f32.mrf.mxu0
        %3019 = vmatprep.mubr.bf16.mxu0 %v2193
        %3020 = vmatmul.mubr.bf16.gmra.mxu0 %v1857
        %v3021 = vpop.f32.mrf.mxu0
        %v3022 = vadd.f32 %v2717, %v3021
        %v3023 = vpop.f32.mrf.mxu0
        %v3024 = vpop.f32.mrf.mxu0
        %v3025 = vadd.f32 %v2720, %v3024
        %v3026 = vpop.f32.mrf.mxu0
        %3027 = vmatprep.mubr.bf16.mxu0 %v2194
        %3028 = vmatmul.mubr.bf16.gmra.mxu0 %v1858
        %v3029 = vpop.f32.mrf.mxu0
        %v3030 = vadd.f32 %v2725, %v3029
        %v3031 = vpop.f32.mrf.mxu0
        %v3032 = vpop.f32.mrf.mxu0
        %v3033 = vadd.f32 %v2728, %v3032
        %v3034 = vpop.f32.mrf.mxu0
        %3035 = vmatprep.mubr.bf16.mxu0 %v2195
        %3036 = vmatmul.mubr.bf16.gmra.mxu0 %v1859
        %v3037 = vpop.f32.mrf.mxu0
        %v3038 = vadd.f32 %v2733, %v3037
        %v3039 = vpop.f32.mrf.mxu0
        %v3040 = vpop.f32.mrf.mxu0
        %v3041 = vadd.f32 %v2736, %v3040
        %v3042 = vpop.f32.mrf.mxu0
        %3043 = vmatprep.mubr.bf16.mxu0 %v2196
        %3044 = vmatmul.mubr.bf16.gmra.mxu0 %v1860
        %v3045 = vpop.f32.mrf.mxu0
        %v3046 = vadd.f32 %v2741, %v3045
        %v3047 = vpop.f32.mrf.mxu0
        %v3048 = vpop.f32.mrf.mxu0
        %v3049 = vadd.f32 %v2744, %v3048
        %v3050 = vpop.f32.mrf.mxu0
        %3051 = vmatprep.mubr.bf16.mxu0 %v2197
        %3052 = vmatmul.mubr.bf16.gmra.mxu0 %v1861
        %v3053 = vpop.f32.mrf.mxu0
        %v3054 = vadd.f32 %v2749, %v3053
        %v3055 = vpop.f32.mrf.mxu0
        %v3056 = vpop.f32.mrf.mxu0
        %v3057 = vadd.f32 %v2752, %v3056
        %v3058 = vpop.f32.mrf.mxu0
        %3059 = vmatprep.mubr.bf16.mxu0 %v2198
        %3060 = vmatmul.mubr.bf16.gmra.mxu0 %v1862
        %v3061 = vpop.f32.mrf.mxu0
        %v3062 = vadd.f32 %v2757, %v3061
        %v3063 = vpop.f32.mrf.mxu0
        %v3064 = vpop.f32.mrf.mxu0
        %v3065 = vadd.f32 %v2760, %v3064
        %v3066 = vpop.f32.mrf.mxu0
        %3067 = vdwg.mxu0
        %3068 = vmatprep.subr.bf16.mxu0 0
        %3069 = vmatpush1.bf16.msra.mxu0 %v2882
        %3070 = vmatprep.subr.bf16.mxu0 0
        %3071 = vmatpush1.bf16.msra.mxu0 %v2881
        %3072 = vmatprep.subr.bf16.mxu0 0
        %3073 = vmatpush1.bf16.msra.mxu0 %v2880
        %3074 = vmatprep.subr.bf16.mxu0 0
        %3075 = vmatpush1.bf16.msra.mxu0 %v2879
        %3076 = vmatprep.subr.bf16.mxu0 0
        %3077 = vmatpush1.bf16.msra.mxu0 %v2878
        %3078 = vmatprep.subr.bf16.mxu0 0
        %3079 = vmatpush1.bf16.msra.mxu0 %v2877
        %3080 = vmatprep.subr.bf16.mxu0 0
        %3081 = vmatpush1.bf16.msra.mxu0 %v2876
        %3082 = vmatprep.subr.bf16.mxu0 0
        %3083 = vmatpush1.bf16.msra.mxu0 %v2875
        %3084 = vmatprep.subr.bf16.mxu0 0
        %3085 = vmatpush2.bf16.msra.mxu0 0
        %3086 = vmatprep.subr.bf16.mxu0 0
        %3087 = vmatpush2.bf16.msra.mxu0 0
        %3088 = vmatprep.subr.bf16.mxu0 0
        %3089 = vmatpush2.bf16.msra.mxu0 0
        %3090 = vmatprep.subr.bf16.mxu0 0
        %3091 = vmatpush2.bf16.msra.mxu0 0
        %3092 = vmatprep.subr.bf16.mxu0 0
        %3093 = vmatpush2.bf16.msra.mxu0 0
        %3094 = vmatprep.subr.bf16.mxu0 0
        %3095 = vmatpush2.bf16.msra.mxu0 0
        %3096 = vmatprep.subr.bf16.mxu0 0
        %3097 = vmatpush2.bf16.msra.mxu0 0
        %3098 = vmatprep.subr.bf16.mxu0 0
        %3099 = vmatpush2.bf16.msra.mxu0 0
        %3100 = vmatprep.mubr.bf16.mxu0 0
        %3101 = vmatmul.mubr.bf16.gmra.mxu0 %v2165
        %v3102 = vpop.f32.mrf.mxu0
        %v3103 = vadd.f32 %v2942, %v3102
        %v3104 = vpop.f32.mrf.mxu0
        %v3105 = vpop.f32.mrf.mxu0
        %v3106 = vadd.f32 %v2945, %v3105
        %v3107 = vpop.f32.mrf.mxu0
        %3108 = vmatprep.mubr.bf16.mxu0 0
        %3109 = vmatmul.mubr.bf16.gmra.mxu0 %v2166
        %v3110 = vpop.f32.mrf.mxu0
        %v3111 = vadd.f32 %v2950, %v3110
        %v3112 = vpop.f32.mrf.mxu0
        %v3113 = vpop.f32.mrf.mxu0
        %v3114 = vadd.f32 %v2953, %v3113
        %v3115 = vpop.f32.mrf.mxu0
        %3116 = vmatprep.mubr.bf16.mxu0 0
        %3117 = vmatmul.mubr.bf16.gmra.mxu0 %v2167
        %v3118 = vpop.f32.mrf.mxu0
        %v3119 = vadd.f32 %v2958, %v3118
        %v3120 = vpop.f32.mrf.mxu0
        %v3121 = vpop.f32.mrf.mxu0
        %v3122 = vadd.f32 %v2961, %v3121
        %v3123 = vpop.f32.mrf.mxu0
        %3124 = vmatprep.mubr.bf16.mxu0 0
        %3125 = vmatmul.mubr.bf16.gmra.mxu0 %v2168
        %v3126 = vpop.f32.mrf.mxu0
        %v3127 = vadd.f32 %v2966, %v3126
        %v3128 = vpop.f32.mrf.mxu0
        %v3129 = vpop.f32.mrf.mxu0
        %v3130 = vadd.f32 %v2969, %v3129
        %v3131 = vpop.f32.mrf.mxu0
        %3132 = vmatprep.mubr.bf16.mxu0 0
        %3133 = vmatmul.mubr.bf16.gmra.mxu0 %v2169
        %v3134 = vpop.f32.mrf.mxu0
        %v3135 = vadd.f32 %v2974, %v3134
        %v3136 = vpop.f32.mrf.mxu0
        %v3137 = vpop.f32.mrf.mxu0
        %v3138 = vadd.f32 %v2977, %v3137
        %v3139 = vpop.f32.mrf.mxu0
        %3140 = vmatprep.mubr.bf16.mxu0 0
        %3141 = vmatmul.mubr.bf16.gmra.mxu0 %v2170
        %v3142 = vpop.f32.mrf.mxu0
        %v3143 = vadd.f32 %v2982, %v3142
        %v3144 = vpop.f32.mrf.mxu0
        %v3145 = vpop.f32.mrf.mxu0
        %v3146 = vadd.f32 %v2985, %v3145
        %v3147 = vpop.f32.mrf.mxu0
        %3148 = vmatprep.mubr.bf16.mxu0 0
        %3149 = vmatmul.mubr.bf16.gmra.mxu0 %v2171
        %v3150 = vpop.f32.mrf.mxu0
        %v3151 = vadd.f32 %v2990, %v3150
        %v3152 = vpop.f32.mrf.mxu0
        %v3153 = vpop.f32.mrf.mxu0
        %v3154 = vadd.f32 %v2993, %v3153
        %v3155 = vpop.f32.mrf.mxu0
        %3156 = vmatprep.mubr.bf16.mxu0 0
        %3157 = vmatmul.mubr.bf16.gmra.mxu0 %v2172
        %v3158 = vpop.f32.mrf.mxu0
        %v3159 = vadd.f32 %v2998, %v3158
        %v3160 = vpop.f32.mrf.mxu0
        %v3161 = vpop.f32.mrf.mxu0
        %v3162 = vadd.f32 %v3001, %v3161
        %v3163 = vpop.f32.mrf.mxu0
        %3164 = vmatprep.mubr.bf16.mxu0 0
        %3165 = vmatmul.mubr.bf16.gmra.mxu0 %v2173
        %v3166 = vpop.f32.mrf.mxu0
        %v3167 = vadd.f32 %v3006, %v3166
        %v3168 = vpop.f32.mrf.mxu0
        %v3169 = vpop.f32.mrf.mxu0
        %v3170 = vadd.f32 %v3009, %v3169
        %v3171 = vpop.f32.mrf.mxu0
        %3172 = vmatprep.mubr.bf16.mxu0 0
        %3173 = vmatmul.mubr.bf16.gmra.mxu0 %v2174
        %v3174 = vpop.f32.mrf.mxu0
        %v3175 = vadd.f32 %v3014, %v3174
        %v3176 = vpop.f32.mrf.mxu0
        %v3177 = vpop.f32.mrf.mxu0
        %v3178 = vadd.f32 %v3017, %v3177
        %v3179 = vpop.f32.mrf.mxu0
        %3180 = vmatprep.mubr.bf16.mxu0 0
        %3181 = vmatmul.mubr.bf16.gmra.mxu0 %v2175
        %v3182 = vpop.f32.mrf.mxu0
        %v3183 = vadd.f32 %v3022, %v3182
        %v3184 = vpop.f32.mrf.mxu0
        %v3185 = vpop.f32.mrf.mxu0
        %v3186 = vadd.f32 %v3025, %v3185
        %v3187 = vpop.f32.mrf.mxu0
        %3188 = vmatprep.mubr.bf16.mxu0 0
        %3189 = vmatmul.mubr.bf16.gmra.mxu0 %v2176
        %v3190 = vpop.f32.mrf.mxu0
        %v3191 = vadd.f32 %v3030, %v3190
        %v3192 = vpop.f32.mrf.mxu0
        %v3193 = vpop.f32.mrf.mxu0
        %v3194 = vadd.f32 %v3033, %v3193
        %v3195 = vpop.f32.mrf.mxu0
        %3196 = vmatprep.mubr.bf16.mxu0 0
        %3197 = vmatmul.mubr.bf16.gmra.mxu0 %v2177
        %v3198 = vpop.f32.mrf.mxu0
        %v3199 = vadd.f32 %v3038, %v3198
        %v3200 = vpop.f32.mrf.mxu0
        %v3201 = vpop.f32.mrf.mxu0
        %v3202 = vadd.f32 %v3041, %v3201
        %v3203 = vpop.f32.mrf.mxu0
        %3204 = vmatprep.mubr.bf16.mxu0 0
        %3205 = vmatmul.mubr.bf16.gmra.mxu0 %v2178
        %v3206 = vpop.f32.mrf.mxu0
        %v3207 = vadd.f32 %v3046, %v3206
        %v3208 = vpop.f32.mrf.mxu0
        %v3209 = vpop.f32.mrf.mxu0
        %v3210 = vadd.f32 %v3049, %v3209
        %v3211 = vpop.f32.mrf.mxu0
        %3212 = vmatprep.mubr.bf16.mxu0 0
        %3213 = vmatmul.mubr.bf16.gmra.mxu0 %v2179
        %v3214 = vpop.f32.mrf.mxu0
        %v3215 = vadd.f32 %v3054, %v3214
        %v3216 = vpop.f32.mrf.mxu0
        %v3217 = vpop.f32.mrf.mxu0
        %v3218 = vadd.f32 %v3057, %v3217
        %v3219 = vpop.f32.mrf.mxu0
        %3220 = vmatprep.mubr.bf16.mxu0 0
        %3221 = vmatmul.mubr.bf16.gmra.mxu0 %v2180
        %v3222 = vpop.f32.mrf.mxu0
        %v3223 = vadd.f32 %v3062, %v3222
        %v3224 = vpop.f32.mrf.mxu0
        %v3225 = vpop.f32.mrf.mxu0
        %v3226 = vadd.f32 %v3065, %v3225
        %v3227 = vpop.f32.mrf.mxu0
        %3228 = vdwg.mxu0
        %s3229 = scalar_lea.vmem [#allocation7], 384
        %v3230 = vld [vmem:[%s3229] sm:$0xf]
        %v3231 = vld [vmem:[%s3229 + $0x4] sm:$0xf]
        %v3232 = vld [vmem:[%s3229 + $0x8] sm:$0xf]
        %v3233 = vld [vmem:[%s3229 + $0xc] sm:$0xf]
        %v3234 = vld [vmem:[%s3229 + $0x10] sm:$0xf]
        %v3235 = vld [vmem:[%s3229 + $0x14] sm:$0xf]
        %v3236 = vld [vmem:[%s3229 + $0x18] sm:$0xf]
        %v3237 = vld [vmem:[%s3229 + $0x1c] sm:$0xf]
        %v3238 = vld [vmem:[%s3229 + $0x20] sm:$0xf]
        %v3239 = vld [vmem:[%s3229 + $0x24] sm:$0xf]
        %v3240 = vld [vmem:[%s3229 + $0x28] sm:$0xf]
        %v3241 = vld [vmem:[%s3229 + $0x2c] sm:$0xf]
        %v3242 = vld [vmem:[%s3229 + $0x30] sm:$0xf]
        %v3243 = vld [vmem:[%s3229 + $0x34] sm:$0xf]
        %v3244 = vld [vmem:[%s3229 + $0x38] sm:$0xf]
        %v3245 = vld [vmem:[%s3229 + $0x3c] sm:$0xf]
        %v3246 = vld [vmem:[%s3229 + $0x40] sm:$0xf]
        %v3247 = vld [vmem:[%s3229 + $0x44] sm:$0xf]
        %v3248 = vld [vmem:[%s3229 + $0x48] sm:$0xf]
        %v3249 = vld [vmem:[%s3229 + $0x4c] sm:$0xf]
        %v3250 = vld [vmem:[%s3229 + $0x50] sm:$0xf]
        %v3251 = vld [vmem:[%s3229 + $0x54] sm:$0xf]
        %v3252 = vld [vmem:[%s3229 + $0x58] sm:$0xf]
        %v3253 = vld [vmem:[%s3229 + $0x5c] sm:$0xf]
        %v3254 = vld [vmem:[%s3229 + $0x60] sm:$0xf]
        %v3255 = vld [vmem:[%s3229 + $0x64] sm:$0xf]
        %v3256 = vld [vmem:[%s3229 + $0x68] sm:$0xf]
        %v3257 = vld [vmem:[%s3229 + $0x6c] sm:$0xf]
        %v3258 = vld [vmem:[%s3229 + $0x70] sm:$0xf]
        %v3259 = vld [vmem:[%s3229 + $0x74] sm:$0xf]
        %v3260 = vld [vmem:[%s3229 + $0x78] sm:$0xf]
        %v3261 = vld [vmem:[%s3229 + $0x7c] sm:$0xf]
        %v3262 = vld [vmem:[%s3229 + $0x80] sm:$0xf]
        %v3263 = vld [vmem:[%s3229 + $0x84] sm:$0xf]
        %v3264 = vld [vmem:[%s3229 + $0x88] sm:$0xf]
        %v3265 = vld [vmem:[%s3229 + $0x8c] sm:$0xf]
        %v3266 = vld [vmem:[%s3229 + $0x90] sm:$0xf]
        %v3267 = vld [vmem:[%s3229 + $0x94] sm:$0xf]
        %v3268 = vld [vmem:[%s3229 + $0x98] sm:$0xf]
        %v3269 = vld [vmem:[%s3229 + $0x9c] sm:$0xf]
        %v3270 = vld [vmem:[%s3229 + $0xa0] sm:$0xf]
        %v3271 = vld [vmem:[%s3229 + $0xa4] sm:$0xf]
        %v3272 = vld [vmem:[%s3229 + $0xa8] sm:$0xf]
        %v3273 = vld [vmem:[%s3229 + $0xac] sm:$0xf]
        %v3274 = vld [vmem:[%s3229 + $0xb0] sm:$0xf]
        %v3275 = vld [vmem:[%s3229 + $0xb4] sm:$0xf]
        %v3276 = vld [vmem:[%s3229 + $0xb8] sm:$0xf]
        %v3277 = vld [vmem:[%s3229 + $0xbc] sm:$0xf]
        %v3326 = vunpack.c.l.b16 %v3230
        %v3327 = vunpack.c.l.b16 %v3231
        %v3328 = vunpack.c.l.b16 %v3232
        %v3329 = vunpack.c.l.b16 %v3233
        %v3330 = vunpack.c.l.b16 %v3234
        %v3331 = vunpack.c.l.b16 %v3235
        %v3332 = vunpack.c.l.b16 %v3236
        %v3333 = vunpack.c.l.b16 %v3237
        %v3334 = vunpack.c.l.b16 %v3238
        %v3335 = vunpack.c.l.b16 %v3239
        %v3336 = vunpack.c.l.b16 %v3240
        %v3337 = vunpack.c.l.b16 %v3241
        %v3338 = vunpack.c.l.b16 %v3242
        %v3339 = vunpack.c.l.b16 %v3243
        %v3340 = vunpack.c.l.b16 %v3244
        %v3341 = vunpack.c.l.b16 %v3245
        %v3342 = vunpack.c.l.b16 %v3246
        %v3343 = vunpack.c.l.b16 %v3247
        %v3344 = vunpack.c.l.b16 %v3248
        %v3345 = vunpack.c.l.b16 %v3249
        %v3346 = vunpack.c.l.b16 %v3250
        %v3347 = vunpack.c.l.b16 %v3251
        %v3348 = vunpack.c.l.b16 %v3252
        %v3349 = vunpack.c.l.b16 %v3253
        %v3350 = vunpack.c.l.b16 %v3254
        %v3351 = vunpack.c.l.b16 %v3255
        %v3352 = vunpack.c.l.b16 %v3256
        %v3353 = vunpack.c.l.b16 %v3257
        %v3354 = vunpack.c.l.b16 %v3258
        %v3355 = vunpack.c.l.b16 %v3259
        %v3356 = vunpack.c.l.b16 %v3260
        %v3357 = vunpack.c.l.b16 %v3261
        %v3358 = vunpack.c.l.b16 %v3262
        %v3359 = vunpack.c.l.b16 %v3263
        %v3360 = vunpack.c.l.b16 %v3264
        %v3361 = vunpack.c.l.b16 %v3265
        %v3362 = vunpack.c.l.b16 %v3266
        %v3363 = vunpack.c.l.b16 %v3267
        %v3364 = vunpack.c.l.b16 %v3268
        %v3365 = vunpack.c.l.b16 %v3269
        %v3366 = vunpack.c.l.b16 %v3270
        %v3367 = vunpack.c.l.b16 %v3271
        %v3368 = vunpack.c.l.b16 %v3272
        %v3369 = vunpack.c.l.b16 %v3273
        %v3370 = vunpack.c.l.b16 %v3274
        %v3371 = vunpack.c.l.b16 %v3275
        %v3372 = vunpack.c.l.b16 %v3276
        %v3373 = vunpack.c.l.b16 %v3277
        %v3374 = vpack.c.b16 %v3327, %v3326
        %v3375 = vpack.c.b16 %v3329, %v3328
        %v3376 = vpack.c.b16 %v3331, %v3330
        %v3377 = vpack.c.b16 %v3333, %v3332
        %v3378 = vpack.c.b16 %v3335, %v3334
        %v3379 = vpack.c.b16 %v3337, %v3336
        %v3380 = vpack.c.b16 %v3339, %v3338
        %v3381 = vpack.c.b16 %v3341, %v3340
        %v3382 = vpack.c.b16 %v3343, %v3342
        %v3383 = vpack.c.b16 %v3345, %v3344
        %v3384 = vpack.c.b16 %v3347, %v3346
        %v3385 = vpack.c.b16 %v3349, %v3348
        %v3386 = vpack.c.b16 %v3351, %v3350
        %v3387 = vpack.c.b16 %v3353, %v3352
        %v3388 = vpack.c.b16 %v3355, %v3354
        %v3389 = vpack.c.b16 %v3357, %v3356
        %v3390 = vpack.c.b16 %v3359, %v3358
        %v3391 = vpack.c.b16 %v3361, %v3360
        %v3392 = vpack.c.b16 %v3363, %v3362
        %v3393 = vpack.c.b16 %v3365, %v3364
        %v3394 = vpack.c.b16 %v3367, %v3366
        %v3395 = vpack.c.b16 %v3369, %v3368
        %v3396 = vpack.c.b16 %v3371, %v3370
        %v3397 = vpack.c.b16 %v3373, %v3372
        %3422 = vmatprep.subr.bf16.mxu0 0
        %3423 = vmatpush1.bf16.msra.mxu0 %v3381
        %3424 = vmatprep.subr.bf16.mxu0 0
        %3425 = vmatpush1.bf16.msra.mxu0 %v3380
        %3426 = vmatprep.subr.bf16.mxu0 0
        %3427 = vmatpush1.bf16.msra.mxu0 %v3379
        %3428 = vmatprep.subr.bf16.mxu0 0
        %3429 = vmatpush1.bf16.msra.mxu0 %v3378
        %3430 = vmatprep.subr.bf16.mxu0 0
        %3431 = vmatpush1.bf16.msra.mxu0 %v3377
        %3432 = vmatprep.subr.bf16.mxu0 0
        %3433 = vmatpush1.bf16.msra.mxu0 %v3376
        %3434 = vmatprep.subr.bf16.mxu0 0
        %3435 = vmatpush1.bf16.msra.mxu0 %v3375
        %3436 = vmatprep.subr.bf16.mxu0 0
        %3437 = vmatpush1.bf16.msra.mxu0 %v3374
        %3438 = vmatprep.subr.bf16.mxu0 0
        %3439 = vmatpush2.bf16.msra.mxu0 %v3389
        %3440 = vmatprep.subr.bf16.mxu0 0
        %3441 = vmatpush2.bf16.msra.mxu0 %v3388
        %3442 = vmatprep.subr.bf16.mxu0 0
        %3443 = vmatpush2.bf16.msra.mxu0 %v3387
        %3444 = vmatprep.subr.bf16.mxu0 0
        %3445 = vmatpush2.bf16.msra.mxu0 %v3386
        %3446 = vmatprep.subr.bf16.mxu0 0
        %3447 = vmatpush2.bf16.msra.mxu0 %v3385
        %3448 = vmatprep.subr.bf16.mxu0 0
        %3449 = vmatpush2.bf16.msra.mxu0 %v3384
        %3450 = vmatprep.subr.bf16.mxu0 0
        %3451 = vmatpush2.bf16.msra.mxu0 %v3383
        %3452 = vmatprep.subr.bf16.mxu0 0
        %3453 = vmatpush2.bf16.msra.mxu0 %v3382
        %3454 = vmatprep.mubr.bf16.mxu0 %v2185
        %3455 = vmatmul.mubr.bf16.gmra.mxu0 %v1849
        %v3456 = vpop.f32.mrf.mxu0
        %v3457 = vadd.f32 0.0, %v3456
        %v3458 = vpop.f32.mrf.mxu0
        %v3459 = vpop.f32.mrf.mxu0
        %v3460 = vadd.f32 0.0, %v3459
        %v3461 = vpop.f32.mrf.mxu0
        %3462 = vmatprep.mubr.bf16.mxu0 %v2186
        %3463 = vmatmul.mubr.bf16.gmra.mxu0 %v1850
        %v3464 = vpop.f32.mrf.mxu0
        %v3465 = vadd.f32 0.0, %v3464
        %v3466 = vpop.f32.mrf.mxu0
        %v3467 = vpop.f32.mrf.mxu0
        %v3468 = vadd.f32 0.0, %v3467
        %v3469 = vpop.f32.mrf.mxu0
        %3470 = vmatprep.mubr.bf16.mxu0 %v2187
        %3471 = vmatmul.mubr.bf16.gmra.mxu0 %v1851
        %v3472 = vpop.f32.mrf.mxu0
        %v3473 = vadd.f32 0.0, %v3472
        %v3474 = vpop.f32.mrf.mxu0
        %v3475 = vpop.f32.mrf.mxu0
        %v3476 = vadd.f32 0.0, %v3475
        %v3477 = vpop.f32.mrf.mxu0
        %3478 = vmatprep.mubr.bf16.mxu0 %v2188
        %3479 = vmatmul.mubr.bf16.gmra.mxu0 %v1852
        %v3480 = vpop.f32.mrf.mxu0
        %v3481 = vadd.f32 0.0, %v3480
        %v3482 = vpop.f32.mrf.mxu0
        %v3483 = vpop.f32.mrf.mxu0
        %v3484 = vadd.f32 0.0, %v3483
        %v3485 = vpop.f32.mrf.mxu0
        %3486 = vmatprep.mubr.bf16.mxu0 %v2189
        %3487 = vmatmul.mubr.bf16.gmra.mxu0 %v1853
        %v3488 = vpop.f32.mrf.mxu0
        %v3489 = vadd.f32 0.0, %v3488
        %v3490 = vpop.f32.mrf.mxu0
        %v3491 = vpop.f32.mrf.mxu0
        %v3492 = vadd.f32 0.0, %v3491
        %v3493 = vpop.f32.mrf.mxu0
        %3494 = vmatprep.mubr.bf16.mxu0 %v2190
        %3495 = vmatmul.mubr.bf16.gmra.mxu0 %v1854
        %v3496 = vpop.f32.mrf.mxu0
        %v3497 = vadd.f32 0.0, %v3496
        %v3498 = vpop.f32.mrf.mxu0
        %v3499 = vpop.f32.mrf.mxu0
        %v3500 = vadd.f32 0.0, %v3499
        %v3501 = vpop.f32.mrf.mxu0
        %3502 = vmatprep.mubr.bf16.mxu0 %v2191
        %3503 = vmatmul.mubr.bf16.gmra.mxu0 %v1855
        %v3504 = vpop.f32.mrf.mxu0
        %v3505 = vadd.f32 0.0, %v3504
        %v3506 = vpop.f32.mrf.mxu0
        %v3507 = vpop.f32.mrf.mxu0
        %v3508 = vadd.f32 0.0, %v3507
        %v3509 = vpop.f32.mrf.mxu0
        %3510 = vmatprep.mubr.bf16.mxu0 %v2192
        %3511 = vmatmul.mubr.bf16.gmra.mxu0 %v1856
        %v3512 = vpop.f32.mrf.mxu0
        %v3513 = vadd.f32 0.0, %v3512
        %v3514 = vpop.f32.mrf.mxu0
        %v3515 = vpop.f32.mrf.mxu0
        %v3516 = vadd.f32 0.0, %v3515
        %v3517 = vpop.f32.mrf.mxu0
        %3518 = vmatprep.mubr.bf16.mxu0 %v2193
        %3519 = vmatmul.mubr.bf16.gmra.mxu0 %v1857
        %v3520 = vpop.f32.mrf.mxu0
        %v3521 = vadd.f32 0.0, %v3520
        %v3522 = vpop.f32.mrf.mxu0
        %v3523 = vpop.f32.mrf.mxu0
        %v3524 = vadd.f32 0.0, %v3523
        %v3525 = vpop.f32.mrf.mxu0
        %3526 = vmatprep.mubr.bf16.mxu0 %v2194
        %3527 = vmatmul.mubr.bf16.gmra.mxu0 %v1858
        %v3528 = vpop.f32.mrf.mxu0
        %v3529 = vadd.f32 0.0, %v3528
        %v3530 = vpop.f32.mrf.mxu0
        %v3531 = vpop.f32.mrf.mxu0
        %v3532 = vadd.f32 0.0, %v3531
        %v3533 = vpop.f32.mrf.mxu0
        %3534 = vmatprep.mubr.bf16.mxu0 %v2195
        %3535 = vmatmul.mubr.bf16.gmra.mxu0 %v1859
        %v3536 = vpop.f32.mrf.mxu0
        %v3537 = vadd.f32 0.0, %v3536
        %v3538 = vpop.f32.mrf.mxu0
        %v3539 = vpop.f32.mrf.mxu0
        %v3540 = vadd.f32 0.0, %v3539
        %v3541 = vpop.f32.mrf.mxu0
        %3542 = vmatprep.mubr.bf16.mxu0 %v2196
        %3543 = vmatmul.mubr.bf16.gmra.mxu0 %v1860
        %v3544 = vpop.f32.mrf.mxu0
        %v3545 = vadd.f32 0.0, %v3544
        %v3546 = vpop.f32.mrf.mxu0
        %v3547 = vpop.f32.mrf.mxu0
        %v3548 = vadd.f32 0.0, %v3547
        %v3549 = vpop.f32.mrf.mxu0
        %3550 = vmatprep.mubr.bf16.mxu0 %v2197
        %3551 = vmatmul.mubr.bf16.gmra.mxu0 %v1861
        %v3552 = vpop.f32.mrf.mxu0
        %v3553 = vadd.f32 0.0, %v3552
        %v3554 = vpop.f32.mrf.mxu0
        %v3555 = vpop.f32.mrf.mxu0
        %v3556 = vadd.f32 0.0, %v3555
        %v3557 = vpop.f32.mrf.mxu0
        %3558 = vmatprep.mubr.bf16.mxu0 %v2198
        %3559 = vmatmul.mubr.bf16.gmra.mxu0 %v1862
        %v3560 = vpop.f32.mrf.mxu0
        %v3561 = vadd.f32 0.0, %v3560
        %v3562 = vpop.f32.mrf.mxu0
        %v3563 = vpop.f32.mrf.mxu0
        %v3564 = vadd.f32 0.0, %v3563
        %v3565 = vpop.f32.mrf.mxu0
        %3566 = vmatprep.mubr.bf16.mxu0 %v2199
        %3567 = vmatmul.mubr.bf16.gmra.mxu0 %v1863
        %v3568 = vpop.f32.mrf.mxu0
        %v3569 = vadd.f32 0.0, %v3568
        %v3570 = vpop.f32.mrf.mxu0
        %v3571 = vpop.f32.mrf.mxu0
        %v3572 = vadd.f32 0.0, %v3571
        %v3573 = vpop.f32.mrf.mxu0
        %3574 = vmatprep.mubr.bf16.mxu0 %v2183
        %3575 = vmatmul.mubr.bf16.gmra.mxu0 %v1864
        %v3576 = vpop.f32.mrf.mxu0
        %v3577 = vadd.f32 0.0, %v3576
        %v3578 = vpop.f32.mrf.mxu0
        %v3579 = vpop.f32.mrf.mxu0
        %v3580 = vadd.f32 0.0, %v3579
        %v3581 = vpop.f32.mrf.mxu0
        %3582 = vdwg.mxu0
        %3583 = vmatprep.subr.bf16.mxu0 0
        %3584 = vmatpush1.bf16.msra.mxu0 %v3397
        %3585 = vmatprep.subr.bf16.mxu0 0
        %3586 = vmatpush1.bf16.msra.mxu0 %v3396
        %3587 = vmatprep.subr.bf16.mxu0 0
        %3588 = vmatpush1.bf16.msra.mxu0 %v3395
        %3589 = vmatprep.subr.bf16.mxu0 0
        %3590 = vmatpush1.bf16.msra.mxu0 %v3394
        %3591 = vmatprep.subr.bf16.mxu0 0
        %3592 = vmatpush1.bf16.msra.mxu0 %v3393
        %3593 = vmatprep.subr.bf16.mxu0 0
        %3594 = vmatpush1.bf16.msra.mxu0 %v3392
        %3595 = vmatprep.subr.bf16.mxu0 0
        %3596 = vmatpush1.bf16.msra.mxu0 %v3391
        %3597 = vmatprep.subr.bf16.mxu0 0
        %3598 = vmatpush1.bf16.msra.mxu0 %v3390
        %3599 = vmatprep.subr.bf16.mxu0 0
        %3600 = vmatpush2.bf16.msra.mxu0 0
        %3601 = vmatprep.subr.bf16.mxu0 0
        %3602 = vmatpush2.bf16.msra.mxu0 0
        %3603 = vmatprep.subr.bf16.mxu0 0
        %3604 = vmatpush2.bf16.msra.mxu0 0
        %3605 = vmatprep.subr.bf16.mxu0 0
        %3606 = vmatpush2.bf16.msra.mxu0 0
        %3607 = vmatprep.subr.bf16.mxu0 0
        %3608 = vmatpush2.bf16.msra.mxu0 0
        %3609 = vmatprep.subr.bf16.mxu0 0
        %3610 = vmatpush2.bf16.msra.mxu0 0
        %3611 = vmatprep.subr.bf16.mxu0 0
        %3612 = vmatpush2.bf16.msra.mxu0 0
        %3613 = vmatprep.subr.bf16.mxu0 0
        %3614 = vmatpush2.bf16.msra.mxu0 0
        %3615 = vmatprep.mubr.bf16.mxu0 0
        %3616 = vmatmul.mubr.bf16.gmra.mxu0 %v2167
        %v3617 = vpop.f32.mrf.mxu0
        %v3618 = vadd.f32 %v3457, %v3617
        %v3619 = vpop.f32.mrf.mxu0
        %v3620 = vpop.f32.mrf.mxu0
        %v3621 = vadd.f32 %v3460, %v3620
        %v3622 = vpop.f32.mrf.mxu0
        %3623 = vmatprep.mubr.bf16.mxu0 0
        %3624 = vmatmul.mubr.bf16.gmra.mxu0 %v2168
        %v3625 = vpop.f32.mrf.mxu0
        %v3626 = vadd.f32 %v3465, %v3625
        %v3627 = vpop.f32.mrf.mxu0
        %v3628 = vpop.f32.mrf.mxu0
        %v3629 = vadd.f32 %v3468, %v3628
        %v3630 = vpop.f32.mrf.mxu0
        %3631 = vmatprep.mubr.bf16.mxu0 0
        %3632 = vmatmul.mubr.bf16.gmra.mxu0 %v2169
        %v3633 = vpop.f32.mrf.mxu0
        %v3634 = vadd.f32 %v3473, %v3633
        %v3635 = vpop.f32.mrf.mxu0
        %v3636 = vpop.f32.mrf.mxu0
        %v3637 = vadd.f32 %v3476, %v3636
        %v3638 = vpop.f32.mrf.mxu0
        %3639 = vmatprep.mubr.bf16.mxu0 0
        %3640 = vmatmul.mubr.bf16.gmra.mxu0 %v2170
        %v3641 = vpop.f32.mrf.mxu0
        %v3642 = vadd.f32 %v3481, %v3641
        %v3643 = vpop.f32.mrf.mxu0
        %v3644 = vpop.f32.mrf.mxu0
        %v3645 = vadd.f32 %v3484, %v3644
        %v3646 = vpop.f32.mrf.mxu0
        %3647 = vmatprep.mubr.bf16.mxu0 0
        %3648 = vmatmul.mubr.bf16.gmra.mxu0 %v2171
        %v3649 = vpop.f32.mrf.mxu0
        %v3650 = vadd.f32 %v3489, %v3649
        %v3651 = vpop.f32.mrf.mxu0
        %v3652 = vpop.f32.mrf.mxu0
        %v3653 = vadd.f32 %v3492, %v3652
        %v3654 = vpop.f32.mrf.mxu0
        %3655 = vmatprep.mubr.bf16.mxu0 0
        %3656 = vmatmul.mubr.bf16.gmra.mxu0 %v2172
        %v3657 = vpop.f32.mrf.mxu0
        %v3658 = vadd.f32 %v3497, %v3657
        %v3659 = vpop.f32.mrf.mxu0
        %v3660 = vpop.f32.mrf.mxu0
        %v3661 = vadd.f32 %v3500, %v3660
        %v3662 = vpop.f32.mrf.mxu0
        %3663 = vmatprep.mubr.bf16.mxu0 0
        %3664 = vmatmul.mubr.bf16.gmra.mxu0 %v2173
        %v3665 = vpop.f32.mrf.mxu0
        %v3666 = vadd.f32 %v3505, %v3665
        %v3667 = vpop.f32.mrf.mxu0
        %v3668 = vpop.f32.mrf.mxu0
        %v3669 = vadd.f32 %v3508, %v3668
        %v3670 = vpop.f32.mrf.mxu0
        %3671 = vmatprep.mubr.bf16.mxu0 0
        %3672 = vmatmul.mubr.bf16.gmra.mxu0 %v2174
        %v3673 = vpop.f32.mrf.mxu0
        %v3674 = vadd.f32 %v3513, %v3673
        %v3675 = vpop.f32.mrf.mxu0
        %v3676 = vpop.f32.mrf.mxu0
        %v3677 = vadd.f32 %v3516, %v3676
        %v3678 = vpop.f32.mrf.mxu0
        %3679 = vmatprep.mubr.bf16.mxu0 0
        %3680 = vmatmul.mubr.bf16.gmra.mxu0 %v2175
        %v3681 = vpop.f32.mrf.mxu0
        %v3682 = vadd.f32 %v3521, %v3681
        %v3683 = vpop.f32.mrf.mxu0
        %v3684 = vpop.f32.mrf.mxu0
        %v3685 = vadd.f32 %v3524, %v3684
        %v3686 = vpop.f32.mrf.mxu0
        %3687 = vmatprep.mubr.bf16.mxu0 0
        %3688 = vmatmul.mubr.bf16.gmra.mxu0 %v2176
        %v3689 = vpop.f32.mrf.mxu0
        %v3690 = vadd.f32 %v3529, %v3689
        %v3691 = vpop.f32.mrf.mxu0
        %v3692 = vpop.f32.mrf.mxu0
        %v3693 = vadd.f32 %v3532, %v3692
        %v3694 = vpop.f32.mrf.mxu0
        %3695 = vmatprep.mubr.bf16.mxu0 0
        %3696 = vmatmul.mubr.bf16.gmra.mxu0 %v2177
        %v3697 = vpop.f32.mrf.mxu0
        %v3698 = vadd.f32 %v3537, %v3697
        %v3699 = vpop.f32.mrf.mxu0
        %v3700 = vpop.f32.mrf.mxu0
        %v3701 = vadd.f32 %v3540, %v3700
        %v3702 = vpop.f32.mrf.mxu0
        %3703 = vmatprep.mubr.bf16.mxu0 0
        %3704 = vmatmul.mubr.bf16.gmra.mxu0 %v2178
        %v3705 = vpop.f32.mrf.mxu0
        %v3706 = vadd.f32 %v3545, %v3705
        %v3707 = vpop.f32.mrf.mxu0
        %v3708 = vpop.f32.mrf.mxu0
        %v3709 = vadd.f32 %v3548, %v3708
        %v3710 = vpop.f32.mrf.mxu0
        %3711 = vmatprep.mubr.bf16.mxu0 0
        %3712 = vmatmul.mubr.bf16.gmra.mxu0 %v2179
        %v3713 = vpop.f32.mrf.mxu0
        %v3714 = vadd.f32 %v3553, %v3713
        %v3715 = vpop.f32.mrf.mxu0
        %v3716 = vpop.f32.mrf.mxu0
        %v3717 = vadd.f32 %v3556, %v3716
        %v3718 = vpop.f32.mrf.mxu0
        %3719 = vmatprep.mubr.bf16.mxu0 0
        %3720 = vmatmul.mubr.bf16.gmra.mxu0 %v2180
        %v3721 = vpop.f32.mrf.mxu0
        %v3722 = vadd.f32 %v3561, %v3721
        %v3723 = vpop.f32.mrf.mxu0
        %v3724 = vpop.f32.mrf.mxu0
        %v3725 = vadd.f32 %v3564, %v3724
        %v3726 = vpop.f32.mrf.mxu0
        %3727 = vmatprep.mubr.bf16.mxu0 0
        %3728 = vmatmul.mubr.bf16.gmra.mxu0 %v2181
        %v3729 = vpop.f32.mrf.mxu0
        %v3730 = vadd.f32 %v3569, %v3729
        %v3731 = vpop.f32.mrf.mxu0
        %v3732 = vpop.f32.mrf.mxu0
        %v3733 = vadd.f32 %v3572, %v3732
        %v3734 = vpop.f32.mrf.mxu0
        %3735 = vmatprep.mubr.bf16.mxu0 0
        %3736 = vmatmul.mubr.bf16.gmra.mxu0 %v2182
        %v3737 = vpop.f32.mrf.mxu0
        %v3738 = vadd.f32 %v3577, %v3737
        %v3739 = vpop.f32.mrf.mxu0
        %v3740 = vpop.f32.mrf.mxu0
        %v3741 = vadd.f32 %v3580, %v3740
        %v3742 = vpop.f32.mrf.mxu0
        %3743 = vdwg.mxu0
        %v3744 = vadd.f32 %v3103, %v3618
        %v3745 = vadd.f32 %v3106, %v3621
        %v3746 = vadd.f32 %v3111, %v3626
        %v3747 = vadd.f32 %v3114, %v3629
        %v3748 = vadd.f32 %v3119, %v3634
        %v3749 = vadd.f32 %v3122, %v3637
        %v3750 = vadd.f32 %v3127, %v3642
        %v3751 = vadd.f32 %v3130, %v3645
        %v3752 = vadd.f32 %v3135, %v3650
        %v3753 = vadd.f32 %v3138, %v3653
        %v3754 = vadd.f32 %v3143, %v3658
        %v3755 = vadd.f32 %v3146, %v3661
        %v3756 = vadd.f32 %v3151, %v3666
        %v3757 = vadd.f32 %v3154, %v3669
        %v3758 = vadd.f32 %v3159, %v3674
        %v3759 = vadd.f32 %v3162, %v3677
        %v3760 = vadd.f32 %v3167, %v3682
        %v3761 = vadd.f32 %v3170, %v3685
        %v3762 = vadd.f32 %v3175, %v3690
        %v3763 = vadd.f32 %v3178, %v3693
        %v3764 = vadd.f32 %v3183, %v3698
        %v3765 = vadd.f32 %v3186, %v3701
        %v3766 = vadd.f32 %v3191, %v3706
        %v3767 = vadd.f32 %v3194, %v3709
        %v3768 = vadd.f32 %v3199, %v3714
        %v3769 = vadd.f32 %v3202, %v3717
        %v3770 = vadd.f32 %v3207, %v3722
        %v3771 = vadd.f32 %v3210, %v3725
        %v3772 = vadd.f32 %v3215, %v3730
        %v3773 = vadd.f32 %v3218, %v3733
        %v3774 = vadd.f32 %v3223, %v3738
        %v3775 = vadd.f32 %v3226, %v3741
        %v3776 = vld [vmem:[%s5] sm:$0x1]
        %v3778 = vlaneseq
        %v3779 = vshrl.u32 %v3778, 7
        %v3780 = vsub.s32 0, %v3779
        %v3781 = vrot.slane %v3776, %v3780
        %v3783 = vmul.f32 %v3744, %v3781
        %v3784 = vmul.f32 %v3745, %v3781
        %v3785 = vmul.f32 %v3746, %v3781
        %v3786 = vmul.f32 %v3747, %v3781
        %v3787 = vmul.f32 %v3748, %v3781
        %v3788 = vmul.f32 %v3749, %v3781
        %v3789 = vmul.f32 %v3750, %v3781
        %v3790 = vmul.f32 %v3751, %v3781
        %v3791 = vmul.f32 %v3752, %v3781
        %v3792 = vmul.f32 %v3753, %v3781
        %v3793 = vmul.f32 %v3754, %v3781
        %v3794 = vmul.f32 %v3755, %v3781
        %v3795 = vmul.f32 %v3756, %v3781
        %v3796 = vmul.f32 %v3757, %v3781
        %v3797 = vmul.f32 %v3758, %v3781
        %v3798 = vmul.f32 %v3759, %v3781
        %v3799 = vmul.f32 %v3760, %v3781
        %v3800 = vmul.f32 %v3761, %v3781
        %v3801 = vmul.f32 %v3762, %v3781
        %v3802 = vmul.f32 %v3763, %v3781
        %v3803 = vmul.f32 %v3764, %v3781
        %v3804 = vmul.f32 %v3765, %v3781
        %v3805 = vmul.f32 %v3766, %v3781
        %v3806 = vmul.f32 %v3767, %v3781
        %v3807 = vmul.f32 %v3768, %v3781
        %v3808 = vmul.f32 %v3769, %v3781
        %v3809 = vmul.f32 %v3770, %v3781
        %v3810 = vmul.f32 %v3771, %v3781
        %v3811 = vmul.f32 %v3772, %v3781
        %v3812 = vmul.f32 %v3773, %v3781
        %v3813 = vmul.f32 %v3774, %v3781
        %v3814 = vmul.f32 %v3775, %v3781
        %v3815 = vld [vmem:[%s6] sm:$0x1]
        %v3817 = vlaneseq
        %v3818 = vshrl.u32 %v3817, 7
        %v3819 = vsub.s32 0, %v3818
        %v3820 = vrot.slane %v3815, %v3819
        %v3822 = vadd.f32 %v3783, %v3820
        %v3823 = vadd.f32 %v3784, %v3820
        %v3824 = vadd.f32 %v3785, %v3820
        %v3825 = vadd.f32 %v3786, %v3820
        %v3826 = vadd.f32 %v3787, %v3820
        %v3827 = vadd.f32 %v3788, %v3820
        %v3828 = vadd.f32 %v3789, %v3820
        %v3829 = vadd.f32 %v3790, %v3820
        %v3830 = vadd.f32 %v3791, %v3820
        %v3831 = vadd.f32 %v3792, %v3820
        %v3832 = vadd.f32 %v3793, %v3820
        %v3833 = vadd.f32 %v3794, %v3820
        %v3834 = vadd.f32 %v3795, %v3820
        %v3835 = vadd.f32 %v3796, %v3820
        %v3836 = vadd.f32 %v3797, %v3820
        %v3837 = vadd.f32 %v3798, %v3820
        %v3838 = vadd.f32 %v3799, %v3820
        %v3839 = vadd.f32 %v3800, %v3820
        %v3840 = vadd.f32 %v3801, %v3820
        %v3841 = vadd.f32 %v3802, %v3820
        %v3842 = vadd.f32 %v3803, %v3820
        %v3843 = vadd.f32 %v3804, %v3820
        %v3844 = vadd.f32 %v3805, %v3820
        %v3845 = vadd.f32 %v3806, %v3820
        %v3846 = vadd.f32 %v3807, %v3820
        %v3847 = vadd.f32 %v3808, %v3820
        %v3848 = vadd.f32 %v3809, %v3820
        %v3849 = vadd.f32 %v3810, %v3820
        %v3850 = vadd.f32 %v3811, %v3820
        %v3851 = vadd.f32 %v3812, %v3820
        %v3852 = vadd.f32 %v3813, %v3820
        %v3853 = vadd.f32 %v3814, %v3820
        %v3854 = vmax.f32 %v3822, 0.0
        %v3855 = vmax.f32 %v3823, 0.0
        %v3856 = vmax.f32 %v3824, 0.0
        %v3857 = vmax.f32 %v3825, 0.0
        %v3858 = vmax.f32 %v3826, 0.0
        %v3859 = vmax.f32 %v3827, 0.0
        %v3860 = vmax.f32 %v3828, 0.0
        %v3861 = vmax.f32 %v3829, 0.0
        %v3862 = vmax.f32 %v3830, 0.0
        %v3863 = vmax.f32 %v3831, 0.0
        %v3864 = vmax.f32 %v3832, 0.0
        %v3865 = vmax.f32 %v3833, 0.0
        %v3866 = vmax.f32 %v3834, 0.0
        %v3867 = vmax.f32 %v3835, 0.0
        %v3868 = vmax.f32 %v3836, 0.0
        %v3869 = vmax.f32 %v3837, 0.0
        %v3870 = vmax.f32 %v3838, 0.0
        %v3871 = vmax.f32 %v3839, 0.0
        %v3872 = vmax.f32 %v3840, 0.0
        %v3873 = vmax.f32 %v3841, 0.0
        %v3874 = vmax.f32 %v3842, 0.0
        %v3875 = vmax.f32 %v3843, 0.0
        %v3876 = vmax.f32 %v3844, 0.0
        %v3877 = vmax.f32 %v3845, 0.0
        %v3878 = vmax.f32 %v3846, 0.0
        %v3879 = vmax.f32 %v3847, 0.0
        %v3880 = vmax.f32 %v3848, 0.0
        %v3881 = vmax.f32 %v3849, 0.0
        %v3882 = vmax.f32 %v3850, 0.0
        %v3883 = vmax.f32 %v3851, 0.0
        %v3884 = vmax.f32 %v3852, 0.0
        %v3885 = vmax.f32 %v3853, 0.0
        %v3886 = vpack.c.bf16 %v3855, %v3854
        %v3887 = vpack.c.bf16 %v3857, %v3856
        %v3888 = vpack.c.bf16 %v3859, %v3858
        %v3889 = vpack.c.bf16 %v3861, %v3860
        %v3890 = vpack.c.bf16 %v3863, %v3862
        %v3891 = vpack.c.bf16 %v3865, %v3864
        %v3892 = vpack.c.bf16 %v3867, %v3866
        %v3893 = vpack.c.bf16 %v3869, %v3868
        %v3894 = vpack.c.bf16 %v3871, %v3870
        %v3895 = vpack.c.bf16 %v3873, %v3872
        %v3896 = vpack.c.bf16 %v3875, %v3874
        %v3897 = vpack.c.bf16 %v3877, %v3876
        %v3898 = vpack.c.bf16 %v3879, %v3878
        %v3899 = vpack.c.bf16 %v3881, %v3880
        %v3900 = vpack.c.bf16 %v3883, %v3882
        %v3901 = vpack.c.bf16 %v3885, %v3884
        %v3902 = vld [vmem:[%s10] sm:$0x1]
        %v3904 = vlaneseq
        %v3905 = vshrl.u32 %v3904, 7
        %v3906 = vsub.s32 0, %v3905
        %v3907 = vrot.slane %v3902, %v3906
        %v3909 = vmul.f32 %v740, %v3907
        %v3910 = vmul.f32 %v744, %v3907
        %v3911 = vmul.f32 %v750, %v3907
        %v3912 = vmul.f32 %v754, %v3907
        %v3913 = vmul.f32 %v760, %v3907
        %v3914 = vmul.f32 %v764, %v3907
        %v3915 = vmul.f32 %v770, %v3907
        %v3916 = vmul.f32 %v774, %v3907
        %v3917 = vmul.f32 %v780, %v3907
        %v3918 = vmul.f32 %v784, %v3907
        %v3919 = vmul.f32 %v790, %v3907
        %v3920 = vmul.f32 %v794, %v3907
        %v3921 = vmul.f32 %v800, %v3907
        %v3922 = vmul.f32 %v804, %v3907
        %v3923 = vmul.f32 %v810, %v3907
        %v3924 = vmul.f32 %v814, %v3907
        %v3925 = vmul.f32 %v820, %v3907
        %v3926 = vmul.f32 %v824, %v3907
        %v3927 = vmul.f32 %v830, %v3907
        %v3928 = vmul.f32 %v834, %v3907
        %v3929 = vmul.f32 %v840, %v3907
        %v3930 = vmul.f32 %v844, %v3907
        %v3931 = vmul.f32 %v850, %v3907
        %v3932 = vmul.f32 %v854, %v3907
        %v3933 = vmul.f32 %v860, %v3907
        %v3934 = vmul.f32 %v864, %v3907
        %v3935 = vmul.f32 %v870, %v3907
        %v3936 = vmul.f32 %v874, %v3907
        %v3937 = vmul.f32 %v880, %v3907
        %v3938 = vmul.f32 %v884, %v3907
        %v3939 = vmul.f32 %v890, %v3907
        %v3940 = vmul.f32 %v894, %v3907
        %v3941 = vld [vmem:[%s11] sm:$0x1]
        %v3943 = vlaneseq
        %v3944 = vshrl.u32 %v3943, 7
        %v3945 = vsub.s32 0, %v3944
        %v3946 = vrot.slane %v3941, %v3945
        %v3948 = vadd.f32 %v3909, %v3946
        %v3949 = vadd.f32 %v3910, %v3946
        %v3950 = vadd.f32 %v3911, %v3946
        %v3951 = vadd.f32 %v3912, %v3946
        %v3952 = vadd.f32 %v3913, %v3946
        %v3953 = vadd.f32 %v3914, %v3946
        %v3954 = vadd.f32 %v3915, %v3946
        %v3955 = vadd.f32 %v3916, %v3946
        %v3956 = vadd.f32 %v3917, %v3946
        %v3957 = vadd.f32 %v3918, %v3946
        %v3958 = vadd.f32 %v3919, %v3946
        %v3959 = vadd.f32 %v3920, %v3946
        %v3960 = vadd.f32 %v3921, %v3946
        %v3961 = vadd.f32 %v3922, %v3946
        %v3962 = vadd.f32 %v3923, %v3946
        %v3963 = vadd.f32 %v3924, %v3946
        %v3964 = vadd.f32 %v3925, %v3946
        %v3965 = vadd.f32 %v3926, %v3946
        %v3966 = vadd.f32 %v3927, %v3946
        %v3967 = vadd.f32 %v3928, %v3946
        %v3968 = vadd.f32 %v3929, %v3946
        %v3969 = vadd.f32 %v3930, %v3946
        %v3970 = vadd.f32 %v3931, %v3946
        %v3971 = vadd.f32 %v3932, %v3946
        %v3972 = vadd.f32 %v3933, %v3946
        %v3973 = vadd.f32 %v3934, %v3946
        %v3974 = vadd.f32 %v3935, %v3946
        %v3975 = vadd.f32 %v3936, %v3946
        %v3976 = vadd.f32 %v3937, %v3946
        %v3977 = vadd.f32 %v3938, %v3946
        %v3978 = vadd.f32 %v3939, %v3946
        %v3979 = vadd.f32 %v3940, %v3946
        %v3980 = vld [vmem:[#allocation8] sm:$0xf]
        %v3981 = vld [vmem:[#allocation8 + $0x4] sm:$0xf]
        %v3982 = vld [vmem:[#allocation8 + $0x8] sm:$0xf]
        %v3983 = vld [vmem:[#allocation8 + $0xc] sm:$0xf]
        %v3984 = vld [vmem:[#allocation8 + $0x10] sm:$0xf]
        %v3985 = vld [vmem:[#allocation8 + $0x14] sm:$0xf]
        %v3986 = vld [vmem:[#allocation8 + $0x18] sm:$0xf]
        %v3987 = vld [vmem:[#allocation8 + $0x1c] sm:$0xf]
        %v3988 = vld [vmem:[#allocation8 + $0x20] sm:$0xf]
        %v3989 = vld [vmem:[#allocation8 + $0x24] sm:$0xf]
        %v3990 = vld [vmem:[#allocation8 + $0x28] sm:$0xf]
        %v3991 = vld [vmem:[#allocation8 + $0x2c] sm:$0xf]
        %v3992 = vld [vmem:[#allocation8 + $0x30] sm:$0xf]
        %v3993 = vld [vmem:[#allocation8 + $0x34] sm:$0xf]
        %v3994 = vld [vmem:[#allocation8 + $0x38] sm:$0xf]
        %v3995 = vld [vmem:[#allocation8 + $0x3c] sm:$0xf]
        %v4012 = vunpack.c.l.b16 %v3980
        %v4013 = vunpack.c.l.b16 %v3981
        %v4014 = vunpack.c.l.b16 %v3982
        %v4015 = vunpack.c.l.b16 %v3983
        %v4016 = vunpack.c.l.b16 %v3984
        %v4017 = vunpack.c.l.b16 %v3985
        %v4018 = vunpack.c.l.b16 %v3986
        %v4019 = vunpack.c.l.b16 %v3987
        %v4020 = vunpack.c.l.b16 %v3988
        %v4021 = vunpack.c.l.b16 %v3989
        %v4022 = vunpack.c.l.b16 %v3990
        %v4023 = vunpack.c.l.b16 %v3991
        %v4024 = vunpack.c.l.b16 %v3992
        %v4025 = vunpack.c.l.b16 %v3993
        %v4026 = vunpack.c.l.b16 %v3994
        %v4027 = vunpack.c.l.b16 %v3995
        %v4028 = vpack.c.b16 %v4013, %v4012
        %v4029 = vpack.c.b16 %v4015, %v4014
        %v4030 = vpack.c.b16 %v4017, %v4016
        %v4031 = vpack.c.b16 %v4019, %v4018
        %v4032 = vpack.c.b16 %v4021, %v4020
        %v4033 = vpack.c.b16 %v4023, %v4022
        %v4034 = vpack.c.b16 %v4025, %v4024
        %v4035 = vpack.c.b16 %v4027, %v4026
        %4044 = vmatprep.subr.bf16.mxu0 0
        %4045 = vmatpush1.bf16.msra.mxu0 %v4035
        %4046 = vmatprep.subr.bf16.mxu0 0
        %4047 = vmatpush1.bf16.msra.mxu0 %v4034
        %4048 = vmatprep.subr.bf16.mxu0 0
        %4049 = vmatpush1.bf16.msra.mxu0 %v4033
        %4050 = vmatprep.subr.bf16.mxu0 0
        %4051 = vmatpush1.bf16.msra.mxu0 %v4032
        %4052 = vmatprep.subr.bf16.mxu0 0
        %4053 = vmatpush1.bf16.msra.mxu0 %v4031
        %4054 = vmatprep.subr.bf16.mxu0 0
        %4055 = vmatpush1.bf16.msra.mxu0 %v4030
        %4056 = vmatprep.subr.bf16.mxu0 0
        %4057 = vmatpush1.bf16.msra.mxu0 %v4029
        %4058 = vmatprep.subr.bf16.mxu0 0
        %4059 = vmatpush1.bf16.msra.mxu0 %v4028
        %4060 = vmatprep.subr.bf16.mxu0 0
        %4061 = vmatpush2.bf16.msra.mxu0 0
        %4062 = vmatprep.subr.bf16.mxu0 0
        %4063 = vmatpush2.bf16.msra.mxu0 0
        %4064 = vmatprep.subr.bf16.mxu0 0
        %4065 = vmatpush2.bf16.msra.mxu0 0
        %4066 = vmatprep.subr.bf16.mxu0 0
        %4067 = vmatpush2.bf16.msra.mxu0 0
        %4068 = vmatprep.subr.bf16.mxu0 0
        %4069 = vmatpush2.bf16.msra.mxu0 0
        %4070 = vmatprep.subr.bf16.mxu0 0
        %4071 = vmatpush2.bf16.msra.mxu0 0
        %4072 = vmatprep.subr.bf16.mxu0 0
        %4073 = vmatpush2.bf16.msra.mxu0 0
        %4074 = vmatprep.subr.bf16.mxu0 0
        %4075 = vmatpush2.bf16.msra.mxu0 0
        %4076 = vmatprep.mubr.bf16.mxu0 0
        %4077 = vmatmul.mubr.bf16.gmra.mxu0 %v3886
        %v4078 = vpop.f32.mrf.mxu0
        %v4079 = vadd.f32 0.0, %v4078
        %v4080 = vpop.f32.mrf.mxu0
        %v4081 = vpop.f32.mrf.mxu0
        %v4082 = vadd.f32 0.0, %v4081
        %v4083 = vpop.f32.mrf.mxu0
        %4084 = vmatprep.mubr.bf16.mxu0 0
        %4085 = vmatmul.mubr.bf16.gmra.mxu0 %v3887
        %v4086 = vpop.f32.mrf.mxu0
        %v4087 = vadd.f32 0.0, %v4086
        %v4088 = vpop.f32.mrf.mxu0
        %v4089 = vpop.f32.mrf.mxu0
        %v4090 = vadd.f32 0.0, %v4089
        %v4091 = vpop.f32.mrf.mxu0
        %4092 = vmatprep.mubr.bf16.mxu0 0
        %4093 = vmatmul.mubr.bf16.gmra.mxu0 %v3888
        %v4094 = vpop.f32.mrf.mxu0
        %v4095 = vadd.f32 0.0, %v4094
        %v4096 = vpop.f32.mrf.mxu0
        %v4097 = vpop.f32.mrf.mxu0
        %v4098 = vadd.f32 0.0, %v4097
        %v4099 = vpop.f32.mrf.mxu0
        %4100 = vmatprep.mubr.bf16.mxu0 0
        %4101 = vmatmul.mubr.bf16.gmra.mxu0 %v3889
        %v4102 = vpop.f32.mrf.mxu0
        %v4103 = vadd.f32 0.0, %v4102
        %v4104 = vpop.f32.mrf.mxu0
        %v4105 = vpop.f32.mrf.mxu0
        %v4106 = vadd.f32 0.0, %v4105
        %v4107 = vpop.f32.mrf.mxu0
        %4108 = vmatprep.mubr.bf16.mxu0 0
        %4109 = vmatmul.mubr.bf16.gmra.mxu0 %v3890
        %v4110 = vpop.f32.mrf.mxu0
        %v4111 = vadd.f32 0.0, %v4110
        %v4112 = vpop.f32.mrf.mxu0
        %v4113 = vpop.f32.mrf.mxu0
        %v4114 = vadd.f32 0.0, %v4113
        %v4115 = vpop.f32.mrf.mxu0
        %4116 = vmatprep.mubr.bf16.mxu0 0
        %4117 = vmatmul.mubr.bf16.gmra.mxu0 %v3891
        %v4118 = vpop.f32.mrf.mxu0
        %v4119 = vadd.f32 0.0, %v4118
        %v4120 = vpop.f32.mrf.mxu0
        %v4121 = vpop.f32.mrf.mxu0
        %v4122 = vadd.f32 0.0, %v4121
        %v4123 = vpop.f32.mrf.mxu0
        %4124 = vmatprep.mubr.bf16.mxu0 0
        %4125 = vmatmul.mubr.bf16.gmra.mxu0 %v3892
        %v4126 = vpop.f32.mrf.mxu0
        %v4127 = vadd.f32 0.0, %v4126
        %v4128 = vpop.f32.mrf.mxu0
        %v4129 = vpop.f32.mrf.mxu0
        %v4130 = vadd.f32 0.0, %v4129
        %v4131 = vpop.f32.mrf.mxu0
        %4132 = vmatprep.mubr.bf16.mxu0 0
        %4133 = vmatmul.mubr.bf16.gmra.mxu0 %v3893
        %v4134 = vpop.f32.mrf.mxu0
        %v4135 = vadd.f32 0.0, %v4134
        %v4136 = vpop.f32.mrf.mxu0
        %v4137 = vpop.f32.mrf.mxu0
        %v4138 = vadd.f32 0.0, %v4137
        %v4139 = vpop.f32.mrf.mxu0
        %4140 = vmatprep.mubr.bf16.mxu0 0
        %4141 = vmatmul.mubr.bf16.gmra.mxu0 %v3894
        %v4142 = vpop.f32.mrf.mxu0
        %v4143 = vadd.f32 0.0, %v4142
        %v4144 = vpop.f32.mrf.mxu0
        %v4145 = vpop.f32.mrf.mxu0
        %v4146 = vadd.f32 0.0, %v4145
        %v4147 = vpop.f32.mrf.mxu0
        %4148 = vmatprep.mubr.bf16.mxu0 0
        %4149 = vmatmul.mubr.bf16.gmra.mxu0 %v3895
        %v4150 = vpop.f32.mrf.mxu0
        %v4151 = vadd.f32 0.0, %v4150
        %v4152 = vpop.f32.mrf.mxu0
        %v4153 = vpop.f32.mrf.mxu0
        %v4154 = vadd.f32 0.0, %v4153
        %v4155 = vpop.f32.mrf.mxu0
        %4156 = vmatprep.mubr.bf16.mxu0 0
        %4157 = vmatmul.mubr.bf16.gmra.mxu0 %v3896
        %v4158 = vpop.f32.mrf.mxu0
        %v4159 = vadd.f32 0.0, %v4158
        %v4160 = vpop.f32.mrf.mxu0
        %v4161 = vpop.f32.mrf.mxu0
        %v4162 = vadd.f32 0.0, %v4161
        %v4163 = vpop.f32.mrf.mxu0
        %4164 = vmatprep.mubr.bf16.mxu0 0
        %4165 = vmatmul.mubr.bf16.gmra.mxu0 %v3897
        %v4166 = vpop.f32.mrf.mxu0
        %v4167 = vadd.f32 0.0, %v4166
        %v4168 = vpop.f32.mrf.mxu0
        %v4169 = vpop.f32.mrf.mxu0
        %v4170 = vadd.f32 0.0, %v4169
        %v4171 = vpop.f32.mrf.mxu0
        %4172 = vmatprep.mubr.bf16.mxu0 0
        %4173 = vmatmul.mubr.bf16.gmra.mxu0 %v3898
        %v4174 = vpop.f32.mrf.mxu0
        %v4175 = vadd.f32 0.0, %v4174
        %v4176 = vpop.f32.mrf.mxu0
        %v4177 = vpop.f32.mrf.mxu0
        %v4178 = vadd.f32 0.0, %v4177
        %v4179 = vpop.f32.mrf.mxu0
        %4180 = vmatprep.mubr.bf16.mxu0 0
        %4181 = vmatmul.mubr.bf16.gmra.mxu0 %v3899
        %v4182 = vpop.f32.mrf.mxu0
        %v4183 = vadd.f32 0.0, %v4182
        %v4184 = vpop.f32.mrf.mxu0
        %v4185 = vpop.f32.mrf.mxu0
        %v4186 = vadd.f32 0.0, %v4185
        %v4187 = vpop.f32.mrf.mxu0
        %4188 = vmatprep.mubr.bf16.mxu0 0
        %4189 = vmatmul.mubr.bf16.gmra.mxu0 %v3900
        %v4190 = vpop.f32.mrf.mxu0
        %v4191 = vadd.f32 0.0, %v4190
        %v4192 = vpop.f32.mrf.mxu0
        %v4193 = vpop.f32.mrf.mxu0
        %v4194 = vadd.f32 0.0, %v4193
        %v4195 = vpop.f32.mrf.mxu0
        %4196 = vmatprep.mubr.bf16.mxu0 0
        %4197 = vmatmul.mubr.bf16.gmra.mxu0 %v3901
        %v4198 = vpop.f32.mrf.mxu0
        %v4199 = vadd.f32 0.0, %v4198
        %v4200 = vpop.f32.mrf.mxu0
        %v4201 = vpop.f32.mrf.mxu0
        %v4202 = vadd.f32 0.0, %v4201
        %v4203 = vpop.f32.mrf.mxu0
        %4204 = vdwg.mxu0
        %v4205 = vld [vmem:[%s8] sm:$0x1]
        %v4207 = vlaneseq
        %v4208 = vshrl.u32 %v4207, 7
        %v4209 = vsub.s32 0, %v4208
        %v4210 = vrot.slane %v4205, %v4209
        %v4212 = vmul.f32 %v4079, %v4210
        %v4213 = vmul.f32 %v4082, %v4210
        %v4214 = vmul.f32 %v4087, %v4210
        %v4215 = vmul.f32 %v4090, %v4210
        %v4216 = vmul.f32 %v4095, %v4210
        %v4217 = vmul.f32 %v4098, %v4210
        %v4218 = vmul.f32 %v4103, %v4210
        %v4219 = vmul.f32 %v4106, %v4210
        %v4220 = vmul.f32 %v4111, %v4210
        %v4221 = vmul.f32 %v4114, %v4210
        %v4222 = vmul.f32 %v4119, %v4210
        %v4223 = vmul.f32 %v4122, %v4210
        %v4224 = vmul.f32 %v4127, %v4210
        %v4225 = vmul.f32 %v4130, %v4210
        %v4226 = vmul.f32 %v4135, %v4210
        %v4227 = vmul.f32 %v4138, %v4210
        %v4228 = vmul.f32 %v4143, %v4210
        %v4229 = vmul.f32 %v4146, %v4210
        %v4230 = vmul.f32 %v4151, %v4210
        %v4231 = vmul.f32 %v4154, %v4210
        %v4232 = vmul.f32 %v4159, %v4210
        %v4233 = vmul.f32 %v4162, %v4210
        %v4234 = vmul.f32 %v4167, %v4210
        %v4235 = vmul.f32 %v4170, %v4210
        %v4236 = vmul.f32 %v4175, %v4210
        %v4237 = vmul.f32 %v4178, %v4210
        %v4238 = vmul.f32 %v4183, %v4210
        %v4239 = vmul.f32 %v4186, %v4210
        %v4240 = vmul.f32 %v4191, %v4210
        %v4241 = vmul.f32 %v4194, %v4210
        %v4242 = vmul.f32 %v4199, %v4210
        %v4243 = vmul.f32 %v4202, %v4210
        %v4244 = vld [vmem:[%s9] sm:$0x1]
        %v4246 = vlaneseq
        %v4247 = vshrl.u32 %v4246, 7
        %v4248 = vsub.s32 0, %v4247
        %v4249 = vrot.slane %v4244, %v4248
        %v4251 = vadd.f32 %v4212, %v4249
        %v4252 = vadd.f32 %v4213, %v4249
        %v4253 = vadd.f32 %v4214, %v4249
        %v4254 = vadd.f32 %v4215, %v4249
        %v4255 = vadd.f32 %v4216, %v4249
        %v4256 = vadd.f32 %v4217, %v4249
        %v4257 = vadd.f32 %v4218, %v4249
        %v4258 = vadd.f32 %v4219, %v4249
        %v4259 = vadd.f32 %v4220, %v4249
        %v4260 = vadd.f32 %v4221, %v4249
        %v4261 = vadd.f32 %v4222, %v4249
        %v4262 = vadd.f32 %v4223, %v4249
        %v4263 = vadd.f32 %v4224, %v4249
        %v4264 = vadd.f32 %v4225, %v4249
        %v4265 = vadd.f32 %v4226, %v4249
        %v4266 = vadd.f32 %v4227, %v4249
        %v4267 = vadd.f32 %v4228, %v4249
        %v4268 = vadd.f32 %v4229, %v4249
        %v4269 = vadd.f32 %v4230, %v4249
        %v4270 = vadd.f32 %v4231, %v4249
        %v4271 = vadd.f32 %v4232, %v4249
        %v4272 = vadd.f32 %v4233, %v4249
        %v4273 = vadd.f32 %v4234, %v4249
        %v4274 = vadd.f32 %v4235, %v4249
        %v4275 = vadd.f32 %v4236, %v4249
        %v4276 = vadd.f32 %v4237, %v4249
        %v4277 = vadd.f32 %v4238, %v4249
        %v4278 = vadd.f32 %v4239, %v4249
        %v4279 = vadd.f32 %v4240, %v4249
        %v4280 = vadd.f32 %v4241, %v4249
        %v4281 = vadd.f32 %v4242, %v4249
        %v4282 = vadd.f32 %v4243, %v4249
        %v4283 = vadd.f32 %v4251, %v3948
        %v4284 = vadd.f32 %v4252, %v3949
        %v4285 = vadd.f32 %v4253, %v3950
        %v4286 = vadd.f32 %v4254, %v3951
        %v4287 = vadd.f32 %v4255, %v3952
        %v4288 = vadd.f32 %v4256, %v3953
        %v4289 = vadd.f32 %v4257, %v3954
        %v4290 = vadd.f32 %v4258, %v3955
        %v4291 = vadd.f32 %v4259, %v3956
        %v4292 = vadd.f32 %v4260, %v3957
        %v4293 = vadd.f32 %v4261, %v3958
        %v4294 = vadd.f32 %v4262, %v3959
        %v4295 = vadd.f32 %v4263, %v3960
        %v4296 = vadd.f32 %v4264, %v3961
        %v4297 = vadd.f32 %v4265, %v3962
        %v4298 = vadd.f32 %v4266, %v3963
        %v4299 = vadd.f32 %v4267, %v3964
        %v4300 = vadd.f32 %v4268, %v3965
        %v4301 = vadd.f32 %v4269, %v3966
        %v4302 = vadd.f32 %v4270, %v3967
        %v4303 = vadd.f32 %v4271, %v3968
        %v4304 = vadd.f32 %v4272, %v3969
        %v4305 = vadd.f32 %v4273, %v3970
        %v4306 = vadd.f32 %v4274, %v3971
        %v4307 = vadd.f32 %v4275, %v3972
        %v4308 = vadd.f32 %v4276, %v3973
        %v4309 = vadd.f32 %v4277, %v3974
        %v4310 = vadd.f32 %v4278, %v3975
        %v4311 = vadd.f32 %v4279, %v3976
        %v4312 = vadd.f32 %v4280, %v3977
        %v4313 = vadd.f32 %v4281, %v3978
        %v4314 = vadd.f32 %v4282, %v3979
        %v4315 = vmax.f32 %v4283, 0.0
        %v4316 = vmax.f32 %v4284, 0.0
        %v4317 = vmax.f32 %v4285, 0.0
        %v4318 = vmax.f32 %v4286, 0.0
        %v4319 = vmax.f32 %v4287, 0.0
        %v4320 = vmax.f32 %v4288, 0.0
        %v4321 = vmax.f32 %v4289, 0.0
        %v4322 = vmax.f32 %v4290, 0.0
        %v4323 = vmax.f32 %v4291, 0.0
        %v4324 = vmax.f32 %v4292, 0.0
        %v4325 = vmax.f32 %v4293, 0.0
        %v4326 = vmax.f32 %v4294, 0.0
        %v4327 = vmax.f32 %v4295, 0.0
        %v4328 = vmax.f32 %v4296, 0.0
        %v4329 = vmax.f32 %v4297, 0.0
        %v4330 = vmax.f32 %v4298, 0.0
        %v4331 = vmax.f32 %v4299, 0.0
        %v4332 = vmax.f32 %v4300, 0.0
        %v4333 = vmax.f32 %v4301, 0.0
        %v4334 = vmax.f32 %v4302, 0.0
        %v4335 = vmax.f32 %v4303, 0.0
        %v4336 = vmax.f32 %v4304, 0.0
        %v4337 = vmax.f32 %v4305, 0.0
        %v4338 = vmax.f32 %v4306, 0.0
        %v4339 = vmax.f32 %v4307, 0.0
        %v4340 = vmax.f32 %v4308, 0.0
        %v4341 = vmax.f32 %v4309, 0.0
        %v4342 = vmax.f32 %v4310, 0.0
        %v4343 = vmax.f32 %v4311, 0.0
        %v4344 = vmax.f32 %v4312, 0.0
        %v4345 = vmax.f32 %v4313, 0.0
        %v4346 = vmax.f32 %v4314, 0.0
        %4347 = vst [vmem:[%s475] sm:$0xff] %v4315
        %4348 = vst [vmem:[%s475 + $0x8] sm:$0xff] %v4316
        %4349 = vst [vmem:[%s475 + $0x10] sm:$0xff] %v4317
        %4350 = vst [vmem:[%s475 + $0x18] sm:$0xff] %v4318
        %4351 = vst [vmem:[%s475 + $0x20] sm:$0xff] %v4319
        %4352 = vst [vmem:[%s475 + $0x28] sm:$0xff] %v4320
        %4353 = vst [vmem:[%s475 + $0x30] sm:$0xff] %v4321
        %4354 = vst [vmem:[%s475 + $0x38] sm:$0xff] %v4322
        %4355 = vst [vmem:[%s475 + $0x40] sm:$0xff] %v4323
        %4356 = vst [vmem:[%s475 + $0x48] sm:$0xff] %v4324
        %4357 = vst [vmem:[%s475 + $0x50] sm:$0xff] %v4325
        %4358 = vst [vmem:[%s475 + $0x58] sm:$0xff] %v4326
        %4359 = vst [vmem:[%s475 + $0x60] sm:$0xff] %v4327
        %4360 = vst [vmem:[%s475 + $0x68] sm:$0xff] %v4328
        %4361 = vst [vmem:[%s475 + $0x70] sm:$0xff] %v4329
        %4362 = vst [vmem:[%s475 + $0x78] sm:$0xff] %v4330
        %4363 = vst [vmem:[%s475 + $0x80] sm:$0xff] %v4331
        %4364 = vst [vmem:[%s475 + $0x88] sm:$0xff] %v4332
        %4365 = vst [vmem:[%s475 + $0x90] sm:$0xff] %v4333
        %4366 = vst [vmem:[%s475 + $0x98] sm:$0xff] %v4334
        %4367 = vst [vmem:[%s475 + $0xa0] sm:$0xff] %v4335
        %4368 = vst [vmem:[%s475 + $0xa8] sm:$0xff] %v4336
        %4369 = vst [vmem:[%s475 + $0xb0] sm:$0xff] %v4337
        %4370 = vst [vmem:[%s475 + $0xb8] sm:$0xff] %v4338
        %4371 = vst [vmem:[%s475 + $0xc0] sm:$0xff] %v4339
        %4372 = vst [vmem:[%s475 + $0xc8] sm:$0xff] %v4340
        %4373 = vst [vmem:[%s475 + $0xd0] sm:$0xff] %v4341
        %4374 = vst [vmem:[%s475 + $0xd8] sm:$0xff] %v4342
        %4375 = vst [vmem:[%s475 + $0xe0] sm:$0xff] %v4343
        %4376 = vst [vmem:[%s475 + $0xe8] sm:$0xff] %v4344
        %4377 = vst [vmem:[%s475 + $0xf0] sm:$0xff] %v4345
        %4378 = vst [vmem:[%s475 + $0xf8] sm:$0xff] %v4346
        %s4379 = sand.u32 %s296, 1
        %s4380 = scalar_lea.sflag [#allocation4], %s4379
        %s4381 = sand.u32 %s296, 1
        %s4382 = smul.addr %s4381, 256
        %s4383 = scalar_lea.vmem [#allocation10], %s4382
        // Predicated region
        $region85: #{tpu_custom_call.1} parent=67 // pred_check
          %p4384 = pneg %p306
        $region86: #{tpu_custom_call.1} parent=67 // pred_check_branch
          %4386 = sbr.rel (%p4384) target = $region88
        $region87: #{tpu_custom_call.1} parent=67 // pred_region
          %s4388 = ssub.s32 4096, 4096
          %4389 = vsyncadd %s4380, %s4388
          %s4390 = smul.addr %s31, 32
          %s4391 = smul.addr %s4390, 128
          %s4392 = scalar_lea.hbm %s12, %s4391
          %s4393 = sshll.u32 %s4383, 4
          %s4394 = int_to_ptr.vmem [resolvable:$true] %s4393
          %4399 = dma.vmem_to_hbm [thread:$0]  %s4394, 4096, %s4392, %s4380, 128, 128, 8
        $region88: #{tpu_custom_call.1} parent=67 // pred_fallthru
          _
      $region68: #{tpu_custom_call.1} parent=5 // pred_fallthru
        _
      %p4400 = scmp.le.s32.totalorder 2, %s26
      // Predicated region
      $region89: #{tpu_custom_call.1} parent=5 // pred_check
        %p4401 = pneg %p4400
      $region90: #{tpu_custom_call.1} parent=5 // pred_check_branch
        %4403 = sbr.rel (%p4401) target = $region92
      $region91: #{tpu_custom_call.1} parent=5 // pred_region
        %s4404 = ssub.s32 %s26, 2
        // Predicated region
        $region93: #{tpu_custom_call.1} parent=91 // pred_check
          %p4405 = pneg %p312
        $region94: #{tpu_custom_call.1} parent=91 // pred_check_branch
          %4407 = sbr.rel (%p4405) target = $region96
        $region95: #{tpu_custom_call.1} parent=91 // pred_region
          %s4408 = sand.u32 %s297, 1
          %s4409 = scalar_lea.sflag [#allocation4], %s4408
          %s4410 = sand.u32 %s297, 1
          %s4411 = smul.addr %s4410, 256
          %s4412 = scalar_lea.vmem [#allocation10], %s4411
          %4413 = dma.done %s4409, 4096
        $region96: #{tpu_custom_call.1} parent=91 // pred_fallthru
          _
      $region92: #{tpu_custom_call.1} parent=5 // pred_fallthru
        _
    $region6: #{tpu_custom_call.1} parent=1 // loop_footer
      %s30 = sadd.s32 1, %s26
    $region7: #{tpu_custom_call.1} parent=1 // loop_footer_branch
      %25 = sbr.rel target = $region3
    $region8: #{tpu_custom_call.1} parent=1 // loop_exit
      _
    %4414 = vsyncpa [#allocation3], 1
    %s4415 = scalar_lea.sflag [#allocation3], 1
    %4416 = vsyncpa %s4415, 1
    %4417 = vsyncpa [#allocation6], 1
    %4418 = vsyncpa [#allocation9], 1
    %4419 = vsyncpa [#allocation4], 1
    %s4420 = scalar_lea.sflag [#allocation4], 1
    %4421 = vsyncpa %s4420, 1

// kernel: tpu_custom_call.1
$region0: #{tpu_custom_call.1}
  #allocation0 [shape = 'u32[]', space=smem, size = 0x4, offset = 0x4, fixed_abs, tag = 'smem constant byte address 0x4 - core index']
  #allocation1 [shape = 'u32[144,128]{1,0:T(1,128)}', space=vmem, size = 0x12000, scoped, tag = 'internal scratch']
  %s0 = inlined_call_operand.hbm [shape: bf16[2,16,16,128], index: 0, kind: input, shape index: {}]
  %s1 = inlined_call_operand.hbm [shape: bf16[128,256], index: 1, kind: input, shape index: {}]
  %s2 = inlined_call_operand.vmem [shape: f32[1,128], index: 2, kind: input, shape index: {}]
  %s3 = inlined_call_operand.vmem [shape: f32[1,128], index: 3, kind: input, shape index: {}]
  %s4 = inlined_call_operand.hbm [shape: bf16[3,384,128], index: 4, kind: input, shape index: {}]
  %s5 = inlined_call_operand.vmem [shape: f32[1,128], index: 5, kind: input, shape index: {}]
  %s6 = inlined_call_operand.vmem [shape: f32[1,128], index: 6, kind: input, shape index: {}]
  %s7 = inlined_call_operand.hbm [shape: bf16[128,128], index: 7, kind: input, shape index: {}]
  %s8 = inlined_call_operand.vmem [shape: f32[1,128], index: 8, kind: input, shape index: {}]
  %s9 = inlined_call_operand.vmem [shape: f32[1,128], index: 9, kind: input, shape index: {}]
  %s10 = inlined_call_operand.vmem [shape: f32[1,128], index: 10, kind: input, shape index: {}]
  %s11 = inlined_call_operand.vmem [shape: f32[1,128], index: 11, kind: input, shape index: {}]
  %s12 = inlined_call_operand.hbm [shape: f32[2,16,16,128], index: 12, kind: output, shape index: {}]
  %s13 = sld [smem:[#allocation0]]
  $region97: #{tpu_custom_call.1} parent=0
    _
  %s15 = ssub.s32 1, %s13
  %s16 = scalar_select 0, %s15, %s13
  $region1: #{tpu_custom_call.1} parent=0
    #allocation2 [shape = 'u8[131072]{0}', space=vmem, size = 0x20000, scoped, tag = 'input window, operand 0']
    #allocation3 [shape = 's32[2]{0}', space=sflag, size = 0x8, scoped, tag = 'scoped memory for tpu_custom_call.1']
    #allocation4 [shape = 's32[2]{0}', space=sflag, size = 0x8, scoped, tag = 'scoped memory for tpu_custom_call.1']
    #allocation5 [shape = 'u8[65536]{0}', space=vmem, size = 0x10000, scoped, tag = 'input window, operand 1, single buffered']
    #allocation6 [shape = 's32[1]{0}', space=sflag, size = 0x4, scoped, tag = 'scoped memory for tpu_custom_call.1']
    #allocation7 [shape = 'u8[294912]{0}', space=vmem, size = 0x48000, scoped, tag = 'input window, operand 4, single buffered']
    #allocation8 [shape = 'u8[32768]{0}', space=vmem, size = 0x8000, scoped, tag = 'input window, operand 7, single buffered']
    #allocation9 [shape = 's32[1]{0}', space=sflag, size = 0x4, scoped, tag = 'scoped memory for tpu_custom_call.1']
    #allocation10 [shape = 'u8[262144]{0}', space=vmem, size = 0x40000, scoped, tag = 'output window, operand 0']
    %17 = vsyncpa [#allocation3], 0
    %s18 = scalar_lea.sflag [#allocation3], 1
    %19 = vsyncpa %s18, 0
    %20 = vsyncpa [#allocation6], 0
    %21 = vsyncpa [#allocation9], 0
    %22 = vsyncpa [#allocation4], 0
    %s23 = scalar_lea.sflag [#allocation4], 1
    %24 = vsyncpa %s23, 0
    loop: start=0, step=1, limit=4
    $region2: #{tpu_custom_call.1} parent=1 // loop_pre_header
      _
    $region3: #{tpu_custom_call.1} parent=1 // loop_header
      %s26 = sphi 0, %s30
      %p27 = scmp.ge.s32.totalorder %s26, 4
      %s36 = sphi 0, %s38
      %s39 = sphi 0, %s36
      %s40 = sphi 0, %s39
      %s56 = sphi 0, %s40
      %s60 = sphi 0, %s60
      %s62 = sphi 0, %s60
      %s63 = sphi 0, %s62
      %s77 = sphi 0, %s63
      %s81 = sphi 0, %s81
      %s83 = sphi 0, %s81
      %s84 = sphi 0, %s83
      %s98 = sphi 0, %s84
      %s102 = sphi 0, %s102
      %s104 = sphi 0, %s102
      %s105 = sphi 0, %s104
      %s119 = sphi 0, %s105
      %s123 = sphi 0, %s123
      %s125 = sphi 0, %s123
      %s126 = sphi 0, %s125
      %s140 = sphi 0, %s126
      %s144 = sphi 0, %s144
      %s146 = sphi 0, %s144
      %s147 = sphi 0, %s146
      %s161 = sphi 0, %s147
      %s165 = sphi 0, %s165
      %s167 = sphi 0, %s165
      %s168 = sphi 0, %s167
      %s182 = sphi 0, %s168
      %s186 = sphi 0, %s186
      %s188 = sphi 0, %s186
      %s189 = sphi 0, %s188
      %s203 = sphi 0, %s189
      %s207 = sphi 0, %s207
      %s209 = sphi 0, %s207
      %s210 = sphi 0, %s209
      %s224 = sphi 0, %s210
      %s228 = sphi 0, %s228
      %s230 = sphi 0, %s228
      %s231 = sphi 0, %s230
      %s245 = sphi 0, %s231
      %s249 = sphi 0, %s249
      %s251 = sphi 0, %s249
      %s252 = sphi 0, %s251
      %s266 = sphi 0, %s252
      %s270 = sphi 0, %s270
      %s272 = sphi 0, %s270
      %s273 = sphi 0, %s272
      %s287 = sphi 0, %s273
      %s293 = sphi 0, %s295
      %s296 = sphi 0, %s293
      %s297 = sphi 0, %s296
      %s313 = sphi 0, %s297
    $region4: #{tpu_custom_call.1} parent=1 // loop_header_branch
      %29 = sbr.rel (%p27) target = $region8
    $region5: #{tpu_custom_call.1} parent=1 // loop_body
      %s31 = ssub.s32 %s26, 1
      %s32 = ssub.s32 %s26, 2
      %s33 = sadd.s32 %s26, 1
      %s34 = ssub.s32 %s26, %s33
      %p35 = scmp.eq.s32.totalorder %s34, 0
      %s37 = sadd.s32 %s36, 1
      %s38 = scalar_select %p35, %s36, %s37
      %p41 = pneg %p35
      %p42 = scmp.eq.s32.totalorder %s26, 1
      %p43 = por %p41, %p42
      %p44 = scmp.ne.s32.totalorder %s36, %s39
      %p45 = scmp.eq.s32.totalorder %s26, 0
      %p46 = por %p44, %p45
      %p47 = scmp.ne.s32.totalorder %s36, %s39
      %p48 = scmp.eq.s32.totalorder %s31, 1
      %p49 = por %p47, %p48
      %p50 = scmp.ne.s32.totalorder %s39, %s40
      %p51 = scmp.eq.s32.totalorder %s31, 0
      %p52 = por %p50, %p51
      %p53 = scmp.ne.s32.totalorder %s39, %s40
      %p54 = scmp.eq.s32.totalorder %s32, 1
      %p55 = por %p53, %p54
      %p57 = scmp.ne.s32.totalorder %s40, %s56
      %p58 = scmp.eq.s32.totalorder %s32, 0
      %p59 = por %p57, %p58
      %s61 = sadd.s32 %s60, 1
      %p64 = scmp.eq.s32.totalorder %s26, 1
      %p65 = scmp.ne.s32.totalorder %s60, %s62
      %p66 = scmp.eq.s32.totalorder %s26, 0
      %p67 = por %p65, %p66
      %p68 = scmp.ne.s32.totalorder %s60, %s62
      %p69 = scmp.eq.s32.totalorder %s31, 1
      %p70 = por %p68, %p69
      %p71 = scmp.ne.s32.totalorder %s62, %s63
      %p72 = scmp.eq.s32.totalorder %s31, 0
      %p73 = por %p71, %p72
      %p74 = scmp.ne.s32.totalorder %s62, %s63
      %p75 = scmp.eq.s32.totalorder %s32, 1
      %p76 = por %p74, %p75
      %p78 = scmp.ne.s32.totalorder %s63, %s77
      %p79 = scmp.eq.s32.totalorder %s32, 0
      %p80 = por %p78, %p79
      %s82 = sadd.s32 %s81, 1
      %p85 = scmp.eq.s32.totalorder %s26, 1
      %p86 = scmp.ne.s32.totalorder %s81, %s83
      %p87 = scmp.eq.s32.totalorder %s26, 0
      %p88 = por %p86, %p87
      %p89 = scmp.ne.s32.totalorder %s81, %s83
      %p90 = scmp.eq.s32.totalorder %s31, 1
      %p91 = por %p89, %p90
      %p92 = scmp.ne.s32.totalorder %s83, %s84
      %p93 = scmp.eq.s32.totalorder %s31, 0
      %p94 = por %p92, %p93
      %p95 = scmp.ne.s32.totalorder %s83, %s84
      %p96 = scmp.eq.s32.totalorder %s32, 1
      %p97 = por %p95, %p96
      %p99 = scmp.ne.s32.totalorder %s84, %s98
      %p100 = scmp.eq.s32.totalorder %s32, 0
      %p101 = por %p99, %p100
      %s103 = sadd.s32 %s102, 1
      %p106 = scmp.eq.s32.totalorder %s26, 1
      %p107 = scmp.ne.s32.totalorder %s102, %s104
      %p108 = scmp.eq.s32.totalorder %s26, 0
      %p109 = por %p107, %p108
      %p110 = scmp.ne.s32.totalorder %s102, %s104
      %p111 = scmp.eq.s32.totalorder %s31, 1
      %p112 = por %p110, %p111
      %p113 = scmp.ne.s32.totalorder %s104, %s105
      %p114 = scmp.eq.s32.totalorder %s31, 0
      %p115 = por %p113, %p114
      %p116 = scmp.ne.s32.totalorder %s104, %s105
      %p117 = scmp.eq.s32.totalorder %s32, 1
      %p118 = por %p116, %p117
      %p120 = scmp.ne.s32.totalorder %s105, %s119
      %p121 = scmp.eq.s32.totalorder %s32, 0
      %p122 = por %p120, %p121
      %s124 = sadd.s32 %s123, 1
      %p127 = scmp.eq.s32.totalorder %s26, 1
      %p128 = scmp.ne.s32.totalorder %s123, %s125
      %p129 = scmp.eq.s32.totalorder %s26, 0
      %p130 = por %p128, %p129
      %p131 = scmp.ne.s32.totalorder %s123, %s125
      %p132 = scmp.eq.s32.totalorder %s31, 1
      %p133 = por %p131, %p132
      %p134 = scmp.ne.s32.totalorder %s125, %s126
      %p135 = scmp.eq.s32.totalorder %s31, 0
      %p136 = por %p134, %p135
      %p137 = scmp.ne.s32.totalorder %s125, %s126
      %p138 = scmp.eq.s32.totalorder %s32, 1
      %p139 = por %p137, %p138
      %p141 = scmp.ne.s32.totalorder %s126, %s140
      %p142 = scmp.eq.s32.totalorder %s32, 0
      %p143 = por %p141, %p142
      %s145 = sadd.s32 %s144, 1
      %p148 = scmp.eq.s32.totalorder %s26, 1
      %p149 = scmp.ne.s32.totalorder %s144, %s146
      %p150 = scmp.eq.s32.totalorder %s26, 0
      %p151 = por %p149, %p150
      %p152 = scmp.ne.s32.totalorder %s144, %s146
      %p153 = scmp.eq.s32.totalorder %s31, 1
      %p154 = por %p152, %p153
      %p155 = scmp.ne.s32.totalorder %s146, %s147
      %p156 = scmp.eq.s32.totalorder %s31, 0
      %p157 = por %p155, %p156
      %p158 = scmp.ne.s32.totalorder %s146, %s147
      %p159 = scmp.eq.s32.totalorder %s32, 1
      %p160 = por %p158, %p159
      %p162 = scmp.ne.s32.totalorder %s147, %s161
      %p163 = scmp.eq.s32.totalorder %s32, 0
      %p164 = por %p162, %p163
      %s166 = sadd.s32 %s165, 1
      %p169 = scmp.eq.s32.totalorder %s26, 1
      %p170 = scmp.ne.s32.totalorder %s165, %s167
      %p171 = scmp.eq.s32.totalorder %s26, 0
      %p172 = por %p170, %p171
      %p173 = scmp.ne.s32.totalorder %s165, %s167
      %p174 = scmp.eq.s32.totalorder %s31, 1
      %p175 = por %p173, %p174
      %p176 = scmp.ne.s32.totalorder %s167, %s168
      %p177 = scmp.eq.s32.totalorder %s31, 0
      %p178 = por %p176, %p177
      %p179 = scmp.ne.s32.totalorder %s167, %s168
      %p180 = scmp.eq.s32.totalorder %s32, 1
      %p181 = por %p179, %p180
      %p183 = scmp.ne.s32.totalorder %s168, %s182
      %p184 = scmp.eq.s32.totalorder %s32, 0
      %p185 = por %p183, %p184
      %s187 = sadd.s32 %s186, 1
      %p190 = scmp.eq.s32.totalorder %s26, 1
      %p191 = scmp.ne.s32.totalorder %s186, %s188
      %p192 = scmp.eq.s32.totalorder %s26, 0
      %p193 = por %p191, %p192
      %p194 = scmp.ne.s32.totalorder %s186, %s188
      %p195 = scmp.eq.s32.totalorder %s31, 1
      %p196 = por %p194, %p195
      %p197 = scmp.ne.s32.totalorder %s188, %s189
      %p198 = scmp.eq.s32.totalorder %s31, 0
      %p199 = por %p197, %p198
      %p200 = scmp.ne.s32.totalorder %s188, %s189
      %p201 = scmp.eq.s32.totalorder %s32, 1
      %p202 = por %p200, %p201
      %p204 = scmp.ne.s32.totalorder %s189, %s203
      %p205 = scmp.eq.s32.totalorder %s32, 0
      %p206 = por %p204, %p205
      %s208 = sadd.s32 %s207, 1
      %p211 = scmp.eq.s32.totalorder %s26, 1
      %p212 = scmp.ne.s32.totalorder %s207, %s209
      %p213 = scmp.eq.s32.totalorder %s26, 0
      %p214 = por %p212, %p213
      %p215 = scmp.ne.s32.totalorder %s207, %s209
      %p216 = scmp.eq.s32.totalorder %s31, 1
      %p217 = por %p215, %p216
      %p218 = scmp.ne.s32.totalorder %s209, %s210
      %p219 = scmp.eq.s32.totalorder %s31, 0
      %p220 = por %p218, %p219
      %p221 = scmp.ne.s32.totalorder %s209, %s210
      %p222 = scmp.eq.s32.totalorder %s32, 1
      %p223 = por %p221, %p222
      %p225 = scmp.ne.s32.totalorder %s210, %s224
      %p226 = scmp.eq.s32.totalorder %s32, 0
      %p227 = por %p225, %p226
      %s229 = sadd.s32 %s228, 1
      %p232 = scmp.eq.s32.totalorder %s26, 1
      %p233 = scmp.ne.s32.totalorder %s228, %s230
      %p234 = scmp.eq.s32.totalorder %s26, 0
      %p235 = por %p233, %p234
      %p236 = scmp.ne.s32.totalorder %s228, %s230
      %p237 = scmp.eq.s32.totalorder %s31, 1
      %p238 = por %p236, %p237
      %p239 = scmp.ne.s32.totalorder %s230, %s231
      %p240 = scmp.eq.s32.totalorder %s31, 0
      %p241 = por %p239, %p240
      %p242 = scmp.ne.s32.totalorder %s230, %s231
      %p243 = scmp.eq.s32.totalorder %s32, 1
      %p244 = por %p242, %p243
      %p246 = scmp.ne.s32.totalorder %s231, %s245
      %p247 = scmp.eq.s32.totalorder %s32, 0
      %p248 = por %p246, %p247
      %s250 = sadd.s32 %s249, 1
      %p253 = scmp.eq.s32.totalorder %s26, 1
      %p254 = scmp.ne.s32.totalorder %s249, %s251
      %p255 = scmp.eq.s32.totalorder %s26, 0
      %p256 = por %p254, %p255
      %p257 = scmp.ne.s32.totalorder %s249, %s251
      %p258 = scmp.eq.s32.totalorder %s31, 1
      %p259 = por %p257, %p258
      %p260 = scmp.ne.s32.totalorder %s251, %s252
      %p261 = scmp.eq.s32.totalorder %s31, 0
      %p262 = por %p260, %p261
      %p263 = scmp.ne.s32.totalorder %s251, %s252
      %p264 = scmp.eq.s32.totalorder %s32, 1
      %p265 = por %p263, %p264
      %p267 = scmp.ne.s32.totalorder %s252, %s266
      %p268 = scmp.eq.s32.totalorder %s32, 0
      %p269 = por %p267, %p268
      %s271 = sadd.s32 %s270, 1
      %p274 = scmp.eq.s32.totalorder %s26, 1
      %p275 = scmp.ne.s32.totalorder %s270, %s272
      %p276 = scmp.eq.s32.totalorder %s26, 0
      %p277 = por %p275, %p276
      %p278 = scmp.ne.s32.totalorder %s270, %s272
      %p279 = scmp.eq.s32.totalorder %s31, 1
      %p280 = por %p278, %p279
      %p281 = scmp.ne.s32.totalorder %s272, %s273
      %p282 = scmp.eq.s32.totalorder %s31, 0
      %p283 = por %p281, %p282
      %p284 = scmp.ne.s32.totalorder %s272, %s273
      %p285 = scmp.eq.s32.totalorder %s32, 1
      %p286 = por %p284, %p285
      %p288 = scmp.ne.s32.totalorder %s273, %s287
      %p289 = scmp.eq.s32.totalorder %s32, 0
      %p290 = por %p288, %p289
      %s291 = ssub.s32 %s26, %s33
      %p292 = scmp.eq.s32.totalorder %s291, 0
      %s294 = sadd.s32 %s293, 1
      %s295 = scalar_select %p292, %s293, %s294
      %p298 = pneg %p292
      %p299 = scmp.eq.s32.totalorder %s26, 1
      %p300 = por %p298, %p299
      %p301 = scmp.ne.s32.totalorder %s293, %s296
      %p302 = scmp.eq.s32.totalorder %s26, 0
      %p303 = por %p301, %p302
      %p304 = scmp.ne.s32.totalorder %s293, %s296
      %p305 = scmp.eq.s32.totalorder %s31, 1
      %p306 = por %p304, %p305
      %p307 = scmp.ne.s32.totalorder %s296, %s297
      %p308 = scmp.eq.s32.totalorder %s31, 0
      %p309 = por %p307, %p308
      %p310 = scmp.ne.s32.totalorder %s296, %s297
      %p311 = scmp.eq.s32.totalorder %s32, 1
      %p312 = por %p310, %p311
      %p314 = scmp.ne.s32.totalorder %s297, %s313
      %p315 = scmp.eq.s32.totalorder %s32, 0
      %p316 = por %p314, %p315
      %p317 = scmp.le.s32.totalorder 1, %s26
      %p318 = scmp.lt.s32.totalorder %s26, 3
      %p319 = pnand %p317, %p318
      %p320 = pneg %p319
      // Predicated region
      $region9: #{tpu_custom_call.1} parent=5 // pred_check
        _
      $region10: #{tpu_custom_call.1} parent=5 // pred_check_branch
        %322 = sbr.rel (%p319) target = $region12
      $region11: #{tpu_custom_call.1} parent=5 // pred_region
        %s323 = ssub.s32 %s26, 1
        // Predicated region
        $region13: #{tpu_custom_call.1} parent=11 // pred_check
          %p324 = pneg %p73
        $region14: #{tpu_custom_call.1} parent=11 // pred_check_branch
          %326 = sbr.rel (%p324) target = $region16
        $region15: #{tpu_custom_call.1} parent=11 // pred_region
          %s328 = ssub.s32 2048, 2048
          %329 = vsyncadd [#allocation6], %s328
          %s330 = sshll.u32 [#allocation5], 4
          %s331 = int_to_ptr.vmem [resolvable:$true] %s330
          %336 = dma.hbm_to_vmem [thread:$0]  %s1, 2048, %s331, [#allocation6], 128, 128, 8
        $region16: #{tpu_custom_call.1} parent=11 // pred_fallthru
          _
        // Predicated region
        $region17: #{tpu_custom_call.1} parent=11 // pred_check
          %p337 = pneg %p94
        $region18: #{tpu_custom_call.1} parent=11 // pred_check_branch
          %339 = sbr.rel (%p337) target = $region20
        $region19: #{tpu_custom_call.1} parent=11 // pred_region
          _
        $region20: #{tpu_custom_call.1} parent=11 // pred_fallthru
          _
        // Predicated region
        $region21: #{tpu_custom_call.1} parent=11 // pred_check
          %p340 = pneg %p115
        $region22: #{tpu_custom_call.1} parent=11 // pred_check_branch
          %342 = sbr.rel (%p340) target = $region24
        $region23: #{tpu_custom_call.1} parent=11 // pred_region
          _
        $region24: #{tpu_custom_call.1} parent=11 // pred_fallthru
          _
        // Predicated region
        $region25: #{tpu_custom_call.1} parent=11 // pred_check
          %p343 = pneg %p136
        $region26: #{tpu_custom_call.1} parent=11 // pred_check_branch
          %345 = sbr.rel (%p343) target = $region28
        $region27: #{tpu_custom_call.1} parent=11 // pred_region
          %s347 = ssub.s32 9216, 9216
          %348 = vsyncadd [#allocation6], %s347
          %s349 = sshll.u32 [#allocation7], 4
          %s350 = int_to_ptr.vmem [resolvable:$true] %s349
          %355 = dma.hbm_to_vmem [thread:$0]  %s4, 9216, %s350, [#allocation6], 64, 64, 4
        $region28: #{tpu_custom_call.1} parent=11 // pred_fallthru
          _
        // Predicated region
        $region29: #{tpu_custom_call.1} parent=11 // pred_check
          %p356 = pneg %p157
        $region30: #{tpu_custom_call.1} parent=11 // pred_check_branch
          %358 = sbr.rel (%p356) target = $region32
        $region31: #{tpu_custom_call.1} parent=11 // pred_region
          _
        $region32: #{tpu_custom_call.1} parent=11 // pred_fallthru
          _
        // Predicated region
        $region33: #{tpu_custom_call.1} parent=11 // pred_check
          %p359 = pneg %p178
        $region34: #{tpu_custom_call.1} parent=11 // pred_check_branch
          %361 = sbr.rel (%p359) target = $region36
        $region35: #{tpu_custom_call.1} parent=11 // pred_region
          _
        $region36: #{tpu_custom_call.1} parent=11 // pred_fallthru
          _
        // Predicated region
        $region37: #{tpu_custom_call.1} parent=11 // pred_check
          %p362 = pneg %p199
        $region38: #{tpu_custom_call.1} parent=11 // pred_check_branch
          %364 = sbr.rel (%p362) target = $region40
        $region39: #{tpu_custom_call.1} parent=11 // pred_region
          %s366 = ssub.s32 1024, 1024
          %367 = vsyncadd [#allocation9], %s366
          %s368 = sshll.u32 [#allocation8], 4
          %s369 = int_to_ptr.vmem [resolvable:$true] %s368
          %374 = dma.hbm_to_vmem [thread:$0]  %s7, 1024, %s369, [#allocation9], 64, 64, 4
        $region40: #{tpu_custom_call.1} parent=11 // pred_fallthru
          _
        // Predicated region
        $region41: #{tpu_custom_call.1} parent=11 // pred_check
          %p375 = pneg %p220
        $region42: #{tpu_custom_call.1} parent=11 // pred_check_branch
          %377 = sbr.rel (%p375) target = $region44
        $region43: #{tpu_custom_call.1} parent=11 // pred_region
          _
        $region44: #{tpu_custom_call.1} parent=11 // pred_fallthru
          _
        // Predicated region
        $region45: #{tpu_custom_call.1} parent=11 // pred_check
          %p378 = pneg %p241
        $region46: #{tpu_custom_call.1} parent=11 // pred_check_branch
          %380 = sbr.rel (%p378) target = $region48
        $region47: #{tpu_custom_call.1} parent=11 // pred_region
          _
        $region48: #{tpu_custom_call.1} parent=11 // pred_fallthru
          _
        // Predicated region
        $region49: #{tpu_custom_call.1} parent=11 // pred_check
          %p381 = pneg %p262
        $region50: #{tpu_custom_call.1} parent=11 // pred_check_branch
          %383 = sbr.rel (%p381) target = $region52
        $region51: #{tpu_custom_call.1} parent=11 // pred_region
          _
        $region52: #{tpu_custom_call.1} parent=11 // pred_fallthru
          _
        // Predicated region
        $region53: #{tpu_custom_call.1} parent=11 // pred_check
          %p384 = pneg %p283
        $region54: #{tpu_custom_call.1} parent=11 // pred_check_branch
          %386 = sbr.rel (%p384) target = $region56
        $region55: #{tpu_custom_call.1} parent=11 // pred_region
          _
        $region56: #{tpu_custom_call.1} parent=11 // pred_fallthru
          _
      $region12: #{tpu_custom_call.1} parent=5 // pred_fallthru
        _
      %p387 = scmp.lt.s32.totalorder %s26, 2
      // Predicated region
      $region57: #{tpu_custom_call.1} parent=5 // pred_check
        %p388 = pneg %p387
      $region58: #{tpu_custom_call.1} parent=5 // pred_check_branch
        %390 = sbr.rel (%p388) target = $region60
      $region59: #{tpu_custom_call.1} parent=5 // pred_region
        // Predicated region
        $region61: #{tpu_custom_call.1} parent=59 // pred_check
          %p391 = pneg %p46
        $region62: #{tpu_custom_call.1} parent=59 // pred_check_branch
          %393 = sbr.rel (%p391) target = $region64
        $region63: #{tpu_custom_call.1} parent=59 // pred_region
          %s394 = sand.u32 %s36, 1
          %s395 = scalar_lea.sflag [#allocation3], %s394
          %s396 = sand.u32 %s36, 1
          %s397 = smul.addr %s396, 128
          %s398 = scalar_lea.vmem [#allocation2], %s397
          %s400 = ssub.s32 2048, 2048
          %401 = vsyncadd %s395, %s400
          %s402 = smul.addr %s26, 32
          %s403 = smul.addr %s402, 64
          %s404 = scalar_lea.hbm %s0, %s403
          %s405 = sshll.u32 %s398, 4
          %s406 = int_to_ptr.vmem [resolvable:$true] %s405
          %411 = dma.hbm_to_vmem [thread:$0]  %s404, 2048, %s406, %s395, 64, 64, 4
        $region64: #{tpu_custom_call.1} parent=59 // pred_fallthru
          _
      $region60: #{tpu_custom_call.1} parent=5 // pred_fallthru
        _
      %p412 = scmp.le.s32.totalorder 1, %s26
      %p413 = scmp.lt.s32.totalorder %s26, 3
      %p414 = pnand %p412, %p413
      %p415 = pneg %p414
      // Predicated region
      $region65: #{tpu_custom_call.1} parent=5 // pred_check
        _
      $region66: #{tpu_custom_call.1} parent=5 // pred_check_branch
        %417 = sbr.rel (%p414) target = $region68
      $region67: #{tpu_custom_call.1} parent=5 // pred_region
        %s418 = ssub.s32 %s26, 1
        %s419 = sand.u32 %s39, 1
        %s420 = scalar_lea.sflag [#allocation3], %s419
        %s421 = sand.u32 %s39, 1
        %s422 = smul.addr %s421, 128
        %s423 = scalar_lea.vmem [#allocation2], %s422
        // Predicated region
        $region69: #{tpu_custom_call.1} parent=67 // pred_check
          %p424 = pneg %p52
        $region70: #{tpu_custom_call.1} parent=67 // pred_check_branch
          %426 = sbr.rel (%p424) target = $region72
        $region71: #{tpu_custom_call.1} parent=67 // pred_region
          %427 = dma.done %s420, 2048
        $region72: #{tpu_custom_call.1} parent=67 // pred_fallthru
          _
        // Predicated region
        $region73: #{tpu_custom_call.1} parent=67 // pred_check
          %p428 = pneg %p73
        $region74: #{tpu_custom_call.1} parent=67 // pred_check_branch
          %430 = sbr.rel (%p428) target = $region76
        $region75: #{tpu_custom_call.1} parent=67 // pred_region
          %431 = dma.done [#allocation6], 2048
        $region76: #{tpu_custom_call.1} parent=67 // pred_fallthru
          _
        // Predicated region
        $region77: #{tpu_custom_call.1} parent=67 // pred_check
          %p432 = pneg %p136
        $region78: #{tpu_custom_call.1} parent=67 // pred_check_branch
          %434 = sbr.rel (%p432) target = $region80
        $region79: #{tpu_custom_call.1} parent=67 // pred_region
          %435 = dma.done [#allocation6], 9216
        $region80: #{tpu_custom_call.1} parent=67 // pred_fallthru
          _
        // Predicated region
        $region81: #{tpu_custom_call.1} parent=67 // pred_check
          %p436 = pneg %p199
        $region82: #{tpu_custom_call.1} parent=67 // pred_check_branch
          %438 = sbr.rel (%p436) target = $region84
        $region83: #{tpu_custom_call.1} parent=67 // pred_region
          %439 = dma.done [#allocation9], 1024
        $region84: #{tpu_custom_call.1} parent=67 // pred_fallthru
          _
        %s440 = sand.u32 %s39, 1
        %s441 = scalar_lea.sflag [#allocation3], %s440
        %s442 = sand.u32 %s39, 1
        %s443 = smul.addr %s442, 128
        %s444 = scalar_lea.vmem [#allocation2], %s443
        %p445 = pneg %p52
        %p446 = pneg %p49
        %p447 = pneg %p73
        %p448 = pneg %p70
        %p449 = pneg %p94
        %p450 = pneg %p91
        %p451 = pneg %p115
        %p452 = pneg %p112
        %p453 = pneg %p136
        %p454 = pneg %p133
        %p455 = pneg %p157
        %p456 = pneg %p154
        %p457 = pneg %p178
        %p458 = pneg %p175
        %p459 = pneg %p199
        %p460 = pneg %p196
        %p461 = pneg %p220
        %p462 = pneg %p217
        %p463 = pneg %p241
        %p464 = pneg %p238
        %p465 = pneg %p262
        %p466 = pneg %p259
        %p467 = pneg %p283
        %p468 = pneg %p280
        %p469 = pneg %p309
        %p470 = pneg %p306
        %s471 = sand.u32 %s296, 1
        %s472 = scalar_lea.sflag [#allocation4], %s471
        %s473 = sand.u32 %s296, 1
        %s474 = smul.addr %s473, 256
        %s475 = scalar_lea.vmem [#allocation10], %s474
        %v479 = vld [vmem:[%s423] sm:$0xf]
        %v480 = vld [vmem:[%s423 + $0x4] sm:$0xf]
        %v481 = vld [vmem:[%s423 + $0x8] sm:$0xf]
        %v482 = vld [vmem:[%s423 + $0xc] sm:$0xf]
        %v483 = vld [vmem:[%s423 + $0x10] sm:$0xf]
        %v484 = vld [vmem:[%s423 + $0x14] sm:$0xf]
        %v485 = vld [vmem:[%s423 + $0x18] sm:$0xf]
        %v486 = vld [vmem:[%s423 + $0x1c] sm:$0xf]
        %v487 = vld [vmem:[%s423 + $0x20] sm:$0xf]
        %v488 = vld [vmem:[%s423 + $0x24] sm:$0xf]
        %v489 = vld [vmem:[%s423 + $0x28] sm:$0xf]
        %v490 = vld [vmem:[%s423 + $0x2c] sm:$0xf]
        %v491 = vld [vmem:[%s423 + $0x30] sm:$0xf]
        %v492 = vld [vmem:[%s423 + $0x34] sm:$0xf]
        %v493 = vld [vmem:[%s423 + $0x38] sm:$0xf]
        %v494 = vld [vmem:[%s423 + $0x3c] sm:$0xf]
        %v495 = vld [vmem:[%s423 + $0x40] sm:$0xf]
        %v496 = vld [vmem:[%s423 + $0x44] sm:$0xf]
        %v497 = vld [vmem:[%s423 + $0x48] sm:$0xf]
        %v498 = vld [vmem:[%s423 + $0x4c] sm:$0xf]
        %v499 = vld [vmem:[%s423 + $0x50] sm:$0xf]
        %v500 = vld [vmem:[%s423 + $0x54] sm:$0xf]
        %v501 = vld [vmem:[%s423 + $0x58] sm:$0xf]
        %v502 = vld [vmem:[%s423 + $0x5c] sm:$0xf]
        %v503 = vld [vmem:[%s423 + $0x60] sm:$0xf]
        %v504 = vld [vmem:[%s423 + $0x64] sm:$0xf]
        %v505 = vld [vmem:[%s423 + $0x68] sm:$0xf]
        %v506 = vld [vmem:[%s423 + $0x6c] sm:$0xf]
        %v507 = vld [vmem:[%s423 + $0x70] sm:$0xf]
        %v508 = vld [vmem:[%s423 + $0x74] sm:$0xf]
        %v509 = vld [vmem:[%s423 + $0x78] sm:$0xf]
        %v510 = vld [vmem:[%s423 + $0x7c] sm:$0xf]
        %v511 = vld [vmem:[#allocation5] sm:$0xff]
        %v512 = vld [vmem:[#allocation5 + $0x8] sm:$0xff]
        %v513 = vld [vmem:[#allocation5 + $0x10] sm:$0xff]
        %v514 = vld [vmem:[#allocation5 + $0x18] sm:$0xff]
        %v515 = vld [vmem:[#allocation5 + $0x20] sm:$0xff]
        %v516 = vld [vmem:[#allocation5 + $0x28] sm:$0xff]
        %v517 = vld [vmem:[#allocation5 + $0x30] sm:$0xff]
        %v518 = vld [vmem:[#allocation5 + $0x38] sm:$0xff]
        %v519 = vld [vmem:[#allocation5 + $0x40] sm:$0xff]
        %v520 = vld [vmem:[#allocation5 + $0x48] sm:$0xff]
        %v521 = vld [vmem:[#allocation5 + $0x50] sm:$0xff]
        %v522 = vld [vmem:[#allocation5 + $0x58] sm:$0xff]
        %v523 = vld [vmem:[#allocation5 + $0x60] sm:$0xff]
        %v524 = vld [vmem:[#allocation5 + $0x68] sm:$0xff]
        %v525 = vld [vmem:[#allocation5 + $0x70] sm:$0xff]
        %v526 = vld [vmem:[#allocation5 + $0x78] sm:$0xff]
        %v559 = vunpack.c.l.b16 %v479
        %v560 = vunpack.c.l.b16 %v480
        %v561 = vunpack.c.l.b16 %v481
        %v562 = vunpack.c.l.b16 %v482
        %v563 = vunpack.c.l.b16 %v483
        %v564 = vunpack.c.l.b16 %v484
        %v565 = vunpack.c.l.b16 %v485
        %v566 = vunpack.c.l.b16 %v486
        %v567 = vunpack.c.l.b16 %v487
        %v568 = vunpack.c.l.b16 %v488
        %v569 = vunpack.c.l.b16 %v489
        %v570 = vunpack.c.l.b16 %v490
        %v571 = vunpack.c.l.b16 %v491
        %v572 = vunpack.c.l.b16 %v492
        %v573 = vunpack.c.l.b16 %v493
        %v574 = vunpack.c.l.b16 %v494
        %v575 = vunpack.c.l.b16 %v495
        %v576 = vunpack.c.l.b16 %v496
        %v577 = vunpack.c.l.b16 %v497
        %v578 = vunpack.c.l.b16 %v498
        %v579 = vunpack.c.l.b16 %v499
        %v580 = vunpack.c.l.b16 %v500
        %v581 = vunpack.c.l.b16 %v501
        %v582 = vunpack.c.l.b16 %v502
        %v583 = vunpack.c.l.b16 %v503
        %v584 = vunpack.c.l.b16 %v504
        %v585 = vunpack.c.l.b16 %v505
        %v586 = vunpack.c.l.b16 %v506
        %v587 = vunpack.c.l.b16 %v507
        %v588 = vunpack.c.l.b16 %v508
        %v589 = vunpack.c.l.b16 %v509
        %v590 = vunpack.c.l.b16 %v510
        %v591 = vpack.c.b16 %v560, %v559
        %v592 = vpack.c.b16 %v562, %v561
        %v593 = vpack.c.b16 %v564, %v563
        %v594 = vpack.c.b16 %v566, %v565
        %v595 = vpack.c.b16 %v568, %v567
        %v596 = vpack.c.b16 %v570, %v569
        %v597 = vpack.c.b16 %v572, %v571
        %v598 = vpack.c.b16 %v574, %v573
        %v599 = vpack.c.b16 %v576, %v575
        %v600 = vpack.c.b16 %v578, %v577
        %v601 = vpack.c.b16 %v580, %v579
        %v602 = vpack.c.b16 %v582, %v581
        %v603 = vpack.c.b16 %v584, %v583
        %v604 = vpack.c.b16 %v586, %v585
        %v605 = vpack.c.b16 %v588, %v587
        %v606 = vpack.c.b16 %v590, %v589
        %v639 = vunpack.c.l.b16 %v511
        %v640 = vunpack.c.h.b16 %v511
        %v641 = vunpack.c.l.b16 %v512
        %v642 = vunpack.c.h.b16 %v512
        %v643 = vunpack.c.l.b16 %v513
        %v644 = vunpack.c.h.b16 %v513
        %v645 = vunpack.c.l.b16 %v514
        %v646 = vunpack.c.h.b16 %v514
        %v647 = vunpack.c.l.b16 %v515
        %v648 = vunpack.c.h.b16 %v515
        %v649 = vunpack.c.l.b16 %v516
        %v650 = vunpack.c.h.b16 %v516
        %v651 = vunpack.c.l.b16 %v517
        %v652 = vunpack.c.h.b16 %v517
        %v653 = vunpack.c.l.b16 %v518
        %v654 = vunpack.c.h.b16 %v518
        %v655 = vunpack.c.l.b16 %v519
        %v656 = vunpack.c.h.b16 %v519
        %v657 = vunpack.c.l.b16 %v520
        %v658 = vunpack.c.h.b16 %v520
        %v659 = vunpack.c.l.b16 %v521
        %v660 = vunpack.c.h.b16 %v521
        %v661 = vunpack.c.l.b16 %v522
        %v662 = vunpack.c.h.b16 %v522
        %v663 = vunpack.c.l.b16 %v523
        %v664 = vunpack.c.h.b16 %v523
        %v665 = vunpack.c.l.b16 %v524
        %v666 = vunpack.c.h.b16 %v524
        %v667 = vunpack.c.l.b16 %v525
        %v668 = vunpack.c.h.b16 %v525
        %v669 = vunpack.c.l.b16 %v526
        %v670 = vunpack.c.h.b16 %v526
        %v671 = vpack.c.b16 %v641, %v639
        %v672 = vpack.c.b16 %v642, %v640
        %v673 = vpack.c.b16 %v645, %v643
        %v674 = vpack.c.b16 %v646, %v644
        %v675 = vpack.c.b16 %v649, %v647
        %v676 = vpack.c.b16 %v650, %v648
        %v677 = vpack.c.b16 %v653, %v651
        %v678 = vpack.c.b16 %v654, %v652
        %v679 = vpack.c.b16 %v657, %v655
        %v680 = vpack.c.b16 %v658, %v656
        %v681 = vpack.c.b16 %v661, %v659
        %v682 = vpack.c.b16 %v662, %v660
        %v683 = vpack.c.b16 %v665, %v663
        %v684 = vpack.c.b16 %v666, %v664
        %v685 = vpack.c.b16 %v669, %v667
        %v686 = vpack.c.b16 %v670, %v668
        %703 = vmatprep.subr.bf16.mxu0 %v686
        %704 = vmatpush1.bf16.msra.mxu0 %v685
        %705 = vmatprep.subr.bf16.mxu0 %v684
        %706 = vmatpush1.bf16.msra.mxu0 %v683
        %707 = vmatprep.subr.bf16.mxu0 %v682
        %708 = vmatpush1.bf16.msra.mxu0 %v681
        %709 = vmatprep.subr.bf16.mxu0 %v680
        %710 = vmatpush1.bf16.msra.mxu0 %v679
        %711 = vmatprep.subr.bf16.mxu0 %v678
        %712 = vmatpush1.bf16.msra.mxu0 %v677
        %713 = vmatprep.subr.bf16.mxu0 %v676
        %714 = vmatpush1.bf16.msra.mxu0 %v675
        %715 = vmatprep.subr.bf16.mxu0 %v674
        %716 = vmatpush1.bf16.msra.mxu0 %v673
        %717 = vmatprep.subr.bf16.mxu0 %v672
        %718 = vmatpush1.bf16.msra.mxu0 %v671
        %719 = vmatprep.subr.bf16.mxu0 0
        %720 = vmatpush2.bf16.msra.mxu0 0
        %721 = vmatprep.subr.bf16.mxu0 0
        %722 = vmatpush2.bf16.msra.mxu0 0
        %723 = vmatprep.subr.bf16.mxu0 0
        %724 = vmatpush2.bf16.msra.mxu0 0
        %725 = vmatprep.subr.bf16.mxu0 0
        %726 = vmatpush2.bf16.msra.mxu0 0
        %727 = vmatprep.subr.bf16.mxu0 0
        %728 = vmatpush2.bf16.msra.mxu0 0
        %729 = vmatprep.subr.bf16.mxu0 0
        %730 = vmatpush2.bf16.msra.mxu0 0
        %731 = vmatprep.subr.bf16.mxu0 0
        %732 = vmatpush2.bf16.msra.mxu0 0
        %733 = vmatprep.subr.bf16.mxu0 0
        %734 = vmatpush2.bf16.msra.mxu0 0
        %735 = vmatprep.mubr.bf16.mxu0 0
        %736 = vmatmul.mubr.bf16.gmra.mxu0 %v591
        %v737 = vpop.f32.mrf.mxu0
        %v738 = vadd.f32 0.0, %v737
        %v739 = vpop.f32.mrf.mxu0
        %v740 = vadd.f32 0.0, %v739
        %v741 = vpop.f32.mrf.mxu0
        %v742 = vadd.f32 0.0, %v741
        %v743 = vpop.f32.mrf.mxu0
        %v744 = vadd.f32 0.0, %v743
        %745 = vmatprep.mubr.bf16.mxu0 0
        %746 = vmatmul.mubr.bf16.gmra.mxu0 %v592
        %v747 = vpop.f32.mrf.mxu0
        %v748 = vadd.f32 0.0, %v747
        %v749 = vpop.f32.mrf.mxu0
        %v750 = vadd.f32 0.0, %v749
        %v751 = vpop.f32.mrf.mxu0
        %v752 = vadd.f32 0.0, %v751
        %v753 = vpop.f32.mrf.mxu0
        %v754 = vadd.f32 0.0, %v753
        %755 = vmatprep.mubr.bf16.mxu0 0
        %756 = vmatmul.mubr.bf16.gmra.mxu0 %v593
        %v757 = vpop.f32.mrf.mxu0
        %v758 = vadd.f32 0.0, %v757
        %v759 = vpop.f32.mrf.mxu0
        %v760 = vadd.f32 0.0, %v759
        %v761 = vpop.f32.mrf.mxu0
        %v762 = vadd.f32 0.0, %v761
        %v763 = vpop.f32.mrf.mxu0
        %v764 = vadd.f32 0.0, %v763
        %765 = vmatprep.mubr.bf16.mxu0 0
        %766 = vmatmul.mubr.bf16.gmra.mxu0 %v594
        %v767 = vpop.f32.mrf.mxu0
        %v768 = vadd.f32 0.0, %v767
        %v769 = vpop.f32.mrf.mxu0
        %v770 = vadd.f32 0.0, %v769
        %v771 = vpop.f32.mrf.mxu0
        %v772 = vadd.f32 0.0, %v771
        %v773 = vpop.f32.mrf.mxu0
        %v774 = vadd.f32 0.0, %v773
        %775 = vmatprep.mubr.bf16.mxu0 0
        %776 = vmatmul.mubr.bf16.gmra.mxu0 %v595
        %v777 = vpop.f32.mrf.mxu0
        %v778 = vadd.f32 0.0, %v777
        %v779 = vpop.f32.mrf.mxu0
        %v780 = vadd.f32 0.0, %v779
        %v781 = vpop.f32.mrf.mxu0
        %v782 = vadd.f32 0.0, %v781
        %v783 = vpop.f32.mrf.mxu0
        %v784 = vadd.f32 0.0, %v783
        %785 = vmatprep.mubr.bf16.mxu0 0
        %786 = vmatmul.mubr.bf16.gmra.mxu0 %v596
        %v787 = vpop.f32.mrf.mxu0
        %v788 = vadd.f32 0.0, %v787
        %v789 = vpop.f32.mrf.mxu0
        %v790 = vadd.f32 0.0, %v789
        %v791 = vpop.f32.mrf.mxu0
        %v792 = vadd.f32 0.0, %v791
        %v793 = vpop.f32.mrf.mxu0
        %v794 = vadd.f32 0.0, %v793
        %795 = vmatprep.mubr.bf16.mxu0 0
        %796 = vmatmul.mubr.bf16.gmra.mxu0 %v597
        %v797 = vpop.f32.mrf.mxu0
        %v798 = vadd.f32 0.0, %v797
        %v799 = vpop.f32.mrf.mxu0
        %v800 = vadd.f32 0.0, %v799
        %v801 = vpop.f32.mrf.mxu0
        %v802 = vadd.f32 0.0, %v801
        %v803 = vpop.f32.mrf.mxu0
        %v804 = vadd.f32 0.0, %v803
        %805 = vmatprep.mubr.bf16.mxu0 0
        %806 = vmatmul.mubr.bf16.gmra.mxu0 %v598
        %v807 = vpop.f32.mrf.mxu0
        %v808 = vadd.f32 0.0, %v807
        %v809 = vpop.f32.mrf.mxu0
        %v810 = vadd.f32 0.0, %v809
        %v811 = vpop.f32.mrf.mxu0
        %v812 = vadd.f32 0.0, %v811
        %v813 = vpop.f32.mrf.mxu0
        %v814 = vadd.f32 0.0, %v813
        %815 = vmatprep.mubr.bf16.mxu0 0
        %816 = vmatmul.mubr.bf16.gmra.mxu0 %v599
        %v817 = vpop.f32.mrf.mxu0
        %v818 = vadd.f32 0.0, %v817
        %v819 = vpop.f32.mrf.mxu0
        %v820 = vadd.f32 0.0, %v819
        %v821 = vpop.f32.mrf.mxu0
        %v822 = vadd.f32 0.0, %v821
        %v823 = vpop.f32.mrf.mxu0
        %v824 = vadd.f32 0.0, %v823
        %825 = vmatprep.mubr.bf16.mxu0 0
        %826 = vmatmul.mubr.bf16.gmra.mxu0 %v600
        %v827 = vpop.f32.mrf.mxu0
        %v828 = vadd.f32 0.0, %v827
        %v829 = vpop.f32.mrf.mxu0
        %v830 = vadd.f32 0.0, %v829
        %v831 = vpop.f32.mrf.mxu0
        %v832 = vadd.f32 0.0, %v831
        %v833 = vpop.f32.mrf.mxu0
        %v834 = vadd.f32 0.0, %v833
        %835 = vmatprep.mubr.bf16.mxu0 0
        %836 = vmatmul.mubr.bf16.gmra.mxu0 %v601
        %v837 = vpop.f32.mrf.mxu0
        %v838 = vadd.f32 0.0, %v837
        %v839 = vpop.f32.mrf.mxu0
        %v840 = vadd.f32 0.0, %v839
        %v841 = vpop.f32.mrf.mxu0
        %v842 = vadd.f32 0.0, %v841
        %v843 = vpop.f32.mrf.mxu0
        %v844 = vadd.f32 0.0, %v843
        %845 = vmatprep.mubr.bf16.mxu0 0
        %846 = vmatmul.mubr.bf16.gmra.mxu0 %v602
        %v847 = vpop.f32.mrf.mxu0
        %v848 = vadd.f32 0.0, %v847
        %v849 = vpop.f32.mrf.mxu0
        %v850 = vadd.f32 0.0, %v849
        %v851 = vpop.f32.mrf.mxu0
        %v852 = vadd.f32 0.0, %v851
        %v853 = vpop.f32.mrf.mxu0
        %v854 = vadd.f32 0.0, %v853
        %855 = vmatprep.mubr.bf16.mxu0 0
        %856 = vmatmul.mubr.bf16.gmra.mxu0 %v603
        %v857 = vpop.f32.mrf.mxu0
        %v858 = vadd.f32 0.0, %v857
        %v859 = vpop.f32.mrf.mxu0
        %v860 = vadd.f32 0.0, %v859
        %v861 = vpop.f32.mrf.mxu0
        %v862 = vadd.f32 0.0, %v861
        %v863 = vpop.f32.mrf.mxu0
        %v864 = vadd.f32 0.0, %v863
        %865 = vmatprep.mubr.bf16.mxu0 0
        %866 = vmatmul.mubr.bf16.gmra.mxu0 %v604
        %v867 = vpop.f32.mrf.mxu0
        %v868 = vadd.f32 0.0, %v867
        %v869 = vpop.f32.mrf.mxu0
        %v870 = vadd.f32 0.0, %v869
        %v871 = vpop.f32.mrf.mxu0
        %v872 = vadd.f32 0.0, %v871
        %v873 = vpop.f32.mrf.mxu0
        %v874 = vadd.f32 0.0, %v873
        %875 = vmatprep.mubr.bf16.mxu0 0
        %876 = vmatmul.mubr.bf16.gmra.mxu0 %v605
        %v877 = vpop.f32.mrf.mxu0
        %v878 = vadd.f32 0.0, %v877
        %v879 = vpop.f32.mrf.mxu0
        %v880 = vadd.f32 0.0, %v879
        %v881 = vpop.f32.mrf.mxu0
        %v882 = vadd.f32 0.0, %v881
        %v883 = vpop.f32.mrf.mxu0
        %v884 = vadd.f32 0.0, %v883
        %885 = vmatprep.mubr.bf16.mxu0 0
        %886 = vmatmul.mubr.bf16.gmra.mxu0 %v606
        %v887 = vpop.f32.mrf.mxu0
        %v888 = vadd.f32 0.0, %v887
        %v889 = vpop.f32.mrf.mxu0
        %v890 = vadd.f32 0.0, %v889
        %v891 = vpop.f32.mrf.mxu0
        %v892 = vadd.f32 0.0, %v891
        %v893 = vpop.f32.mrf.mxu0
        %v894 = vadd.f32 0.0, %v893
        %895 = vdwg.mxu0
        %v896 = vld [vmem:[%s2] sm:$0x1]
        %v898 = vlaneseq
        %v899 = vshrl.u32 %v898, 7
        %v900 = vsub.s32 0, %v899
        %v901 = vrot.slane %v896, %v900
        %v903 = vmul.f32 %v738, %v901
        %v904 = vmul.f32 %v742, %v901
        %v905 = vmul.f32 %v748, %v901
        %v906 = vmul.f32 %v752, %v901
        %v907 = vmul.f32 %v758, %v901
        %v908 = vmul.f32 %v762, %v901
        %v909 = vmul.f32 %v768, %v901
        %v910 = vmul.f32 %v772, %v901
        %v911 = vmul.f32 %v778, %v901
        %v912 = vmul.f32 %v782, %v901
        %v913 = vmul.f32 %v788, %v901
        %v914 = vmul.f32 %v792, %v901
        %v915 = vmul.f32 %v798, %v901
        %v916 = vmul.f32 %v802, %v901
        %v917 = vmul.f32 %v808, %v901
        %v918 = vmul.f32 %v812, %v901
        %v919 = vmul.f32 %v818, %v901
        %v920 = vmul.f32 %v822, %v901
        %v921 = vmul.f32 %v828, %v901
        %v922 = vmul.f32 %v832, %v901
        %v923 = vmul.f32 %v838, %v901
        %v924 = vmul.f32 %v842, %v901
        %v925 = vmul.f32 %v848, %v901
        %v926 = vmul.f32 %v852, %v901
        %v927 = vmul.f32 %v858, %v901
        %v928 = vmul.f32 %v862, %v901
        %v929 = vmul.f32 %v868, %v901
        %v930 = vmul.f32 %v872, %v901
        %v931 = vmul.f32 %v878, %v901
        %v932 = vmul.f32 %v882, %v901
        %v933 = vmul.f32 %v888, %v901
        %v934 = vmul.f32 %v892, %v901
        %v935 = vld [vmem:[%s3] sm:$0x1]
        %v937 = vlaneseq
        %v938 = vshrl.u32 %v937, 7
        %v939 = vsub.s32 0, %v938
        %v940 = vrot.slane %v935, %v939
        %v942 = vadd.f32 %v903, %v940
        %v943 = vadd.f32 %v904, %v940
        %v944 = vadd.f32 %v905, %v940
        %v945 = vadd.f32 %v906, %v940
        %v946 = vadd.f32 %v907, %v940
        %v947 = vadd.f32 %v908, %v940
        %v948 = vadd.f32 %v909, %v940
        %v949 = vadd.f32 %v910, %v940
        %v950 = vadd.f32 %v911, %v940
        %v951 = vadd.f32 %v912, %v940
        %v952 = vadd.f32 %v913, %v940
        %v953 = vadd.f32 %v914, %v940
        %v954 = vadd.f32 %v915, %v940
        %v955 = vadd.f32 %v916, %v940
        %v956 = vadd.f32 %v917, %v940
        %v957 = vadd.f32 %v918, %v940
        %v958 = vadd.f32 %v919, %v940
        %v959 = vadd.f32 %v920, %v940
        %v960 = vadd.f32 %v921, %v940
        %v961 = vadd.f32 %v922, %v940
        %v962 = vadd.f32 %v923, %v940
        %v963 = vadd.f32 %v924, %v940
        %v964 = vadd.f32 %v925, %v940
        %v965 = vadd.f32 %v926, %v940
        %v966 = vadd.f32 %v927, %v940
        %v967 = vadd.f32 %v928, %v940
        %v968 = vadd.f32 %v929, %v940
        %v969 = vadd.f32 %v930, %v940
        %v970 = vadd.f32 %v931, %v940
        %v971 = vadd.f32 %v932, %v940
        %v972 = vadd.f32 %v933, %v940
        %v973 = vadd.f32 %v934, %v940
        %v974 = vmax.f32 %v942, 0.0
        %v975 = vmax.f32 %v943, 0.0
        %v976 = vmax.f32 %v944, 0.0
        %v977 = vmax.f32 %v945, 0.0
        %v978 = vmax.f32 %v946, 0.0
        %v979 = vmax.f32 %v947, 0.0
        %v980 = vmax.f32 %v948, 0.0
        %v981 = vmax.f32 %v949, 0.0
        %v982 = vmax.f32 %v950, 0.0
        %v983 = vmax.f32 %v951, 0.0
        %v984 = vmax.f32 %v952, 0.0
        %v985 = vmax.f32 %v953, 0.0
        %v986 = vmax.f32 %v954, 0.0
        %v987 = vmax.f32 %v955, 0.0
        %v988 = vmax.f32 %v956, 0.0
        %v989 = vmax.f32 %v957, 0.0
        %v990 = vmax.f32 %v958, 0.0
        %v991 = vmax.f32 %v959, 0.0
        %v992 = vmax.f32 %v960, 0.0
        %v993 = vmax.f32 %v961, 0.0
        %v994 = vmax.f32 %v962, 0.0
        %v995 = vmax.f32 %v963, 0.0
        %v996 = vmax.f32 %v964, 0.0
        %v997 = vmax.f32 %v965, 0.0
        %v998 = vmax.f32 %v966, 0.0
        %v999 = vmax.f32 %v967, 0.0
        %v1000 = vmax.f32 %v968, 0.0
        %v1001 = vmax.f32 %v969, 0.0
        %v1002 = vmax.f32 %v970, 0.0
        %v1003 = vmax.f32 %v971, 0.0
        %v1004 = vmax.f32 %v972, 0.0
        %v1005 = vmax.f32 %v973, 0.0
        %v1006 = vlaneseq
        %v1007 = vshrl.u32 %v1006, 7
        %v1008 = vadd.s32 %v1007, 8
        %v1009 = vadd.s32 %v1007, 16
        %v1010 = vadd.s32 %v1007, 24
        %v1011 = vadd.s32 %v1007, 32
        %v1012 = vadd.s32 %v1007, 40
        %v1013 = vadd.s32 %v1007, 48
        %v1014 = vadd.s32 %v1007, 56
        %v1015 = vadd.s32 %v1007, 64
        %v1016 = vadd.s32 %v1007, 72
        %v1017 = vadd.s32 %v1007, 80
        %v1018 = vadd.s32 %v1007, 88
        %v1019 = vadd.s32 %v1007, 96
        %v1020 = vadd.s32 %v1007, 104
        %v1021 = vadd.s32 %v1007, 112
        %v1022 = vadd.s32 %v1007, 120
        %v1023 = vadd.s32 %v1007, 128
        %v1024 = vadd.s32 %v1007, 136
        %v1025 = vadd.s32 %v1007, 144
        %v1026 = vadd.s32 %v1007, 152
        %v1027 = vadd.s32 %v1007, 160
        %v1028 = vadd.s32 %v1007, 168
        %v1029 = vadd.s32 %v1007, 176
        %v1030 = vadd.s32 %v1007, 184
        %v1031 = vadd.s32 %v1007, 192
        %v1032 = vadd.s32 %v1007, 200
        %v1033 = vadd.s32 %v1007, 208
        %v1034 = vadd.s32 %v1007, 216
        %v1035 = vadd.s32 %v1007, 224
        %v1036 = vadd.s32 %v1007, 232
        %v1037 = vadd.s32 %v1007, 240
        %v1038 = vadd.s32 %v1007, 248
        %v1039 = vadd.s32 %v1007, 256
        %v1040 = vadd.s32 %v1007, 264
        %v1041 = vadd.s32 %v1007, 272
        %v1042 = vadd.s32 %v1007, 280
        %vm1043 = vcmp.lt.s32.totalorder %v1007, 0
        %v1044 = vsub.s32 0, %v1007
        %v1045 = vsel %vm1043, %v1044, %v1007
        %v1046 = vshrl.u32 %v1045, 4
        %v1047 = vand.u32 %v1045, 15
        %v1048 = vsub.s32 0, %v1047
        %v1049 = vsel %vm1043, %v1048, %v1047
        %vm1050 = vcmp.lt.s32.totalorder %v1008, 0
        %v1051 = vsub.s32 0, %v1008
        %v1052 = vsel %vm1050, %v1051, %v1008
        %v1053 = vshrl.u32 %v1052, 4
        %v1054 = vand.u32 %v1052, 15
        %v1055 = vsub.s32 0, %v1054
        %v1056 = vsel %vm1050, %v1055, %v1054
        %vm1057 = vcmp.lt.s32.totalorder %v1009, 0
        %v1058 = vsub.s32 0, %v1009
        %v1059 = vsel %vm1057, %v1058, %v1009
        %v1060 = vshrl.u32 %v1059, 4
        %v1061 = vand.u32 %v1059, 15
        %v1062 = vsub.s32 0, %v1061
        %v1063 = vsel %vm1057, %v1062, %v1061
        %vm1064 = vcmp.lt.s32.totalorder %v1010, 0
        %v1065 = vsub.s32 0, %v1010
        %v1066 = vsel %vm1064, %v1065, %v1010
        %v1067 = vshrl.u32 %v1066, 4
        %v1068 = vand.u32 %v1066, 15
        %v1069 = vsub.s32 0, %v1068
        %v1070 = vsel %vm1064, %v1069, %v1068
        %vm1071 = vcmp.lt.s32.totalorder %v1011, 0
        %v1072 = vsub.s32 0, %v1011
        %v1073 = vsel %vm1071, %v1072, %v1011
        %v1074 = vshrl.u32 %v1073, 4
        %v1075 = vand.u32 %v1073, 15
        %v1076 = vsub.s32 0, %v1075
        %v1077 = vsel %vm1071, %v1076, %v1075
        %vm1078 = vcmp.lt.s32.totalorder %v1012, 0
        %v1079 = vsub.s32 0, %v1012
        %v1080 = vsel %vm1078, %v1079, %v1012
        %v1081 = vshrl.u32 %v1080, 4
        %v1082 = vand.u32 %v1080, 15
        %v1083 = vsub.s32 0, %v1082
        %v1084 = vsel %vm1078, %v1083, %v1082
        %vm1085 = vcmp.lt.s32.totalorder %v1013, 0
        %v1086 = vsub.s32 0, %v1013
        %v1087 = vsel %vm1085, %v1086, %v1013
        %v1088 = vshrl.u32 %v1087, 4
        %v1089 = vand.u32 %v1087, 15
        %v1090 = vsub.s32 0, %v1089
        %v1091 = vsel %vm1085, %v1090, %v1089
        %vm1092 = vcmp.lt.s32.totalorder %v1014, 0
        %v1093 = vsub.s32 0, %v1014
        %v1094 = vsel %vm1092, %v1093, %v1014
        %v1095 = vshrl.u32 %v1094, 4
        %v1096 = vand.u32 %v1094, 15
        %v1097 = vsub.s32 0, %v1096
        %v1098 = vsel %vm1092, %v1097, %v1096
        %vm1099 = vcmp.lt.s32.totalorder %v1015, 0
        %v1100 = vsub.s32 0, %v1015
        %v1101 = vsel %vm1099, %v1100, %v1015
        %v1102 = vshrl.u32 %v1101, 4
        %v1103 = vand.u32 %v1101, 15
        %v1104 = vsub.s32 0, %v1103
        %v1105 = vsel %vm1099, %v1104, %v1103
        %vm1106 = vcmp.lt.s32.totalorder %v1016, 0
        %v1107 = vsub.s32 0, %v1016
        %v1108 = vsel %vm1106, %v1107, %v1016
        %v1109 = vshrl.u32 %v1108, 4
        %v1110 = vand.u32 %v1108, 15
        %v1111 = vsub.s32 0, %v1110
        %v1112 = vsel %vm1106, %v1111, %v1110
        %vm1113 = vcmp.lt.s32.totalorder %v1017, 0
        %v1114 = vsub.s32 0, %v1017
        %v1115 = vsel %vm1113, %v1114, %v1017
        %v1116 = vshrl.u32 %v1115, 4
        %v1117 = vand.u32 %v1115, 15
        %v1118 = vsub.s32 0, %v1117
        %v1119 = vsel %vm1113, %v1118, %v1117
        %vm1120 = vcmp.lt.s32.totalorder %v1018, 0
        %v1121 = vsub.s32 0, %v1018
        %v1122 = vsel %vm1120, %v1121, %v1018
        %v1123 = vshrl.u32 %v1122, 4
        %v1124 = vand.u32 %v1122, 15
        %v1125 = vsub.s32 0, %v1124
        %v1126 = vsel %vm1120, %v1125, %v1124
        %vm1127 = vcmp.lt.s32.totalorder %v1019, 0
        %v1128 = vsub.s32 0, %v1019
        %v1129 = vsel %vm1127, %v1128, %v1019
        %v1130 = vshrl.u32 %v1129, 4
        %v1131 = vand.u32 %v1129, 15
        %v1132 = vsub.s32 0, %v1131
        %v1133 = vsel %vm1127, %v1132, %v1131
        %vm1134 = vcmp.lt.s32.totalorder %v1020, 0
        %v1135 = vsub.s32 0, %v1020
        %v1136 = vsel %vm1134, %v1135, %v1020
        %v1137 = vshrl.u32 %v1136, 4
        %v1138 = vand.u32 %v1136, 15
        %v1139 = vsub.s32 0, %v1138
        %v1140 = vsel %vm1134, %v1139, %v1138
        %vm1141 = vcmp.lt.s32.totalorder %v1021, 0
        %v1142 = vsub.s32 0, %v1021
        %v1143 = vsel %vm1141, %v1142, %v1021
        %v1144 = vshrl.u32 %v1143, 4
        %v1145 = vand.u32 %v1143, 15
        %v1146 = vsub.s32 0, %v1145
        %v1147 = vsel %vm1141, %v1146, %v1145
        %vm1148 = vcmp.lt.s32.totalorder %v1022, 0
        %v1149 = vsub.s32 0, %v1022
        %v1150 = vsel %vm1148, %v1149, %v1022
        %v1151 = vshrl.u32 %v1150, 4
        %v1152 = vand.u32 %v1150, 15
        %v1153 = vsub.s32 0, %v1152
        %v1154 = vsel %vm1148, %v1153, %v1152
        %vm1155 = vcmp.lt.s32.totalorder %v1023, 0
        %v1156 = vsub.s32 0, %v1023
        %v1157 = vsel %vm1155, %v1156, %v1023
        %v1158 = vshrl.u32 %v1157, 4
        %v1159 = vand.u32 %v1157, 15
        %v1160 = vsub.s32 0, %v1159
        %v1161 = vsel %vm1155, %v1160, %v1159
        %vm1162 = vcmp.lt.s32.totalorder %v1024, 0
        %v1163 = vsub.s32 0, %v1024
        %v1164 = vsel %vm1162, %v1163, %v1024
        %v1165 = vshrl.u32 %v1164, 4
        %v1166 = vand.u32 %v1164, 15
        %v1167 = vsub.s32 0, %v1166
        %v1168 = vsel %vm1162, %v1167, %v1166
        %vm1169 = vcmp.lt.s32.totalorder %v1025, 0
        %v1170 = vsub.s32 0, %v1025
        %v1171 = vsel %vm1169, %v1170, %v1025
        %v1172 = vshrl.u32 %v1171, 4
        %v1173 = vand.u32 %v1171, 15
        %v1174 = vsub.s32 0, %v1173
        %v1175 = vsel %vm1169, %v1174, %v1173
        %vm1176 = vcmp.lt.s32.totalorder %v1026, 0
        %v1177 = vsub.s32 0, %v1026
        %v1178 = vsel %vm1176, %v1177, %v1026
        %v1179 = vshrl.u32 %v1178, 4
        %v1180 = vand.u32 %v1178, 15
        %v1181 = vsub.s32 0, %v1180
        %v1182 = vsel %vm1176, %v1181, %v1180
        %vm1183 = vcmp.lt.s32.totalorder %v1027, 0
        %v1184 = vsub.s32 0, %v1027
        %v1185 = vsel %vm1183, %v1184, %v1027
        %v1186 = vshrl.u32 %v1185, 4
        %v1187 = vand.u32 %v1185, 15
        %v1188 = vsub.s32 0, %v1187
        %v1189 = vsel %vm1183, %v1188, %v1187
        %vm1190 = vcmp.lt.s32.totalorder %v1028, 0
        %v1191 = vsub.s32 0, %v1028
        %v1192 = vsel %vm1190, %v1191, %v1028
        %v1193 = vshrl.u32 %v1192, 4
        %v1194 = vand.u32 %v1192, 15
        %v1195 = vsub.s32 0, %v1194
        %v1196 = vsel %vm1190, %v1195, %v1194
        %vm1197 = vcmp.lt.s32.totalorder %v1029, 0
        %v1198 = vsub.s32 0, %v1029
        %v1199 = vsel %vm1197, %v1198, %v1029
        %v1200 = vshrl.u32 %v1199, 4
        %v1201 = vand.u32 %v1199, 15
        %v1202 = vsub.s32 0, %v1201
        %v1203 = vsel %vm1197, %v1202, %v1201
        %vm1204 = vcmp.lt.s32.totalorder %v1030, 0
        %v1205 = vsub.s32 0, %v1030
        %v1206 = vsel %vm1204, %v1205, %v1030
        %v1207 = vshrl.u32 %v1206, 4
        %v1208 = vand.u32 %v1206, 15
        %v1209 = vsub.s32 0, %v1208
        %v1210 = vsel %vm1204, %v1209, %v1208
        %vm1211 = vcmp.lt.s32.totalorder %v1031, 0
        %v1212 = vsub.s32 0, %v1031
        %v1213 = vsel %vm1211, %v1212, %v1031
        %v1214 = vshrl.u32 %v1213, 4
        %v1215 = vand.u32 %v1213, 15
        %v1216 = vsub.s32 0, %v1215
        %v1217 = vsel %vm1211, %v1216, %v1215
        %vm1218 = vcmp.lt.s32.totalorder %v1032, 0
        %v1219 = vsub.s32 0, %v1032
        %v1220 = vsel %vm1218, %v1219, %v1032
        %v1221 = vshrl.u32 %v1220, 4
        %v1222 = vand.u32 %v1220, 15
        %v1223 = vsub.s32 0, %v1222
        %v1224 = vsel %vm1218, %v1223, %v1222
        %vm1225 = vcmp.lt.s32.totalorder %v1033, 0
        %v1226 = vsub.s32 0, %v1033
        %v1227 = vsel %vm1225, %v1226, %v1033
        %v1228 = vshrl.u32 %v1227, 4
        %v1229 = vand.u32 %v1227, 15
        %v1230 = vsub.s32 0, %v1229
        %v1231 = vsel %vm1225, %v1230, %v1229
        %vm1232 = vcmp.lt.s32.totalorder %v1034, 0
        %v1233 = vsub.s32 0, %v1034
        %v1234 = vsel %vm1232, %v1233, %v1034
        %v1235 = vshrl.u32 %v1234, 4
        %v1236 = vand.u32 %v1234, 15
        %v1237 = vsub.s32 0, %v1236
        %v1238 = vsel %vm1232, %v1237, %v1236
        %vm1239 = vcmp.lt.s32.totalorder %v1035, 0
        %v1240 = vsub.s32 0, %v1035
        %v1241 = vsel %vm1239, %v1240, %v1035
        %v1242 = vshrl.u32 %v1241, 4
        %v1243 = vand.u32 %v1241, 15
        %v1244 = vsub.s32 0, %v1243
        %v1245 = vsel %vm1239, %v1244, %v1243
        %vm1246 = vcmp.lt.s32.totalorder %v1036, 0
        %v1247 = vsub.s32 0, %v1036
        %v1248 = vsel %vm1246, %v1247, %v1036
        %v1249 = vshrl.u32 %v1248, 4
        %v1250 = vand.u32 %v1248, 15
        %v1251 = vsub.s32 0, %v1250
        %v1252 = vsel %vm1246, %v1251, %v1250
        %vm1253 = vcmp.lt.s32.totalorder %v1037, 0
        %v1254 = vsub.s32 0, %v1037
        %v1255 = vsel %vm1253, %v1254, %v1037
        %v1256 = vshrl.u32 %v1255, 4
        %v1257 = vand.u32 %v1255, 15
        %v1258 = vsub.s32 0, %v1257
        %v1259 = vsel %vm1253, %v1258, %v1257
        %vm1260 = vcmp.lt.s32.totalorder %v1038, 0
        %v1261 = vsub.s32 0, %v1038
        %v1262 = vsel %vm1260, %v1261, %v1038
        %v1263 = vshrl.u32 %v1262, 4
        %v1264 = vand.u32 %v1262, 15
        %v1265 = vsub.s32 0, %v1264
        %v1266 = vsel %vm1260, %v1265, %v1264
        %vm1267 = vcmp.lt.s32.totalorder %v1039, 0
        %v1268 = vsub.s32 0, %v1039
        %v1269 = vsel %vm1267, %v1268, %v1039
        %v1270 = vshrl.u32 %v1269, 4
        %v1271 = vand.u32 %v1269, 15
        %v1272 = vsub.s32 0, %v1271
        %v1273 = vsel %vm1267, %v1272, %v1271
        %vm1274 = vcmp.lt.s32.totalorder %v1040, 0
        %v1275 = vsub.s32 0, %v1040
        %v1276 = vsel %vm1274, %v1275, %v1040
        %v1277 = vshrl.u32 %v1276, 4
        %v1278 = vand.u32 %v1276, 15
        %v1279 = vsub.s32 0, %v1278
        %v1280 = vsel %vm1274, %v1279, %v1278
        %vm1281 = vcmp.lt.s32.totalorder %v1041, 0
        %v1282 = vsub.s32 0, %v1041
        %v1283 = vsel %vm1281, %v1282, %v1041
        %v1284 = vshrl.u32 %v1283, 4
        %v1285 = vand.u32 %v1283, 15
        %v1286 = vsub.s32 0, %v1285
        %v1287 = vsel %vm1281, %v1286, %v1285
        %vm1288 = vcmp.lt.s32.totalorder %v1042, 0
        %v1289 = vsub.s32 0, %v1042
        %v1290 = vsel %vm1288, %v1289, %v1042
        %v1291 = vshrl.u32 %v1290, 4
        %v1292 = vand.u32 %v1290, 15
        %v1293 = vsub.s32 0, %v1292
        %v1294 = vsel %vm1288, %v1293, %v1292
        %vm1295 = vcmp.ne.s32.totalorder %v1049, 0
        %vm1296 = vcmp.ne.s32.totalorder %v1056, 0
        %vm1297 = vcmp.ne.s32.totalorder %v1063, 0
        %vm1298 = vcmp.ne.s32.totalorder %v1070, 0
        %vm1299 = vcmp.ne.s32.totalorder %v1077, 0
        %vm1300 = vcmp.ne.s32.totalorder %v1084, 0
        %vm1301 = vcmp.ne.s32.totalorder %v1091, 0
        %vm1302 = vcmp.ne.s32.totalorder %v1098, 0
        %vm1303 = vcmp.ne.s32.totalorder %v1105, 0
        %vm1304 = vcmp.ne.s32.totalorder %v1112, 0
        %vm1305 = vcmp.ne.s32.totalorder %v1119, 0
        %vm1306 = vcmp.ne.s32.totalorder %v1126, 0
        %vm1307 = vcmp.ne.s32.totalorder %v1133, 0
        %vm1308 = vcmp.ne.s32.totalorder %v1140, 0
        %vm1309 = vcmp.ne.s32.totalorder %v1147, 0
        %vm1310 = vcmp.ne.s32.totalorder %v1154, 0
        %vm1311 = vcmp.ne.s32.totalorder %v1161, 0
        %vm1312 = vcmp.ne.s32.totalorder %v1168, 0
        %vm1313 = vcmp.ne.s32.totalorder %v1175, 0
        %vm1314 = vcmp.ne.s32.totalorder %v1182, 0
        %vm1315 = vcmp.ne.s32.totalorder %v1189, 0
        %vm1316 = vcmp.ne.s32.totalorder %v1196, 0
        %vm1317 = vcmp.ne.s32.totalorder %v1203, 0
        %vm1318 = vcmp.ne.s32.totalorder %v1210, 0
        %vm1319 = vcmp.ne.s32.totalorder %v1217, 0
        %vm1320 = vcmp.ne.s32.totalorder %v1224, 0
        %vm1321 = vcmp.ne.s32.totalorder %v1231, 0
        %vm1322 = vcmp.ne.s32.totalorder %v1238, 0
        %vm1323 = vcmp.ne.s32.totalorder %v1245, 0
        %vm1324 = vcmp.ne.s32.totalorder %v1252, 0
        %vm1325 = vcmp.ne.s32.totalorder %v1259, 0
        %vm1326 = vcmp.ne.s32.totalorder %v1266, 0
        %vm1327 = vcmp.ne.s32.totalorder %v1273, 0
        %vm1328 = vcmp.ne.s32.totalorder %v1280, 0
        %vm1329 = vcmp.ne.s32.totalorder %v1287, 0
        %vm1330 = vcmp.ne.s32.totalorder %v1294, 0
        %vm1331 = vcmp.lt.s32.totalorder %v1049, 0
        %vm1332 = vcmp.lt.s32.totalorder %v1056, 0
        %vm1333 = vcmp.lt.s32.totalorder %v1063, 0
        %vm1334 = vcmp.lt.s32.totalorder %v1070, 0
        %vm1335 = vcmp.lt.s32.totalorder %v1077, 0
        %vm1336 = vcmp.lt.s32.totalorder %v1084, 0
        %vm1337 = vcmp.lt.s32.totalorder %v1091, 0
        %vm1338 = vcmp.lt.s32.totalorder %v1098, 0
        %vm1339 = vcmp.lt.s32.totalorder %v1105, 0
        %vm1340 = vcmp.lt.s32.totalorder %v1112, 0
        %vm1341 = vcmp.lt.s32.totalorder %v1119, 0
        %vm1342 = vcmp.lt.s32.totalorder %v1126, 0
        %vm1343 = vcmp.lt.s32.totalorder %v1133, 0
        %vm1344 = vcmp.lt.s32.totalorder %v1140, 0
        %vm1345 = vcmp.lt.s32.totalorder %v1147, 0
        %vm1346 = vcmp.lt.s32.totalorder %v1154, 0
        %vm1347 = vcmp.lt.s32.totalorder %v1161, 0
        %vm1348 = vcmp.lt.s32.totalorder %v1168, 0
        %vm1349 = vcmp.lt.s32.totalorder %v1175, 0
        %vm1350 = vcmp.lt.s32.totalorder %v1182, 0
        %vm1351 = vcmp.lt.s32.totalorder %v1189, 0
        %vm1352 = vcmp.lt.s32.totalorder %v1196, 0
        %vm1353 = vcmp.lt.s32.totalorder %v1203, 0
        %vm1354 = vcmp.lt.s32.totalorder %v1210, 0
        %vm1355 = vcmp.lt.s32.totalorder %v1217, 0
        %vm1356 = vcmp.lt.s32.totalorder %v1224, 0
        %vm1357 = vcmp.lt.s32.totalorder %v1231, 0
        %vm1358 = vcmp.lt.s32.totalorder %v1238, 0
        %vm1359 = vcmp.lt.s32.totalorder %v1245, 0
        %vm1360 = vcmp.lt.s32.totalorder %v1252, 0
        %vm1361 = vcmp.lt.s32.totalorder %v1259, 0
        %vm1362 = vcmp.lt.s32.totalorder %v1266, 0
        %vm1363 = vcmp.lt.s32.totalorder %v1273, 0
        %vm1364 = vcmp.lt.s32.totalorder %v1280, 0
        %vm1365 = vcmp.lt.s32.totalorder %v1287, 0
        %vm1366 = vcmp.lt.s32.totalorder %v1294, 0
        %vm1367 = vmand %vm1331, %vm1295
        %vm1368 = vmand %vm1332, %vm1296
        %vm1369 = vmand %vm1333, %vm1297
        %vm1370 = vmand %vm1334, %vm1298
        %vm1371 = vmand %vm1335, %vm1299
        %vm1372 = vmand %vm1336, %vm1300
        %vm1373 = vmand %vm1337, %vm1301
        %vm1374 = vmand %vm1338, %vm1302
        %vm1375 = vmand %vm1339, %vm1303
        %vm1376 = vmand %vm1340, %vm1304
        %vm1377 = vmand %vm1341, %vm1305
        %vm1378 = vmand %vm1342, %vm1306
        %vm1379 = vmand %vm1343, %vm1307
        %vm1380 = vmand %vm1344, %vm1308
        %vm1381 = vmand %vm1345, %vm1309
        %vm1382 = vmand %vm1346, %vm1310
        %vm1383 = vmand %vm1347, %vm1311
        %vm1384 = vmand %vm1348, %vm1312
        %vm1385 = vmand %vm1349, %vm1313
        %vm1386 = vmand %vm1350, %vm1314
        %vm1387 = vmand %vm1351, %vm1315
        %vm1388 = vmand %vm1352, %vm1316
        %vm1389 = vmand %vm1353, %vm1317
        %vm1390 = vmand %vm1354, %vm1318
        %vm1391 = vmand %vm1355, %vm1319
        %vm1392 = vmand %vm1356, %vm1320
        %vm1393 = vmand %vm1357, %vm1321
        %vm1394 = vmand %vm1358, %vm1322
        %vm1395 = vmand %vm1359, %vm1323
        %vm1396 = vmand %vm1360, %vm1324
        %vm1397 = vmand %vm1361, %vm1325
        %vm1398 = vmand %vm1362, %vm1326
        %vm1399 = vmand %vm1363, %vm1327
        %vm1400 = vmand %vm1364, %vm1328
        %vm1401 = vmand %vm1365, %vm1329
        %vm1402 = vmand %vm1366, %vm1330
        %v1403 = vadd.s32 %v1049, 16
        %v1404 = vadd.s32 %v1056, 16
        %v1405 = vadd.s32 %v1063, 16
        %v1406 = vadd.s32 %v1070, 16
        %v1407 = vadd.s32 %v1077, 16
        %v1408 = vadd.s32 %v1084, 16
        %v1409 = vadd.s32 %v1091, 16
        %v1410 = vadd.s32 %v1098, 16
        %v1411 = vadd.s32 %v1105, 16
        %v1412 = vadd.s32 %v1112, 16
        %v1413 = vadd.s32 %v1119, 16
        %v1414 = vadd.s32 %v1126, 16
        %v1415 = vadd.s32 %v1133, 16
        %v1416 = vadd.s32 %v1140, 16
        %v1417 = vadd.s32 %v1147, 16
        %v1418 = vadd.s32 %v1154, 16
        %v1419 = vadd.s32 %v1161, 16
        %v1420 = vadd.s32 %v1168, 16
        %v1421 = vadd.s32 %v1175, 16
        %v1422 = vadd.s32 %v1182, 16
        %v1423 = vadd.s32 %v1189, 16
        %v1424 = vadd.s32 %v1196, 16
        %v1425 = vadd.s32 %v1203, 16
        %v1426 = vadd.s32 %v1210, 16
        %v1427 = vadd.s32 %v1217, 16
        %v1428 = vadd.s32 %v1224, 16
        %v1429 = vadd.s32 %v1231, 16
        %v1430 = vadd.s32 %v1238, 16
        %v1431 = vadd.s32 %v1245, 16
        %v1432 = vadd.s32 %v1252, 16
        %v1433 = vadd.s32 %v1259, 16
        %v1434 = vadd.s32 %v1266, 16
        %v1435 = vadd.s32 %v1273, 16
        %v1436 = vadd.s32 %v1280, 16
        %v1437 = vadd.s32 %v1287, 16
        %v1438 = vadd.s32 %v1294, 16
        %v1439 = vsel %vm1367, %v1403, %v1049
        %v1440 = vsel %vm1368, %v1404, %v1056
        %v1441 = vsel %vm1369, %v1405, %v1063
        %v1442 = vsel %vm1370, %v1406, %v1070
        %v1443 = vsel %vm1371, %v1407, %v1077
        %v1444 = vsel %vm1372, %v1408, %v1084
        %v1445 = vsel %vm1373, %v1409, %v1091
        %v1446 = vsel %vm1374, %v1410, %v1098
        %v1447 = vsel %vm1375, %v1411, %v1105
        %v1448 = vsel %vm1376, %v1412, %v1112
        %v1449 = vsel %vm1377, %v1413, %v1119
        %v1450 = vsel %vm1378, %v1414, %v1126
        %v1451 = vsel %vm1379, %v1415, %v1133
        %v1452 = vsel %vm1380, %v1416, %v1140
        %v1453 = vsel %vm1381, %v1417, %v1147
        %v1454 = vsel %vm1382, %v1418, %v1154
        %v1455 = vsel %vm1383, %v1419, %v1161
        %v1456 = vsel %vm1384, %v1420, %v1168
        %v1457 = vsel %vm1385, %v1421, %v1175
        %v1458 = vsel %vm1386, %v1422, %v1182
        %v1459 = vsel %vm1387, %v1423, %v1189
        %v1460 = vsel %vm1388, %v1424, %v1196
        %v1461 = vsel %vm1389, %v1425, %v1203
        %v1462 = vsel %vm1390, %v1426, %v1210
        %v1463 = vsel %vm1391, %v1427, %v1217
        %v1464 = vsel %vm1392, %v1428, %v1224
        %v1465 = vsel %vm1393, %v1429, %v1231
        %v1466 = vsel %vm1394, %v1430, %v1238
        %v1467 = vsel %vm1395, %v1431, %v1245
        %v1468 = vsel %vm1396, %v1432, %v1252
        %v1469 = vsel %vm1397, %v1433, %v1259
        %v1470 = vsel %vm1398, %v1434, %v1266
        %v1471 = vsel %vm1399, %v1435, %v1273
        %v1472 = vsel %vm1400, %v1436, %v1280
        %v1473 = vsel %vm1401, %v1437, %v1287
        %v1474 = vsel %vm1402, %v1438, %v1294
        %vm1475 = vcmp.eq.s32.totalorder %v1439, 0
        %vm1476 = vcmp.eq.s32.totalorder %v1440, 0
        %vm1477 = vcmp.eq.s32.totalorder %v1441, 0
        %vm1478 = vcmp.eq.s32.totalorder %v1442, 0
        %vm1479 = vcmp.eq.s32.totalorder %v1443, 0
        %vm1480 = vcmp.eq.s32.totalorder %v1444, 0
        %vm1481 = vcmp.eq.s32.totalorder %v1445, 0
        %vm1482 = vcmp.eq.s32.totalorder %v1446, 0
        %vm1483 = vcmp.eq.s32.totalorder %v1447, 0
        %vm1484 = vcmp.eq.s32.totalorder %v1448, 0
        %vm1485 = vcmp.eq.s32.totalorder %v1449, 0
        %vm1486 = vcmp.eq.s32.totalorder %v1450, 0
        %vm1487 = vcmp.eq.s32.totalorder %v1451, 0
        %vm1488 = vcmp.eq.s32.totalorder %v1452, 0
        %vm1489 = vcmp.eq.s32.totalorder %v1453, 0
        %vm1490 = vcmp.eq.s32.totalorder %v1454, 0
        %vm1491 = vcmp.eq.s32.totalorder %v1455, 0
        %vm1492 = vcmp.eq.s32.totalorder %v1456, 0
        %vm1493 = vcmp.eq.s32.totalorder %v1457, 0
        %vm1494 = vcmp.eq.s32.totalorder %v1458, 0
        %vm1495 = vcmp.eq.s32.totalorder %v1459, 0
        %vm1496 = vcmp.eq.s32.totalorder %v1460, 0
        %vm1497 = vcmp.eq.s32.totalorder %v1461, 0
        %vm1498 = vcmp.eq.s32.totalorder %v1462, 0
        %vm1499 = vcmp.eq.s32.totalorder %v1463, 0
        %vm1500 = vcmp.eq.s32.totalorder %v1464, 0
        %vm1501 = vcmp.eq.s32.totalorder %v1465, 0
        %vm1502 = vcmp.eq.s32.totalorder %v1466, 0
        %vm1503 = vcmp.eq.s32.totalorder %v1467, 0
        %vm1504 = vcmp.eq.s32.totalorder %v1468, 0
        %vm1505 = vcmp.eq.s32.totalorder %v1469, 0
        %vm1506 = vcmp.eq.s32.totalorder %v1470, 0
        %vm1507 = vcmp.eq.s32.totalorder %v1471, 0
        %vm1508 = vcmp.eq.s32.totalorder %v1472, 0
        %vm1509 = vcmp.eq.s32.totalorder %v1473, 0
        %vm1510 = vcmp.eq.s32.totalorder %v1474, 0
        %vm1511 = vcmp.eq.s32.totalorder %v1439, 15
        %vm1512 = vcmp.eq.s32.totalorder %v1440, 15
        %vm1513 = vcmp.eq.s32.totalorder %v1441, 15
        %vm1514 = vcmp.eq.s32.totalorder %v1442, 15
        %vm1515 = vcmp.eq.s32.totalorder %v1443, 15
        %vm1516 = vcmp.eq.s32.totalorder %v1444, 15
        %vm1517 = vcmp.eq.s32.totalorder %v1445, 15
        %vm1518 = vcmp.eq.s32.totalorder %v1446, 15
        %vm1519 = vcmp.eq.s32.totalorder %v1447, 15
        %vm1520 = vcmp.eq.s32.totalorder %v1448, 15
        %vm1521 = vcmp.eq.s32.totalorder %v1449, 15
        %vm1522 = vcmp.eq.s32.totalorder %v1450, 15
        %vm1523 = vcmp.eq.s32.totalorder %v1451, 15
        %vm1524 = vcmp.eq.s32.totalorder %v1452, 15
        %vm1525 = vcmp.eq.s32.totalorder %v1453, 15
        %vm1526 = vcmp.eq.s32.totalorder %v1454, 15
        %vm1527 = vcmp.eq.s32.totalorder %v1455, 15
        %vm1528 = vcmp.eq.s32.totalorder %v1456, 15
        %vm1529 = vcmp.eq.s32.totalorder %v1457, 15
        %vm1530 = vcmp.eq.s32.totalorder %v1458, 15
        %vm1531 = vcmp.eq.s32.totalorder %v1459, 15
        %vm1532 = vcmp.eq.s32.totalorder %v1460, 15
        %vm1533 = vcmp.eq.s32.totalorder %v1461, 15
        %vm1534 = vcmp.eq.s32.totalorder %v1462, 15
        %vm1535 = vcmp.eq.s32.totalorder %v1463, 15
        %vm1536 = vcmp.eq.s32.totalorder %v1464, 15
        %vm1537 = vcmp.eq.s32.totalorder %v1465, 15
        %vm1538 = vcmp.eq.s32.totalorder %v1466, 15
        %vm1539 = vcmp.eq.s32.totalorder %v1467, 15
        %vm1540 = vcmp.eq.s32.totalorder %v1468, 15
        %vm1541 = vcmp.eq.s32.totalorder %v1469, 15
        %vm1542 = vcmp.eq.s32.totalorder %v1470, 15
        %vm1543 = vcmp.eq.s32.totalorder %v1471, 15
        %vm1544 = vcmp.eq.s32.totalorder %v1472, 15
        %vm1545 = vcmp.eq.s32.totalorder %v1473, 15
        %vm1546 = vcmp.eq.s32.totalorder %v1474, 15
        %v1547 = vrot.slane %v974, 7
        %v1548 = vrot.slane %v975, 7
        %v1549 = vrot.slane %v976, 7
        %v1550 = vrot.slane %v977, 7
        %v1551 = vrot.slane %v978, 7
        %v1552 = vrot.slane %v979, 7
        %v1553 = vrot.slane %v980, 7
        %v1554 = vrot.slane %v981, 7
        %v1555 = vrot.slane %v982, 7
        %v1556 = vrot.slane %v983, 7
        %v1557 = vrot.slane %v984, 7
        %v1558 = vrot.slane %v985, 7
        %v1559 = vrot.slane %v986, 7
        %v1560 = vrot.slane %v987, 7
        %v1561 = vrot.slane %v988, 7
        %v1562 = vrot.slane %v989, 7
        %v1563 = vrot.slane %v990, 7
        %v1564 = vrot.slane %v991, 7
        %v1565 = vrot.slane %v992, 7
        %v1566 = vrot.slane %v993, 7
        %v1567 = vrot.slane %v994, 7
        %v1568 = vrot.slane %v995, 7
        %v1569 = vrot.slane %v996, 7
        %v1570 = vrot.slane %v997, 7
        %v1571 = vrot.slane %v998, 7
        %v1572 = vrot.slane %v999, 7
        %v1573 = vrot.slane %v1000, 7
        %v1574 = vrot.slane %v1001, 7
        %v1575 = vrot.slane %v1002, 7
        %v1576 = vrot.slane %v1003, 7
        %v1577 = vrot.slane %v1004, 7
        %v1578 = vrot.slane %v1005, 7
        %vm1579 = vcmp.lt.s32.totalorder %v1007, 1
        %v1580 = vsel %vm1579, %v1578, 0.0
        %v1581 = vsel %vm1579, %v1577, %v1578
        %v1582 = vsel %vm1579, %v1576, %v1577
        %v1583 = vsel %vm1579, %v1575, %v1576
        %v1584 = vsel %vm1579, %v1574, %v1575
        %v1585 = vsel %vm1579, %v1573, %v1574
        %v1586 = vsel %vm1579, %v1572, %v1573
        %v1587 = vsel %vm1579, %v1571, %v1572
        %v1588 = vsel %vm1579, %v1570, %v1571
        %v1589 = vsel %vm1579, %v1569, %v1570
        %v1590 = vsel %vm1579, %v1568, %v1569
        %v1591 = vsel %vm1579, %v1567, %v1568
        %v1592 = vsel %vm1579, %v1566, %v1567
        %v1593 = vsel %vm1579, %v1565, %v1566
        %v1594 = vsel %vm1579, %v1564, %v1565
        %v1595 = vsel %vm1579, %v1563, %v1564
        %v1596 = vsel %vm1579, %v1562, %v1563
        %v1597 = vsel %vm1579, %v1561, %v1562
        %v1598 = vsel %vm1579, %v1560, %v1561
        %v1599 = vsel %vm1579, %v1559, %v1560
        %v1600 = vsel %vm1579, %v1558, %v1559
        %v1601 = vsel %vm1579, %v1557, %v1558
        %v1602 = vsel %vm1579, %v1556, %v1557
        %v1603 = vsel %vm1579, %v1555, %v1556
        %v1604 = vsel %vm1579, %v1554, %v1555
        %v1605 = vsel %vm1579, %v1553, %v1554
        %v1606 = vsel %vm1579, %v1552, %v1553
        %v1607 = vsel %vm1579, %v1551, %v1552
        %v1608 = vsel %vm1579, %v1550, %v1551
        %v1609 = vsel %vm1579, %v1549, %v1550
        %v1610 = vsel %vm1579, %v1548, %v1549
        %v1611 = vsel %vm1579, %v1547, %v1548
        %v1612 = vsel %vm1579, 0.0, %v1547
        %v1613 = vpack.c.bf16 0.0, 0.0
        %v1614 = vpack.c.bf16 %v1611, %v1612
        %v1615 = vpack.c.bf16 %v1609, %v1610
        %v1616 = vpack.c.bf16 %v1607, %v1608
        %v1617 = vpack.c.bf16 %v1605, %v1606
        %v1618 = vpack.c.bf16 %v1603, %v1604
        %v1619 = vpack.c.bf16 %v1601, %v1602
        %v1620 = vpack.c.bf16 %v1599, %v1600
        %v1621 = vpack.c.bf16 %v1597, %v1598
        %v1622 = vpack.c.bf16 %v1595, %v1596
        %v1623 = vpack.c.bf16 %v1593, %v1594
        %v1624 = vpack.c.bf16 %v1591, %v1592
        %v1625 = vpack.c.bf16 %v1589, %v1590
        %v1626 = vpack.c.bf16 %v1587, %v1588
        %v1627 = vpack.c.bf16 %v1585, %v1586
        %v1628 = vpack.c.bf16 %v1583, %v1584
        %v1629 = vpack.c.bf16 %v1581, %v1582
        %v1630 = vpack.c.bf16 0.0, %v1580
        %v1631 = vsel %vm1475, 1, 0
        %v1632 = vsel %vm1476, 1, 0
        %v1633 = vsel %vm1477, 1, 0
        %v1634 = vsel %vm1478, 1, 0
        %v1635 = vsel %vm1479, 1, 0
        %v1636 = vsel %vm1480, 1, 0
        %v1637 = vsel %vm1481, 1, 0
        %v1638 = vsel %vm1482, 1, 0
        %v1639 = vsel %vm1483, 1, 0
        %v1640 = vsel %vm1484, 1, 0
        %v1641 = vsel %vm1485, 1, 0
        %v1642 = vsel %vm1486, 1, 0
        %v1643 = vsel %vm1487, 1, 0
        %v1644 = vsel %vm1488, 1, 0
        %v1645 = vsel %vm1489, 1, 0
        %v1646 = vsel %vm1490, 1, 0
        %v1647 = vsel %vm1491, 1, 0
        %v1648 = vsel %vm1492, 1, 0
        %v1649 = vsel %vm1493, 1, 0
        %v1650 = vsel %vm1494, 1, 0
        %v1651 = vsel %vm1495, 1, 0
        %v1652 = vsel %vm1496, 1, 0
        %v1653 = vsel %vm1497, 1, 0
        %v1654 = vsel %vm1498, 1, 0
        %v1655 = vsel %vm1499, 1, 0
        %v1656 = vsel %vm1500, 1, 0
        %v1657 = vsel %vm1501, 1, 0
        %v1658 = vsel %vm1502, 1, 0
        %v1659 = vsel %vm1503, 1, 0
        %v1660 = vsel %vm1504, 1, 0
        %v1661 = vsel %vm1505, 1, 0
        %v1662 = vsel %vm1506, 1, 0
        %v1663 = vsel %vm1507, 1, 0
        %v1664 = vsel %vm1508, 1, 0
        %v1665 = vsel %vm1509, 1, 0
        %v1666 = vsel %vm1510, 1, 0
        %vm1667 = vcmp.eq.s32.totalorder %v1631, 1
        %vm1668 = vcmp.eq.s32.totalorder %v1632, 1
        %vm1669 = vcmp.eq.s32.totalorder %v1633, 1
        %vm1670 = vcmp.eq.s32.totalorder %v1634, 1
        %vm1671 = vcmp.eq.s32.totalorder %v1635, 1
        %vm1672 = vcmp.eq.s32.totalorder %v1636, 1
        %vm1673 = vcmp.eq.s32.totalorder %v1637, 1
        %vm1674 = vcmp.eq.s32.totalorder %v1638, 1
        %vm1675 = vcmp.eq.s32.totalorder %v1639, 1
        %vm1676 = vcmp.eq.s32.totalorder %v1640, 1
        %vm1677 = vcmp.eq.s32.totalorder %v1641, 1
        %vm1678 = vcmp.eq.s32.totalorder %v1642, 1
        %vm1679 = vcmp.eq.s32.totalorder %v1643, 1
        %vm1680 = vcmp.eq.s32.totalorder %v1644, 1
        %vm1681 = vcmp.eq.s32.totalorder %v1645, 1
        %vm1682 = vcmp.eq.s32.totalorder %v1646, 1
        %vm1683 = vcmp.eq.s32.totalorder %v1647, 1
        %vm1684 = vcmp.eq.s32.totalorder %v1648, 1
        %vm1685 = vcmp.eq.s32.totalorder %v1649, 1
        %vm1686 = vcmp.eq.s32.totalorder %v1650, 1
        %vm1687 = vcmp.eq.s32.totalorder %v1651, 1
        %vm1688 = vcmp.eq.s32.totalorder %v1652, 1
        %vm1689 = vcmp.eq.s32.totalorder %v1653, 1
        %vm1690 = vcmp.eq.s32.totalorder %v1654, 1
        %vm1691 = vcmp.eq.s32.totalorder %v1655, 1
        %vm1692 = vcmp.eq.s32.totalorder %v1656, 1
        %vm1693 = vcmp.eq.s32.totalorder %v1657, 1
        %vm1694 = vcmp.eq.s32.totalorder %v1658, 1
        %vm1695 = vcmp.eq.s32.totalorder %v1659, 1
        %vm1696 = vcmp.eq.s32.totalorder %v1660, 1
        %vm1697 = vcmp.eq.s32.totalorder %v1661, 1
        %vm1698 = vcmp.eq.s32.totalorder %v1662, 1
        %vm1699 = vcmp.eq.s32.totalorder %v1663, 1
        %vm1700 = vcmp.eq.s32.totalorder %v1664, 1
        %vm1701 = vcmp.eq.s32.totalorder %v1665, 1
        %vm1702 = vcmp.eq.s32.totalorder %v1666, 1
        %vm1703 = vmpackc.low %vm1667, %vm1667
        %vm1704 = vmpackc.low %vm1668, %vm1668
        %vm1705 = vmpackc.low %vm1669, %vm1669
        %vm1706 = vmpackc.low %vm1670, %vm1670
        %vm1707 = vmpackc.low %vm1671, %vm1671
        %vm1708 = vmpackc.low %vm1672, %vm1672
        %vm1709 = vmpackc.low %vm1673, %vm1673
        %vm1710 = vmpackc.low %vm1674, %vm1674
        %vm1711 = vmpackc.low %vm1675, %vm1675
        %vm1712 = vmpackc.low %vm1676, %vm1676
        %vm1713 = vmpackc.low %vm1677, %vm1677
        %vm1714 = vmpackc.low %vm1678, %vm1678
        %vm1715 = vmpackc.low %vm1679, %vm1679
        %vm1716 = vmpackc.low %vm1680, %vm1680
        %vm1717 = vmpackc.low %vm1681, %vm1681
        %vm1718 = vmpackc.low %vm1682, %vm1682
        %vm1719 = vmpackc.low %vm1683, %vm1683
        %vm1720 = vmpackc.low %vm1684, %vm1684
        %vm1721 = vmpackc.low %vm1685, %vm1685
        %vm1722 = vmpackc.low %vm1686, %vm1686
        %vm1723 = vmpackc.low %vm1687, %vm1687
        %vm1724 = vmpackc.low %vm1688, %vm1688
        %vm1725 = vmpackc.low %vm1689, %vm1689
        %vm1726 = vmpackc.low %vm1690, %vm1690
        %vm1727 = vmpackc.low %vm1691, %vm1691
        %vm1728 = vmpackc.low %vm1692, %vm1692
        %vm1729 = vmpackc.low %vm1693, %vm1693
        %vm1730 = vmpackc.low %vm1694, %vm1694
        %vm1731 = vmpackc.low %vm1695, %vm1695
        %vm1732 = vmpackc.low %vm1696, %vm1696
        %vm1733 = vmpackc.low %vm1697, %vm1697
        %vm1734 = vmpackc.low %vm1698, %vm1698
        %vm1735 = vmpackc.low %vm1699, %vm1699
        %vm1736 = vmpackc.low %vm1700, %vm1700
        %vm1737 = vmpackc.low %vm1701, %vm1701
        %vm1738 = vmpackc.low %vm1702, %vm1702
        %v1739 = vsel %vm1703, 65537, 0
        %v1740 = vsel %vm1704, 65537, 0
        %v1741 = vsel %vm1705, 65537, 0
        %v1742 = vsel %vm1706, 65537, 0
        %v1743 = vsel %vm1707, 65537, 0
        %v1744 = vsel %vm1708, 65537, 0
        %v1745 = vsel %vm1709, 65537, 0
        %v1746 = vsel %vm1710, 65537, 0
        %v1747 = vsel %vm1711, 65537, 0
        %v1748 = vsel %vm1712, 65537, 0
        %v1749 = vsel %vm1713, 65537, 0
        %v1750 = vsel %vm1714, 65537, 0
        %v1751 = vsel %vm1715, 65537, 0
        %v1752 = vsel %vm1716, 65537, 0
        %v1753 = vsel %vm1717, 65537, 0
        %v1754 = vsel %vm1718, 65537, 0
        %v1755 = vsel %vm1719, 65537, 0
        %v1756 = vsel %vm1720, 65537, 0
        %v1757 = vsel %vm1721, 65537, 0
        %v1758 = vsel %vm1722, 65537, 0
        %v1759 = vsel %vm1723, 65537, 0
        %v1760 = vsel %vm1724, 65537, 0
        %v1761 = vsel %vm1725, 65537, 0
        %v1762 = vsel %vm1726, 65537, 0
        %v1763 = vsel %vm1727, 65537, 0
        %v1764 = vsel %vm1728, 65537, 0
        %v1765 = vsel %vm1729, 65537, 0
        %v1766 = vsel %vm1730, 65537, 0
        %v1767 = vsel %vm1731, 65537, 0
        %v1768 = vsel %vm1732, 65537, 0
        %v1769 = vsel %vm1733, 65537, 0
        %v1770 = vsel %vm1734, 65537, 0
        %v1771 = vsel %vm1735, 65537, 0
        %v1772 = vsel %vm1736, 65537, 0
        %v1773 = vsel %vm1737, 65537, 0
        %v1774 = vsel %vm1738, 65537, 0
        %v1775 = vunpack.c.l.b16 %v1739
        %v1776 = vunpack.c.l.b16 %v1740
        %v1777 = vunpack.c.l.b16 %v1741
        %v1778 = vunpack.c.l.b16 %v1742
        %v1779 = vunpack.c.l.b16 %v1743
        %v1780 = vunpack.c.l.b16 %v1744
        %v1781 = vunpack.c.l.b16 %v1745
        %v1782 = vunpack.c.l.b16 %v1746
        %v1783 = vunpack.c.l.b16 %v1747
        %v1784 = vunpack.c.l.b16 %v1748
        %v1785 = vunpack.c.l.b16 %v1749
        %v1786 = vunpack.c.l.b16 %v1750
        %v1787 = vunpack.c.l.b16 %v1751
        %v1788 = vunpack.c.l.b16 %v1752
        %v1789 = vunpack.c.l.b16 %v1753
        %v1790 = vunpack.c.l.b16 %v1754
        %v1791 = vunpack.c.l.b16 %v1755
        %v1792 = vunpack.c.l.b16 %v1756
        %v1793 = vunpack.c.l.b16 %v1757
        %v1794 = vunpack.c.l.b16 %v1758
        %v1795 = vunpack.c.l.b16 %v1759
        %v1796 = vunpack.c.l.b16 %v1760
        %v1797 = vunpack.c.l.b16 %v1761
        %v1798 = vunpack.c.l.b16 %v1762
        %v1799 = vunpack.c.l.b16 %v1763
        %v1800 = vunpack.c.l.b16 %v1764
        %v1801 = vunpack.c.l.b16 %v1765
        %v1802 = vunpack.c.l.b16 %v1766
        %v1803 = vunpack.c.l.b16 %v1767
        %v1804 = vunpack.c.l.b16 %v1768
        %v1805 = vunpack.c.l.b16 %v1769
        %v1806 = vunpack.c.l.b16 %v1770
        %v1807 = vunpack.c.l.b16 %v1771
        %v1808 = vunpack.c.l.b16 %v1772
        %v1809 = vunpack.c.l.b16 %v1773
        %v1810 = vunpack.c.l.b16 %v1774
        %v1811 = vpack.c.b16 %v1776, %v1775
        %v1812 = vpack.c.b16 %v1778, %v1777
        %v1813 = vpack.c.b16 %v1780, %v1779
        %v1814 = vpack.c.b16 %v1782, %v1781
        %v1815 = vpack.c.b16 %v1784, %v1783
        %v1816 = vpack.c.b16 %v1786, %v1785
        %v1817 = vpack.c.b16 %v1788, %v1787
        %v1818 = vpack.c.b16 %v1790, %v1789
        %v1819 = vpack.c.b16 %v1792, %v1791
        %v1820 = vpack.c.b16 %v1794, %v1793
        %v1821 = vpack.c.b16 %v1796, %v1795
        %v1822 = vpack.c.b16 %v1798, %v1797
        %v1823 = vpack.c.b16 %v1800, %v1799
        %v1824 = vpack.c.b16 %v1802, %v1801
        %v1825 = vpack.c.b16 %v1804, %v1803
        %v1826 = vpack.c.b16 %v1806, %v1805
        %v1827 = vpack.c.b16 %v1808, %v1807
        %v1828 = vpack.c.b16 %v1810, %v1809
        %vm1829 = vcmp.ne.s16.totalorder %v1811, 0
        %vm1830 = vcmp.ne.s16.totalorder %v1812, 0
        %vm1831 = vcmp.ne.s16.totalorder %v1813, 0
        %vm1832 = vcmp.ne.s16.totalorder %v1814, 0
        %vm1833 = vcmp.ne.s16.totalorder %v1815, 0
        %vm1834 = vcmp.ne.s16.totalorder %v1816, 0
        %vm1835 = vcmp.ne.s16.totalorder %v1817, 0
        %vm1836 = vcmp.ne.s16.totalorder %v1818, 0
        %vm1837 = vcmp.ne.s16.totalorder %v1819, 0
        %vm1838 = vcmp.ne.s16.totalorder %v1820, 0
        %vm1839 = vcmp.ne.s16.totalorder %v1821, 0
        %vm1840 = vcmp.ne.s16.totalorder %v1822, 0
        %vm1841 = vcmp.ne.s16.totalorder %v1823, 0
        %vm1842 = vcmp.ne.s16.totalorder %v1824, 0
        %vm1843 = vcmp.ne.s16.totalorder %v1825, 0
        %vm1844 = vcmp.ne.s16.totalorder %v1826, 0
        %vm1845 = vcmp.ne.s16.totalorder %v1827, 0
        %vm1846 = vcmp.ne.s16.totalorder %v1828, 0
        %v1847 = vsel %vm1829, 0, %v1613
        %v1848 = vsel %vm1830, 0, %v1614
        %v1849 = vsel %vm1831, 0, %v1615
        %v1850 = vsel %vm1832, 0, %v1616
        %v1851 = vsel %vm1833, 0, %v1617
        %v1852 = vsel %vm1834, 0, %v1618
        %v1853 = vsel %vm1835, 0, %v1619
        %v1854 = vsel %vm1836, 0, %v1620
        %v1855 = vsel %vm1837, 0, %v1621
        %v1856 = vsel %vm1838, 0, %v1622
        %v1857 = vsel %vm1839, 0, %v1623
        %v1858 = vsel %vm1840, 0, %v1624
        %v1859 = vsel %vm1841, 0, %v1625
        %v1860 = vsel %vm1842, 0, %v1626
        %v1861 = vsel %vm1843, 0, %v1627
        %v1862 = vsel %vm1844, 0, %v1628
        %v1863 = vsel %vm1845, 0, %v1629
        %v1864 = vsel %vm1846, 0, %v1630
        %v1865 = vrot.slane %v974, 1
        %v1866 = vrot.slane %v975, 1
        %v1867 = vrot.slane %v976, 1
        %v1868 = vrot.slane %v977, 1
        %v1869 = vrot.slane %v978, 1
        %v1870 = vrot.slane %v979, 1
        %v1871 = vrot.slane %v980, 1
        %v1872 = vrot.slane %v981, 1
        %v1873 = vrot.slane %v982, 1
        %v1874 = vrot.slane %v983, 1
        %v1875 = vrot.slane %v984, 1
        %v1876 = vrot.slane %v985, 1
        %v1877 = vrot.slane %v986, 1
        %v1878 = vrot.slane %v987, 1
        %v1879 = vrot.slane %v988, 1
        %v1880 = vrot.slane %v989, 1
        %v1881 = vrot.slane %v990, 1
        %v1882 = vrot.slane %v991, 1
        %v1883 = vrot.slane %v992, 1
        %v1884 = vrot.slane %v993, 1
        %v1885 = vrot.slane %v994, 1
        %v1886 = vrot.slane %v995, 1
        %v1887 = vrot.slane %v996, 1
        %v1888 = vrot.slane %v997, 1
        %v1889 = vrot.slane %v998, 1
        %v1890 = vrot.slane %v999, 1
        %v1891 = vrot.slane %v1000, 1
        %v1892 = vrot.slane %v1001, 1
        %v1893 = vrot.slane %v1002, 1
        %v1894 = vrot.slane %v1003, 1
        %v1895 = vrot.slane %v1004, 1
        %v1896 = vrot.slane %v1005, 1
        %vm1897 = vcmp.lt.s32.totalorder %v1007, 7
        %v1898 = vsel %vm1897, %v1896, 0.0
        %v1899 = vsel %vm1897, %v1895, %v1896
        %v1900 = vsel %vm1897, %v1894, %v1895
        %v1901 = vsel %vm1897, %v1893, %v1894
        %v1902 = vsel %vm1897, %v1892, %v1893
        %v1903 = vsel %vm1897, %v1891, %v1892
        %v1904 = vsel %vm1897, %v1890, %v1891
        %v1905 = vsel %vm1897, %v1889, %v1890
        %v1906 = vsel %vm1897, %v1888, %v1889
        %v1907 = vsel %vm1897, %v1887, %v1888
        %v1908 = vsel %vm1897, %v1886, %v1887
        %v1909 = vsel %vm1897, %v1885, %v1886
        %v1910 = vsel %vm1897, %v1884, %v1885
        %v1911 = vsel %vm1897, %v1883, %v1884
        %v1912 = vsel %vm1897, %v1882, %v1883
        %v1913 = vsel %vm1897, %v1881, %v1882
        %v1914 = vsel %vm1897, %v1880, %v1881
        %v1915 = vsel %vm1897, %v1879, %v1880
        %v1916 = vsel %vm1897, %v1878, %v1879
        %v1917 = vsel %vm1897, %v1877, %v1878
        %v1918 = vsel %vm1897, %v1876, %v1877
        %v1919 = vsel %vm1897, %v1875, %v1876
        %v1920 = vsel %vm1897, %v1874, %v1875
        %v1921 = vsel %vm1897, %v1873, %v1874
        %v1922 = vsel %vm1897, %v1872, %v1873
        %v1923 = vsel %vm1897, %v1871, %v1872
        %v1924 = vsel %vm1897, %v1870, %v1871
        %v1925 = vsel %vm1897, %v1869, %v1870
        %v1926 = vsel %vm1897, %v1868, %v1869
        %v1927 = vsel %vm1897, %v1867, %v1868
        %v1928 = vsel %vm1897, %v1866, %v1867
        %v1929 = vsel %vm1897, %v1865, %v1866
        %v1930 = vsel %vm1897, 0.0, %v1865
        %v1931 = vpack.c.bf16 %v1930, 0.0
        %v1932 = vpack.c.bf16 %v1928, %v1929
        %v1933 = vpack.c.bf16 %v1926, %v1927
        %v1934 = vpack.c.bf16 %v1924, %v1925
        %v1935 = vpack.c.bf16 %v1922, %v1923
        %v1936 = vpack.c.bf16 %v1920, %v1921
        %v1937 = vpack.c.bf16 %v1918, %v1919
        %v1938 = vpack.c.bf16 %v1916, %v1917
        %v1939 = vpack.c.bf16 %v1914, %v1915
        %v1940 = vpack.c.bf16 %v1912, %v1913
        %v1941 = vpack.c.bf16 %v1910, %v1911
        %v1942 = vpack.c.bf16 %v1908, %v1909
        %v1943 = vpack.c.bf16 %v1906, %v1907
        %v1944 = vpack.c.bf16 %v1904, %v1905
        %v1945 = vpack.c.bf16 %v1902, %v1903
        %v1946 = vpack.c.bf16 %v1900, %v1901
        %v1947 = vpack.c.bf16 %v1898, %v1899
        %v1948 = vpack.c.bf16 0.0, 0.0
        %v1949 = vsel %vm1511, 1, 0
        %v1950 = vsel %vm1512, 1, 0
        %v1951 = vsel %vm1513, 1, 0
        %v1952 = vsel %vm1514, 1, 0
        %v1953 = vsel %vm1515, 1, 0
        %v1954 = vsel %vm1516, 1, 0
        %v1955 = vsel %vm1517, 1, 0
        %v1956 = vsel %vm1518, 1, 0
        %v1957 = vsel %vm1519, 1, 0
        %v1958 = vsel %vm1520, 1, 0
        %v1959 = vsel %vm1521, 1, 0
        %v1960 = vsel %vm1522, 1, 0
        %v1961 = vsel %vm1523, 1, 0
        %v1962 = vsel %vm1524, 1, 0
        %v1963 = vsel %vm1525, 1, 0
        %v1964 = vsel %vm1526, 1, 0
        %v1965 = vsel %vm1527, 1, 0
        %v1966 = vsel %vm1528, 1, 0
        %v1967 = vsel %vm1529, 1, 0
        %v1968 = vsel %vm1530, 1, 0
        %v1969 = vsel %vm1531, 1, 0
        %v1970 = vsel %vm1532, 1, 0
        %v1971 = vsel %vm1533, 1, 0
        %v1972 = vsel %vm1534, 1, 0
        %v1973 = vsel %vm1535, 1, 0
        %v1974 = vsel %vm1536, 1, 0
        %v1975 = vsel %vm1537, 1, 0
        %v1976 = vsel %vm1538, 1, 0
        %v1977 = vsel %vm1539, 1, 0
        %v1978 = vsel %vm1540, 1, 0
        %v1979 = vsel %vm1541, 1, 0
        %v1980 = vsel %vm1542, 1, 0
        %v1981 = vsel %vm1543, 1, 0
        %v1982 = vsel %vm1544, 1, 0
        %v1983 = vsel %vm1545, 1, 0
        %v1984 = vsel %vm1546, 1, 0
        %vm1985 = vcmp.eq.s32.totalorder %v1949, 1
        %vm1986 = vcmp.eq.s32.totalorder %v1950, 1
        %vm1987 = vcmp.eq.s32.totalorder %v1951, 1
        %vm1988 = vcmp.eq.s32.totalorder %v1952, 1
        %vm1989 = vcmp.eq.s32.totalorder %v1953, 1
        %vm1990 = vcmp.eq.s32.totalorder %v1954, 1
        %vm1991 = vcmp.eq.s32.totalorder %v1955, 1
        %vm1992 = vcmp.eq.s32.totalorder %v1956, 1
        %vm1993 = vcmp.eq.s32.totalorder %v1957, 1
        %vm1994 = vcmp.eq.s32.totalorder %v1958, 1
        %vm1995 = vcmp.eq.s32.totalorder %v1959, 1
        %vm1996 = vcmp.eq.s32.totalorder %v1960, 1
        %vm1997 = vcmp.eq.s32.totalorder %v1961, 1
        %vm1998 = vcmp.eq.s32.totalorder %v1962, 1
        %vm1999 = vcmp.eq.s32.totalorder %v1963, 1
        %vm2000 = vcmp.eq.s32.totalorder %v1964, 1
        %vm2001 = vcmp.eq.s32.totalorder %v1965, 1
        %vm2002 = vcmp.eq.s32.totalorder %v1966, 1
        %vm2003 = vcmp.eq.s32.totalorder %v1967, 1
        %vm2004 = vcmp.eq.s32.totalorder %v1968, 1
        %vm2005 = vcmp.eq.s32.totalorder %v1969, 1
        %vm2006 = vcmp.eq.s32.totalorder %v1970, 1
        %vm2007 = vcmp.eq.s32.totalorder %v1971, 1
        %vm2008 = vcmp.eq.s32.totalorder %v1972, 1
        %vm2009 = vcmp.eq.s32.totalorder %v1973, 1
        %vm2010 = vcmp.eq.s32.totalorder %v1974, 1
        %vm2011 = vcmp.eq.s32.totalorder %v1975, 1
        %vm2012 = vcmp.eq.s32.totalorder %v1976, 1
        %vm2013 = vcmp.eq.s32.totalorder %v1977, 1
        %vm2014 = vcmp.eq.s32.totalorder %v1978, 1
        %vm2015 = vcmp.eq.s32.totalorder %v1979, 1
        %vm2016 = vcmp.eq.s32.totalorder %v1980, 1
        %vm2017 = vcmp.eq.s32.totalorder %v1981, 1
        %vm2018 = vcmp.eq.s32.totalorder %v1982, 1
        %vm2019 = vcmp.eq.s32.totalorder %v1983, 1
        %vm2020 = vcmp.eq.s32.totalorder %v1984, 1
        %vm2021 = vmpackc.low %vm1985, %vm1985
        %vm2022 = vmpackc.low %vm1986, %vm1986
        %vm2023 = vmpackc.low %vm1987, %vm1987
        %vm2024 = vmpackc.low %vm1988, %vm1988
        %vm2025 = vmpackc.low %vm1989, %vm1989
        %vm2026 = vmpackc.low %vm1990, %vm1990
        %vm2027 = vmpackc.low %vm1991, %vm1991
        %vm2028 = vmpackc.low %vm1992, %vm1992
        %vm2029 = vmpackc.low %vm1993, %vm1993
        %vm2030 = vmpackc.low %vm1994, %vm1994
        %vm2031 = vmpackc.low %vm1995, %vm1995
        %vm2032 = vmpackc.low %vm1996, %vm1996
        %vm2033 = vmpackc.low %vm1997, %vm1997
        %vm2034 = vmpackc.low %vm1998, %vm1998
        %vm2035 = vmpackc.low %vm1999, %vm1999
        %vm2036 = vmpackc.low %vm2000, %vm2000
        %vm2037 = vmpackc.low %vm2001, %vm2001
        %vm2038 = vmpackc.low %vm2002, %vm2002
        %vm2039 = vmpackc.low %vm2003, %vm2003
        %vm2040 = vmpackc.low %vm2004, %vm2004
        %vm2041 = vmpackc.low %vm2005, %vm2005
        %vm2042 = vmpackc.low %vm2006, %vm2006
        %vm2043 = vmpackc.low %vm2007, %vm2007
        %vm2044 = vmpackc.low %vm2008, %vm2008
        %vm2045 = vmpackc.low %vm2009, %vm2009
        %vm2046 = vmpackc.low %vm2010, %vm2010
        %vm2047 = vmpackc.low %vm2011, %vm2011
        %vm2048 = vmpackc.low %vm2012, %vm2012
        %vm2049 = vmpackc.low %vm2013, %vm2013
        %vm2050 = vmpackc.low %vm2014, %vm2014
        %vm2051 = vmpackc.low %vm2015, %vm2015
        %vm2052 = vmpackc.low %vm2016, %vm2016
        %vm2053 = vmpackc.low %vm2017, %vm2017
        %vm2054 = vmpackc.low %vm2018, %vm2018
        %vm2055 = vmpackc.low %vm2019, %vm2019
        %vm2056 = vmpackc.low %vm2020, %vm2020
        %v2057 = vsel %vm2021, 65537, 0
        %v2058 = vsel %vm2022, 65537, 0
        %v2059 = vsel %vm2023, 65537, 0
        %v2060 = vsel %vm2024, 65537, 0
        %v2061 = vsel %vm2025, 65537, 0
        %v2062 = vsel %vm2026, 65537, 0
        %v2063 = vsel %vm2027, 65537, 0
        %v2064 = vsel %vm2028, 65537, 0
        %v2065 = vsel %vm2029, 65537, 0
        %v2066 = vsel %vm2030, 65537, 0
        %v2067 = vsel %vm2031, 65537, 0
        %v2068 = vsel %vm2032, 65537, 0
        %v2069 = vsel %vm2033, 65537, 0
        %v2070 = vsel %vm2034, 65537, 0
        %v2071 = vsel %vm2035, 65537, 0
        %v2072 = vsel %vm2036, 65537, 0
        %v2073 = vsel %vm2037, 65537, 0
        %v2074 = vsel %vm2038, 65537, 0
        %v2075 = vsel %vm2039, 65537, 0
        %v2076 = vsel %vm2040, 65537, 0
        %v2077 = vsel %vm2041, 65537, 0
        %v2078 = vsel %vm2042, 65537, 0
        %v2079 = vsel %vm2043, 65537, 0
        %v2080 = vsel %vm2044, 65537, 0
        %v2081 = vsel %vm2045, 65537, 0
        %v2082 = vsel %vm2046, 65537, 0
        %v2083 = vsel %vm2047, 65537, 0
        %v2084 = vsel %vm2048, 65537, 0
        %v2085 = vsel %vm2049, 65537, 0
        %v2086 = vsel %vm2050, 65537, 0
        %v2087 = vsel %vm2051, 65537, 0
        %v2088 = vsel %vm2052, 65537, 0
        %v2089 = vsel %vm2053, 65537, 0
        %v2090 = vsel %vm2054, 65537, 0
        %v2091 = vsel %vm2055, 65537, 0
        %v2092 = vsel %vm2056, 65537, 0
        %v2093 = vunpack.c.l.b16 %v2057
        %v2094 = vunpack.c.l.b16 %v2058
        %v2095 = vunpack.c.l.b16 %v2059
        %v2096 = vunpack.c.l.b16 %v2060
        %v2097 = vunpack.c.l.b16 %v2061
        %v2098 = vunpack.c.l.b16 %v2062
        %v2099 = vunpack.c.l.b16 %v2063
        %v2100 = vunpack.c.l.b16 %v2064
        %v2101 = vunpack.c.l.b16 %v2065
        %v2102 = vunpack.c.l.b16 %v2066
        %v2103 = vunpack.c.l.b16 %v2067
        %v2104 = vunpack.c.l.b16 %v2068
        %v2105 = vunpack.c.l.b16 %v2069
        %v2106 = vunpack.c.l.b16 %v2070
        %v2107 = vunpack.c.l.b16 %v2071
        %v2108 = vunpack.c.l.b16 %v2072
        %v2109 = vunpack.c.l.b16 %v2073
        %v2110 = vunpack.c.l.b16 %v2074
        %v2111 = vunpack.c.l.b16 %v2075
        %v2112 = vunpack.c.l.b16 %v2076
        %v2113 = vunpack.c.l.b16 %v2077
        %v2114 = vunpack.c.l.b16 %v2078
        %v2115 = vunpack.c.l.b16 %v2079
        %v2116 = vunpack.c.l.b16 %v2080
        %v2117 = vunpack.c.l.b16 %v2081
        %v2118 = vunpack.c.l.b16 %v2082
        %v2119 = vunpack.c.l.b16 %v2083
        %v2120 = vunpack.c.l.b16 %v2084
        %v2121 = vunpack.c.l.b16 %v2085
        %v2122 = vunpack.c.l.b16 %v2086
        %v2123 = vunpack.c.l.b16 %v2087
        %v2124 = vunpack.c.l.b16 %v2088
        %v2125 = vunpack.c.l.b16 %v2089
        %v2126 = vunpack.c.l.b16 %v2090
        %v2127 = vunpack.c.l.b16 %v2091
        %v2128 = vunpack.c.l.b16 %v2092
        %v2129 = vpack.c.b16 %v2094, %v2093
        %v2130 = vpack.c.b16 %v2096, %v2095
        %v2131 = vpack.c.b16 %v2098, %v2097
        %v2132 = vpack.c.b16 %v2100, %v2099
        %v2133 = vpack.c.b16 %v2102, %v2101
        %v2134 = vpack.c.b16 %v2104, %v2103
        %v2135 = vpack.c.b16 %v2106, %v2105
        %v2136 = vpack.c.b16 %v2108, %v2107
        %v2137 = vpack.c.b16 %v2110, %v2109
        %v2138 = vpack.c.b16 %v2112, %v2111
        %v2139 = vpack.c.b16 %v2114, %v2113
        %v2140 = vpack.c.b16 %v2116, %v2115
        %v2141 = vpack.c.b16 %v2118, %v2117
        %v2142 = vpack.c.b16 %v2120, %v2119
        %v2143 = vpack.c.b16 %v2122, %v2121
        %v2144 = vpack.c.b16 %v2124, %v2123
        %v2145 = vpack.c.b16 %v2126, %v2125
        %v2146 = vpack.c.b16 %v2128, %v2127
        %vm2147 = vcmp.ne.s16.totalorder %v2129, 0
        %vm2148 = vcmp.ne.s16.totalorder %v2130, 0
        %vm2149 = vcmp.ne.s16.totalorder %v2131, 0
        %vm2150 = vcmp.ne.s16.totalorder %v2132, 0
        %vm2151 = vcmp.ne.s16.totalorder %v2133, 0
        %vm2152 = vcmp.ne.s16.totalorder %v2134, 0
        %vm2153 = vcmp.ne.s16.totalorder %v2135, 0
        %vm2154 = vcmp.ne.s16.totalorder %v2136, 0
        %vm2155 = vcmp.ne.s16.totalorder %v2137, 0
        %vm2156 = vcmp.ne.s16.totalorder %v2138, 0
        %vm2157 = vcmp.ne.s16.totalorder %v2139, 0
        %vm2158 = vcmp.ne.s16.totalorder %v2140, 0
        %vm2159 = vcmp.ne.s16.totalorder %v2141, 0
        %vm2160 = vcmp.ne.s16.totalorder %v2142, 0
        %vm2161 = vcmp.ne.s16.totalorder %v2143, 0
        %vm2162 = vcmp.ne.s16.totalorder %v2144, 0
        %vm2163 = vcmp.ne.s16.totalorder %v2145, 0
        %vm2164 = vcmp.ne.s16.totalorder %v2146, 0
        %v2165 = vsel %vm2147, 0, %v1931
        %v2166 = vsel %vm2148, 0, %v1932
        %v2167 = vsel %vm2149, 0, %v1933
        %v2168 = vsel %vm2150, 0, %v1934
        %v2169 = vsel %vm2151, 0, %v1935
        %v2170 = vsel %vm2152, 0, %v1936
        %v2171 = vsel %vm2153, 0, %v1937
        %v2172 = vsel %vm2154, 0, %v1938
        %v2173 = vsel %vm2155, 0, %v1939
        %v2174 = vsel %vm2156, 0, %v1940
        %v2175 = vsel %vm2157, 0, %v1941
        %v2176 = vsel %vm2158, 0, %v1942
        %v2177 = vsel %vm2159, 0, %v1943
        %v2178 = vsel %vm2160, 0, %v1944
        %v2179 = vsel %vm2161, 0, %v1945
        %v2180 = vsel %vm2162, 0, %v1946
        %v2181 = vsel %vm2163, 0, %v1947
        %v2182 = vsel %vm2164, 0, %v1948
        %v2183 = vpack.c.bf16 0.0, 0.0
        %v2184 = vpack.c.bf16 %v975, %v974
        %v2185 = vpack.c.bf16 %v977, %v976
        %v2186 = vpack.c.bf16 %v979, %v978
        %v2187 = vpack.c.bf16 %v981, %v980
        %v2188 = vpack.c.bf16 %v983, %v982
        %v2189 = vpack.c.bf16 %v985, %v984
        %v2190 = vpack.c.bf16 %v987, %v986
        %v2191 = vpack.c.bf16 %v989, %v988
        %v2192 = vpack.c.bf16 %v991, %v990
        %v2193 = vpack.c.bf16 %v993, %v992
        %v2194 = vpack.c.bf16 %v995, %v994
        %v2195 = vpack.c.bf16 %v997, %v996
        %v2196 = vpack.c.bf16 %v999, %v998
        %v2197 = vpack.c.bf16 %v1001, %v1000
        %v2198 = vpack.c.bf16 %v1003, %v1002
        %v2199 = vpack.c.bf16 %v1005, %v1004
        %v2200 = vld [vmem:[#allocation7] sm:$0xf]
        %v2201 = vld [vmem:[#allocation7 + $0x4] sm:$0xf]
        %v2202 = vld [vmem:[#allocation7 + $0x8] sm:$0xf]
        %v2203 = vld [vmem:[#allocation7 + $0xc] sm:$0xf]
        %v2204 = vld [vmem:[#allocation7 + $0x10] sm:$0xf]
        %v2205 = vld [vmem:[#allocation7 + $0x14] sm:$0xf]
        %v2206 = vld [vmem:[#allocation7 + $0x18] sm:$0xf]
        %v2207 = vld [vmem:[#allocation7 + $0x1c] sm:$0xf]
        %v2208 = vld [vmem:[#allocation7 + $0x20] sm:$0xf]
        %v2209 = vld [vmem:[#allocation7 + $0x24] sm:$0xf]
        %v2210 = vld [vmem:[#allocation7 + $0x28] sm:$0xf]
        %v2211 = vld [vmem:[#allocation7 + $0x2c] sm:$0xf]
        %v2212 = vld [vmem:[#allocation7 + $0x30] sm:$0xf]
        %v2213 = vld [vmem:[#allocation7 + $0x34] sm:$0xf]
        %v2214 = vld [vmem:[#allocation7 + $0x38] sm:$0xf]
        %v2215 = vld [vmem:[#allocation7 + $0x3c] sm:$0xf]
        %v2216 = vld [vmem:[#allocation7 + $0x40] sm:$0xf]
        %v2217 = vld [vmem:[#allocation7 + $0x44] sm:$0xf]
        %v2218 = vld [vmem:[#allocation7 + $0x48] sm:$0xf]
        %v2219 = vld [vmem:[#allocation7 + $0x4c] sm:$0xf]
        %v2220 = vld [vmem:[#allocation7 + $0x50] sm:$0xf]
        %v2221 = vld [vmem:[#allocation7 + $0x54] sm:$0xf]
        %v2222 = vld [vmem:[#allocation7 + $0x58] sm:$0xf]
        %v2223 = vld [vmem:[#allocation7 + $0x5c] sm:$0xf]
        %v2224 = vld [vmem:[#allocation7 + $0x60] sm:$0xf]
        %v2225 = vld [vmem:[#allocation7 + $0x64] sm:$0xf]
        %v2226 = vld [vmem:[#allocation7 + $0x68] sm:$0xf]
        %v2227 = vld [vmem:[#allocation7 + $0x6c] sm:$0xf]
        %v2228 = vld [vmem:[#allocation7 + $0x70] sm:$0xf]
        %v2229 = vld [vmem:[#allocation7 + $0x74] sm:$0xf]
        %v2230 = vld [vmem:[#allocation7 + $0x78] sm:$0xf]
        %v2231 = vld [vmem:[#allocation7 + $0x7c] sm:$0xf]
        %v2232 = vld [vmem:[#allocation7 + $0x80] sm:$0xf]
        %v2233 = vld [vmem:[#allocation7 + $0x84] sm:$0xf]
        %v2234 = vld [vmem:[#allocation7 + $0x88] sm:$0xf]
        %v2235 = vld [vmem:[#allocation7 + $0x8c] sm:$0xf]
        %v2236 = vld [vmem:[#allocation7 + $0x90] sm:$0xf]
        %v2237 = vld [vmem:[#allocation7 + $0x94] sm:$0xf]
        %v2238 = vld [vmem:[#allocation7 + $0x98] sm:$0xf]
        %v2239 = vld [vmem:[#allocation7 + $0x9c] sm:$0xf]
        %v2240 = vld [vmem:[#allocation7 + $0xa0] sm:$0xf]
        %v2241 = vld [vmem:[#allocation7 + $0xa4] sm:$0xf]
        %v2242 = vld [vmem:[#allocation7 + $0xa8] sm:$0xf]
        %v2243 = vld [vmem:[#allocation7 + $0xac] sm:$0xf]
        %v2244 = vld [vmem:[#allocation7 + $0xb0] sm:$0xf]
        %v2245 = vld [vmem:[#allocation7 + $0xb4] sm:$0xf]
        %v2246 = vld [vmem:[#allocation7 + $0xb8] sm:$0xf]
        %v2247 = vld [vmem:[#allocation7 + $0xbc] sm:$0xf]
        %s2248 = scalar_lea.vmem [#allocation7], 192
        %v2249 = vld [vmem:[%s2248] sm:$0xf]
        %v2250 = vld [vmem:[%s2248 + $0x4] sm:$0xf]
        %v2251 = vld [vmem:[%s2248 + $0x8] sm:$0xf]
        %v2252 = vld [vmem:[%s2248 + $0xc] sm:$0xf]
        %v2253 = vld [vmem:[%s2248 + $0x10] sm:$0xf]
        %v2254 = vld [vmem:[%s2248 + $0x14] sm:$0xf]
        %v2255 = vld [vmem:[%s2248 + $0x18] sm:$0xf]
        %v2256 = vld [vmem:[%s2248 + $0x1c] sm:$0xf]
        %v2257 = vld [vmem:[%s2248 + $0x20] sm:$0xf]
        %v2258 = vld [vmem:[%s2248 + $0x24] sm:$0xf]
        %v2259 = vld [vmem:[%s2248 + $0x28] sm:$0xf]
        %v2260 = vld [vmem:[%s2248 + $0x2c] sm:$0xf]
        %v2261 = vld [vmem:[%s2248 + $0x30] sm:$0xf]
        %v2262 = vld [vmem:[%s2248 + $0x34] sm:$0xf]
        %v2263 = vld [vmem:[%s2248 + $0x38] sm:$0xf]
        %v2264 = vld [vmem:[%s2248 + $0x3c] sm:$0xf]
        %v2265 = vld [vmem:[%s2248 + $0x40] sm:$0xf]
        %v2266 = vld [vmem:[%s2248 + $0x44] sm:$0xf]
        %v2267 = vld [vmem:[%s2248 + $0x48] sm:$0xf]
        %v2268 = vld [vmem:[%s2248 + $0x4c] sm:$0xf]
        %v2269 = vld [vmem:[%s2248 + $0x50] sm:$0xf]
        %v2270 = vld [vmem:[%s2248 + $0x54] sm:$0xf]
        %v2271 = vld [vmem:[%s2248 + $0x58] sm:$0xf]
        %v2272 = vld [vmem:[%s2248 + $0x5c] sm:$0xf]
        %v2273 = vld [vmem:[%s2248 + $0x60] sm:$0xf]
        %v2274 = vld [vmem:[%s2248 + $0x64] sm:$0xf]
        %v2275 = vld [vmem:[%s2248 + $0x68] sm:$0xf]
        %v2276 = vld [vmem:[%s2248 + $0x6c] sm:$0xf]
        %v2277 = vld [vmem:[%s2248 + $0x70] sm:$0xf]
        %v2278 = vld [vmem:[%s2248 + $0x74] sm:$0xf]
        %v2279 = vld [vmem:[%s2248 + $0x78] sm:$0xf]
        %v2280 = vld [vmem:[%s2248 + $0x7c] sm:$0xf]
        %v2281 = vld [vmem:[%s2248 + $0x80] sm:$0xf]
        %v2282 = vld [vmem:[%s2248 + $0x84] sm:$0xf]
        %v2283 = vld [vmem:[%s2248 + $0x88] sm:$0xf]
        %v2284 = vld [vmem:[%s2248 + $0x8c] sm:$0xf]
        %v2285 = vld [vmem:[%s2248 + $0x90] sm:$0xf]
        %v2286 = vld [vmem:[%s2248 + $0x94] sm:$0xf]
        %v2287 = vld [vmem:[%s2248 + $0x98] sm:$0xf]
        %v2288 = vld [vmem:[%s2248 + $0x9c] sm:$0xf]
        %v2289 = vld [vmem:[%s2248 + $0xa0] sm:$0xf]
        %v2290 = vld [vmem:[%s2248 + $0xa4] sm:$0xf]
        %v2291 = vld [vmem:[%s2248 + $0xa8] sm:$0xf]
        %v2292 = vld [vmem:[%s2248 + $0xac] sm:$0xf]
        %v2293 = vld [vmem:[%s2248 + $0xb0] sm:$0xf]
        %v2294 = vld [vmem:[%s2248 + $0xb4] sm:$0xf]
        %v2295 = vld [vmem:[%s2248 + $0xb8] sm:$0xf]
        %v2296 = vld [vmem:[%s2248 + $0xbc] sm:$0xf]
        %v2345 = vunpack.c.l.b16 %v2249
        %v2346 = vunpack.c.l.b16 %v2250
        %v2347 = vunpack.c.l.b16 %v2251
        %v2348 = vunpack.c.l.b16 %v2252
        %v2349 = vunpack.c.l.b16 %v2253
        %v2350 = vunpack.c.l.b16 %v2254
        %v2351 = vunpack.c.l.b16 %v2255
        %v2352 = vunpack.c.l.b16 %v2256
        %v2353 = vunpack.c.l.b16 %v2257
        %v2354 = vunpack.c.l.b16 %v2258
        %v2355 = vunpack.c.l.b16 %v2259
        %v2356 = vunpack.c.l.b16 %v2260
        %v2357 = vunpack.c.l.b16 %v2261
        %v2358 = vunpack.c.l.b16 %v2262
        %v2359 = vunpack.c.l.b16 %v2263
        %v2360 = vunpack.c.l.b16 %v2264
        %v2361 = vunpack.c.l.b16 %v2265
        %v2362 = vunpack.c.l.b16 %v2266
        %v2363 = vunpack.c.l.b16 %v2267
        %v2364 = vunpack.c.l.b16 %v2268
        %v2365 = vunpack.c.l.b16 %v2269
        %v2366 = vunpack.c.l.b16 %v2270
        %v2367 = vunpack.c.l.b16 %v2271
        %v2368 = vunpack.c.l.b16 %v2272
        %v2369 = vunpack.c.l.b16 %v2273
        %v2370 = vunpack.c.l.b16 %v2274
        %v2371 = vunpack.c.l.b16 %v2275
        %v2372 = vunpack.c.l.b16 %v2276
        %v2373 = vunpack.c.l.b16 %v2277
        %v2374 = vunpack.c.l.b16 %v2278
        %v2375 = vunpack.c.l.b16 %v2279
        %v2376 = vunpack.c.l.b16 %v2280
        %v2377 = vunpack.c.l.b16 %v2281
        %v2378 = vunpack.c.l.b16 %v2282
        %v2379 = vunpack.c.l.b16 %v2283
        %v2380 = vunpack.c.l.b16 %v2284
        %v2381 = vunpack.c.l.b16 %v2285
        %v2382 = vunpack.c.l.b16 %v2286
        %v2383 = vunpack.c.l.b16 %v2287
        %v2384 = vunpack.c.l.b16 %v2288
        %v2385 = vunpack.c.l.b16 %v2289
        %v2386 = vunpack.c.l.b16 %v2290
        %v2387 = vunpack.c.l.b16 %v2291
        %v2388 = vunpack.c.l.b16 %v2292
        %v2389 = vunpack.c.l.b16 %v2293
        %v2390 = vunpack.c.l.b16 %v2294
        %v2391 = vunpack.c.l.b16 %v2295
        %v2392 = vunpack.c.l.b16 %v2296
        %v2393 = vpack.c.b16 %v2346, %v2345
        %v2394 = vpack.c.b16 %v2348, %v2347
        %v2395 = vpack.c.b16 %v2350, %v2349
        %v2396 = vpack.c.b16 %v2352, %v2351
        %v2397 = vpack.c.b16 %v2354, %v2353
        %v2398 = vpack.c.b16 %v2356, %v2355
        %v2399 = vpack.c.b16 %v2358, %v2357
        %v2400 = vpack.c.b16 %v2360, %v2359
        %v2401 = vpack.c.b16 %v2362, %v2361
        %v2402 = vpack.c.b16 %v2364, %v2363
        %v2403 = vpack.c.b16 %v2366, %v2365
        %v2404 = vpack.c.b16 %v2368, %v2367
        %v2405 = vpack.c.b16 %v2370, %v2369
        %v2406 = vpack.c.b16 %v2372, %v2371
        %v2407 = vpack.c.b16 %v2374, %v2373
        %v2408 = vpack.c.b16 %v2376, %v2375
        %v2409 = vpack.c.b16 %v2378, %v2377
        %v2410 = vpack.c.b16 %v2380, %v2379
        %v2411 = vpack.c.b16 %v2382, %v2381
        %v2412 = vpack.c.b16 %v2384, %v2383
        %v2413 = vpack.c.b16 %v2386, %v2385
        %v2414 = vpack.c.b16 %v2388, %v2387
        %v2415 = vpack.c.b16 %v2390, %v2389
        %v2416 = vpack.c.b16 %v2392, %v2391
        %2441 = vmatprep.subr.bf16.mxu0 0
        %2442 = vmatpush1.bf16.msra.mxu0 %v2400
        %2443 = vmatprep.subr.bf16.mxu0 0
        %2444 = vmatpush1.bf16.msra.mxu0 %v2399
        %2445 = vmatprep.subr.bf16.mxu0 0
        %2446 = vmatpush1.bf16.msra.mxu0 %v2398
        %2447 = vmatprep.subr.bf16.mxu0 0
        %2448 = vmatpush1.bf16.msra.mxu0 %v2397
        %2449 = vmatprep.subr.bf16.mxu0 0
        %2450 = vmatpush1.bf16.msra.mxu0 %v2396
        %2451 = vmatprep.subr.bf16.mxu0 0
        %2452 = vmatpush1.bf16.msra.mxu0 %v2395
        %2453 = vmatprep.subr.bf16.mxu0 0
        %2454 = vmatpush1.bf16.msra.mxu0 %v2394
        %2455 = vmatprep.subr.bf16.mxu0 0
        %2456 = vmatpush1.bf16.msra.mxu0 %v2393
        %2457 = vmatprep.subr.bf16.mxu0 0
        %2458 = vmatpush2.bf16.msra.mxu0 %v2408
        %2459 = vmatprep.subr.bf16.mxu0 0
        %2460 = vmatpush2.bf16.msra.mxu0 %v2407
        %2461 = vmatprep.subr.bf16.mxu0 0
        %2462 = vmatpush2.bf16.msra.mxu0 %v2406
        %2463 = vmatprep.subr.bf16.mxu0 0
        %2464 = vmatpush2.bf16.msra.mxu0 %v2405
        %2465 = vmatprep.subr.bf16.mxu0 0
        %2466 = vmatpush2.bf16.msra.mxu0 %v2404
        %2467 = vmatprep.subr.bf16.mxu0 0
        %2468 = vmatpush2.bf16.msra.mxu0 %v2403
        %2469 = vmatprep.subr.bf16.mxu0 0
        %2470 = vmatpush2.bf16.msra.mxu0 %v2402
        %2471 = vmatprep.subr.bf16.mxu0 0
        %2472 = vmatpush2.bf16.msra.mxu0 %v2401
        %2473 = vmatprep.mubr.bf16.mxu0 %v2184
        %2474 = vmatmul.mubr.bf16.gmra.mxu0 %v1848
        %v2475 = vpop.f32.mrf.mxu0
        %v2476 = vadd.f32 0.0, %v2475
        %v2477 = vpop.f32.mrf.mxu0
        %v2478 = vpop.f32.mrf.mxu0
        %v2479 = vadd.f32 0.0, %v2478
        %v2480 = vpop.f32.mrf.mxu0
        %2481 = vmatprep.mubr.bf16.mxu0 %v2185
        %2482 = vmatmul.mubr.bf16.gmra.mxu0 %v1849
        %v2483 = vpop.f32.mrf.mxu0
        %v2484 = vadd.f32 0.0, %v2483
        %v2485 = vpop.f32.mrf.mxu0
        %v2486 = vpop.f32.mrf.mxu0
        %v2487 = vadd.f32 0.0, %v2486
        %v2488 = vpop.f32.mrf.mxu0
        %2489 = vmatprep.mubr.bf16.mxu0 %v2186
        %2490 = vmatmul.mubr.bf16.gmra.mxu0 %v1850
        %v2491 = vpop.f32.mrf.mxu0
        %v2492 = vadd.f32 0.0, %v2491
        %v2493 = vpop.f32.mrf.mxu0
        %v2494 = vpop.f32.mrf.mxu0
        %v2495 = vadd.f32 0.0, %v2494
        %v2496 = vpop.f32.mrf.mxu0
        %2497 = vmatprep.mubr.bf16.mxu0 %v2187
        %2498 = vmatmul.mubr.bf16.gmra.mxu0 %v1851
        %v2499 = vpop.f32.mrf.mxu0
        %v2500 = vadd.f32 0.0, %v2499
        %v2501 = vpop.f32.mrf.mxu0
        %v2502 = vpop.f32.mrf.mxu0
        %v2503 = vadd.f32 0.0, %v2502
        %v2504 = vpop.f32.mrf.mxu0
        %2505 = vmatprep.mubr.bf16.mxu0 %v2188
        %2506 = vmatmul.mubr.bf16.gmra.mxu0 %v1852
        %v2507 = vpop.f32.mrf.mxu0
        %v2508 = vadd.f32 0.0, %v2507
        %v2509 = vpop.f32.mrf.mxu0
        %v2510 = vpop.f32.mrf.mxu0
        %v2511 = vadd.f32 0.0, %v2510
        %v2512 = vpop.f32.mrf.mxu0
        %2513 = vmatprep.mubr.bf16.mxu0 %v2189
        %2514 = vmatmul.mubr.bf16.gmra.mxu0 %v1853
        %v2515 = vpop.f32.mrf.mxu0
        %v2516 = vadd.f32 0.0, %v2515
        %v2517 = vpop.f32.mrf.mxu0
        %v2518 = vpop.f32.mrf.mxu0
        %v2519 = vadd.f32 0.0, %v2518
        %v2520 = vpop.f32.mrf.mxu0
        %2521 = vmatprep.mubr.bf16.mxu0 %v2190
        %2522 = vmatmul.mubr.bf16.gmra.mxu0 %v1854
        %v2523 = vpop.f32.mrf.mxu0
        %v2524 = vadd.f32 0.0, %v2523
        %v2525 = vpop.f32.mrf.mxu0
        %v2526 = vpop.f32.mrf.mxu0
        %v2527 = vadd.f32 0.0, %v2526
        %v2528 = vpop.f32.mrf.mxu0
        %2529 = vmatprep.mubr.bf16.mxu0 %v2191
        %2530 = vmatmul.mubr.bf16.gmra.mxu0 %v1855
        %v2531 = vpop.f32.mrf.mxu0
        %v2532 = vadd.f32 0.0, %v2531
        %v2533 = vpop.f32.mrf.mxu0
        %v2534 = vpop.f32.mrf.mxu0
        %v2535 = vadd.f32 0.0, %v2534
        %v2536 = vpop.f32.mrf.mxu0
        %2537 = vmatprep.mubr.bf16.mxu0 %v2192
        %2538 = vmatmul.mubr.bf16.gmra.mxu0 %v1856
        %v2539 = vpop.f32.mrf.mxu0
        %v2540 = vadd.f32 0.0, %v2539
        %v2541 = vpop.f32.mrf.mxu0
        %v2542 = vpop.f32.mrf.mxu0
        %v2543 = vadd.f32 0.0, %v2542
        %v2544 = vpop.f32.mrf.mxu0
        %2545 = vmatprep.mubr.bf16.mxu0 %v2193
        %2546 = vmatmul.mubr.bf16.gmra.mxu0 %v1857
        %v2547 = vpop.f32.mrf.mxu0
        %v2548 = vadd.f32 0.0, %v2547
        %v2549 = vpop.f32.mrf.mxu0
        %v2550 = vpop.f32.mrf.mxu0
        %v2551 = vadd.f32 0.0, %v2550
        %v2552 = vpop.f32.mrf.mxu0
        %2553 = vmatprep.mubr.bf16.mxu0 %v2194
        %2554 = vmatmul.mubr.bf16.gmra.mxu0 %v1858
        %v2555 = vpop.f32.mrf.mxu0
        %v2556 = vadd.f32 0.0, %v2555
        %v2557 = vpop.f32.mrf.mxu0
        %v2558 = vpop.f32.mrf.mxu0
        %v2559 = vadd.f32 0.0, %v2558
        %v2560 = vpop.f32.mrf.mxu0
        %2561 = vmatprep.mubr.bf16.mxu0 %v2195
        %2562 = vmatmul.mubr.bf16.gmra.mxu0 %v1859
        %v2563 = vpop.f32.mrf.mxu0
        %v2564 = vadd.f32 0.0, %v2563
        %v2565 = vpop.f32.mrf.mxu0
        %v2566 = vpop.f32.mrf.mxu0
        %v2567 = vadd.f32 0.0, %v2566
        %v2568 = vpop.f32.mrf.mxu0
        %2569 = vmatprep.mubr.bf16.mxu0 %v2196
        %2570 = vmatmul.mubr.bf16.gmra.mxu0 %v1860
        %v2571 = vpop.f32.mrf.mxu0
        %v2572 = vadd.f32 0.0, %v2571
        %v2573 = vpop.f32.mrf.mxu0
        %v2574 = vpop.f32.mrf.mxu0
        %v2575 = vadd.f32 0.0, %v2574
        %v2576 = vpop.f32.mrf.mxu0
        %2577 = vmatprep.mubr.bf16.mxu0 %v2197
        %2578 = vmatmul.mubr.bf16.gmra.mxu0 %v1861
        %v2579 = vpop.f32.mrf.mxu0
        %v2580 = vadd.f32 0.0, %v2579
        %v2581 = vpop.f32.mrf.mxu0
        %v2582 = vpop.f32.mrf.mxu0
        %v2583 = vadd.f32 0.0, %v2582
        %v2584 = vpop.f32.mrf.mxu0
        %2585 = vmatprep.mubr.bf16.mxu0 %v2198
        %2586 = vmatmul.mubr.bf16.gmra.mxu0 %v1862
        %v2587 = vpop.f32.mrf.mxu0
        %v2588 = vadd.f32 0.0, %v2587
        %v2589 = vpop.f32.mrf.mxu0
        %v2590 = vpop.f32.mrf.mxu0
        %v2591 = vadd.f32 0.0, %v2590
        %v2592 = vpop.f32.mrf.mxu0
        %2593 = vmatprep.mubr.bf16.mxu0 %v2199
        %2594 = vmatmul.mubr.bf16.gmra.mxu0 %v1863
        %v2595 = vpop.f32.mrf.mxu0
        %v2596 = vadd.f32 0.0, %v2595
        %v2597 = vpop.f32.mrf.mxu0
        %v2598 = vpop.f32.mrf.mxu0
        %v2599 = vadd.f32 0.0, %v2598
        %v2600 = vpop.f32.mrf.mxu0
        %2601 = vdwg.mxu0
        %2602 = vmatprep.subr.bf16.mxu0 0
        %2603 = vmatpush1.bf16.msra.mxu0 %v2416
        %2604 = vmatprep.subr.bf16.mxu0 0
        %2605 = vmatpush1.bf16.msra.mxu0 %v2415
        %2606 = vmatprep.subr.bf16.mxu0 0
        %2607 = vmatpush1.bf16.msra.mxu0 %v2414
        %2608 = vmatprep.subr.bf16.mxu0 0
        %2609 = vmatpush1.bf16.msra.mxu0 %v2413
        %2610 = vmatprep.subr.bf16.mxu0 0
        %2611 = vmatpush1.bf16.msra.mxu0 %v2412
        %2612 = vmatprep.subr.bf16.mxu0 0
        %2613 = vmatpush1.bf16.msra.mxu0 %v2411
        %2614 = vmatprep.subr.bf16.mxu0 0
        %2615 = vmatpush1.bf16.msra.mxu0 %v2410
        %2616 = vmatprep.subr.bf16.mxu0 0
        %2617 = vmatpush1.bf16.msra.mxu0 %v2409
        %2618 = vmatprep.subr.bf16.mxu0 0
        %2619 = vmatpush2.bf16.msra.mxu0 0
        %2620 = vmatprep.subr.bf16.mxu0 0
        %2621 = vmatpush2.bf16.msra.mxu0 0
        %2622 = vmatprep.subr.bf16.mxu0 0
        %2623 = vmatpush2.bf16.msra.mxu0 0
        %2624 = vmatprep.subr.bf16.mxu0 0
        %2625 = vmatpush2.bf16.msra.mxu0 0
        %2626 = vmatprep.subr.bf16.mxu0 0
        %2627 = vmatpush2.bf16.msra.mxu0 0
        %2628 = vmatprep.subr.bf16.mxu0 0
        %2629 = vmatpush2.bf16.msra.mxu0 0
        %2630 = vmatprep.subr.bf16.mxu0 0
        %2631 = vmatpush2.bf16.msra.mxu0 0
        %2632 = vmatprep.subr.bf16.mxu0 0
        %2633 = vmatpush2.bf16.msra.mxu0 0
        %2634 = vmatprep.mubr.bf16.mxu0 0
        %2635 = vmatmul.mubr.bf16.gmra.mxu0 %v2166
        %v2636 = vpop.f32.mrf.mxu0
        %v2637 = vadd.f32 %v2476, %v2636
        %v2638 = vpop.f32.mrf.mxu0
        %v2639 = vpop.f32.mrf.mxu0
        %v2640 = vadd.f32 %v2479, %v2639
        %v2641 = vpop.f32.mrf.mxu0
        %2642 = vmatprep.mubr.bf16.mxu0 0
        %2643 = vmatmul.mubr.bf16.gmra.mxu0 %v2167
        %v2644 = vpop.f32.mrf.mxu0
        %v2645 = vadd.f32 %v2484, %v2644
        %v2646 = vpop.f32.mrf.mxu0
        %v2647 = vpop.f32.mrf.mxu0
        %v2648 = vadd.f32 %v2487, %v2647
        %v2649 = vpop.f32.mrf.mxu0
        %2650 = vmatprep.mubr.bf16.mxu0 0
        %2651 = vmatmul.mubr.bf16.gmra.mxu0 %v2168
        %v2652 = vpop.f32.mrf.mxu0
        %v2653 = vadd.f32 %v2492, %v2652
        %v2654 = vpop.f32.mrf.mxu0
        %v2655 = vpop.f32.mrf.mxu0
        %v2656 = vadd.f32 %v2495, %v2655
        %v2657 = vpop.f32.mrf.mxu0
        %2658 = vmatprep.mubr.bf16.mxu0 0
        %2659 = vmatmul.mubr.bf16.gmra.mxu0 %v2169
        %v2660 = vpop.f32.mrf.mxu0
        %v2661 = vadd.f32 %v2500, %v2660
        %v2662 = vpop.f32.mrf.mxu0
        %v2663 = vpop.f32.mrf.mxu0
        %v2664 = vadd.f32 %v2503, %v2663
        %v2665 = vpop.f32.mrf.mxu0
        %2666 = vmatprep.mubr.bf16.mxu0 0
        %2667 = vmatmul.mubr.bf16.gmra.mxu0 %v2170
        %v2668 = vpop.f32.mrf.mxu0
        %v2669 = vadd.f32 %v2508, %v2668
        %v2670 = vpop.f32.mrf.mxu0
        %v2671 = vpop.f32.mrf.mxu0
        %v2672 = vadd.f32 %v2511, %v2671
        %v2673 = vpop.f32.mrf.mxu0
        %2674 = vmatprep.mubr.bf16.mxu0 0
        %2675 = vmatmul.mubr.bf16.gmra.mxu0 %v2171
        %v2676 = vpop.f32.mrf.mxu0
        %v2677 = vadd.f32 %v2516, %v2676
        %v2678 = vpop.f32.mrf.mxu0
        %v2679 = vpop.f32.mrf.mxu0
        %v2680 = vadd.f32 %v2519, %v2679
        %v2681 = vpop.f32.mrf.mxu0
        %2682 = vmatprep.mubr.bf16.mxu0 0
        %2683 = vmatmul.mubr.bf16.gmra.mxu0 %v2172
        %v2684 = vpop.f32.mrf.mxu0
        %v2685 = vadd.f32 %v2524, %v2684
        %v2686 = vpop.f32.mrf.mxu0
        %v2687 = vpop.f32.mrf.mxu0
        %v2688 = vadd.f32 %v2527, %v2687
        %v2689 = vpop.f32.mrf.mxu0
        %2690 = vmatprep.mubr.bf16.mxu0 0
        %2691 = vmatmul.mubr.bf16.gmra.mxu0 %v2173
        %v2692 = vpop.f32.mrf.mxu0
        %v2693 = vadd.f32 %v2532, %v2692
        %v2694 = vpop.f32.mrf.mxu0
        %v2695 = vpop.f32.mrf.mxu0
        %v2696 = vadd.f32 %v2535, %v2695
        %v2697 = vpop.f32.mrf.mxu0
        %2698 = vmatprep.mubr.bf16.mxu0 0
        %2699 = vmatmul.mubr.bf16.gmra.mxu0 %v2174
        %v2700 = vpop.f32.mrf.mxu0
        %v2701 = vadd.f32 %v2540, %v2700
        %v2702 = vpop.f32.mrf.mxu0
        %v2703 = vpop.f32.mrf.mxu0
        %v2704 = vadd.f32 %v2543, %v2703
        %v2705 = vpop.f32.mrf.mxu0
        %2706 = vmatprep.mubr.bf16.mxu0 0
        %2707 = vmatmul.mubr.bf16.gmra.mxu0 %v2175
        %v2708 = vpop.f32.mrf.mxu0
        %v2709 = vadd.f32 %v2548, %v2708
        %v2710 = vpop.f32.mrf.mxu0
        %v2711 = vpop.f32.mrf.mxu0
        %v2712 = vadd.f32 %v2551, %v2711
        %v2713 = vpop.f32.mrf.mxu0
        %2714 = vmatprep.mubr.bf16.mxu0 0
        %2715 = vmatmul.mubr.bf16.gmra.mxu0 %v2176
        %v2716 = vpop.f32.mrf.mxu0
        %v2717 = vadd.f32 %v2556, %v2716
        %v2718 = vpop.f32.mrf.mxu0
        %v2719 = vpop.f32.mrf.mxu0
        %v2720 = vadd.f32 %v2559, %v2719
        %v2721 = vpop.f32.mrf.mxu0
        %2722 = vmatprep.mubr.bf16.mxu0 0
        %2723 = vmatmul.mubr.bf16.gmra.mxu0 %v2177
        %v2724 = vpop.f32.mrf.mxu0
        %v2725 = vadd.f32 %v2564, %v2724
        %v2726 = vpop.f32.mrf.mxu0
        %v2727 = vpop.f32.mrf.mxu0
        %v2728 = vadd.f32 %v2567, %v2727
        %v2729 = vpop.f32.mrf.mxu0
        %2730 = vmatprep.mubr.bf16.mxu0 0
        %2731 = vmatmul.mubr.bf16.gmra.mxu0 %v2178
        %v2732 = vpop.f32.mrf.mxu0
        %v2733 = vadd.f32 %v2572, %v2732
        %v2734 = vpop.f32.mrf.mxu0
        %v2735 = vpop.f32.mrf.mxu0
        %v2736 = vadd.f32 %v2575, %v2735
        %v2737 = vpop.f32.mrf.mxu0
        %2738 = vmatprep.mubr.bf16.mxu0 0
        %2739 = vmatmul.mubr.bf16.gmra.mxu0 %v2179
        %v2740 = vpop.f32.mrf.mxu0
        %v2741 = vadd.f32 %v2580, %v2740
        %v2742 = vpop.f32.mrf.mxu0
        %v2743 = vpop.f32.mrf.mxu0
        %v2744 = vadd.f32 %v2583, %v2743
        %v2745 = vpop.f32.mrf.mxu0
        %2746 = vmatprep.mubr.bf16.mxu0 0
        %2747 = vmatmul.mubr.bf16.gmra.mxu0 %v2180
        %v2748 = vpop.f32.mrf.mxu0
        %v2749 = vadd.f32 %v2588, %v2748
        %v2750 = vpop.f32.mrf.mxu0
        %v2751 = vpop.f32.mrf.mxu0
        %v2752 = vadd.f32 %v2591, %v2751
        %v2753 = vpop.f32.mrf.mxu0
        %2754 = vmatprep.mubr.bf16.mxu0 0
        %2755 = vmatmul.mubr.bf16.gmra.mxu0 %v2181
        %v2756 = vpop.f32.mrf.mxu0
        %v2757 = vadd.f32 %v2596, %v2756
        %v2758 = vpop.f32.mrf.mxu0
        %v2759 = vpop.f32.mrf.mxu0
        %v2760 = vadd.f32 %v2599, %v2759
        %v2761 = vpop.f32.mrf.mxu0
        %2762 = vdwg.mxu0
        %v2811 = vunpack.c.l.b16 %v2200
        %v2812 = vunpack.c.l.b16 %v2201
        %v2813 = vunpack.c.l.b16 %v2202
        %v2814 = vunpack.c.l.b16 %v2203
        %v2815 = vunpack.c.l.b16 %v2204
        %v2816 = vunpack.c.l.b16 %v2205
        %v2817 = vunpack.c.l.b16 %v2206
        %v2818 = vunpack.c.l.b16 %v2207
        %v2819 = vunpack.c.l.b16 %v2208
        %v2820 = vunpack.c.l.b16 %v2209
        %v2821 = vunpack.c.l.b16 %v2210
        %v2822 = vunpack.c.l.b16 %v2211
        %v2823 = vunpack.c.l.b16 %v2212
        %v2824 = vunpack.c.l.b16 %v2213
        %v2825 = vunpack.c.l.b16 %v2214
        %v2826 = vunpack.c.l.b16 %v2215
        %v2827 = vunpack.c.l.b16 %v2216
        %v2828 = vunpack.c.l.b16 %v2217
        %v2829 = vunpack.c.l.b16 %v2218
        %v2830 = vunpack.c.l.b16 %v2219
        %v2831 = vunpack.c.l.b16 %v2220
        %v2832 = vunpack.c.l.b16 %v2221
        %v2833 = vunpack.c.l.b16 %v2222
        %v2834 = vunpack.c.l.b16 %v2223
        %v2835 = vunpack.c.l.b16 %v2224
        %v2836 = vunpack.c.l.b16 %v2225
        %v2837 = vunpack.c.l.b16 %v2226
        %v2838 = vunpack.c.l.b16 %v2227
        %v2839 = vunpack.c.l.b16 %v2228
        %v2840 = vunpack.c.l.b16 %v2229
        %v2841 = vunpack.c.l.b16 %v2230
        %v2842 = vunpack.c.l.b16 %v2231
        %v2843 = vunpack.c.l.b16 %v2232
        %v2844 = vunpack.c.l.b16 %v2233
        %v2845 = vunpack.c.l.b16 %v2234
        %v2846 = vunpack.c.l.b16 %v2235
        %v2847 = vunpack.c.l.b16 %v2236
        %v2848 = vunpack.c.l.b16 %v2237
        %v2849 = vunpack.c.l.b16 %v2238
        %v2850 = vunpack.c.l.b16 %v2239
        %v2851 = vunpack.c.l.b16 %v2240
        %v2852 = vunpack.c.l.b16 %v2241
        %v2853 = vunpack.c.l.b16 %v2242
        %v2854 = vunpack.c.l.b16 %v2243
        %v2855 = vunpack.c.l.b16 %v2244
        %v2856 = vunpack.c.l.b16 %v2245
        %v2857 = vunpack.c.l.b16 %v2246
        %v2858 = vunpack.c.l.b16 %v2247
        %v2859 = vpack.c.b16 %v2812, %v2811
        %v2860 = vpack.c.b16 %v2814, %v2813
        %v2861 = vpack.c.b16 %v2816, %v2815
        %v2862 = vpack.c.b16 %v2818, %v2817
        %v2863 = vpack.c.b16 %v2820, %v2819
        %v2864 = vpack.c.b16 %v2822, %v2821
        %v2865 = vpack.c.b16 %v2824, %v2823
        %v2866 = vpack.c.b16 %v2826, %v2825
        %v2867 = vpack.c.b16 %v2828, %v2827
        %v2868 = vpack.c.b16 %v2830, %v2829
        %v2869 = vpack.c.b16 %v2832, %v2831
        %v2870 = vpack.c.b16 %v2834, %v2833
        %v2871 = vpack.c.b16 %v2836, %v2835
        %v2872 = vpack.c.b16 %v2838, %v2837
        %v2873 = vpack.c.b16 %v2840, %v2839
        %v2874 = vpack.c.b16 %v2842, %v2841
        %v2875 = vpack.c.b16 %v2844, %v2843
        %v2876 = vpack.c.b16 %v2846, %v2845
        %v2877 = vpack.c.b16 %v2848, %v2847
        %v2878 = vpack.c.b16 %v2850, %v2849
        %v2879 = vpack.c.b16 %v2852, %v2851
        %v2880 = vpack.c.b16 %v2854, %v2853
        %v2881 = vpack.c.b16 %v2856, %v2855
        %v2882 = vpack.c.b16 %v2858, %v2857
        %2907 = vmatprep.subr.bf16.mxu0 0
        %2908 = vmatpush1.bf16.msra.mxu0 %v2866
        %2909 = vmatprep.subr.bf16.mxu0 0
        %2910 = vmatpush1.bf16.msra.mxu0 %v2865
        %2911 = vmatprep.subr.bf16.mxu0 0
        %2912 = vmatpush1.bf16.msra.mxu0 %v2864
        %2913 = vmatprep.subr.bf16.mxu0 0
        %2914 = vmatpush1.bf16.msra.mxu0 %v2863
        %2915 = vmatprep.subr.bf16.mxu0 0
        %2916 = vmatpush1.bf16.msra.mxu0 %v2862
        %2917 = vmatprep.subr.bf16.mxu0 0
        %2918 = vmatpush1.bf16.msra.mxu0 %v2861
        %2919 = vmatprep.subr.bf16.mxu0 0
        %2920 = vmatpush1.bf16.msra.mxu0 %v2860
        %2921 = vmatprep.subr.bf16.mxu0 0
        %2922 = vmatpush1.bf16.msra.mxu0 %v2859
        %2923 = vmatprep.subr.bf16.mxu0 0
        %2924 = vmatpush2.bf16.msra.mxu0 %v2874
        %2925 = vmatprep.subr.bf16.mxu0 0
        %2926 = vmatpush2.bf16.msra.mxu0 %v2873
        %2927 = vmatprep.subr.bf16.mxu0 0
        %2928 = vmatpush2.bf16.msra.mxu0 %v2872
        %2929 = vmatprep.subr.bf16.mxu0 0
        %2930 = vmatpush2.bf16.msra.mxu0 %v2871
        %2931 = vmatprep.subr.bf16.mxu0 0
        %2932 = vmatpush2.bf16.msra.mxu0 %v2870
        %2933 = vmatprep.subr.bf16.mxu0 0
        %2934 = vmatpush2.bf16.msra.mxu0 %v2869
        %2935 = vmatprep.subr.bf16.mxu0 0
        %2936 = vmatpush2.bf16.msra.mxu0 %v2868
        %2937 = vmatprep.subr.bf16.mxu0 0
        %2938 = vmatpush2.bf16.msra.mxu0 %v2867
        %2939 = vmatprep.mubr.bf16.mxu0 %v2183
        %2940 = vmatmul.mubr.bf16.gmra.mxu0 %v1847
        %v2941 = vpop.f32.mrf.mxu0
        %v2942 = vadd.f32 %v2637, %v2941
        %v2943 = vpop.f32.mrf.mxu0
        %v2944 = vpop.f32.mrf.mxu0
        %v2945 = vadd.f32 %v2640, %v2944
        %v2946 = vpop.f32.mrf.mxu0
        %2947 = vmatprep.mubr.bf16.mxu0 %v2184
        %2948 = vmatmul.mubr.bf16.gmra.mxu0 %v1848
        %v2949 = vpop.f32.mrf.mxu0
        %v2950 = vadd.f32 %v2645, %v2949
        %v2951 = vpop.f32.mrf.mxu0
        %v2952 = vpop.f32.mrf.mxu0
        %v2953 = vadd.f32 %v2648, %v2952
        %v2954 = vpop.f32.mrf.mxu0
        %2955 = vmatprep.mubr.bf16.mxu0 %v2185
        %2956 = vmatmul.mubr.bf16.gmra.mxu0 %v1849
        %v2957 = vpop.f32.mrf.mxu0
        %v2958 = vadd.f32 %v2653, %v2957
        %v2959 = vpop.f32.mrf.mxu0
        %v2960 = vpop.f32.mrf.mxu0
        %v2961 = vadd.f32 %v2656, %v2960
        %v2962 = vpop.f32.mrf.mxu0
        %2963 = vmatprep.mubr.bf16.mxu0 %v2186
        %2964 = vmatmul.mubr.bf16.gmra.mxu0 %v1850
        %v2965 = vpop.f32.mrf.mxu0
        %v2966 = vadd.f32 %v2661, %v2965
        %v2967 = vpop.f32.mrf.mxu0
        %v2968 = vpop.f32.mrf.mxu0
        %v2969 = vadd.f32 %v2664, %v2968
        %v2970 = vpop.f32.mrf.mxu0
        %2971 = vmatprep.mubr.bf16.mxu0 %v2187
        %2972 = vmatmul.mubr.bf16.gmra.mxu0 %v1851
        %v2973 = vpop.f32.mrf.mxu0
        %v2974 = vadd.f32 %v2669, %v2973
        %v2975 = vpop.f32.mrf.mxu0
        %v2976 = vpop.f32.mrf.mxu0
        %v2977 = vadd.f32 %v2672, %v2976
        %v2978 = vpop.f32.mrf.mxu0
        %2979 = vmatprep.mubr.bf16.mxu0 %v2188
        %2980 = vmatmul.mubr.bf16.gmra.mxu0 %v1852
        %v2981 = vpop.f32.mrf.mxu0
        %v2982 = vadd.f32 %v2677, %v2981
        %v2983 = vpop.f32.mrf.mxu0
        %v2984 = vpop.f32.mrf.mxu0
        %v2985 = vadd.f32 %v2680, %v2984
        %v2986 = vpop.f32.mrf.mxu0
        %2987 = vmatprep.mubr.bf16.mxu0 %v2189
        %2988 = vmatmul.mubr.bf16.gmra.mxu0 %v1853
        %v2989 = vpop.f32.mrf.mxu0
        %v2990 = vadd.f32 %v2685, %v2989
        %v2991 = vpop.f32.mrf.mxu0
        %v2992 = vpop.f32.mrf.mxu0
        %v2993 = vadd.f32 %v2688, %v2992
        %v2994 = vpop.f32.mrf.mxu0
        %2995 = vmatprep.mubr.bf16.mxu0 %v2190
        %2996 = vmatmul.mubr.bf16.gmra.mxu0 %v1854
        %v2997 = vpop.f32.mrf.mxu0
        %v2998 = vadd.f32 %v2693, %v2997
        %v2999 = vpop.f32.mrf.mxu0
        %v3000 = vpop.f32.mrf.mxu0
        %v3001 = vadd.f32 %v2696, %v3000
        %v3002 = vpop.f32.mrf.mxu0
        %3003 = vmatprep.mubr.bf16.mxu0 %v2191
        %3004 = vmatmul.mubr.bf16.gmra.mxu0 %v1855
        %v3005 = vpop.f32.mrf.mxu0
        %v3006 = vadd.f32 %v2701, %v3005
        %v3007 = vpop.f32.mrf.mxu0
        %v3008 = vpop.f32.mrf.mxu0
        %v3009 = vadd.f32 %v2704, %v3008
        %v3010 = vpop.f32.mrf.mxu0
        %3011 = vmatprep.mubr.bf16.mxu0 %v2192
        %3012 = vmatmul.mubr.bf16.gmra.mxu0 %v1856
        %v3013 = vpop.f32.mrf.mxu0
        %v3014 = vadd.f32 %v2709, %v3013
        %v3015 = vpop.f32.mrf.mxu0
        %v3016 = vpop.f32.mrf.mxu0
        %v3017 = vadd.f32 %v2712, %v3016
        %v3018 = vpop.f32.mrf.mxu0
        %3019 = vmatprep.mubr.bf16.mxu0 %v2193
        %3020 = vmatmul.mubr.bf16.gmra.mxu0 %v1857
        %v3021 = vpop.f32.mrf.mxu0
        %v3022 = vadd.f32 %v2717, %v3021
        %v3023 = vpop.f32.mrf.mxu0
        %v3024 = vpop.f32.mrf.mxu0
        %v3025 = vadd.f32 %v2720, %v3024
        %v3026 = vpop.f32.mrf.mxu0
        %3027 = vmatprep.mubr.bf16.mxu0 %v2194
        %3028 = vmatmul.mubr.bf16.gmra.mxu0 %v1858
        %v3029 = vpop.f32.mrf.mxu0
        %v3030 = vadd.f32 %v2725, %v3029
        %v3031 = vpop.f32.mrf.mxu0
        %v3032 = vpop.f32.mrf.mxu0
        %v3033 = vadd.f32 %v2728, %v3032
        %v3034 = vpop.f32.mrf.mxu0
        %3035 = vmatprep.mubr.bf16.mxu0 %v2195
        %3036 = vmatmul.mubr.bf16.gmra.mxu0 %v1859
        %v3037 = vpop.f32.mrf.mxu0
        %v3038 = vadd.f32 %v2733, %v3037
        %v3039 = vpop.f32.mrf.mxu0
        %v3040 = vpop.f32.mrf.mxu0
        %v3041 = vadd.f32 %v2736, %v3040
        %v3042 = vpop.f32.mrf.mxu0
        %3043 = vmatprep.mubr.bf16.mxu0 %v2196
        %3044 = vmatmul.mubr.bf16.gmra.mxu0 %v1860
        %v3045 = vpop.f32.mrf.mxu0
        %v3046 = vadd.f32 %v2741, %v3045
        %v3047 = vpop.f32.mrf.mxu0
        %v3048 = vpop.f32.mrf.mxu0
        %v3049 = vadd.f32 %v2744, %v3048
        %v3050 = vpop.f32.mrf.mxu0
        %3051 = vmatprep.mubr.bf16.mxu0 %v2197
        %3052 = vmatmul.mubr.bf16.gmra.mxu0 %v1861
        %v3053 = vpop.f32.mrf.mxu0
        %v3054 = vadd.f32 %v2749, %v3053
        %v3055 = vpop.f32.mrf.mxu0
        %v3056 = vpop.f32.mrf.mxu0
        %v3057 = vadd.f32 %v2752, %v3056
        %v3058 = vpop.f32.mrf.mxu0
        %3059 = vmatprep.mubr.bf16.mxu0 %v2198
        %3060 = vmatmul.mubr.bf16.gmra.mxu0 %v1862
        %v3061 = vpop.f32.mrf.mxu0
        %v3062 = vadd.f32 %v2757, %v3061
        %v3063 = vpop.f32.mrf.mxu0
        %v3064 = vpop.f32.mrf.mxu0
        %v3065 = vadd.f32 %v2760, %v3064
        %v3066 = vpop.f32.mrf.mxu0
        %3067 = vdwg.mxu0
        %3068 = vmatprep.subr.bf16.mxu0 0
        %3069 = vmatpush1.bf16.msra.mxu0 %v2882
        %3070 = vmatprep.subr.bf16.mxu0 0
        %3071 = vmatpush1.bf16.msra.mxu0 %v2881
        %3072 = vmatprep.subr.bf16.mxu0 0
        %3073 = vmatpush1.bf16.msra.mxu0 %v2880
        %3074 = vmatprep.subr.bf16.mxu0 0
        %3075 = vmatpush1.bf16.msra.mxu0 %v2879
        %3076 = vmatprep.subr.bf16.mxu0 0
        %3077 = vmatpush1.bf16.msra.mxu0 %v2878
        %3078 = vmatprep.subr.bf16.mxu0 0
        %3079 = vmatpush1.bf16.msra.mxu0 %v2877
        %3080 = vmatprep.subr.bf16.mxu0 0
        %3081 = vmatpush1.bf16.msra.mxu0 %v2876
        %3082 = vmatprep.subr.bf16.mxu0 0
        %3083 = vmatpush1.bf16.msra.mxu0 %v2875
        %3084 = vmatprep.subr.bf16.mxu0 0
        %3085 = vmatpush2.bf16.msra.mxu0 0
        %3086 = vmatprep.subr.bf16.mxu0 0
        %3087 = vmatpush2.bf16.msra.mxu0 0
        %3088 = vmatprep.subr.bf16.mxu0 0
        %3089 = vmatpush2.bf16.msra.mxu0 0
        %3090 = vmatprep.subr.bf16.mxu0 0
        %3091 = vmatpush2.bf16.msra.mxu0 0
        %3092 = vmatprep.subr.bf16.mxu0 0
        %3093 = vmatpush2.bf16.msra.mxu0 0
        %3094 = vmatprep.subr.bf16.mxu0 0
        %3095 = vmatpush2.bf16.msra.mxu0 0
        %3096 = vmatprep.subr.bf16.mxu0 0
        %3097 = vmatpush2.bf16.msra.mxu0 0
        %3098 = vmatprep.subr.bf16.mxu0 0
        %3099 = vmatpush2.bf16.msra.mxu0 0
        %3100 = vmatprep.mubr.bf16.mxu0 0
        %3101 = vmatmul.mubr.bf16.gmra.mxu0 %v2165
        %v3102 = vpop.f32.mrf.mxu0
        %v3103 = vadd.f32 %v2942, %v3102
        %v3104 = vpop.f32.mrf.mxu0
        %v3105 = vpop.f32.mrf.mxu0
        %v3106 = vadd.f32 %v2945, %v3105
        %v3107 = vpop.f32.mrf.mxu0
        %3108 = vmatprep.mubr.bf16.mxu0 0
        %3109 = vmatmul.mubr.bf16.gmra.mxu0 %v2166
        %v3110 = vpop.f32.mrf.mxu0
        %v3111 = vadd.f32 %v2950, %v3110
        %v3112 = vpop.f32.mrf.mxu0
        %v3113 = vpop.f32.mrf.mxu0
        %v3114 = vadd.f32 %v2953, %v3113
        %v3115 = vpop.f32.mrf.mxu0
        %3116 = vmatprep.mubr.bf16.mxu0 0
        %3117 = vmatmul.mubr.bf16.gmra.mxu0 %v2167
        %v3118 = vpop.f32.mrf.mxu0
        %v3119 = vadd.f32 %v2958, %v3118
        %v3120 = vpop.f32.mrf.mxu0
        %v3121 = vpop.f32.mrf.mxu0
        %v3122 = vadd.f32 %v2961, %v3121
        %v3123 = vpop.f32.mrf.mxu0
        %3124 = vmatprep.mubr.bf16.mxu0 0
        %3125 = vmatmul.mubr.bf16.gmra.mxu0 %v2168
        %v3126 = vpop.f32.mrf.mxu0
        %v3127 = vadd.f32 %v2966, %v3126
        %v3128 = vpop.f32.mrf.mxu0
        %v3129 = vpop.f32.mrf.mxu0
        %v3130 = vadd.f32 %v2969, %v3129
        %v3131 = vpop.f32.mrf.mxu0
        %3132 = vmatprep.mubr.bf16.mxu0 0
        %3133 = vmatmul.mubr.bf16.gmra.mxu0 %v2169
        %v3134 = vpop.f32.mrf.mxu0
        %v3135 = vadd.f32 %v2974, %v3134
        %v3136 = vpop.f32.mrf.mxu0
        %v3137 = vpop.f32.mrf.mxu0
        %v3138 = vadd.f32 %v2977, %v3137
        %v3139 = vpop.f32.mrf.mxu0
        %3140 = vmatprep.mubr.bf16.mxu0 0
        %3141 = vmatmul.mubr.bf16.gmra.mxu0 %v2170
        %v3142 = vpop.f32.mrf.mxu0
        %v3143 = vadd.f32 %v2982, %v3142
        %v3144 = vpop.f32.mrf.mxu0
        %v3145 = vpop.f32.mrf.mxu0
        %v3146 = vadd.f32 %v2985, %v3145
        %v3147 = vpop.f32.mrf.mxu0
        %3148 = vmatprep.mubr.bf16.mxu0 0
        %3149 = vmatmul.mubr.bf16.gmra.mxu0 %v2171
        %v3150 = vpop.f32.mrf.mxu0
        %v3151 = vadd.f32 %v2990, %v3150
        %v3152 = vpop.f32.mrf.mxu0
        %v3153 = vpop.f32.mrf.mxu0
        %v3154 = vadd.f32 %v2993, %v3153
        %v3155 = vpop.f32.mrf.mxu0
        %3156 = vmatprep.mubr.bf16.mxu0 0
        %3157 = vmatmul.mubr.bf16.gmra.mxu0 %v2172
        %v3158 = vpop.f32.mrf.mxu0
        %v3159 = vadd.f32 %v2998, %v3158
        %v3160 = vpop.f32.mrf.mxu0
        %v3161 = vpop.f32.mrf.mxu0
        %v3162 = vadd.f32 %v3001, %v3161
        %v3163 = vpop.f32.mrf.mxu0
        %3164 = vmatprep.mubr.bf16.mxu0 0
        %3165 = vmatmul.mubr.bf16.gmra.mxu0 %v2173
        %v3166 = vpop.f32.mrf.mxu0
        %v3167 = vadd.f32 %v3006, %v3166
        %v3168 = vpop.f32.mrf.mxu0
        %v3169 = vpop.f32.mrf.mxu0
        %v3170 = vadd.f32 %v3009, %v3169
        %v3171 = vpop.f32.mrf.mxu0
        %3172 = vmatprep.mubr.bf16.mxu0 0
        %3173 = vmatmul.mubr.bf16.gmra.mxu0 %v2174
        %v3174 = vpop.f32.mrf.mxu0
        %v3175 = vadd.f32 %v3014, %v3174
        %v3176 = vpop.f32.mrf.mxu0
        %v3177 = vpop.f32.mrf.mxu0
        %v3178 = vadd.f32 %v3017, %v3177
        %v3179 = vpop.f32.mrf.mxu0
        %3180 = vmatprep.mubr.bf16.mxu0 0
        %3181 = vmatmul.mubr.bf16.gmra.mxu0 %v2175
        %v3182 = vpop.f32.mrf.mxu0
        %v3183 = vadd.f32 %v3022, %v3182
        %v3184 = vpop.f32.mrf.mxu0
        %v3185 = vpop.f32.mrf.mxu0
        %v3186 = vadd.f32 %v3025, %v3185
        %v3187 = vpop.f32.mrf.mxu0
        %3188 = vmatprep.mubr.bf16.mxu0 0
        %3189 = vmatmul.mubr.bf16.gmra.mxu0 %v2176
        %v3190 = vpop.f32.mrf.mxu0
        %v3191 = vadd.f32 %v3030, %v3190
        %v3192 = vpop.f32.mrf.mxu0
        %v3193 = vpop.f32.mrf.mxu0
        %v3194 = vadd.f32 %v3033, %v3193
        %v3195 = vpop.f32.mrf.mxu0
        %3196 = vmatprep.mubr.bf16.mxu0 0
        %3197 = vmatmul.mubr.bf16.gmra.mxu0 %v2177
        %v3198 = vpop.f32.mrf.mxu0
        %v3199 = vadd.f32 %v3038, %v3198
        %v3200 = vpop.f32.mrf.mxu0
        %v3201 = vpop.f32.mrf.mxu0
        %v3202 = vadd.f32 %v3041, %v3201
        %v3203 = vpop.f32.mrf.mxu0
        %3204 = vmatprep.mubr.bf16.mxu0 0
        %3205 = vmatmul.mubr.bf16.gmra.mxu0 %v2178
        %v3206 = vpop.f32.mrf.mxu0
        %v3207 = vadd.f32 %v3046, %v3206
        %v3208 = vpop.f32.mrf.mxu0
        %v3209 = vpop.f32.mrf.mxu0
        %v3210 = vadd.f32 %v3049, %v3209
        %v3211 = vpop.f32.mrf.mxu0
        %3212 = vmatprep.mubr.bf16.mxu0 0
        %3213 = vmatmul.mubr.bf16.gmra.mxu0 %v2179
        %v3214 = vpop.f32.mrf.mxu0
        %v3215 = vadd.f32 %v3054, %v3214
        %v3216 = vpop.f32.mrf.mxu0
        %v3217 = vpop.f32.mrf.mxu0
        %v3218 = vadd.f32 %v3057, %v3217
        %v3219 = vpop.f32.mrf.mxu0
        %3220 = vmatprep.mubr.bf16.mxu0 0
        %3221 = vmatmul.mubr.bf16.gmra.mxu0 %v2180
        %v3222 = vpop.f32.mrf.mxu0
        %v3223 = vadd.f32 %v3062, %v3222
        %v3224 = vpop.f32.mrf.mxu0
        %v3225 = vpop.f32.mrf.mxu0
        %v3226 = vadd.f32 %v3065, %v3225
        %v3227 = vpop.f32.mrf.mxu0
        %3228 = vdwg.mxu0
        %s3229 = scalar_lea.vmem [#allocation7], 384
        %v3230 = vld [vmem:[%s3229] sm:$0xf]
        %v3231 = vld [vmem:[%s3229 + $0x4] sm:$0xf]
        %v3232 = vld [vmem:[%s3229 + $0x8] sm:$0xf]
        %v3233 = vld [vmem:[%s3229 + $0xc] sm:$0xf]
        %v3234 = vld [vmem:[%s3229 + $0x10] sm:$0xf]
        %v3235 = vld [vmem:[%s3229 + $0x14] sm:$0xf]
        %v3236 = vld [vmem:[%s3229 + $0x18] sm:$0xf]
        %v3237 = vld [vmem:[%s3229 + $0x1c] sm:$0xf]
        %v3238 = vld [vmem:[%s3229 + $0x20] sm:$0xf]
        %v3239 = vld [vmem:[%s3229 + $0x24] sm:$0xf]
        %v3240 = vld [vmem:[%s3229 + $0x28] sm:$0xf]
        %v3241 = vld [vmem:[%s3229 + $0x2c] sm:$0xf]
        %v3242 = vld [vmem:[%s3229 + $0x30] sm:$0xf]
        %v3243 = vld [vmem:[%s3229 + $0x34] sm:$0xf]
        %v3244 = vld [vmem:[%s3229 + $0x38] sm:$0xf]
        %v3245 = vld [vmem:[%s3229 + $0x3c] sm:$0xf]
        %v3246 = vld [vmem:[%s3229 + $0x40] sm:$0xf]
        %v3247 = vld [vmem:[%s3229 + $0x44] sm:$0xf]
        %v3248 = vld [vmem:[%s3229 + $0x48] sm:$0xf]
        %v3249 = vld [vmem:[%s3229 + $0x4c] sm:$0xf]
        %v3250 = vld [vmem:[%s3229 + $0x50] sm:$0xf]
        %v3251 = vld [vmem:[%s3229 + $0x54] sm:$0xf]
        %v3252 = vld [vmem:[%s3229 + $0x58] sm:$0xf]
        %v3253 = vld [vmem:[%s3229 + $0x5c] sm:$0xf]
        %v3254 = vld [vmem:[%s3229 + $0x60] sm:$0xf]
        %v3255 = vld [vmem:[%s3229 + $0x64] sm:$0xf]
        %v3256 = vld [vmem:[%s3229 + $0x68] sm:$0xf]
        %v3257 = vld [vmem:[%s3229 + $0x6c] sm:$0xf]
        %v3258 = vld [vmem:[%s3229 + $0x70] sm:$0xf]
        %v3259 = vld [vmem:[%s3229 + $0x74] sm:$0xf]
        %v3260 = vld [vmem:[%s3229 + $0x78] sm:$0xf]
        %v3261 = vld [vmem:[%s3229 + $0x7c] sm:$0xf]
        %v3262 = vld [vmem:[%s3229 + $0x80] sm:$0xf]
        %v3263 = vld [vmem:[%s3229 + $0x84] sm:$0xf]
        %v3264 = vld [vmem:[%s3229 + $0x88] sm:$0xf]
        %v3265 = vld [vmem:[%s3229 + $0x8c] sm:$0xf]
        %v3266 = vld [vmem:[%s3229 + $0x90] sm:$0xf]
        %v3267 = vld [vmem:[%s3229 + $0x94] sm:$0xf]
        %v3268 = vld [vmem:[%s3229 + $0x98] sm:$0xf]
        %v3269 = vld [vmem:[%s3229 + $0x9c] sm:$0xf]
        %v3270 = vld [vmem:[%s3229 + $0xa0] sm:$0xf]
        %v3271 = vld [vmem:[%s3229 + $0xa4] sm:$0xf]
        %v3272 = vld [vmem:[%s3229 + $0xa8] sm:$0xf]
        %v3273 = vld [vmem:[%s3229 + $0xac] sm:$0xf]
        %v3274 = vld [vmem:[%s3229 + $0xb0] sm:$0xf]
        %v3275 = vld [vmem:[%s3229 + $0xb4] sm:$0xf]
        %v3276 = vld [vmem:[%s3229 + $0xb8] sm:$0xf]
        %v3277 = vld [vmem:[%s3229 + $0xbc] sm:$0xf]
        %v3326 = vunpack.c.l.b16 %v3230
        %v3327 = vunpack.c.l.b16 %v3231
        %v3328 = vunpack.c.l.b16 %v3232
        %v3329 = vunpack.c.l.b16 %v3233
        %v3330 = vunpack.c.l.b16 %v3234
        %v3331 = vunpack.c.l.b16 %v3235
        %v3332 = vunpack.c.l.b16 %v3236
        %v3333 = vunpack.c.l.b16 %v3237
        %v3334 = vunpack.c.l.b16 %v3238
        %v3335 = vunpack.c.l.b16 %v3239
        %v3336 = vunpack.c.l.b16 %v3240
        %v3337 = vunpack.c.l.b16 %v3241
        %v3338 = vunpack.c.l.b16 %v3242
        %v3339 = vunpack.c.l.b16 %v3243
        %v3340 = vunpack.c.l.b16 %v3244
        %v3341 = vunpack.c.l.b16 %v3245
        %v3342 = vunpack.c.l.b16 %v3246
        %v3343 = vunpack.c.l.b16 %v3247
        %v3344 = vunpack.c.l.b16 %v3248
        %v3345 = vunpack.c.l.b16 %v3249
        %v3346 = vunpack.c.l.b16 %v3250
        %v3347 = vunpack.c.l.b16 %v3251
        %v3348 = vunpack.c.l.b16 %v3252
        %v3349 = vunpack.c.l.b16 %v3253
        %v3350 = vunpack.c.l.b16 %v3254
        %v3351 = vunpack.c.l.b16 %v3255
        %v3352 = vunpack.c.l.b16 %v3256
        %v3353 = vunpack.c.l.b16 %v3257
        %v3354 = vunpack.c.l.b16 %v3258
        %v3355 = vunpack.c.l.b16 %v3259
        %v3356 = vunpack.c.l.b16 %v3260
        %v3357 = vunpack.c.l.b16 %v3261
        %v3358 = vunpack.c.l.b16 %v3262
        %v3359 = vunpack.c.l.b16 %v3263
        %v3360 = vunpack.c.l.b16 %v3264
        %v3361 = vunpack.c.l.b16 %v3265
        %v3362 = vunpack.c.l.b16 %v3266
        %v3363 = vunpack.c.l.b16 %v3267
        %v3364 = vunpack.c.l.b16 %v3268
        %v3365 = vunpack.c.l.b16 %v3269
        %v3366 = vunpack.c.l.b16 %v3270
        %v3367 = vunpack.c.l.b16 %v3271
        %v3368 = vunpack.c.l.b16 %v3272
        %v3369 = vunpack.c.l.b16 %v3273
        %v3370 = vunpack.c.l.b16 %v3274
        %v3371 = vunpack.c.l.b16 %v3275
        %v3372 = vunpack.c.l.b16 %v3276
        %v3373 = vunpack.c.l.b16 %v3277
        %v3374 = vpack.c.b16 %v3327, %v3326
        %v3375 = vpack.c.b16 %v3329, %v3328
        %v3376 = vpack.c.b16 %v3331, %v3330
        %v3377 = vpack.c.b16 %v3333, %v3332
        %v3378 = vpack.c.b16 %v3335, %v3334
        %v3379 = vpack.c.b16 %v3337, %v3336
        %v3380 = vpack.c.b16 %v3339, %v3338
        %v3381 = vpack.c.b16 %v3341, %v3340
        %v3382 = vpack.c.b16 %v3343, %v3342
        %v3383 = vpack.c.b16 %v3345, %v3344
        %v3384 = vpack.c.b16 %v3347, %v3346
        %v3385 = vpack.c.b16 %v3349, %v3348
        %v3386 = vpack.c.b16 %v3351, %v3350
        %v3387 = vpack.c.b16 %v3353, %v3352
        %v3388 = vpack.c.b16 %v3355, %v3354
        %v3389 = vpack.c.b16 %v3357, %v3356
        %v3390 = vpack.c.b16 %v3359, %v3358
        %v3391 = vpack.c.b16 %v3361, %v3360
        %v3392 = vpack.c.b16 %v3363, %v3362
        %v3393 = vpack.c.b16 %v3365, %v3364
        %v3394 = vpack.c.b16 %v3367, %v3366
        %v3395 = vpack.c.b16 %v3369, %v3368
        %v3396 = vpack.c.b16 %v3371, %v3370
        %v3397 = vpack.c.b16 %v3373, %v3372
        %3422 = vmatprep.subr.bf16.mxu0 0
        %3423 = vmatpush1.bf16.msra.mxu0 %v3381
        %3424 = vmatprep.subr.bf16.mxu0 0
        %3425 = vmatpush1.bf16.msra.mxu0 %v3380
        %3426 = vmatprep.subr.bf16.mxu0 0
        %3427 = vmatpush1.bf16.msra.mxu0 %v3379
        %3428 = vmatprep.subr.bf16.mxu0 0
        %3429 = vmatpush1.bf16.msra.mxu0 %v3378
        %3430 = vmatprep.subr.bf16.mxu0 0
        %3431 = vmatpush1.bf16.msra.mxu0 %v3377
        %3432 = vmatprep.subr.bf16.mxu0 0
        %3433 = vmatpush1.bf16.msra.mxu0 %v3376
        %3434 = vmatprep.subr.bf16.mxu0 0
        %3435 = vmatpush1.bf16.msra.mxu0 %v3375
        %3436 = vmatprep.subr.bf16.mxu0 0
        %3437 = vmatpush1.bf16.msra.mxu0 %v3374
        %3438 = vmatprep.subr.bf16.mxu0 0
        %3439 = vmatpush2.bf16.msra.mxu0 %v3389
        %3440 = vmatprep.subr.bf16.mxu0 0
        %3441 = vmatpush2.bf16.msra.mxu0 %v3388
        %3442 = vmatprep.subr.bf16.mxu0 0
        %3443 = vmatpush2.bf16.msra.mxu0 %v3387
        %3444 = vmatprep.subr.bf16.mxu0 0
        %3445 = vmatpush2.bf16.msra.mxu0 %v3386
        %3446 = vmatprep.subr.bf16.mxu0 0
        %3447 = vmatpush2.bf16.msra.mxu0 %v3385
        %3448 = vmatprep.subr.bf16.mxu0 0
        %3449 = vmatpush2.bf16.msra.mxu0 %v3384
        %3450 = vmatprep.subr.bf16.mxu0 0
        %3451 = vmatpush2.bf16.msra.mxu0 %v3383
        %3452 = vmatprep.subr.bf16.mxu0 0
        %3453 = vmatpush2.bf16.msra.mxu0 %v3382
        %3454 = vmatprep.mubr.bf16.mxu0 %v2185
        %3455 = vmatmul.mubr.bf16.gmra.mxu0 %v1849
        %v3456 = vpop.f32.mrf.mxu0
        %v3457 = vadd.f32 0.0, %v3456
        %v3458 = vpop.f32.mrf.mxu0
        %v3459 = vpop.f32.mrf.mxu0
        %v3460 = vadd.f32 0.0, %v3459
        %v3461 = vpop.f32.mrf.mxu0
        %3462 = vmatprep.mubr.bf16.mxu0 %v2186
        %3463 = vmatmul.mubr.bf16.gmra.mxu0 %v1850
        %v3464 = vpop.f32.mrf.mxu0
        %v3465 = vadd.f32 0.0, %v3464
        %v3466 = vpop.f32.mrf.mxu0
        %v3467 = vpop.f32.mrf.mxu0
        %v3468 = vadd.f32 0.0, %v3467
        %v3469 = vpop.f32.mrf.mxu0
        %3470 = vmatprep.mubr.bf16.mxu0 %v2187
        %3471 = vmatmul.mubr.bf16.gmra.mxu0 %v1851
        %v3472 = vpop.f32.mrf.mxu0
        %v3473 = vadd.f32 0.0, %v3472
        %v3474 = vpop.f32.mrf.mxu0
        %v3475 = vpop.f32.mrf.mxu0
        %v3476 = vadd.f32 0.0, %v3475
        %v3477 = vpop.f32.mrf.mxu0
        %3478 = vmatprep.mubr.bf16.mxu0 %v2188
        %3479 = vmatmul.mubr.bf16.gmra.mxu0 %v1852
        %v3480 = vpop.f32.mrf.mxu0
        %v3481 = vadd.f32 0.0, %v3480
        %v3482 = vpop.f32.mrf.mxu0
        %v3483 = vpop.f32.mrf.mxu0
        %v3484 = vadd.f32 0.0, %v3483
        %v3485 = vpop.f32.mrf.mxu0
        %3486 = vmatprep.mubr.bf16.mxu0 %v2189
        %3487 = vmatmul.mubr.bf16.gmra.mxu0 %v1853
        %v3488 = vpop.f32.mrf.mxu0
        %v3489 = vadd.f32 0.0, %v3488
        %v3490 = vpop.f32.mrf.mxu0
        %v3491 = vpop.f32.mrf.mxu0
        %v3492 = vadd.f32 0.0, %v3491
        %v3493 = vpop.f32.mrf.mxu0
        %3494 = vmatprep.mubr.bf16.mxu0 %v2190
        %3495 = vmatmul.mubr.bf16.gmra.mxu0 %v1854
        %v3496 = vpop.f32.mrf.mxu0
        %v3497 = vadd.f32 0.0, %v3496
        %v3498 = vpop.f32.mrf.mxu0
        %v3499 = vpop.f32.mrf.mxu0
        %v3500 = vadd.f32 0.0, %v3499
        %v3501 = vpop.f32.mrf.mxu0
        %3502 = vmatprep.mubr.bf16.mxu0 %v2191
        %3503 = vmatmul.mubr.bf16.gmra.mxu0 %v1855
        %v3504 = vpop.f32.mrf.mxu0
        %v3505 = vadd.f32 0.0, %v3504
        %v3506 = vpop.f32.mrf.mxu0
        %v3507 = vpop.f32.mrf.mxu0
        %v3508 = vadd.f32 0.0, %v3507
        %v3509 = vpop.f32.mrf.mxu0
        %3510 = vmatprep.mubr.bf16.mxu0 %v2192
        %3511 = vmatmul.mubr.bf16.gmra.mxu0 %v1856
        %v3512 = vpop.f32.mrf.mxu0
        %v3513 = vadd.f32 0.0, %v3512
        %v3514 = vpop.f32.mrf.mxu0
        %v3515 = vpop.f32.mrf.mxu0
        %v3516 = vadd.f32 0.0, %v3515
        %v3517 = vpop.f32.mrf.mxu0
        %3518 = vmatprep.mubr.bf16.mxu0 %v2193
        %3519 = vmatmul.mubr.bf16.gmra.mxu0 %v1857
        %v3520 = vpop.f32.mrf.mxu0
        %v3521 = vadd.f32 0.0, %v3520
        %v3522 = vpop.f32.mrf.mxu0
        %v3523 = vpop.f32.mrf.mxu0
        %v3524 = vadd.f32 0.0, %v3523
        %v3525 = vpop.f32.mrf.mxu0
        %3526 = vmatprep.mubr.bf16.mxu0 %v2194
        %3527 = vmatmul.mubr.bf16.gmra.mxu0 %v1858
        %v3528 = vpop.f32.mrf.mxu0
        %v3529 = vadd.f32 0.0, %v3528
        %v3530 = vpop.f32.mrf.mxu0
        %v3531 = vpop.f32.mrf.mxu0
        %v3532 = vadd.f32 0.0, %v3531
        %v3533 = vpop.f32.mrf.mxu0
        %3534 = vmatprep.mubr.bf16.mxu0 %v2195
        %3535 = vmatmul.mubr.bf16.gmra.mxu0 %v1859
        %v3536 = vpop.f32.mrf.mxu0
        %v3537 = vadd.f32 0.0, %v3536
        %v3538 = vpop.f32.mrf.mxu0
        %v3539 = vpop.f32.mrf.mxu0
        %v3540 = vadd.f32 0.0, %v3539
        %v3541 = vpop.f32.mrf.mxu0
        %3542 = vmatprep.mubr.bf16.mxu0 %v2196
        %3543 = vmatmul.mubr.bf16.gmra.mxu0 %v1860
        %v3544 = vpop.f32.mrf.mxu0
        %v3545 = vadd.f32 0.0, %v3544
        %v3546 = vpop.f32.mrf.mxu0
        %v3547 = vpop.f32.mrf.mxu0
        %v3548 = vadd.f32 0.0, %v3547
        %v3549 = vpop.f32.mrf.mxu0
        %3550 = vmatprep.mubr.bf16.mxu0 %v2197
        %3551 = vmatmul.mubr.bf16.gmra.mxu0 %v1861
        %v3552 = vpop.f32.mrf.mxu0
        %v3553 = vadd.f32 0.0, %v3552
        %v3554 = vpop.f32.mrf.mxu0
        %v3555 = vpop.f32.mrf.mxu0
        %v3556 = vadd.f32 0.0, %v3555
        %v3557 = vpop.f32.mrf.mxu0
        %3558 = vmatprep.mubr.bf16.mxu0 %v2198
        %3559 = vmatmul.mubr.bf16.gmra.mxu0 %v1862
        %v3560 = vpop.f32.mrf.mxu0
        %v3561 = vadd.f32 0.0, %v3560
        %v3562 = vpop.f32.mrf.mxu0
        %v3563 = vpop.f32.mrf.mxu0
        %v3564 = vadd.f32 0.0, %v3563
        %v3565 = vpop.f32.mrf.mxu0
        %3566 = vmatprep.mubr.bf16.mxu0 %v2199
        %3567 = vmatmul.mubr.bf16.gmra.mxu0 %v1863
        %v3568 = vpop.f32.mrf.mxu0
        %v3569 = vadd.f32 0.0, %v3568
        %v3570 = vpop.f32.mrf.mxu0
        %v3571 = vpop.f32.mrf.mxu0
        %v3572 = vadd.f32 0.0, %v3571
        %v3573 = vpop.f32.mrf.mxu0
        %3574 = vmatprep.mubr.bf16.mxu0 %v2183
        %3575 = vmatmul.mubr.bf16.gmra.mxu0 %v1864
        %v3576 = vpop.f32.mrf.mxu0
        %v3577 = vadd.f32 0.0, %v3576
        %v3578 = vpop.f32.mrf.mxu0
        %v3579 = vpop.f32.mrf.mxu0
        %v3580 = vadd.f32 0.0, %v3579
        %v3581 = vpop.f32.mrf.mxu0
        %3582 = vdwg.mxu0
        %3583 = vmatprep.subr.bf16.mxu0 0
        %3584 = vmatpush1.bf16.msra.mxu0 %v3397
        %3585 = vmatprep.subr.bf16.mxu0 0
        %3586 = vmatpush1.bf16.msra.mxu0 %v3396
        %3587 = vmatprep.subr.bf16.mxu0 0
        %3588 = vmatpush1.bf16.msra.mxu0 %v3395
        %3589 = vmatprep.subr.bf16.mxu0 0
        %3590 = vmatpush1.bf16.msra.mxu0 %v3394
        %3591 = vmatprep.subr.bf16.mxu0 0
        %3592 = vmatpush1.bf16.msra.mxu0 %v3393
        %3593 = vmatprep.subr.bf16.mxu0 0
        %3594 = vmatpush1.bf16.msra.mxu0 %v3392
        %3595 = vmatprep.subr.bf16.mxu0 0
        %3596 = vmatpush1.bf16.msra.mxu0 %v3391
        %3597 = vmatprep.subr.bf16.mxu0 0
        %3598 = vmatpush1.bf16.msra.mxu0 %v3390
        %3599 = vmatprep.subr.bf16.mxu0 0
        %3600 = vmatpush2.bf16.msra.mxu0 0
        %3601 = vmatprep.subr.bf16.mxu0 0
        %3602 = vmatpush2.bf16.msra.mxu0 0
        %3603 = vmatprep.subr.bf16.mxu0 0
        %3604 = vmatpush2.bf16.msra.mxu0 0
        %3605 = vmatprep.subr.bf16.mxu0 0
        %3606 = vmatpush2.bf16.msra.mxu0 0
        %3607 = vmatprep.subr.bf16.mxu0 0
        %3608 = vmatpush2.bf16.msra.mxu0 0
        %3609 = vmatprep.subr.bf16.mxu0 0
        %3610 = vmatpush2.bf16.msra.mxu0 0
        %3611 = vmatprep.subr.bf16.mxu0 0
        %3612 = vmatpush2.bf16.msra.mxu0 0
        %3613 = vmatprep.subr.bf16.mxu0 0
        %3614 = vmatpush2.bf16.msra.mxu0 0
        %3615 = vmatprep.mubr.bf16.mxu0 0
        %3616 = vmatmul.mubr.bf16.gmra.mxu0 %v2167
        %v3617 = vpop.f32.mrf.mxu0
        %v3618 = vadd.f32 %v3457, %v3617
        %v3619 = vpop.f32.mrf.mxu0
        %v3620 = vpop.f32.mrf.mxu0
        %v3621 = vadd.f32 %v3460, %v3620
        %v3622 = vpop.f32.mrf.mxu0
        %3623 = vmatprep.mubr.bf16.mxu0 0
        %3624 = vmatmul.mubr.bf16.gmra.mxu0 %v2168
        %v3625 = vpop.f32.mrf.mxu0
        %v3626 = vadd.f32 %v3465, %v3625
        %v3627 = vpop.f32.mrf.mxu0
        %v3628 = vpop.f32.mrf.mxu0
        %v3629 = vadd.f32 %v3468, %v3628
        %v3630 = vpop.f32.mrf.mxu0
        %3631 = vmatprep.mubr.bf16.mxu0 0
        %3632 = vmatmul.mubr.bf16.gmra.mxu0 %v2169
        %v3633 = vpop.f32.mrf.mxu0
        %v3634 = vadd.f32 %v3473, %v3633
        %v3635 = vpop.f32.mrf.mxu0
        %v3636 = vpop.f32.mrf.mxu0
        %v3637 = vadd.f32 %v3476, %v3636
        %v3638 = vpop.f32.mrf.mxu0
        %3639 = vmatprep.mubr.bf16.mxu0 0
        %3640 = vmatmul.mubr.bf16.gmra.mxu0 %v2170
        %v3641 = vpop.f32.mrf.mxu0
        %v3642 = vadd.f32 %v3481, %v3641
        %v3643 = vpop.f32.mrf.mxu0
        %v3644 = vpop.f32.mrf.mxu0
        %v3645 = vadd.f32 %v3484, %v3644
        %v3646 = vpop.f32.mrf.mxu0
        %3647 = vmatprep.mubr.bf16.mxu0 0
        %3648 = vmatmul.mubr.bf16.gmra.mxu0 %v2171
        %v3649 = vpop.f32.mrf.mxu0
        %v3650 = vadd.f32 %v3489, %v3649
        %v3651 = vpop.f32.mrf.mxu0
        %v3652 = vpop.f32.mrf.mxu0
        %v3653 = vadd.f32 %v3492, %v3652
        %v3654 = vpop.f32.mrf.mxu0
        %3655 = vmatprep.mubr.bf16.mxu0 0
        %3656 = vmatmul.mubr.bf16.gmra.mxu0 %v2172
        %v3657 = vpop.f32.mrf.mxu0
        %v3658 = vadd.f32 %v3497, %v3657
        %v3659 = vpop.f32.mrf.mxu0
        %v3660 = vpop.f32.mrf.mxu0
        %v3661 = vadd.f32 %v3500, %v3660
        %v3662 = vpop.f32.mrf.mxu0
        %3663 = vmatprep.mubr.bf16.mxu0 0
        %3664 = vmatmul.mubr.bf16.gmra.mxu0 %v2173
        %v3665 = vpop.f32.mrf.mxu0
        %v3666 = vadd.f32 %v3505, %v3665
        %v3667 = vpop.f32.mrf.mxu0
        %v3668 = vpop.f32.mrf.mxu0
        %v3669 = vadd.f32 %v3508, %v3668
        %v3670 = vpop.f32.mrf.mxu0
        %3671 = vmatprep.mubr.bf16.mxu0 0
        %3672 = vmatmul.mubr.bf16.gmra.mxu0 %v2174
        %v3673 = vpop.f32.mrf.mxu0
        %v3674 = vadd.f32 %v3513, %v3673
        %v3675 = vpop.f32.mrf.mxu0
        %v3676 = vpop.f32.mrf.mxu0
        %v3677 = vadd.f32 %v3516, %v3676
        %v3678 = vpop.f32.mrf.mxu0
        %3679 = vmatprep.mubr.bf16.mxu0 0
        %3680 = vmatmul.mubr.bf16.gmra.mxu0 %v2175
        %v3681 = vpop.f32.mrf.mxu0
        %v3682 = vadd.f32 %v3521, %v3681
        %v3683 = vpop.f32.mrf.mxu0
        %v3684 = vpop.f32.mrf.mxu0
        %v3685 = vadd.f32 %v3524, %v3684
        %v3686 = vpop.f32.mrf.mxu0
        %3687 = vmatprep.mubr.bf16.mxu0 0
        %3688 = vmatmul.mubr.bf16.gmra.mxu0 %v2176
        %v3689 = vpop.f32.mrf.mxu0
        %v3690 = vadd.f32 %v3529, %v3689
        %v3691 = vpop.f32.mrf.mxu0
        %v3692 = vpop.f32.mrf.mxu0
        %v3693 = vadd.f32 %v3532, %v3692
        %v3694 = vpop.f32.mrf.mxu0
        %3695 = vmatprep.mubr.bf16.mxu0 0
        %3696 = vmatmul.mubr.bf16.gmra.mxu0 %v2177
        %v3697 = vpop.f32.mrf.mxu0
        %v3698 = vadd.f32 %v3537, %v3697
        %v3699 = vpop.f32.mrf.mxu0
        %v3700 = vpop.f32.mrf.mxu0
        %v3701 = vadd.f32 %v3540, %v3700
        %v3702 = vpop.f32.mrf.mxu0
        %3703 = vmatprep.mubr.bf16.mxu0 0
        %3704 = vmatmul.mubr.bf16.gmra.mxu0 %v2178
        %v3705 = vpop.f32.mrf.mxu0
        %v3706 = vadd.f32 %v3545, %v3705
        %v3707 = vpop.f32.mrf.mxu0
        %v3708 = vpop.f32.mrf.mxu0
        %v3709 = vadd.f32 %v3548, %v3708
        %v3710 = vpop.f32.mrf.mxu0
        %3711 = vmatprep.mubr.bf16.mxu0 0
        %3712 = vmatmul.mubr.bf16.gmra.mxu0 %v2179
        %v3713 = vpop.f32.mrf.mxu0
        %v3714 = vadd.f32 %v3553, %v3713
        %v3715 = vpop.f32.mrf.mxu0
        %v3716 = vpop.f32.mrf.mxu0
        %v3717 = vadd.f32 %v3556, %v3716
        %v3718 = vpop.f32.mrf.mxu0
        %3719 = vmatprep.mubr.bf16.mxu0 0
        %3720 = vmatmul.mubr.bf16.gmra.mxu0 %v2180
        %v3721 = vpop.f32.mrf.mxu0
        %v3722 = vadd.f32 %v3561, %v3721
        %v3723 = vpop.f32.mrf.mxu0
        %v3724 = vpop.f32.mrf.mxu0
        %v3725 = vadd.f32 %v3564, %v3724
        %v3726 = vpop.f32.mrf.mxu0
        %3727 = vmatprep.mubr.bf16.mxu0 0
        %3728 = vmatmul.mubr.bf16.gmra.mxu0 %v2181
        %v3729 = vpop.f32.mrf.mxu0
        %v3730 = vadd.f32 %v3569, %v3729
        %v3731 = vpop.f32.mrf.mxu0
        %v3732 = vpop.f32.mrf.mxu0
        %v3733 = vadd.f32 %v3572, %v3732
        %v3734 = vpop.f32.mrf.mxu0
        %3735 = vmatprep.mubr.bf16.mxu0 0
        %3736 = vmatmul.mubr.bf16.gmra.mxu0 %v2182
        %v3737 = vpop.f32.mrf.mxu0
        %v3738 = vadd.f32 %v3577, %v3737
        %v3739 = vpop.f32.mrf.mxu0
        %v3740 = vpop.f32.mrf.mxu0
        %v3741 = vadd.f32 %v3580, %v3740
        %v3742 = vpop.f32.mrf.mxu0
        %3743 = vdwg.mxu0
        %v3744 = vadd.f32 %v3103, %v3618
        %v3745 = vadd.f32 %v3106, %v3621
        %v3746 = vadd.f32 %v3111, %v3626
        %v3747 = vadd.f32 %v3114, %v3629
        %v3748 = vadd.f32 %v3119, %v3634
        %v3749 = vadd.f32 %v3122, %v3637
        %v3750 = vadd.f32 %v3127, %v3642
        %v3751 = vadd.f32 %v3130, %v3645
        %v3752 = vadd.f32 %v3135, %v3650
        %v3753 = vadd.f32 %v3138, %v3653
        %v3754 = vadd.f32 %v3143, %v3658
        %v3755 = vadd.f32 %v3146, %v3661
        %v3756 = vadd.f32 %v3151, %v3666
        %v3757 = vadd.f32 %v3154, %v3669
        %v3758 = vadd.f32 %v3159, %v3674
        %v3759 = vadd.f32 %v3162, %v3677
        %v3760 = vadd.f32 %v3167, %v3682
        %v3761 = vadd.f32 %v3170, %v3685
        %v3762 = vadd.f32 %v3175, %v3690
        %v3763 = vadd.f32 %v3178, %v3693
        %v3764 = vadd.f32 %v3183, %v3698
        %v3765 = vadd.f32 %v3186, %v3701
        %v3766 = vadd.f32 %v3191, %v3706
        %v3767 = vadd.f32 %v3194, %v3709
        %v3768 = vadd.f32 %v3199, %v3714
        %v3769 = vadd.f32 %v3202, %v3717
        %v3770 = vadd.f32 %v3207, %v3722
        %v3771 = vadd.f32 %v3210, %v3725
        %v3772 = vadd.f32 %v3215, %v3730
        %v3773 = vadd.f32 %v3218, %v3733
        %v3774 = vadd.f32 %v3223, %v3738
        %v3775 = vadd.f32 %v3226, %v3741
        %v3776 = vld [vmem:[%s5] sm:$0x1]
        %v3778 = vlaneseq
        %v3779 = vshrl.u32 %v3778, 7
        %v3780 = vsub.s32 0, %v3779
        %v3781 = vrot.slane %v3776, %v3780
        %v3783 = vmul.f32 %v3744, %v3781
        %v3784 = vmul.f32 %v3745, %v3781
        %v3785 = vmul.f32 %v3746, %v3781
        %v3786 = vmul.f32 %v3747, %v3781
        %v3787 = vmul.f32 %v3748, %v3781
        %v3788 = vmul.f32 %v3749, %v3781
        %v3789 = vmul.f32 %v3750, %v3781
        %v3790 = vmul.f32 %v3751, %v3781
        %v3791 = vmul.f32 %v3752, %v3781
        %v3792 = vmul.f32 %v3753, %v3781
        %v3793 = vmul.f32 %v3754, %v3781
        %v3794 = vmul.f32 %v3755, %v3781
        %v3795 = vmul.f32 %v3756, %v3781
        %v3796 = vmul.f32 %v3757, %v3781
        %v3797 = vmul.f32 %v3758, %v3781
        %v3798 = vmul.f32 %v3759, %v3781
        %v3799 = vmul.f32 %v3760, %v3781
        %v3800 = vmul.f32 %v3761, %v3781
        %v3801 = vmul.f32 %v3762, %v3781
        %v3802 = vmul.f32 %v3763, %v3781
        %v3803 = vmul.f32 %v3764, %v3781
        %v3804 = vmul.f32 %v3765, %v3781
        %v3805 = vmul.f32 %v3766, %v3781
        %v3806 = vmul.f32 %v3767, %v3781
        %v3807 = vmul.f32 %v3768, %v3781
        %v3808 = vmul.f32 %v3769, %v3781
        %v3809 = vmul.f32 %v3770, %v3781
        %v3810 = vmul.f32 %v3771, %v3781
        %v3811 = vmul.f32 %v3772, %v3781
        %v3812 = vmul.f32 %v3773, %v3781
        %v3813 = vmul.f32 %v3774, %v3781
        %v3814 = vmul.f32 %v3775, %v3781
        %v3815 = vld [vmem:[%s6] sm:$0x1]
        %v3817 = vlaneseq
        %v3818 = vshrl.u32 %v3817, 7
        %v3819 = vsub.s32 0, %v3818
        %v3820 = vrot.slane %v3815, %v3819
        %v3822 = vadd.f32 %v3783, %v3820
        %v3823 = vadd.f32 %v3784, %v3820
        %v3824 = vadd.f32 %v3785, %v3820
        %v3825 = vadd.f32 %v3786, %v3820
        %v3826 = vadd.f32 %v3787, %v3820
        %v3827 = vadd.f32 %v3788, %v3820
        %v3828 = vadd.f32 %v3789, %v3820
        %v3829 = vadd.f32 %v3790, %v3820
        %v3830 = vadd.f32 %v3791, %v3820
        %v3831 = vadd.f32 %v3792, %v3820
        %v3832 = vadd.f32 %v3793, %v3820
        %v3833 = vadd.f32 %v3794, %v3820
        %v3834 = vadd.f32 %v3795, %v3820
        %v3835 = vadd.f32 %v3796, %v3820
        %v3836 = vadd.f32 %v3797, %v3820
        %v3837 = vadd.f32 %v3798, %v3820
        %v3838 = vadd.f32 %v3799, %v3820
        %v3839 = vadd.f32 %v3800, %v3820
        %v3840 = vadd.f32 %v3801, %v3820
        %v3841 = vadd.f32 %v3802, %v3820
        %v3842 = vadd.f32 %v3803, %v3820
        %v3843 = vadd.f32 %v3804, %v3820
        %v3844 = vadd.f32 %v3805, %v3820
        %v3845 = vadd.f32 %v3806, %v3820
        %v3846 = vadd.f32 %v3807, %v3820
        %v3847 = vadd.f32 %v3808, %v3820
        %v3848 = vadd.f32 %v3809, %v3820
        %v3849 = vadd.f32 %v3810, %v3820
        %v3850 = vadd.f32 %v3811, %v3820
        %v3851 = vadd.f32 %v3812, %v3820
        %v3852 = vadd.f32 %v3813, %v3820
        %v3853 = vadd.f32 %v3814, %v3820
        %v3854 = vmax.f32 %v3822, 0.0
        %v3855 = vmax.f32 %v3823, 0.0
        %v3856 = vmax.f32 %v3824, 0.0
        %v3857 = vmax.f32 %v3825, 0.0
        %v3858 = vmax.f32 %v3826, 0.0
        %v3859 = vmax.f32 %v3827, 0.0
        %v3860 = vmax.f32 %v3828, 0.0
        %v3861 = vmax.f32 %v3829, 0.0
        %v3862 = vmax.f32 %v3830, 0.0
        %v3863 = vmax.f32 %v3831, 0.0
        %v3864 = vmax.f32 %v3832, 0.0
        %v3865 = vmax.f32 %v3833, 0.0
        %v3866 = vmax.f32 %v3834, 0.0
        %v3867 = vmax.f32 %v3835, 0.0
        %v3868 = vmax.f32 %v3836, 0.0
        %v3869 = vmax.f32 %v3837, 0.0
        %v3870 = vmax.f32 %v3838, 0.0
        %v3871 = vmax.f32 %v3839, 0.0
        %v3872 = vmax.f32 %v3840, 0.0
        %v3873 = vmax.f32 %v3841, 0.0
        %v3874 = vmax.f32 %v3842, 0.0
        %v3875 = vmax.f32 %v3843, 0.0
        %v3876 = vmax.f32 %v3844, 0.0
        %v3877 = vmax.f32 %v3845, 0.0
        %v3878 = vmax.f32 %v3846, 0.0
        %v3879 = vmax.f32 %v3847, 0.0
        %v3880 = vmax.f32 %v3848, 0.0
        %v3881 = vmax.f32 %v3849, 0.0
        %v3882 = vmax.f32 %v3850, 0.0
        %v3883 = vmax.f32 %v3851, 0.0
        %v3884 = vmax.f32 %v3852, 0.0
        %v3885 = vmax.f32 %v3853, 0.0
        %v3886 = vpack.c.bf16 %v3855, %v3854
        %v3887 = vpack.c.bf16 %v3857, %v3856
        %v3888 = vpack.c.bf16 %v3859, %v3858
        %v3889 = vpack.c.bf16 %v3861, %v3860
        %v3890 = vpack.c.bf16 %v3863, %v3862
        %v3891 = vpack.c.bf16 %v3865, %v3864
        %v3892 = vpack.c.bf16 %v3867, %v3866
        %v3893 = vpack.c.bf16 %v3869, %v3868
        %v3894 = vpack.c.bf16 %v3871, %v3870
        %v3895 = vpack.c.bf16 %v3873, %v3872
        %v3896 = vpack.c.bf16 %v3875, %v3874
        %v3897 = vpack.c.bf16 %v3877, %v3876
        %v3898 = vpack.c.bf16 %v3879, %v3878
        %v3899 = vpack.c.bf16 %v3881, %v3880
        %v3900 = vpack.c.bf16 %v3883, %v3882
        %v3901 = vpack.c.bf16 %v3885, %v3884
        %v3902 = vld [vmem:[%s10] sm:$0x1]
        %v3904 = vlaneseq
        %v3905 = vshrl.u32 %v3904, 7
        %v3906 = vsub.s32 0, %v3905
        %v3907 = vrot.slane %v3902, %v3906
        %v3909 = vmul.f32 %v740, %v3907
        %v3910 = vmul.f32 %v744, %v3907
        %v3911 = vmul.f32 %v750, %v3907
        %v3912 = vmul.f32 %v754, %v3907
        %v3913 = vmul.f32 %v760, %v3907
        %v3914 = vmul.f32 %v764, %v3907
        %v3915 = vmul.f32 %v770, %v3907
        %v3916 = vmul.f32 %v774, %v3907
        %v3917 = vmul.f32 %v780, %v3907
        %v3918 = vmul.f32 %v784, %v3907
        %v3919 = vmul.f32 %v790, %v3907
        %v3920 = vmul.f32 %v794, %v3907
        %v3921 = vmul.f32 %v800, %v3907
        %v3922 = vmul.f32 %v804, %v3907
        %v3923 = vmul.f32 %v810, %v3907
        %v3924 = vmul.f32 %v814, %v3907
        %v3925 = vmul.f32 %v820, %v3907
        %v3926 = vmul.f32 %v824, %v3907
        %v3927 = vmul.f32 %v830, %v3907
        %v3928 = vmul.f32 %v834, %v3907
        %v3929 = vmul.f32 %v840, %v3907
        %v3930 = vmul.f32 %v844, %v3907
        %v3931 = vmul.f32 %v850, %v3907
        %v3932 = vmul.f32 %v854, %v3907
        %v3933 = vmul.f32 %v860, %v3907
        %v3934 = vmul.f32 %v864, %v3907
        %v3935 = vmul.f32 %v870, %v3907
        %v3936 = vmul.f32 %v874, %v3907
        %v3937 = vmul.f32 %v880, %v3907
        %v3938 = vmul.f32 %v884, %v3907
        %v3939 = vmul.f32 %v890, %v3907
        %v3940 = vmul.f32 %v894, %v3907
        %v3941 = vld [vmem:[%s11] sm:$0x1]
        %v3943 = vlaneseq
        %v3944 = vshrl.u32 %v3943, 7
        %v3945 = vsub.s32 0, %v3944
        %v3946 = vrot.slane %v3941, %v3945
        %v3948 = vadd.f32 %v3909, %v3946
        %v3949 = vadd.f32 %v3910, %v3946
        %v3950 = vadd.f32 %v3911, %v3946
        %v3951 = vadd.f32 %v3912, %v3946
        %v3952 = vadd.f32 %v3913, %v3946
        %v3953 = vadd.f32 %v3914, %v3946
        %v3954 = vadd.f32 %v3915, %v3946
        %v3955 = vadd.f32 %v3916, %v3946
        %v3956 = vadd.f32 %v3917, %v3946
        %v3957 = vadd.f32 %v3918, %v3946
        %v3958 = vadd.f32 %v3919, %v3946
        %v3959 = vadd.f32 %v3920, %v3946
        %v3960 = vadd.f32 %v3921, %v3946
        %v3961 = vadd.f32 %v3922, %v3946
        %v3962 = vadd.f32 %v3923, %v3946
        %v3963 = vadd.f32 %v3924, %v3946
        %v3964 = vadd.f32 %v3925, %v3946
        %v3965 = vadd.f32 %v3926, %v3946
        %v3966 = vadd.f32 %v3927, %v3946
        %v3967 = vadd.f32 %v3928, %v3946
        %v3968 = vadd.f32 %v3929, %v3946
        %v3969 = vadd.f32 %v3930, %v3946
        %v3970 = vadd.f32 %v3931, %v3946
        %v3971 = vadd.f32 %v3932, %v3946
        %v3972 = vadd.f32 %v3933, %v3946
        %v3973 = vadd.f32 %v3934, %v3946
        %v3974 = vadd.f32 %v3935, %v3946
        %v3975 = vadd.f32 %v3936, %v3946
        %v3976 = vadd.f32 %v3937, %v3946
        %v3977 = vadd.f32 %v3938, %v3946
        %v3978 = vadd.f32 %v3939, %v3946
        %v3979 = vadd.f32 %v3940, %v3946
        %v3980 = vld [vmem:[#allocation8] sm:$0xf]
        %v3981 = vld [vmem:[#allocation8 + $0x4] sm:$0xf]
        %v3982 = vld [vmem:[#allocation8 + $0x8] sm:$0xf]
        %v3983 = vld [vmem:[#allocation8 + $0xc] sm:$0xf]
        %v3984 = vld [vmem:[#allocation8 + $0x10] sm:$0xf]
        %v3985 = vld [vmem:[#allocation8 + $0x14] sm:$0xf]
        %v3986 = vld [vmem:[#allocation8 + $0x18] sm:$0xf]
        %v3987 = vld [vmem:[#allocation8 + $0x1c] sm:$0xf]
        %v3988 = vld [vmem:[#allocation8 + $0x20] sm:$0xf]
        %v3989 = vld [vmem:[#allocation8 + $0x24] sm:$0xf]
        %v3990 = vld [vmem:[#allocation8 + $0x28] sm:$0xf]
        %v3991 = vld [vmem:[#allocation8 + $0x2c] sm:$0xf]
        %v3992 = vld [vmem:[#allocation8 + $0x30] sm:$0xf]
        %v3993 = vld [vmem:[#allocation8 + $0x34] sm:$0xf]
        %v3994 = vld [vmem:[#allocation8 + $0x38] sm:$0xf]
        %v3995 = vld [vmem:[#allocation8 + $0x3c] sm:$0xf]
        %v4012 = vunpack.c.l.b16 %v3980
        %v4013 = vunpack.c.l.b16 %v3981
        %v4014 = vunpack.c.l.b16 %v3982
        %v4015 = vunpack.c.l.b16 %v3983
        %v4016 = vunpack.c.l.b16 %v3984
        %v4017 = vunpack.c.l.b16 %v3985
        %v4018 = vunpack.c.l.b16 %v3986
        %v4019 = vunpack.c.l.b16 %v3987
        %v4020 = vunpack.c.l.b16 %v3988
        %v4021 = vunpack.c.l.b16 %v3989
        %v4022 = vunpack.c.l.b16 %v3990
        %v4023 = vunpack.c.l.b16 %v3991
        %v4024 = vunpack.c.l.b16 %v3992
        %v4025 = vunpack.c.l.b16 %v3993
        %v4026 = vunpack.c.l.b16 %v3994
        %v4027 = vunpack.c.l.b16 %v3995
        %v4028 = vpack.c.b16 %v4013, %v4012
        %v4029 = vpack.c.b16 %v4015, %v4014
        %v4030 = vpack.c.b16 %v4017, %v4016
        %v4031 = vpack.c.b16 %v4019, %v4018
        %v4032 = vpack.c.b16 %v4021, %v4020
        %v4033 = vpack.c.b16 %v4023, %v4022
        %v4034 = vpack.c.b16 %v4025, %v4024
        %v4035 = vpack.c.b16 %v4027, %v4026
        %4044 = vmatprep.subr.bf16.mxu0 0
        %4045 = vmatpush1.bf16.msra.mxu0 %v4035
        %4046 = vmatprep.subr.bf16.mxu0 0
        %4047 = vmatpush1.bf16.msra.mxu0 %v4034
        %4048 = vmatprep.subr.bf16.mxu0 0
        %4049 = vmatpush1.bf16.msra.mxu0 %v4033
        %4050 = vmatprep.subr.bf16.mxu0 0
        %4051 = vmatpush1.bf16.msra.mxu0 %v4032
        %4052 = vmatprep.subr.bf16.mxu0 0
        %4053 = vmatpush1.bf16.msra.mxu0 %v4031
        %4054 = vmatprep.subr.bf16.mxu0 0
        %4055 = vmatpush1.bf16.msra.mxu0 %v4030
        %4056 = vmatprep.subr.bf16.mxu0 0
        %4057 = vmatpush1.bf16.msra.mxu0 %v4029
        %4058 = vmatprep.subr.bf16.mxu0 0
        %4059 = vmatpush1.bf16.msra.mxu0 %v4028
        %4060 = vmatprep.subr.bf16.mxu0 0
        %4061 = vmatpush2.bf16.msra.mxu0 0
        %4062 = vmatprep.subr.bf16.mxu0 0
        %4063 = vmatpush2.bf16.msra.mxu0 0
        %4064 = vmatprep.subr.bf16.mxu0 0
        %4065 = vmatpush2.bf16.msra.mxu0 0
        %4066 = vmatprep.subr.bf16.mxu0 0
        %4067 = vmatpush2.bf16.msra.mxu0 0
        %4068 = vmatprep.subr.bf16.mxu0 0
        %4069 = vmatpush2.bf16.msra.mxu0 0
        %4070 = vmatprep.subr.bf16.mxu0 0
        %4071 = vmatpush2.bf16.msra.mxu0 0
        %4072 = vmatprep.subr.bf16.mxu0 0
        %4073 = vmatpush2.bf16.msra.mxu0 0
        %4074 = vmatprep.subr.bf16.mxu0 0
        %4075 = vmatpush2.bf16.msra.mxu0 0
        %4076 = vmatprep.mubr.bf16.mxu0 0
        %4077 = vmatmul.mubr.bf16.gmra.mxu0 %v3886
        %v4078 = vpop.f32.mrf.mxu0
        %v4079 = vadd.f32 0.0, %v4078
        %v4080 = vpop.f32.mrf.mxu0
        %v4081 = vpop.f32.mrf.mxu0
        %v4082 = vadd.f32 0.0, %v4081
        %v4083 = vpop.f32.mrf.mxu0
        %4084 = vmatprep.mubr.bf16.mxu0 0
        %4085 = vmatmul.mubr.bf16.gmra.mxu0 %v3887
        %v4086 = vpop.f32.mrf.mxu0
        %v4087 = vadd.f32 0.0, %v4086
        %v4088 = vpop.f32.mrf.mxu0
        %v4089 = vpop.f32.mrf.mxu0
        %v4090 = vadd.f32 0.0, %v4089
        %v4091 = vpop.f32.mrf.mxu0
        %4092 = vmatprep.mubr.bf16.mxu0 0
        %4093 = vmatmul.mubr.bf16.gmra.mxu0 %v3888
        %v4094 = vpop.f32.mrf.mxu0
        %v4095 = vadd.f32 0.0, %v4094
        %v4096 = vpop.f32.mrf.mxu0
        %v4097 = vpop.f32.mrf.mxu0
        %v4098 = vadd.f32 0.0, %v4097
        %v4099 = vpop.f32.mrf.mxu0
        %4100 = vmatprep.mubr.bf16.mxu0 0
        %4101 = vmatmul.mubr.bf16.gmra.mxu0 %v3889
        %v4102 = vpop.f32.mrf.mxu0
        %v4103 = vadd.f32 0.0, %v4102
        %v4104 = vpop.f32.mrf.mxu0
        %v4105 = vpop.f32.mrf.mxu0
        %v4106 = vadd.f32 0.0, %v4105
        %v4107 = vpop.f32.mrf.mxu0
        %4108 = vmatprep.mubr.bf16.mxu0 0
        %4109 = vmatmul.mubr.bf16.gmra.mxu0 %v3890
        %v4110 = vpop.f32.mrf.mxu0
        %v4111 = vadd.f32 0.0, %v4110
        %v4112 = vpop.f32.mrf.mxu0
        %v4113 = vpop.f32.mrf.mxu0
        %v4114 = vadd.f32 0.0, %v4113
        %v4115 = vpop.f32.mrf.mxu0
        %4116 = vmatprep.mubr.bf16.mxu0 0
        %4117 = vmatmul.mubr.bf16.gmra.mxu0 %v3891
        %v4118 = vpop.f32.mrf.mxu0
        %v4119 = vadd.f32 0.0, %v4118
        %v4120 = vpop.f32.mrf.mxu0
        %v4121 = vpop.f32.mrf.mxu0
        %v4122 = vadd.f32 0.0, %v4121
        %v4123 = vpop.f32.mrf.mxu0
        %4124 = vmatprep.mubr.bf16.mxu0 0
        %4125 = vmatmul.mubr.bf16.gmra.mxu0 %v3892
        %v4126 = vpop.f32.mrf.mxu0
        %v4127 = vadd.f32 0.0, %v4126
        %v4128 = vpop.f32.mrf.mxu0
        %v4129 = vpop.f32.mrf.mxu0
        %v4130 = vadd.f32 0.0, %v4129
        %v4131 = vpop.f32.mrf.mxu0
        %4132 = vmatprep.mubr.bf16.mxu0 0
        %4133 = vmatmul.mubr.bf16.gmra.mxu0 %v3893
        %v4134 = vpop.f32.mrf.mxu0
        %v4135 = vadd.f32 0.0, %v4134
        %v4136 = vpop.f32.mrf.mxu0
        %v4137 = vpop.f32.mrf.mxu0
        %v4138 = vadd.f32 0.0, %v4137
        %v4139 = vpop.f32.mrf.mxu0
        %4140 = vmatprep.mubr.bf16.mxu0 0
        %4141 = vmatmul.mubr.bf16.gmra.mxu0 %v3894
        %v4142 = vpop.f32.mrf.mxu0
        %v4143 = vadd.f32 0.0, %v4142
        %v4144 = vpop.f32.mrf.mxu0
        %v4145 = vpop.f32.mrf.mxu0
        %v4146 = vadd.f32 0.0, %v4145
        %v4147 = vpop.f32.mrf.mxu0
        %4148 = vmatprep.mubr.bf16.mxu0 0
        %4149 = vmatmul.mubr.bf16.gmra.mxu0 %v3895
        %v4150 = vpop.f32.mrf.mxu0
        %v4151 = vadd.f32 0.0, %v4150
        %v4152 = vpop.f32.mrf.mxu0
        %v4153 = vpop.f32.mrf.mxu0
        %v4154 = vadd.f32 0.0, %v4153
        %v4155 = vpop.f32.mrf.mxu0
        %4156 = vmatprep.mubr.bf16.mxu0 0
        %4157 = vmatmul.mubr.bf16.gmra.mxu0 %v3896
        %v4158 = vpop.f32.mrf.mxu0
        %v4159 = vadd.f32 0.0, %v4158
        %v4160 = vpop.f32.mrf.mxu0
        %v4161 = vpop.f32.mrf.mxu0
        %v4162 = vadd.f32 0.0, %v4161
        %v4163 = vpop.f32.mrf.mxu0
        %4164 = vmatprep.mubr.bf16.mxu0 0
        %4165 = vmatmul.mubr.bf16.gmra.mxu0 %v3897
        %v4166 = vpop.f32.mrf.mxu0
        %v4167 = vadd.f32 0.0, %v4166
        %v4168 = vpop.f32.mrf.mxu0
        %v4169 = vpop.f32.mrf.mxu0
        %v4170 = vadd.f32 0.0, %v4169
        %v4171 = vpop.f32.mrf.mxu0
        %4172 = vmatprep.mubr.bf16.mxu0 0
        %4173 = vmatmul.mubr.bf16.gmra.mxu0 %v3898
        %v4174 = vpop.f32.mrf.mxu0
        %v4175 = vadd.f32 0.0, %v4174
        %v4176 = vpop.f32.mrf.mxu0
        %v4177 = vpop.f32.mrf.mxu0
        %v4178 = vadd.f32 0.0, %v4177
        %v4179 = vpop.f32.mrf.mxu0
        %4180 = vmatprep.mubr.bf16.mxu0 0
        %4181 = vmatmul.mubr.bf16.gmra.mxu0 %v3899
        %v4182 = vpop.f32.mrf.mxu0
        %v4183 = vadd.f32 0.0, %v4182
        %v4184 = vpop.f32.mrf.mxu0
        %v4185 = vpop.f32.mrf.mxu0
        %v4186 = vadd.f32 0.0, %v4185
        %v4187 = vpop.f32.mrf.mxu0
        %4188 = vmatprep.mubr.bf16.mxu0 0
        %4189 = vmatmul.mubr.bf16.gmra.mxu0 %v3900
        %v4190 = vpop.f32.mrf.mxu0
        %v4191 = vadd.f32 0.0, %v4190
        %v4192 = vpop.f32.mrf.mxu0
        %v4193 = vpop.f32.mrf.mxu0
        %v4194 = vadd.f32 0.0, %v4193
        %v4195 = vpop.f32.mrf.mxu0
        %4196 = vmatprep.mubr.bf16.mxu0 0
        %4197 = vmatmul.mubr.bf16.gmra.mxu0 %v3901
        %v4198 = vpop.f32.mrf.mxu0
        %v4199 = vadd.f32 0.0, %v4198
        %v4200 = vpop.f32.mrf.mxu0
        %v4201 = vpop.f32.mrf.mxu0
        %v4202 = vadd.f32 0.0, %v4201
        %v4203 = vpop.f32.mrf.mxu0
        %4204 = vdwg.mxu0
        %v4205 = vld [vmem:[%s8] sm:$0x1]
        %v4207 = vlaneseq
        %v4208 = vshrl.u32 %v4207, 7
        %v4209 = vsub.s32 0, %v4208
        %v4210 = vrot.slane %v4205, %v4209
        %v4212 = vmul.f32 %v4079, %v4210
        %v4213 = vmul.f32 %v4082, %v4210
        %v4214 = vmul.f32 %v4087, %v4210
        %v4215 = vmul.f32 %v4090, %v4210
        %v4216 = vmul.f32 %v4095, %v4210
        %v4217 = vmul.f32 %v4098, %v4210
        %v4218 = vmul.f32 %v4103, %v4210
        %v4219 = vmul.f32 %v4106, %v4210
        %v4220 = vmul.f32 %v4111, %v4210
        %v4221 = vmul.f32 %v4114, %v4210
        %v4222 = vmul.f32 %v4119, %v4210
        %v4223 = vmul.f32 %v4122, %v4210
        %v4224 = vmul.f32 %v4127, %v4210
        %v4225 = vmul.f32 %v4130, %v4210
        %v4226 = vmul.f32 %v4135, %v4210
        %v4227 = vmul.f32 %v4138, %v4210
        %v4228 = vmul.f32 %v4143, %v4210
        %v4229 = vmul.f32 %v4146, %v4210
        %v4230 = vmul.f32 %v4151, %v4210
        %v4231 = vmul.f32 %v4154, %v4210
        %v4232 = vmul.f32 %v4159, %v4210
        %v4233 = vmul.f32 %v4162, %v4210
        %v4234 = vmul.f32 %v4167, %v4210
        %v4235 = vmul.f32 %v4170, %v4210
        %v4236 = vmul.f32 %v4175, %v4210
        %v4237 = vmul.f32 %v4178, %v4210
        %v4238 = vmul.f32 %v4183, %v4210
        %v4239 = vmul.f32 %v4186, %v4210
        %v4240 = vmul.f32 %v4191, %v4210
        %v4241 = vmul.f32 %v4194, %v4210
        %v4242 = vmul.f32 %v4199, %v4210
        %v4243 = vmul.f32 %v4202, %v4210
        %v4244 = vld [vmem:[%s9] sm:$0x1]
        %v4246 = vlaneseq
        %v4247 = vshrl.u32 %v4246, 7
        %v4248 = vsub.s32 0, %v4247
        %v4249 = vrot.slane %v4244, %v4248
        %v4251 = vadd.f32 %v4212, %v4249
        %v4252 = vadd.f32 %v4213, %v4249
        %v4253 = vadd.f32 %v4214, %v4249
        %v4254 = vadd.f32 %v4215, %v4249
        %v4255 = vadd.f32 %v4216, %v4249
        %v4256 = vadd.f32 %v4217, %v4249
        %v4257 = vadd.f32 %v4218, %v4249
        %v4258 = vadd.f32 %v4219, %v4249
        %v4259 = vadd.f32 %v4220, %v4249
        %v4260 = vadd.f32 %v4221, %v4249
        %v4261 = vadd.f32 %v4222, %v4249
        %v4262 = vadd.f32 %v4223, %v4249
        %v4263 = vadd.f32 %v4224, %v4249
        %v4264 = vadd.f32 %v4225, %v4249
        %v4265 = vadd.f32 %v4226, %v4249
        %v4266 = vadd.f32 %v4227, %v4249
        %v4267 = vadd.f32 %v4228, %v4249
        %v4268 = vadd.f32 %v4229, %v4249
        %v4269 = vadd.f32 %v4230, %v4249
        %v4270 = vadd.f32 %v4231, %v4249
        %v4271 = vadd.f32 %v4232, %v4249
        %v4272 = vadd.f32 %v4233, %v4249
        %v4273 = vadd.f32 %v4234, %v4249
        %v4274 = vadd.f32 %v4235, %v4249
        %v4275 = vadd.f32 %v4236, %v4249
        %v4276 = vadd.f32 %v4237, %v4249
        %v4277 = vadd.f32 %v4238, %v4249
        %v4278 = vadd.f32 %v4239, %v4249
        %v4279 = vadd.f32 %v4240, %v4249
        %v4280 = vadd.f32 %v4241, %v4249
        %v4281 = vadd.f32 %v4242, %v4249
        %v4282 = vadd.f32 %v4243, %v4249
        %v4283 = vadd.f32 %v4251, %v3948
        %v4284 = vadd.f32 %v4252, %v3949
        %v4285 = vadd.f32 %v4253, %v3950
        %v4286 = vadd.f32 %v4254, %v3951
        %v4287 = vadd.f32 %v4255, %v3952
        %v4288 = vadd.f32 %v4256, %v3953
        %v4289 = vadd.f32 %v4257, %v3954
        %v4290 = vadd.f32 %v4258, %v3955
        %v4291 = vadd.f32 %v4259, %v3956
        %v4292 = vadd.f32 %v4260, %v3957
        %v4293 = vadd.f32 %v4261, %v3958
        %v4294 = vadd.f32 %v4262, %v3959
        %v4295 = vadd.f32 %v4263, %v3960
        %v4296 = vadd.f32 %v4264, %v3961
        %v4297 = vadd.f32 %v4265, %v3962
        %v4298 = vadd.f32 %v4266, %v3963
        %v4299 = vadd.f32 %v4267, %v3964
        %v4300 = vadd.f32 %v4268, %v3965
        %v4301 = vadd.f32 %v4269, %v3966
        %v4302 = vadd.f32 %v4270, %v3967
        %v4303 = vadd.f32 %v4271, %v3968
        %v4304 = vadd.f32 %v4272, %v3969
        %v4305 = vadd.f32 %v4273, %v3970
        %v4306 = vadd.f32 %v4274, %v3971
        %v4307 = vadd.f32 %v4275, %v3972
        %v4308 = vadd.f32 %v4276, %v3973
        %v4309 = vadd.f32 %v4277, %v3974
        %v4310 = vadd.f32 %v4278, %v3975
        %v4311 = vadd.f32 %v4279, %v3976
        %v4312 = vadd.f32 %v4280, %v3977
        %v4313 = vadd.f32 %v4281, %v3978
        %v4314 = vadd.f32 %v4282, %v3979
        %v4315 = vmax.f32 %v4283, 0.0
        %v4316 = vmax.f32 %v4284, 0.0
        %v4317 = vmax.f32 %v4285, 0.0
        %v4318 = vmax.f32 %v4286, 0.0
        %v4319 = vmax.f32 %v4287, 0.0
        %v4320 = vmax.f32 %v4288, 0.0
        %v4321 = vmax.f32 %v4289, 0.0
        %v4322 = vmax.f32 %v4290, 0.0
        %v4323 = vmax.f32 %v4291, 0.0
        %v4324 = vmax.f32 %v4292, 0.0
        %v4325 = vmax.f32 %v4293, 0.0
        %v4326 = vmax.f32 %v4294, 0.0
        %v4327 = vmax.f32 %v4295, 0.0
        %v4328 = vmax.f32 %v4296, 0.0
        %v4329 = vmax.f32 %v4297, 0.0
        %v4330 = vmax.f32 %v4298, 0.0
        %v4331 = vmax.f32 %v4299, 0.0
        %v4332 = vmax.f32 %v4300, 0.0
        %v4333 = vmax.f32 %v4301, 0.0
        %v4334 = vmax.f32 %v4302, 0.0
        %v4335 = vmax.f32 %v4303, 0.0
        %v4336 = vmax.f32 %v4304, 0.0
        %v4337 = vmax.f32 %v4305, 0.0
        %v4338 = vmax.f32 %v4306, 0.0
        %v4339 = vmax.f32 %v4307, 0.0
        %v4340 = vmax.f32 %v4308, 0.0
        %v4341 = vmax.f32 %v4309, 0.0
        %v4342 = vmax.f32 %v4310, 0.0
        %v4343 = vmax.f32 %v4311, 0.0
        %v4344 = vmax.f32 %v4312, 0.0
        %v4345 = vmax.f32 %v4313, 0.0
        %v4346 = vmax.f32 %v4314, 0.0
        %4347 = vst [vmem:[%s475] sm:$0xff] %v4315
        %4348 = vst [vmem:[%s475 + $0x8] sm:$0xff] %v4316
        %4349 = vst [vmem:[%s475 + $0x10] sm:$0xff] %v4317
        %4350 = vst [vmem:[%s475 + $0x18] sm:$0xff] %v4318
        %4351 = vst [vmem:[%s475 + $0x20] sm:$0xff] %v4319
        %4352 = vst [vmem:[%s475 + $0x28] sm:$0xff] %v4320
        %4353 = vst [vmem:[%s475 + $0x30] sm:$0xff] %v4321
        %4354 = vst [vmem:[%s475 + $0x38] sm:$0xff] %v4322
        %4355 = vst [vmem:[%s475 + $0x40] sm:$0xff] %v4323
        %4356 = vst [vmem:[%s475 + $0x48] sm:$0xff] %v4324
        %4357 = vst [vmem:[%s475 + $0x50] sm:$0xff] %v4325
        %4358 = vst [vmem:[%s475 + $0x58] sm:$0xff] %v4326
        %4359 = vst [vmem:[%s475 + $0x60] sm:$0xff] %v4327
        %4360 = vst [vmem:[%s475 + $0x68] sm:$0xff] %v4328
        %4361 = vst [vmem:[%s475 + $0x70] sm:$0xff] %v4329
        %4362 = vst [vmem:[%s475 + $0x78] sm:$0xff] %v4330
        %4363 = vst [vmem:[%s475 + $0x80] sm:$0xff] %v4331
        %4364 = vst [vmem:[%s475 + $0x88] sm:$0xff] %v4332
        %4365 = vst [vmem:[%s475 + $0x90] sm:$0xff] %v4333
        %4366 = vst [vmem:[%s475 + $0x98] sm:$0xff] %v4334
        %4367 = vst [vmem:[%s475 + $0xa0] sm:$0xff] %v4335
        %4368 = vst [vmem:[%s475 + $0xa8] sm:$0xff] %v4336
        %4369 = vst [vmem:[%s475 + $0xb0] sm:$0xff] %v4337
        %4370 = vst [vmem:[%s475 + $0xb8] sm:$0xff] %v4338
        %4371 = vst [vmem:[%s475 + $0xc0] sm:$0xff] %v4339
        %4372 = vst [vmem:[%s475 + $0xc8] sm:$0xff] %v4340
        %4373 = vst [vmem:[%s475 + $0xd0] sm:$0xff] %v4341
        %4374 = vst [vmem:[%s475 + $0xd8] sm:$0xff] %v4342
        %4375 = vst [vmem:[%s475 + $0xe0] sm:$0xff] %v4343
        %4376 = vst [vmem:[%s475 + $0xe8] sm:$0xff] %v4344
        %4377 = vst [vmem:[%s475 + $0xf0] sm:$0xff] %v4345
        %4378 = vst [vmem:[%s475 + $0xf8] sm:$0xff] %v4346
        %s4379 = sand.u32 %s296, 1
        %s4380 = scalar_lea.sflag [#allocation4], %s4379
        %s4381 = sand.u32 %s296, 1
        %s4382 = smul.addr %s4381, 256
        %s4383 = scalar_lea.vmem [#allocation10], %s4382
        // Predicated region
        $region85: #{tpu_custom_call.1} parent=67 // pred_check
          %p4384 = pneg %p306
        $region86: #{tpu_custom_call.1} parent=67 // pred_check_branch
          %4386 = sbr.rel (%p4384) target = $region88
        $region87: #{tpu_custom_call.1} parent=67 // pred_region
          %s4388 = ssub.s32 4096, 4096
          %4389 = vsyncadd %s4380, %s4388
          %s4390 = smul.addr %s31, 32
          %s4391 = smul.addr %s4390, 128
          %s4392 = scalar_lea.hbm %s12, %s4391
          %s4393 = sshll.u32 %s4383, 4
          %s4394 = int_to_ptr.vmem [resolvable:$true] %s4393
          %4399 = dma.vmem_to_hbm [thread:$0]  %s4394, 4096, %s4392, %s4380, 128, 128, 8
        $region88: #{tpu_custom_call.1} parent=67 // pred_fallthru
          _
      $region68: #{tpu_custom_call.1} parent=5 // pred_fallthru
        _
      %p4400 = scmp.le.s32.totalorder 2, %s26
      // Predicated region
      $region89: #{tpu_custom_call.1} parent=5 // pred_check
        %p4401 = pneg %p4400
      $region90: #{tpu_custom_call.1} parent=5 // pred_check_branch
        %4403 = sbr.rel (%p4401) target = $region92
      $region91: #{tpu_custom_call.1} parent=5 // pred_region
        %s4404 = ssub.s32 %s26, 2
        // Predicated region
        $region93: #{tpu_custom_call.1} parent=91 // pred_check
          %p4405 = pneg %p312
        $region94: #{tpu_custom_call.1} parent=91 // pred_check_branch
          %4407 = sbr.rel (%p4405) target = $region96
        $region95: #{tpu_custom_call.1} parent=91 // pred_region
          %s4408 = sand.u32 %s297, 1
          %s4409 = scalar_lea.sflag [#allocation4], %s4408
          %s4410 = sand.u32 %s297, 1
          %s4411 = smul.addr %s4410, 256
          %s4412 = scalar_lea.vmem [#allocation10], %s4411
          %4413 = dma.done %s4409, 4096
        $region96: #{tpu_custom_call.1} parent=91 // pred_fallthru
          _
      $region92: #{tpu_custom_call.1} parent=5 // pred_fallthru
        _
    $region6: #{tpu_custom_call.1} parent=1 // loop_footer
      %s30 = sadd.s32 1, %s26
    $region7: #{tpu_custom_call.1} parent=1 // loop_footer_branch
      %25 = sbr.rel target = $region3
    $region8: #{tpu_custom_call.1} parent=1 // loop_exit
      _
    %4414 = vsyncpa [#allocation3], 1
    %s4415 = scalar_lea.sflag [#allocation3], 1
    %4416 = vsyncpa %s4415, 1
    %4417 = vsyncpa [#allocation6], 1
    %4418 = vsyncpa [#allocation9], 1
    %4419 = vsyncpa [#allocation4], 1
    %s4420 = scalar_lea.sflag [#allocation4], 1
    %4421 = vsyncpa %s4420, 1

</llo_original>
